<compile_context>
chip_gen: v7x
topology: tpu7x:2x2x1
jax: 0.10.0
libtpu: 0.0.40
codegen_flags: <defaults>
</compile_context>

<pallas_src>
import jax
import jax.numpy as jnp
from jax.experimental import pallas as pl
from jax.experimental.pallas import tpu as pltpu

_EPS = 1e-5  # nn.GroupNorm default eps


def _make_c2f1_kernel(meta, c, h, w):
    """meta: per-block tuples (c1, c2, kh, kw, w_off, g_off, b_off)."""
    half = c // 2
    inv_hw = 1.0 / float(h * w)

    def kernel(p_ref, x_ref, o_ref, pad_ref):
        # Zero the padded staging tile once; only its interior is overwritten
        # per channel, so the 1-pixel border stays zero for every 3x3 block.
        pad_ref[...] = jnp.zeros((h + 2, w + 2), jnp.float32)

        def conv_gn_tanh(bi, xin):
            """xin: list of C1 (H, W) f32 values -> list of C2 (H, W) values."""
            c1, c2, kh, kw, w_off, g_off, b_off = meta[bi]
            ph, pw = kh // 2, kw // 2
            accs = [jnp.zeros((h, w), jnp.float32) for _ in range(c2)]

            for ci in range(c1):
                if kh == 1 and kw == 1:
                    views = [xin[ci]]
                else:
                    # Stage this channel into the zero-bordered tile, then read
                    # the nine shifted windows ("same" conv taps) from VMEM.
                    pad_ref[pl.ds(ph, h), pl.ds(pw, w)] = xin[ci]
                    views = [pad_ref[pl.ds(dh, h), pl.ds(dw, w)]
                             for dh in range(kh) for dw in range(kw)]
                for o in range(c2):
                    for t in range(kh * kw):
                        widx = w_off + (t * c1 + ci) * c2 + o
                        accs[o] = accs[o] + p_ref[widx] * views[t]

            outs = []
            for o in range(c2):
                acc = accs[o]
                # GroupNorm(C2, C2) == per-(sample, channel) stats over H*W.
                mean = jnp.sum(jnp.sum(acc, axis=1, keepdims=True),
                               axis=0, keepdims=True) * inv_hw
                cen = acc - mean
                var = jnp.sum(jnp.sum(cen * cen, axis=1, keepdims=True),
                              axis=0, keepdims=True) * inv_hw
                # Fold the affine: out = tanh(cen * (gamma * rsqrt(var+eps)) + beta)
                scale = p_ref[g_off + o] * jax.lax.rsqrt(var + _EPS)
                outs.append(jnp.tanh(cen * scale + p_ref[b_off + o]))
            return outs

        x_list = [x_ref[0, ci].astype(jnp.float32) for ci in range(c)]

        # --- C2f_1 wiring (all in VMEM / vregs) ---
        y0 = conv_gn_tanh(0, x_list)               # conv0: (C) -> (C)
        x1, x2 = y0[:half], y0[half:]
        t = conv_gn_tanh(1, x2)                    # conv1: C/2 -> C/4
        t = conv_gn_tanh(2, t)                     # conv2: C/4 -> C/2
        xout1 = t
        x2 = [a + b for a, b in zip(x2, t)]        # residual
        t = conv_gn_tanh(3, x2)                    # conv3: C/2 -> C/4
        t = conv_gn_tanh(4, t)                     # conv4: C/4 -> C/2
        x2 = [a + b for a, b in zip(x2, t)]        # residual
        xcat = x1 + x2 + xout1                     # concat along channels
        out = conv_gn_tanh(5, xcat)                # conv5: 3C/2 -> C

        for oc in range(c):
            o_ref[0, oc] = out[oc].astype(o_ref.dtype)

    return kernel


def c2f1_pallas(x, params):
    """x: (N, C, H, W) f32.  params: dict conv0..conv5 -> (w, gamma, beta)."""
    n, c, h, w = x.shape
    names = ["conv0", "conv1", "conv2", "conv3", "conv4", "conv5"]

    meta = []
    pieces = []
    off = 0
    flops = 0
    trans = 0
    for nm in names:
        wc, g, b = params[nm]
        c2, c1, kh, kw = wc.shape
        # Flat weight layout: index ((dh*KW + dw)*C1 + ci)*C2 + o == w[o, ci, dh, dw]
        wflat = jnp.transpose(wc, (2, 3, 1, 0)).reshape(-1).astype(jnp.float32)
        w_off = off
        off += kh * kw * c1 * c2
        g_off = off
        off += c2
        b_off = off
        off += c2
        meta.append((c1, c2, kh, kw, w_off, g_off, b_off))
        pieces += [wflat,
                   g.astype(jnp.float32).reshape(-1),
                   b.astype(jnp.float32).reshape(-1)]
        flops += 2 * kh * kw * c1 * c2 * h * w + 8 * c2 * h * w
        trans += c2 * h * w + c2
    pflat = jnp.concatenate(pieces)                      # small: ~500 scalars

    cost = pl.CostEstimate(
        flops=int(n * flops),
        transcendentals=int(n * trans),
        bytes_accessed=int(4 * (2 * n * c * h * w) + 4 * int(pflat.shape[0])),
    )

    kernel = _make_c2f1_kernel(tuple(meta), c, h, w)

    out = pl.pallas_call(
        kernel,
        out_shape=jax.ShapeDtypeStruct((n, c, h, w), x.dtype),
        grid=(n,),                                       # one sample per step
        in_specs=[
            pl.BlockSpec(memory_space=pltpu.MemorySpace.SMEM),   # packed scalars
            pl.BlockSpec((1, c, h, w), lambda i: (i, 0, 0, 0)),  # activations
        ],
        out_specs=pl.BlockSpec((1, c, h, w), lambda i: (i, 0, 0, 0)),
        scratch_shapes=[pltpu.VMEM((h + 2, w + 2), jnp.float32)],  # padded tap tile
        compiler_params=pltpu.CompilerParams(
            dimension_semantics=("parallel",),           # megacore-friendly axis
            vmem_limit_bytes=48 * 1024 * 1024,           # headroom on v7x (64 MiB)
        ),
        cost_estimate=cost,
    )(pflat, x)
    return out


# ----------------------------- pure-JAX reference -----------------------------
def _conv_block_ref(x, w, gamma, beta):
    k = w.shape[-1]
    pad = k // 2
    y = jax.lax.conv_general_dilated(
        x, w, window_strides=(1, 1), padding=[(pad, pad), (pad, pad)],
        dimension_numbers=("NCHW", "OIHW", "NCHW"),
        precision=jax.lax.Precision.HIGHEST)
    mean = jnp.mean(y, axis=(2, 3), keepdims=True)
    var = jnp.mean((y - mean) ** 2, axis=(2, 3), keepdims=True)
    y = (y - mean) * jax.lax.rsqrt(var + _EPS)
    y = y * gamma[None, :, None, None] + beta[None, :, None, None]
    return jnp.tanh(y)


def _c2f1_ref(x, params):
    c = x.shape[1]
    half = c // 2
    y = _conv_block_ref(x, *params["conv0"])
    x1, x2 = y[:, :half], y[:, half:]
    t = _conv_block_ref(x2, *params["conv1"])
    t = _conv_block_ref(t, *params["conv2"])
    xout1 = t
    x2 = x2 + t
    t = _conv_block_ref(x2, *params["conv3"])
    t = _conv_block_ref(t, *params["conv4"])
    x2 = x2 + t
    xcat = jnp.concatenate([x1, x2, xout1], axis=1)
    return _conv_block_ref(xcat, *params["conv5"])


if __name__ == "__main__":
    # Small config: channels_in=8 so every sub-conv has >=2 channels.
    N, C, H, W = 2, 8, 16, 16
    half, quarter = C // 2, C // 4

    key = jax.random.PRNGKey(0)
    keys = jax.random.split(key, 7)

    def conv_params(k_, c1, c2, ksz):
        kw_, kg_, kb_ = jax.random.split(k_, 3)
        wgt = jax.random.normal(kw_, (c2, c1, ksz, ksz), jnp.float32)
        wgt = wgt * (1.0 / (c1 * ksz * ksz) ** 0.5)
        gamma = 1.0 + 0.1 * jax.random.normal(kg_, (c2,), jnp.float32)
        beta = 0.1 * jax.random.normal(kb_, (c2,), jnp.float32)
        return (wgt, gamma, beta)

    params = {
        "conv0": conv_params(keys[0], C, C, 1),
        "conv1": conv_params(keys[1], half, quarter, 3),
        "conv2": conv_params(keys[2], quarter, half, 3),
        "conv3": conv_params(keys[3], half, quarter, 3),
        "conv4": conv_params(keys[4], quarter, half, 3),
        "conv5": conv_params(keys[5], 3 * half, C, 1),
    }
    x = jax.random.normal(keys[6], (N, C, H, W), jnp.float32)

    out = jax.block_until_ready(jax.jit(c2f1_pallas)(x, params))
    ref = _c2f1_ref(x, params)

    assert out.shape == (N, C, H, W)
    max_err = float(jnp.max(jnp.abs(out - ref)))
    assert jnp.allclose(out, ref, rtol=1e-4, atol=1e-4), f"mismatch vs reference: {max_err}"

    print("KERNEL_OK")
</pallas_src>

<mosaic_0001>
module attributes {stable_mosaic.version = 11 : i64} {
  func.func @kernel(%arg0: i32, %arg1: memref<504xf32, #tpu.memory_space<smem>>, %arg2: memref<1x8x16x16xf32, #tpu.memory_space<vmem>>, %arg3: memref<1x8x16x16xf32, #tpu.memory_space<vmem>>, %arg4: memref<18x18xf32, #tpu.memory_space<vmem>>) attributes {dimension_semantics = [#tpu.dimension_semantics<parallel>], iteration_bounds = array<i64: 2>, scalar_prefetch = 0 : i64, scratch_operands = 1 : i64, tpu.core_type = #tpu.core_type<tc>, window_params = [{transform_indices = @transform_0, window_bounds = array<i64: 504>}, {transform_indices = @transform_1, window_bounds = array<i64: 1, 8, 16, 16>}, {transform_indices = @transform_2, window_bounds = array<i64: 1, 8, 16, 16>}]} {
    %cst = arith.constant 0.000000e+00 : f32
    %0 = vector.broadcast %cst : f32 to vector<18x18xf32>
    %c0 = arith.constant 0 : index
    %c0_0 = arith.constant 0 : index
    %1 = vector.load %arg4[%c0, %c0_0] : memref<18x18xf32, #tpu.memory_space<vmem>>, vector<18x18xf32>
    tpu.vector_store %arg4[%c0, %c0_0], %0 {strides = array<i32>} : memref<18x18xf32, #tpu.memory_space<vmem>>, vector<18x18xf32>,
    %c0_1 = arith.constant 0 : index
    %c0_2 = arith.constant 0 : index
    %c0_3 = arith.constant 0 : index
    %c0_4 = arith.constant 0 : index
    %2 = vector.load %arg2[%c0_1, %c0_2, %c0_3, %c0_4] : memref<1x8x16x16xf32, #tpu.memory_space<vmem>>, vector<1x1x16x16xf32>
    %3 = vector.shape_cast %2 : vector<1x1x16x16xf32> to vector<16x16xf32>
    %c0_5 = arith.constant 0 : index
    %c1 = arith.constant 1 : index
    %c0_6 = arith.constant 0 : index
    %c0_7 = arith.constant 0 : index
    %4 = vector.load %arg2[%c0_5, %c1, %c0_6, %c0_7] : memref<1x8x16x16xf32, #tpu.memory_space<vmem>>, vector<1x1x16x16xf32>
    %5 = vector.shape_cast %4 : vector<1x1x16x16xf32> to vector<16x16xf32>
    %c0_8 = arith.constant 0 : index
    %c2 = arith.constant 2 : index
    %c0_9 = arith.constant 0 : index
    %c0_10 = arith.constant 0 : index
    %6 = vector.load %arg2[%c0_8, %c2, %c0_9, %c0_10] : memref<1x8x16x16xf32, #tpu.memory_space<vmem>>, vector<1x1x16x16xf32>
    %7 = vector.shape_cast %6 : vector<1x1x16x16xf32> to vector<16x16xf32>
    %c0_11 = arith.constant 0 : index
    %c3 = arith.constant 3 : index
    %c0_12 = arith.constant 0 : index
    %c0_13 = arith.constant 0 : index
    %8 = vector.load %arg2[%c0_11, %c3, %c0_12, %c0_13] : memref<1x8x16x16xf32, #tpu.memory_space<vmem>>, vector<1x1x16x16xf32>
    %9 = vector.shape_cast %8 : vector<1x1x16x16xf32> to vector<16x16xf32>
    %c0_14 = arith.constant 0 : index
    %c4 = arith.constant 4 : index
    %c0_15 = arith.constant 0 : index
    %c0_16 = arith.constant 0 : index
    %10 = vector.load %arg2[%c0_14, %c4, %c0_15, %c0_16] : memref<1x8x16x16xf32, #tpu.memory_space<vmem>>, vector<1x1x16x16xf32>
    %11 = vector.shape_cast %10 : vector<1x1x16x16xf32> to vector<16x16xf32>
    %c0_17 = arith.constant 0 : index
    %c5 = arith.constant 5 : index
    %c0_18 = arith.constant 0 : index
    %c0_19 = arith.constant 0 : index
    %12 = vector.load %arg2[%c0_17, %c5, %c0_18, %c0_19] : memref<1x8x16x16xf32, #tpu.memory_space<vmem>>, vector<1x1x16x16xf32>
    %13 = vector.shape_cast %12 : vector<1x1x16x16xf32> to vector<16x16xf32>
    %c0_20 = arith.constant 0 : index
    %c6 = arith.constant 6 : index
    %c0_21 = arith.constant 0 : index
    %c0_22 = arith.constant 0 : index
    %14 = vector.load %arg2[%c0_20, %c6, %c0_21, %c0_22] : memref<1x8x16x16xf32, #tpu.memory_space<vmem>>, vector<1x1x16x16xf32>
    %15 = vector.shape_cast %14 : vector<1x1x16x16xf32> to vector<16x16xf32>
    %c0_23 = arith.constant 0 : index
    %c7 = arith.constant 7 : index
    %c0_24 = arith.constant 0 : index
    %c0_25 = arith.constant 0 : index
    %16 = vector.load %arg2[%c0_23, %c7, %c0_24, %c0_25] : memref<1x8x16x16xf32, #tpu.memory_space<vmem>>, vector<1x1x16x16xf32>
    %17 = vector.shape_cast %16 : vector<1x1x16x16xf32> to vector<16x16xf32>
    %cst_26 = arith.constant 0.000000e+00 : f32
    %18 = vector.broadcast %cst_26 : f32 to vector<16x16xf32>
    %cst_27 = arith.constant 0.000000e+00 : f32
    %19 = vector.broadcast %cst_27 : f32 to vector<16x16xf32>
    %cst_28 = arith.constant 0.000000e+00 : f32
    %20 = vector.broadcast %cst_28 : f32 to vector<16x16xf32>
    %cst_29 = arith.constant 0.000000e+00 : f32
    %21 = vector.broadcast %cst_29 : f32 to vector<16x16xf32>
    %cst_30 = arith.constant 0.000000e+00 : f32
    %22 = vector.broadcast %cst_30 : f32 to vector<16x16xf32>
    %cst_31 = arith.constant 0.000000e+00 : f32
    %23 = vector.broadcast %cst_31 : f32 to vector<16x16xf32>
    %cst_32 = arith.constant 0.000000e+00 : f32
    %24 = vector.broadcast %cst_32 : f32 to vector<16x16xf32>
    %cst_33 = arith.constant 0.000000e+00 : f32
    %25 = vector.broadcast %cst_33 : f32 to vector<16x16xf32>
    %c0_34 = arith.constant 0 : index
    %26 = memref.load %arg1[%c0_34] : memref<504xf32, #tpu.memory_space<smem>>
    %27 = vector.broadcast %26 : f32 to vector<16x16xf32>
    %28 = arith.mulf %27, %3 : vector<16x16xf32>
    %29 = arith.addf %18, %28 : vector<16x16xf32>
    %c1_35 = arith.constant 1 : index
    %30 = memref.load %arg1[%c1_35] : memref<504xf32, #tpu.memory_space<smem>>
    %31 = vector.broadcast %30 : f32 to vector<16x16xf32>
    %32 = arith.mulf %31, %3 : vector<16x16xf32>
    %33 = arith.addf %19, %32 : vector<16x16xf32>
    %c2_36 = arith.constant 2 : index
    %34 = memref.load %arg1[%c2_36] : memref<504xf32, #tpu.memory_space<smem>>
    %35 = vector.broadcast %34 : f32 to vector<16x16xf32>
    %36 = arith.mulf %35, %3 : vector<16x16xf32>
    %37 = arith.addf %20, %36 : vector<16x16xf32>
    %c3_37 = arith.constant 3 : index
    %38 = memref.load %arg1[%c3_37] : memref<504xf32, #tpu.memory_space<smem>>
    %39 = vector.broadcast %38 : f32 to vector<16x16xf32>
    %40 = arith.mulf %39, %3 : vector<16x16xf32>
    %41 = arith.addf %21, %40 : vector<16x16xf32>
    %c4_38 = arith.constant 4 : index
    %42 = memref.load %arg1[%c4_38] : memref<504xf32, #tpu.memory_space<smem>>
    %43 = vector.broadcast %42 : f32 to vector<16x16xf32>
    %44 = arith.mulf %43, %3 : vector<16x16xf32>
    %45 = arith.addf %22, %44 : vector<16x16xf32>
    %c5_39 = arith.constant 5 : index
    %46 = memref.load %arg1[%c5_39] : memref<504xf32, #tpu.memory_space<smem>>
    %47 = vector.broadcast %46 : f32 to vector<16x16xf32>
    %48 = arith.mulf %47, %3 : vector<16x16xf32>
    %49 = arith.addf %23, %48 : vector<16x16xf32>
    %c6_40 = arith.constant 6 : index
    %50 = memref.load %arg1[%c6_40] : memref<504xf32, #tpu.memory_space<smem>>
    %51 = vector.broadcast %50 : f32 to vector<16x16xf32>
    %52 = arith.mulf %51, %3 : vector<16x16xf32>
    %53 = arith.addf %24, %52 : vector<16x16xf32>
    %c7_41 = arith.constant 7 : index
    %54 = memref.load %arg1[%c7_41] : memref<504xf32, #tpu.memory_space<smem>>
    %55 = vector.broadcast %54 : f32 to vector<16x16xf32>
    %56 = arith.mulf %55, %3 : vector<16x16xf32>
    %57 = arith.addf %25, %56 : vector<16x16xf32>
    %c8 = arith.constant 8 : index
    %58 = memref.load %arg1[%c8] : memref<504xf32, #tpu.memory_space<smem>>
    %59 = vector.broadcast %58 : f32 to vector<16x16xf32>
    %60 = arith.mulf %59, %5 : vector<16x16xf32>
    %61 = arith.addf %29, %60 : vector<16x16xf32>
    %c9 = arith.constant 9 : index
    %62 = memref.load %arg1[%c9] : memref<504xf32, #tpu.memory_space<smem>>
    %63 = vector.broadcast %62 : f32 to vector<16x16xf32>
    %64 = arith.mulf %63, %5 : vector<16x16xf32>
    %65 = arith.addf %33, %64 : vector<16x16xf32>
    %c10 = arith.constant 10 : index
    %66 = memref.load %arg1[%c10] : memref<504xf32, #tpu.memory_space<smem>>
    %67 = vector.broadcast %66 : f32 to vector<16x16xf32>
    %68 = arith.mulf %67, %5 : vector<16x16xf32>
    %69 = arith.addf %37, %68 : vector<16x16xf32>
    %c11 = arith.constant 11 : index
    %70 = memref.load %arg1[%c11] : memref<504xf32, #tpu.memory_space<smem>>
    %71 = vector.broadcast %70 : f32 to vector<16x16xf32>
    %72 = arith.mulf %71, %5 : vector<16x16xf32>
    %73 = arith.addf %41, %72 : vector<16x16xf32>
    %c12 = arith.constant 12 : index
    %74 = memref.load %arg1[%c12] : memref<504xf32, #tpu.memory_space<smem>>
    %75 = vector.broadcast %74 : f32 to vector<16x16xf32>
    %76 = arith.mulf %75, %5 : vector<16x16xf32>
    %77 = arith.addf %45, %76 : vector<16x16xf32>
    %c13 = arith.constant 13 : index
    %78 = memref.load %arg1[%c13] : memref<504xf32, #tpu.memory_space<smem>>
    %79 = vector.broadcast %78 : f32 to vector<16x16xf32>
    %80 = arith.mulf %79, %5 : vector<16x16xf32>
    %81 = arith.addf %49, %80 : vector<16x16xf32>
    %c14 = arith.constant 14 : index
    %82 = memref.load %arg1[%c14] : memref<504xf32, #tpu.memory_space<smem>>
    %83 = vector.broadcast %82 : f32 to vector<16x16xf32>
    %84 = arith.mulf %83, %5 : vector<16x16xf32>
    %85 = arith.addf %53, %84 : vector<16x16xf32>
    %c15 = arith.constant 15 : index
    %86 = memref.load %arg1[%c15] : memref<504xf32, #tpu.memory_space<smem>>
    %87 = vector.broadcast %86 : f32 to vector<16x16xf32>
    %88 = arith.mulf %87, %5 : vector<16x16xf32>
    %89 = arith.addf %57, %88 : vector<16x16xf32>
    %c16 = arith.constant 16 : index
    %90 = memref.load %arg1[%c16] : memref<504xf32, #tpu.memory_space<smem>>
    %91 = vector.broadcast %90 : f32 to vector<16x16xf32>
    %92 = arith.mulf %91, %7 : vector<16x16xf32>
    %93 = arith.addf %61, %92 : vector<16x16xf32>
    %c17 = arith.constant 17 : index
    %94 = memref.load %arg1[%c17] : memref<504xf32, #tpu.memory_space<smem>>
    %95 = vector.broadcast %94 : f32 to vector<16x16xf32>
    %96 = arith.mulf %95, %7 : vector<16x16xf32>
    %97 = arith.addf %65, %96 : vector<16x16xf32>
    %c18 = arith.constant 18 : index
    %98 = memref.load %arg1[%c18] : memref<504xf32, #tpu.memory_space<smem>>
    %99 = vector.broadcast %98 : f32 to vector<16x16xf32>
    %100 = arith.mulf %99, %7 : vector<16x16xf32>
    %101 = arith.addf %69, %100 : vector<16x16xf32>
    %c19 = arith.constant 19 : index
    %102 = memref.load %arg1[%c19] : memref<504xf32, #tpu.memory_space<smem>>
    %103 = vector.broadcast %102 : f32 to vector<16x16xf32>
    %104 = arith.mulf %103, %7 : vector<16x16xf32>
    %105 = arith.addf %73, %104 : vector<16x16xf32>
    %c20 = arith.constant 20 : index
    %106 = memref.load %arg1[%c20] : memref<504xf32, #tpu.memory_space<smem>>
    %107 = vector.broadcast %106 : f32 to vector<16x16xf32>
    %108 = arith.mulf %107, %7 : vector<16x16xf32>
    %109 = arith.addf %77, %108 : vector<16x16xf32>
    %c21 = arith.constant 21 : index
    %110 = memref.load %arg1[%c21] : memref<504xf32, #tpu.memory_space<smem>>
    %111 = vector.broadcast %110 : f32 to vector<16x16xf32>
    %112 = arith.mulf %111, %7 : vector<16x16xf32>
    %113 = arith.addf %81, %112 : vector<16x16xf32>
    %c22 = arith.constant 22 : index
    %114 = memref.load %arg1[%c22] : memref<504xf32, #tpu.memory_space<smem>>
    %115 = vector.broadcast %114 : f32 to vector<16x16xf32>
    %116 = arith.mulf %115, %7 : vector<16x16xf32>
    %117 = arith.addf %85, %116 : vector<16x16xf32>
    %c23 = arith.constant 23 : index
    %118 = memref.load %arg1[%c23] : memref<504xf32, #tpu.memory_space<smem>>
    %119 = vector.broadcast %118 : f32 to vector<16x16xf32>
    %120 = arith.mulf %119, %7 : vector<16x16xf32>
    %121 = arith.addf %89, %120 : vector<16x16xf32>
    %c24 = arith.constant 24 : index
    %122 = memref.load %arg1[%c24] : memref<504xf32, #tpu.memory_space<smem>>
    %123 = vector.broadcast %122 : f32 to vector<16x16xf32>
    %124 = arith.mulf %123, %9 : vector<16x16xf32>
    %125 = arith.addf %93, %124 : vector<16x16xf32>
    %c25 = arith.constant 25 : index
    %126 = memref.load %arg1[%c25] : memref<504xf32, #tpu.memory_space<smem>>
    %127 = vector.broadcast %126 : f32 to vector<16x16xf32>
    %128 = arith.mulf %127, %9 : vector<16x16xf32>
    %129 = arith.addf %97, %128 : vector<16x16xf32>
    %c26 = arith.constant 26 : index
    %130 = memref.load %arg1[%c26] : memref<504xf32, #tpu.memory_space<smem>>
    %131 = vector.broadcast %130 : f32 to vector<16x16xf32>
    %132 = arith.mulf %131, %9 : vector<16x16xf32>
    %133 = arith.addf %101, %132 : vector<16x16xf32>
    %c27 = arith.constant 27 : index
    %134 = memref.load %arg1[%c27] : memref<504xf32, #tpu.memory_space<smem>>
    %135 = vector.broadcast %134 : f32 to vector<16x16xf32>
    %136 = arith.mulf %135, %9 : vector<16x16xf32>
    %137 = arith.addf %105, %136 : vector<16x16xf32>
    %c28 = arith.constant 28 : index
    %138 = memref.load %arg1[%c28] : memref<504xf32, #tpu.memory_space<smem>>
    %139 = vector.broadcast %138 : f32 to vector<16x16xf32>
    %140 = arith.mulf %139, %9 : vector<16x16xf32>
    %141 = arith.addf %109, %140 : vector<16x16xf32>
    %c29 = arith.constant 29 : index
    %142 = memref.load %arg1[%c29] : memref<504xf32, #tpu.memory_space<smem>>
    %143 = vector.broadcast %142 : f32 to vector<16x16xf32>
    %144 = arith.mulf %143, %9 : vector<16x16xf32>
    %145 = arith.addf %113, %144 : vector<16x16xf32>
    %c30 = arith.constant 30 : index
    %146 = memref.load %arg1[%c30] : memref<504xf32, #tpu.memory_space<smem>>
    %147 = vector.broadcast %146 : f32 to vector<16x16xf32>
    %148 = arith.mulf %147, %9 : vector<16x16xf32>
    %149 = arith.addf %117, %148 : vector<16x16xf32>
    %c31 = arith.constant 31 : index
    %150 = memref.load %arg1[%c31] : memref<504xf32, #tpu.memory_space<smem>>
    %151 = vector.broadcast %150 : f32 to vector<16x16xf32>
    %152 = arith.mulf %151, %9 : vector<16x16xf32>
    %153 = arith.addf %121, %152 : vector<16x16xf32>
    %c32 = arith.constant 32 : index
    %154 = memref.load %arg1[%c32] : memref<504xf32, #tpu.memory_space<smem>>
    %155 = vector.broadcast %154 : f32 to vector<16x16xf32>
    %156 = arith.mulf %155, %11 : vector<16x16xf32>
    %157 = arith.addf %125, %156 : vector<16x16xf32>
    %c33 = arith.constant 33 : index
    %158 = memref.load %arg1[%c33] : memref<504xf32, #tpu.memory_space<smem>>
    %159 = vector.broadcast %158 : f32 to vector<16x16xf32>
    %160 = arith.mulf %159, %11 : vector<16x16xf32>
    %161 = arith.addf %129, %160 : vector<16x16xf32>
    %c34 = arith.constant 34 : index
    %162 = memref.load %arg1[%c34] : memref<504xf32, #tpu.memory_space<smem>>
    %163 = vector.broadcast %162 : f32 to vector<16x16xf32>
    %164 = arith.mulf %163, %11 : vector<16x16xf32>
    %165 = arith.addf %133, %164 : vector<16x16xf32>
    %c35 = arith.constant 35 : index
    %166 = memref.load %arg1[%c35] : memref<504xf32, #tpu.memory_space<smem>>
    %167 = vector.broadcast %166 : f32 to vector<16x16xf32>
    %168 = arith.mulf %167, %11 : vector<16x16xf32>
    %169 = arith.addf %137, %168 : vector<16x16xf32>
    %c36 = arith.constant 36 : index
    %170 = memref.load %arg1[%c36] : memref<504xf32, #tpu.memory_space<smem>>
    %171 = vector.broadcast %170 : f32 to vector<16x16xf32>
    %172 = arith.mulf %171, %11 : vector<16x16xf32>
    %173 = arith.addf %141, %172 : vector<16x16xf32>
    %c37 = arith.constant 37 : index
    %174 = memref.load %arg1[%c37] : memref<504xf32, #tpu.memory_space<smem>>
    %175 = vector.broadcast %174 : f32 to vector<16x16xf32>
    %176 = arith.mulf %175, %11 : vector<16x16xf32>
    %177 = arith.addf %145, %176 : vector<16x16xf32>
    %c38 = arith.constant 38 : index
    %178 = memref.load %arg1[%c38] : memref<504xf32, #tpu.memory_space<smem>>
    %179 = vector.broadcast %178 : f32 to vector<16x16xf32>
    %180 = arith.mulf %179, %11 : vector<16x16xf32>
    %181 = arith.addf %149, %180 : vector<16x16xf32>
    %c39 = arith.constant 39 : index
    %182 = memref.load %arg1[%c39] : memref<504xf32, #tpu.memory_space<smem>>
    %183 = vector.broadcast %182 : f32 to vector<16x16xf32>
    %184 = arith.mulf %183, %11 : vector<16x16xf32>
    %185 = arith.addf %153, %184 : vector<16x16xf32>
    %c40 = arith.constant 40 : index
    %186 = memref.load %arg1[%c40] : memref<504xf32, #tpu.memory_space<smem>>
    %187 = vector.broadcast %186 : f32 to vector<16x16xf32>
    %188 = arith.mulf %187, %13 : vector<16x16xf32>
    %189 = arith.addf %157, %188 : vector<16x16xf32>
    %c41 = arith.constant 41 : index
    %190 = memref.load %arg1[%c41] : memref<504xf32, #tpu.memory_space<smem>>
    %191 = vector.broadcast %190 : f32 to vector<16x16xf32>
    %192 = arith.mulf %191, %13 : vector<16x16xf32>
    %193 = arith.addf %161, %192 : vector<16x16xf32>
    %c42 = arith.constant 42 : index
    %194 = memref.load %arg1[%c42] : memref<504xf32, #tpu.memory_space<smem>>
    %195 = vector.broadcast %194 : f32 to vector<16x16xf32>
    %196 = arith.mulf %195, %13 : vector<16x16xf32>
    %197 = arith.addf %165, %196 : vector<16x16xf32>
    %c43 = arith.constant 43 : index
    %198 = memref.load %arg1[%c43] : memref<504xf32, #tpu.memory_space<smem>>
    %199 = vector.broadcast %198 : f32 to vector<16x16xf32>
    %200 = arith.mulf %199, %13 : vector<16x16xf32>
    %201 = arith.addf %169, %200 : vector<16x16xf32>
    %c44 = arith.constant 44 : index
    %202 = memref.load %arg1[%c44] : memref<504xf32, #tpu.memory_space<smem>>
    %203 = vector.broadcast %202 : f32 to vector<16x16xf32>
    %204 = arith.mulf %203, %13 : vector<16x16xf32>
    %205 = arith.addf %173, %204 : vector<16x16xf32>
    %c45 = arith.constant 45 : index
    %206 = memref.load %arg1[%c45] : memref<504xf32, #tpu.memory_space<smem>>
    %207 = vector.broadcast %206 : f32 to vector<16x16xf32>
    %208 = arith.mulf %207, %13 : vector<16x16xf32>
    %209 = arith.addf %177, %208 : vector<16x16xf32>
    %c46 = arith.constant 46 : index
    %210 = memref.load %arg1[%c46] : memref<504xf32, #tpu.memory_space<smem>>
    %211 = vector.broadcast %210 : f32 to vector<16x16xf32>
    %212 = arith.mulf %211, %13 : vector<16x16xf32>
    %213 = arith.addf %181, %212 : vector<16x16xf32>
    %c47 = arith.constant 47 : index
    %214 = memref.load %arg1[%c47] : memref<504xf32, #tpu.memory_space<smem>>
    %215 = vector.broadcast %214 : f32 to vector<16x16xf32>
    %216 = arith.mulf %215, %13 : vector<16x16xf32>
    %217 = arith.addf %185, %216 : vector<16x16xf32>
    %c48 = arith.constant 48 : index
    %218 = memref.load %arg1[%c48] : memref<504xf32, #tpu.memory_space<smem>>
    %219 = vector.broadcast %218 : f32 to vector<16x16xf32>
    %220 = arith.mulf %219, %15 : vector<16x16xf32>
    %221 = arith.addf %189, %220 : vector<16x16xf32>
    %c49 = arith.constant 49 : index
    %222 = memref.load %arg1[%c49] : memref<504xf32, #tpu.memory_space<smem>>
    %223 = vector.broadcast %222 : f32 to vector<16x16xf32>
    %224 = arith.mulf %223, %15 : vector<16x16xf32>
    %225 = arith.addf %193, %224 : vector<16x16xf32>
    %c50 = arith.constant 50 : index
    %226 = memref.load %arg1[%c50] : memref<504xf32, #tpu.memory_space<smem>>
    %227 = vector.broadcast %226 : f32 to vector<16x16xf32>
    %228 = arith.mulf %227, %15 : vector<16x16xf32>
    %229 = arith.addf %197, %228 : vector<16x16xf32>
    %c51 = arith.constant 51 : index
    %230 = memref.load %arg1[%c51] : memref<504xf32, #tpu.memory_space<smem>>
    %231 = vector.broadcast %230 : f32 to vector<16x16xf32>
    %232 = arith.mulf %231, %15 : vector<16x16xf32>
    %233 = arith.addf %201, %232 : vector<16x16xf32>
    %c52 = arith.constant 52 : index
    %234 = memref.load %arg1[%c52] : memref<504xf32, #tpu.memory_space<smem>>
    %235 = vector.broadcast %234 : f32 to vector<16x16xf32>
    %236 = arith.mulf %235, %15 : vector<16x16xf32>
    %237 = arith.addf %205, %236 : vector<16x16xf32>
    %c53 = arith.constant 53 : index
    %238 = memref.load %arg1[%c53] : memref<504xf32, #tpu.memory_space<smem>>
    %239 = vector.broadcast %238 : f32 to vector<16x16xf32>
    %240 = arith.mulf %239, %15 : vector<16x16xf32>
    %241 = arith.addf %209, %240 : vector<16x16xf32>
    %c54 = arith.constant 54 : index
    %242 = memref.load %arg1[%c54] : memref<504xf32, #tpu.memory_space<smem>>
    %243 = vector.broadcast %242 : f32 to vector<16x16xf32>
    %244 = arith.mulf %243, %15 : vector<16x16xf32>
    %245 = arith.addf %213, %244 : vector<16x16xf32>
    %c55 = arith.constant 55 : index
    %246 = memref.load %arg1[%c55] : memref<504xf32, #tpu.memory_space<smem>>
    %247 = vector.broadcast %246 : f32 to vector<16x16xf32>
    %248 = arith.mulf %247, %15 : vector<16x16xf32>
    %249 = arith.addf %217, %248 : vector<16x16xf32>
    %c56 = arith.constant 56 : index
    %250 = memref.load %arg1[%c56] : memref<504xf32, #tpu.memory_space<smem>>
    %251 = vector.broadcast %250 : f32 to vector<16x16xf32>
    %252 = arith.mulf %251, %17 : vector<16x16xf32>
    %253 = arith.addf %221, %252 : vector<16x16xf32>
    %c57 = arith.constant 57 : index
    %254 = memref.load %arg1[%c57] : memref<504xf32, #tpu.memory_space<smem>>
    %255 = vector.broadcast %254 : f32 to vector<16x16xf32>
    %256 = arith.mulf %255, %17 : vector<16x16xf32>
    %257 = arith.addf %225, %256 : vector<16x16xf32>
    %c58 = arith.constant 58 : index
    %258 = memref.load %arg1[%c58] : memref<504xf32, #tpu.memory_space<smem>>
    %259 = vector.broadcast %258 : f32 to vector<16x16xf32>
    %260 = arith.mulf %259, %17 : vector<16x16xf32>
    %261 = arith.addf %229, %260 : vector<16x16xf32>
    %c59 = arith.constant 59 : index
    %262 = memref.load %arg1[%c59] : memref<504xf32, #tpu.memory_space<smem>>
    %263 = vector.broadcast %262 : f32 to vector<16x16xf32>
    %264 = arith.mulf %263, %17 : vector<16x16xf32>
    %265 = arith.addf %233, %264 : vector<16x16xf32>
    %c60 = arith.constant 60 : index
    %266 = memref.load %arg1[%c60] : memref<504xf32, #tpu.memory_space<smem>>
    %267 = vector.broadcast %266 : f32 to vector<16x16xf32>
    %268 = arith.mulf %267, %17 : vector<16x16xf32>
    %269 = arith.addf %237, %268 : vector<16x16xf32>
    %c61 = arith.constant 61 : index
    %270 = memref.load %arg1[%c61] : memref<504xf32, #tpu.memory_space<smem>>
    %271 = vector.broadcast %270 : f32 to vector<16x16xf32>
    %272 = arith.mulf %271, %17 : vector<16x16xf32>
    %273 = arith.addf %241, %272 : vector<16x16xf32>
    %c62 = arith.constant 62 : index
    %274 = memref.load %arg1[%c62] : memref<504xf32, #tpu.memory_space<smem>>
    %275 = vector.broadcast %274 : f32 to vector<16x16xf32>
    %276 = arith.mulf %275, %17 : vector<16x16xf32>
    %277 = arith.addf %245, %276 : vector<16x16xf32>
    %c63 = arith.constant 63 : index
    %278 = memref.load %arg1[%c63] : memref<504xf32, #tpu.memory_space<smem>>
    %279 = vector.broadcast %278 : f32 to vector<16x16xf32>
    %280 = arith.mulf %279, %17 : vector<16x16xf32>
    %281 = arith.addf %249, %280 : vector<16x16xf32>
    %cst_42 = arith.constant dense<0.000000e+00> : vector<16xf32>
    %282 = vector.multi_reduction <add>, %253, %cst_42 [1] : vector<16x16xf32> to vector<16xf32>
    %283 = vector.shape_cast %282 : vector<16xf32> to vector<16x1xf32>
    %cst_43 = arith.constant dense<0.000000e+00> : vector<1xf32>
    %284 = vector.multi_reduction <add>, %283, %cst_43 [0] : vector<16x1xf32> to vector<1xf32>
    %285 = vector.shape_cast %284 : vector<1xf32> to vector<1x1xf32>
    %cst_44 = arith.constant 3.906250e-03 : f32
    %286 = vector.broadcast %cst_44 : f32 to vector<1x1xf32>
    %287 = arith.mulf %285, %286 : vector<1x1xf32>
    %288 = vector.broadcast %287 : vector<1x1xf32> to vector<16x16xf32>
    %289 = arith.subf %253, %288 : vector<16x16xf32>
    %290 = arith.mulf %289, %289 : vector<16x16xf32>
    %cst_45 = arith.constant dense<0.000000e+00> : vector<16xf32>
    %291 = vector.multi_reduction <add>, %290, %cst_45 [1] : vector<16x16xf32> to vector<16xf32>
    %292 = vector.shape_cast %291 : vector<16xf32> to vector<16x1xf32>
    %cst_46 = arith.constant dense<0.000000e+00> : vector<1xf32>
    %293 = vector.multi_reduction <add>, %292, %cst_46 [0] : vector<16x1xf32> to vector<1xf32>
    %294 = vector.shape_cast %293 : vector<1xf32> to vector<1x1xf32>
    %cst_47 = arith.constant 3.906250e-03 : f32
    %295 = vector.broadcast %cst_47 : f32 to vector<1x1xf32>
    %296 = arith.mulf %294, %295 : vector<1x1xf32>
    %c64 = arith.constant 64 : index
    %297 = memref.load %arg1[%c64] : memref<504xf32, #tpu.memory_space<smem>>
    %cst_48 = arith.constant 9.99999974E-6 : f32
    %298 = vector.broadcast %cst_48 : f32 to vector<1x1xf32>
    %299 = arith.addf %296, %298 : vector<1x1xf32>
    %300 = math.rsqrt %299 : vector<1x1xf32>
    %301 = vector.broadcast %297 : f32 to vector<1x1xf32>
    %302 = arith.mulf %301, %300 : vector<1x1xf32>
    %303 = vector.broadcast %302 : vector<1x1xf32> to vector<16x16xf32>
    %304 = arith.mulf %289, %303 : vector<16x16xf32>
    %c72 = arith.constant 72 : index
    %305 = memref.load %arg1[%c72] : memref<504xf32, #tpu.memory_space<smem>>
    %306 = vector.broadcast %305 : f32 to vector<16x16xf32>
    %307 = arith.addf %304, %306 : vector<16x16xf32>
    %308 = math.tanh %307 : vector<16x16xf32>
    %cst_49 = arith.constant dense<0.000000e+00> : vector<16xf32>
    %309 = vector.multi_reduction <add>, %257, %cst_49 [1] : vector<16x16xf32> to vector<16xf32>
    %310 = vector.shape_cast %309 : vector<16xf32> to vector<16x1xf32>
    %cst_50 = arith.constant dense<0.000000e+00> : vector<1xf32>
    %311 = vector.multi_reduction <add>, %310, %cst_50 [0] : vector<16x1xf32> to vector<1xf32>
    %312 = vector.shape_cast %311 : vector<1xf32> to vector<1x1xf32>
    %cst_51 = arith.constant 3.906250e-03 : f32
    %313 = vector.broadcast %cst_51 : f32 to vector<1x1xf32>
    %314 = arith.mulf %312, %313 : vector<1x1xf32>
    %315 = vector.broadcast %314 : vector<1x1xf32> to vector<16x16xf32>
    %316 = arith.subf %257, %315 : vector<16x16xf32>
    %317 = arith.mulf %316, %316 : vector<16x16xf32>
    %cst_52 = arith.constant dense<0.000000e+00> : vector<16xf32>
    %318 = vector.multi_reduction <add>, %317, %cst_52 [1] : vector<16x16xf32> to vector<16xf32>
    %319 = vector.shape_cast %318 : vector<16xf32> to vector<16x1xf32>
    %cst_53 = arith.constant dense<0.000000e+00> : vector<1xf32>
    %320 = vector.multi_reduction <add>, %319, %cst_53 [0] : vector<16x1xf32> to vector<1xf32>
    %321 = vector.shape_cast %320 : vector<1xf32> to vector<1x1xf32>
    %cst_54 = arith.constant 3.906250e-03 : f32
    %322 = vector.broadcast %cst_54 : f32 to vector<1x1xf32>
    %323 = arith.mulf %321, %322 : vector<1x1xf32>
    %c65 = arith.constant 65 : index
    %324 = memref.load %arg1[%c65] : memref<504xf32, #tpu.memory_space<smem>>
    %cst_55 = arith.constant 9.99999974E-6 : f32
    %325 = vector.broadcast %cst_55 : f32 to vector<1x1xf32>
    %326 = arith.addf %323, %325 : vector<1x1xf32>
    %327 = math.rsqrt %326 : vector<1x1xf32>
    %328 = vector.broadcast %324 : f32 to vector<1x1xf32>
    %329 = arith.mulf %328, %327 : vector<1x1xf32>
    %330 = vector.broadcast %329 : vector<1x1xf32> to vector<16x16xf32>
    %331 = arith.mulf %316, %330 : vector<16x16xf32>
    %c73 = arith.constant 73 : index
    %332 = memref.load %arg1[%c73] : memref<504xf32, #tpu.memory_space<smem>>
    %333 = vector.broadcast %332 : f32 to vector<16x16xf32>
    %334 = arith.addf %331, %333 : vector<16x16xf32>
    %335 = math.tanh %334 : vector<16x16xf32>
    %cst_56 = arith.constant dense<0.000000e+00> : vector<16xf32>
    %336 = vector.multi_reduction <add>, %261, %cst_56 [1] : vector<16x16xf32> to vector<16xf32>
    %337 = vector.shape_cast %336 : vector<16xf32> to vector<16x1xf32>
    %cst_57 = arith.constant dense<0.000000e+00> : vector<1xf32>
    %338 = vector.multi_reduction <add>, %337, %cst_57 [0] : vector<16x1xf32> to vector<1xf32>
    %339 = vector.shape_cast %338 : vector<1xf32> to vector<1x1xf32>
    %cst_58 = arith.constant 3.906250e-03 : f32
    %340 = vector.broadcast %cst_58 : f32 to vector<1x1xf32>
    %341 = arith.mulf %339, %340 : vector<1x1xf32>
    %342 = vector.broadcast %341 : vector<1x1xf32> to vector<16x16xf32>
    %343 = arith.subf %261, %342 : vector<16x16xf32>
    %344 = arith.mulf %343, %343 : vector<16x16xf32>
    %cst_59 = arith.constant dense<0.000000e+00> : vector<16xf32>
    %345 = vector.multi_reduction <add>, %344, %cst_59 [1] : vector<16x16xf32> to vector<16xf32>
    %346 = vector.shape_cast %345 : vector<16xf32> to vector<16x1xf32>
    %cst_60 = arith.constant dense<0.000000e+00> : vector<1xf32>
    %347 = vector.multi_reduction <add>, %346, %cst_60 [0] : vector<16x1xf32> to vector<1xf32>
    %348 = vector.shape_cast %347 : vector<1xf32> to vector<1x1xf32>
    %cst_61 = arith.constant 3.906250e-03 : f32
    %349 = vector.broadcast %cst_61 : f32 to vector<1x1xf32>
    %350 = arith.mulf %348, %349 : vector<1x1xf32>
    %c66 = arith.constant 66 : index
    %351 = memref.load %arg1[%c66] : memref<504xf32, #tpu.memory_space<smem>>
    %cst_62 = arith.constant 9.99999974E-6 : f32
    %352 = vector.broadcast %cst_62 : f32 to vector<1x1xf32>
    %353 = arith.addf %350, %352 : vector<1x1xf32>
    %354 = math.rsqrt %353 : vector<1x1xf32>
    %355 = vector.broadcast %351 : f32 to vector<1x1xf32>
    %356 = arith.mulf %355, %354 : vector<1x1xf32>
    %357 = vector.broadcast %356 : vector<1x1xf32> to vector<16x16xf32>
    %358 = arith.mulf %343, %357 : vector<16x16xf32>
    %c74 = arith.constant 74 : index
    %359 = memref.load %arg1[%c74] : memref<504xf32, #tpu.memory_space<smem>>
    %360 = vector.broadcast %359 : f32 to vector<16x16xf32>
    %361 = arith.addf %358, %360 : vector<16x16xf32>
    %362 = math.tanh %361 : vector<16x16xf32>
    %cst_63 = arith.constant dense<0.000000e+00> : vector<16xf32>
    %363 = vector.multi_reduction <add>, %265, %cst_63 [1] : vector<16x16xf32> to vector<16xf32>
    %364 = vector.shape_cast %363 : vector<16xf32> to vector<16x1xf32>
    %cst_64 = arith.constant dense<0.000000e+00> : vector<1xf32>
    %365 = vector.multi_reduction <add>, %364, %cst_64 [0] : vector<16x1xf32> to vector<1xf32>
    %366 = vector.shape_cast %365 : vector<1xf32> to vector<1x1xf32>
    %cst_65 = arith.constant 3.906250e-03 : f32
    %367 = vector.broadcast %cst_65 : f32 to vector<1x1xf32>
    %368 = arith.mulf %366, %367 : vector<1x1xf32>
    %369 = vector.broadcast %368 : vector<1x1xf32> to vector<16x16xf32>
    %370 = arith.subf %265, %369 : vector<16x16xf32>
    %371 = arith.mulf %370, %370 : vector<16x16xf32>
    %cst_66 = arith.constant dense<0.000000e+00> : vector<16xf32>
    %372 = vector.multi_reduction <add>, %371, %cst_66 [1] : vector<16x16xf32> to vector<16xf32>
    %373 = vector.shape_cast %372 : vector<16xf32> to vector<16x1xf32>
    %cst_67 = arith.constant dense<0.000000e+00> : vector<1xf32>
    %374 = vector.multi_reduction <add>, %373, %cst_67 [0] : vector<16x1xf32> to vector<1xf32>
    %375 = vector.shape_cast %374 : vector<1xf32> to vector<1x1xf32>
    %cst_68 = arith.constant 3.906250e-03 : f32
    %376 = vector.broadcast %cst_68 : f32 to vector<1x1xf32>
    %377 = arith.mulf %375, %376 : vector<1x1xf32>
    %c67 = arith.constant 67 : index
    %378 = memref.load %arg1[%c67] : memref<504xf32, #tpu.memory_space<smem>>
    %cst_69 = arith.constant 9.99999974E-6 : f32
    %379 = vector.broadcast %cst_69 : f32 to vector<1x1xf32>
    %380 = arith.addf %377, %379 : vector<1x1xf32>
    %381 = math.rsqrt %380 : vector<1x1xf32>
    %382 = vector.broadcast %378 : f32 to vector<1x1xf32>
    %383 = arith.mulf %382, %381 : vector<1x1xf32>
    %384 = vector.broadcast %383 : vector<1x1xf32> to vector<16x16xf32>
    %385 = arith.mulf %370, %384 : vector<16x16xf32>
    %c75 = arith.constant 75 : index
    %386 = memref.load %arg1[%c75] : memref<504xf32, #tpu.memory_space<smem>>
    %387 = vector.broadcast %386 : f32 to vector<16x16xf32>
    %388 = arith.addf %385, %387 : vector<16x16xf32>
    %389 = math.tanh %388 : vector<16x16xf32>
    %cst_70 = arith.constant dense<0.000000e+00> : vector<16xf32>
    %390 = vector.multi_reduction <add>, %269, %cst_70 [1] : vector<16x16xf32> to vector<16xf32>
    %391 = vector.shape_cast %390 : vector<16xf32> to vector<16x1xf32>
    %cst_71 = arith.constant dense<0.000000e+00> : vector<1xf32>
    %392 = vector.multi_reduction <add>, %391, %cst_71 [0] : vector<16x1xf32> to vector<1xf32>
    %393 = vector.shape_cast %392 : vector<1xf32> to vector<1x1xf32>
    %cst_72 = arith.constant 3.906250e-03 : f32
    %394 = vector.broadcast %cst_72 : f32 to vector<1x1xf32>
    %395 = arith.mulf %393, %394 : vector<1x1xf32>
    %396 = vector.broadcast %395 : vector<1x1xf32> to vector<16x16xf32>
    %397 = arith.subf %269, %396 : vector<16x16xf32>
    %398 = arith.mulf %397, %397 : vector<16x16xf32>
    %cst_73 = arith.constant dense<0.000000e+00> : vector<16xf32>
    %399 = vector.multi_reduction <add>, %398, %cst_73 [1] : vector<16x16xf32> to vector<16xf32>
    %400 = vector.shape_cast %399 : vector<16xf32> to vector<16x1xf32>
    %cst_74 = arith.constant dense<0.000000e+00> : vector<1xf32>
    %401 = vector.multi_reduction <add>, %400, %cst_74 [0] : vector<16x1xf32> to vector<1xf32>
    %402 = vector.shape_cast %401 : vector<1xf32> to vector<1x1xf32>
    %cst_75 = arith.constant 3.906250e-03 : f32
    %403 = vector.broadcast %cst_75 : f32 to vector<1x1xf32>
    %404 = arith.mulf %402, %403 : vector<1x1xf32>
    %c68 = arith.constant 68 : index
    %405 = memref.load %arg1[%c68] : memref<504xf32, #tpu.memory_space<smem>>
    %cst_76 = arith.constant 9.99999974E-6 : f32
    %406 = vector.broadcast %cst_76 : f32 to vector<1x1xf32>
    %407 = arith.addf %404, %406 : vector<1x1xf32>
    %408 = math.rsqrt %407 : vector<1x1xf32>
    %409 = vector.broadcast %405 : f32 to vector<1x1xf32>
    %410 = arith.mulf %409, %408 : vector<1x1xf32>
    %411 = vector.broadcast %410 : vector<1x1xf32> to vector<16x16xf32>
    %412 = arith.mulf %397, %411 : vector<16x16xf32>
    %c76 = arith.constant 76 : index
    %413 = memref.load %arg1[%c76] : memref<504xf32, #tpu.memory_space<smem>>
    %414 = vector.broadcast %413 : f32 to vector<16x16xf32>
    %415 = arith.addf %412, %414 : vector<16x16xf32>
    %416 = math.tanh %415 : vector<16x16xf32>
    %cst_77 = arith.constant dense<0.000000e+00> : vector<16xf32>
    %417 = vector.multi_reduction <add>, %273, %cst_77 [1] : vector<16x16xf32> to vector<16xf32>
    %418 = vector.shape_cast %417 : vector<16xf32> to vector<16x1xf32>
    %cst_78 = arith.constant dense<0.000000e+00> : vector<1xf32>
    %419 = vector.multi_reduction <add>, %418, %cst_78 [0] : vector<16x1xf32> to vector<1xf32>
    %420 = vector.shape_cast %419 : vector<1xf32> to vector<1x1xf32>
    %cst_79 = arith.constant 3.906250e-03 : f32
    %421 = vector.broadcast %cst_79 : f32 to vector<1x1xf32>
    %422 = arith.mulf %420, %421 : vector<1x1xf32>
    %423 = vector.broadcast %422 : vector<1x1xf32> to vector<16x16xf32>
    %424 = arith.subf %273, %423 : vector<16x16xf32>
    %425 = arith.mulf %424, %424 : vector<16x16xf32>
    %cst_80 = arith.constant dense<0.000000e+00> : vector<16xf32>
    %426 = vector.multi_reduction <add>, %425, %cst_80 [1] : vector<16x16xf32> to vector<16xf32>
    %427 = vector.shape_cast %426 : vector<16xf32> to vector<16x1xf32>
    %cst_81 = arith.constant dense<0.000000e+00> : vector<1xf32>
    %428 = vector.multi_reduction <add>, %427, %cst_81 [0] : vector<16x1xf32> to vector<1xf32>
    %429 = vector.shape_cast %428 : vector<1xf32> to vector<1x1xf32>
    %cst_82 = arith.constant 3.906250e-03 : f32
    %430 = vector.broadcast %cst_82 : f32 to vector<1x1xf32>
    %431 = arith.mulf %429, %430 : vector<1x1xf32>
    %c69 = arith.constant 69 : index
    %432 = memref.load %arg1[%c69] : memref<504xf32, #tpu.memory_space<smem>>
    %cst_83 = arith.constant 9.99999974E-6 : f32
    %433 = vector.broadcast %cst_83 : f32 to vector<1x1xf32>
    %434 = arith.addf %431, %433 : vector<1x1xf32>
    %435 = math.rsqrt %434 : vector<1x1xf32>
    %436 = vector.broadcast %432 : f32 to vector<1x1xf32>
    %437 = arith.mulf %436, %435 : vector<1x1xf32>
    %438 = vector.broadcast %437 : vector<1x1xf32> to vector<16x16xf32>
    %439 = arith.mulf %424, %438 : vector<16x16xf32>
    %c77 = arith.constant 77 : index
    %440 = memref.load %arg1[%c77] : memref<504xf32, #tpu.memory_space<smem>>
    %441 = vector.broadcast %440 : f32 to vector<16x16xf32>
    %442 = arith.addf %439, %441 : vector<16x16xf32>
    %443 = math.tanh %442 : vector<16x16xf32>
    %cst_84 = arith.constant dense<0.000000e+00> : vector<16xf32>
    %444 = vector.multi_reduction <add>, %277, %cst_84 [1] : vector<16x16xf32> to vector<16xf32>
    %445 = vector.shape_cast %444 : vector<16xf32> to vector<16x1xf32>
    %cst_85 = arith.constant dense<0.000000e+00> : vector<1xf32>
    %446 = vector.multi_reduction <add>, %445, %cst_85 [0] : vector<16x1xf32> to vector<1xf32>
    %447 = vector.shape_cast %446 : vector<1xf32> to vector<1x1xf32>
    %cst_86 = arith.constant 3.906250e-03 : f32
    %448 = vector.broadcast %cst_86 : f32 to vector<1x1xf32>
    %449 = arith.mulf %447, %448 : vector<1x1xf32>
    %450 = vector.broadcast %449 : vector<1x1xf32> to vector<16x16xf32>
    %451 = arith.subf %277, %450 : vector<16x16xf32>
    %452 = arith.mulf %451, %451 : vector<16x16xf32>
    %cst_87 = arith.constant dense<0.000000e+00> : vector<16xf32>
    %453 = vector.multi_reduction <add>, %452, %cst_87 [1] : vector<16x16xf32> to vector<16xf32>
    %454 = vector.shape_cast %453 : vector<16xf32> to vector<16x1xf32>
    %cst_88 = arith.constant dense<0.000000e+00> : vector<1xf32>
    %455 = vector.multi_reduction <add>, %454, %cst_88 [0] : vector<16x1xf32> to vector<1xf32>
    %456 = vector.shape_cast %455 : vector<1xf32> to vector<1x1xf32>
    %cst_89 = arith.constant 3.906250e-03 : f32
    %457 = vector.broadcast %cst_89 : f32 to vector<1x1xf32>
    %458 = arith.mulf %456, %457 : vector<1x1xf32>
    %c70 = arith.constant 70 : index
    %459 = memref.load %arg1[%c70] : memref<504xf32, #tpu.memory_space<smem>>
    %cst_90 = arith.constant 9.99999974E-6 : f32
    %460 = vector.broadcast %cst_90 : f32 to vector<1x1xf32>
    %461 = arith.addf %458, %460 : vector<1x1xf32>
    %462 = math.rsqrt %461 : vector<1x1xf32>
    %463 = vector.broadcast %459 : f32 to vector<1x1xf32>
    %464 = arith.mulf %463, %462 : vector<1x1xf32>
    %465 = vector.broadcast %464 : vector<1x1xf32> to vector<16x16xf32>
    %466 = arith.mulf %451, %465 : vector<16x16xf32>
    %c78 = arith.constant 78 : index
    %467 = memref.load %arg1[%c78] : memref<504xf32, #tpu.memory_space<smem>>
    %468 = vector.broadcast %467 : f32 to vector<16x16xf32>
    %469 = arith.addf %466, %468 : vector<16x16xf32>
    %470 = math.tanh %469 : vector<16x16xf32>
    %cst_91 = arith.constant dense<0.000000e+00> : vector<16xf32>
    %471 = vector.multi_reduction <add>, %281, %cst_91 [1] : vector<16x16xf32> to vector<16xf32>
    %472 = vector.shape_cast %471 : vector<16xf32> to vector<16x1xf32>
    %cst_92 = arith.constant dense<0.000000e+00> : vector<1xf32>
    %473 = vector.multi_reduction <add>, %472, %cst_92 [0] : vector<16x1xf32> to vector<1xf32>
    %474 = vector.shape_cast %473 : vector<1xf32> to vector<1x1xf32>
    %cst_93 = arith.constant 3.906250e-03 : f32
    %475 = vector.broadcast %cst_93 : f32 to vector<1x1xf32>
    %476 = arith.mulf %474, %475 : vector<1x1xf32>
    %477 = vector.broadcast %476 : vector<1x1xf32> to vector<16x16xf32>
    %478 = arith.subf %281, %477 : vector<16x16xf32>
    %479 = arith.mulf %478, %478 : vector<16x16xf32>
    %cst_94 = arith.constant dense<0.000000e+00> : vector<16xf32>
    %480 = vector.multi_reduction <add>, %479, %cst_94 [1] : vector<16x16xf32> to vector<16xf32>
    %481 = vector.shape_cast %480 : vector<16xf32> to vector<16x1xf32>
    %cst_95 = arith.constant dense<0.000000e+00> : vector<1xf32>
    %482 = vector.multi_reduction <add>, %481, %cst_95 [0] : vector<16x1xf32> to vector<1xf32>
    %483 = vector.shape_cast %482 : vector<1xf32> to vector<1x1xf32>
    %cst_96 = arith.constant 3.906250e-03 : f32
    %484 = vector.broadcast %cst_96 : f32 to vector<1x1xf32>
    %485 = arith.mulf %483, %484 : vector<1x1xf32>
    %c71 = arith.constant 71 : index
    %486 = memref.load %arg1[%c71] : memref<504xf32, #tpu.memory_space<smem>>
    %cst_97 = arith.constant 9.99999974E-6 : f32
    %487 = vector.broadcast %cst_97 : f32 to vector<1x1xf32>
    %488 = arith.addf %485, %487 : vector<1x1xf32>
    %489 = math.rsqrt %488 : vector<1x1xf32>
    %490 = vector.broadcast %486 : f32 to vector<1x1xf32>
    %491 = arith.mulf %490, %489 : vector<1x1xf32>
    %492 = vector.broadcast %491 : vector<1x1xf32> to vector<16x16xf32>
    %493 = arith.mulf %478, %492 : vector<16x16xf32>
    %c79 = arith.constant 79 : index
    %494 = memref.load %arg1[%c79] : memref<504xf32, #tpu.memory_space<smem>>
    %495 = vector.broadcast %494 : f32 to vector<16x16xf32>
    %496 = arith.addf %493, %495 : vector<16x16xf32>
    %497 = math.tanh %496 : vector<16x16xf32>
    %cst_98 = arith.constant 0.000000e+00 : f32
    %498 = vector.broadcast %cst_98 : f32 to vector<16x16xf32>
    %cst_99 = arith.constant 0.000000e+00 : f32
    %499 = vector.broadcast %cst_99 : f32 to vector<16x16xf32>
    %c1_100 = arith.constant 1 : index
    %c1_101 = arith.constant 1 : index
    %500 = vector.load %arg4[%c1_100, %c1_101] : memref<18x18xf32, #tpu.memory_space<vmem>>, vector<16x16xf32>
    tpu.vector_store %arg4[%c1_100, %c1_101], %416 {strides = array<i32>} : memref<18x18xf32, #tpu.memory_space<vmem>>, vector<16x16xf32>,
    %c0_102 = arith.constant 0 : index
    %c0_103 = arith.constant 0 : index
    %501 = vector.load %arg4[%c0_102, %c0_103] : memref<18x18xf32, #tpu.memory_space<vmem>>, vector<16x16xf32>
    %c0_104 = arith.constant 0 : index
    %c1_105 = arith.constant 1 : index
    %502 = vector.load %arg4[%c0_104, %c1_105] : memref<18x18xf32, #tpu.memory_space<vmem>>, vector<16x16xf32>
    %c0_106 = arith.constant 0 : index
    %c2_107 = arith.constant 2 : index
    %503 = vector.load %arg4[%c0_106, %c2_107] : memref<18x18xf32, #tpu.memory_space<vmem>>, vector<16x16xf32>
    %c1_108 = arith.constant 1 : index
    %c0_109 = arith.constant 0 : index
    %504 = vector.load %arg4[%c1_108, %c0_109] : memref<18x18xf32, #tpu.memory_space<vmem>>, vector<16x16xf32>
    %c1_110 = arith.constant 1 : index
    %c1_111 = arith.constant 1 : index
    %505 = vector.load %arg4[%c1_110, %c1_111] : memref<18x18xf32, #tpu.memory_space<vmem>>, vector<16x16xf32>
    %c1_112 = arith.constant 1 : index
    %c2_113 = arith.constant 2 : index
    %506 = vector.load %arg4[%c1_112, %c2_113] : memref<18x18xf32, #tpu.memory_space<vmem>>, vector<16x16xf32>
    %c2_114 = arith.constant 2 : index
    %c0_115 = arith.constant 0 : index
    %507 = vector.load %arg4[%c2_114, %c0_115] : memref<18x18xf32, #tpu.memory_space<vmem>>, vector<16x16xf32>
    %c2_116 = arith.constant 2 : index
    %c1_117 = arith.constant 1 : index
    %508 = vector.load %arg4[%c2_116, %c1_117] : memref<18x18xf32, #tpu.memory_space<vmem>>, vector<16x16xf32>
    %c2_118 = arith.constant 2 : index
    %c2_119 = arith.constant 2 : index
    %509 = vector.load %arg4[%c2_118, %c2_119] : memref<18x18xf32, #tpu.memory_space<vmem>>, vector<16x16xf32>
    %c80 = arith.constant 80 : index
    %510 = memref.load %arg1[%c80] : memref<504xf32, #tpu.memory_space<smem>>
    %511 = vector.broadcast %510 : f32 to vector<16x16xf32>
    %512 = arith.mulf %511, %501 : vector<16x16xf32>
    %513 = arith.addf %498, %512 : vector<16x16xf32>
    %c88 = arith.constant 88 : index
    %514 = memref.load %arg1[%c88] : memref<504xf32, #tpu.memory_space<smem>>
    %515 = vector.broadcast %514 : f32 to vector<16x16xf32>
    %516 = arith.mulf %515, %502 : vector<16x16xf32>
    %517 = arith.addf %513, %516 : vector<16x16xf32>
    %c96 = arith.constant 96 : index
    %518 = memref.load %arg1[%c96] : memref<504xf32, #tpu.memory_space<smem>>
    %519 = vector.broadcast %518 : f32 to vector<16x16xf32>
    %520 = arith.mulf %519, %503 : vector<16x16xf32>
    %521 = arith.addf %517, %520 : vector<16x16xf32>
    %c104 = arith.constant 104 : index
    %522 = memref.load %arg1[%c104] : memref<504xf32, #tpu.memory_space<smem>>
    %523 = vector.broadcast %522 : f32 to vector<16x16xf32>
    %524 = arith.mulf %523, %504 : vector<16x16xf32>
    %525 = arith.addf %521, %524 : vector<16x16xf32>
    %c112 = arith.constant 112 : index
    %526 = memref.load %arg1[%c112] : memref<504xf32, #tpu.memory_space<smem>>
    %527 = vector.broadcast %526 : f32 to vector<16x16xf32>
    %528 = arith.mulf %527, %505 : vector<16x16xf32>
    %529 = arith.addf %525, %528 : vector<16x16xf32>
    %c120 = arith.constant 120 : index
    %530 = memref.load %arg1[%c120] : memref<504xf32, #tpu.memory_space<smem>>
    %531 = vector.broadcast %530 : f32 to vector<16x16xf32>
    %532 = arith.mulf %531, %506 : vector<16x16xf32>
    %533 = arith.addf %529, %532 : vector<16x16xf32>
    %c128 = arith.constant 128 : index
    %534 = memref.load %arg1[%c128] : memref<504xf32, #tpu.memory_space<smem>>
    %535 = vector.broadcast %534 : f32 to vector<16x16xf32>
    %536 = arith.mulf %535, %507 : vector<16x16xf32>
    %537 = arith.addf %533, %536 : vector<16x16xf32>
    %c136 = arith.constant 136 : index
    %538 = memref.load %arg1[%c136] : memref<504xf32, #tpu.memory_space<smem>>
    %539 = vector.broadcast %538 : f32 to vector<16x16xf32>
    %540 = arith.mulf %539, %508 : vector<16x16xf32>
    %541 = arith.addf %537, %540 : vector<16x16xf32>
    %c144 = arith.constant 144 : index
    %542 = memref.load %arg1[%c144] : memref<504xf32, #tpu.memory_space<smem>>
    %543 = vector.broadcast %542 : f32 to vector<16x16xf32>
    %544 = arith.mulf %543, %509 : vector<16x16xf32>
    %545 = arith.addf %541, %544 : vector<16x16xf32>
    %c81 = arith.constant 81 : index
    %546 = memref.load %arg1[%c81] : memref<504xf32, #tpu.memory_space<smem>>
    %547 = vector.broadcast %546 : f32 to vector<16x16xf32>
    %548 = arith.mulf %547, %501 : vector<16x16xf32>
    %549 = arith.addf %499, %548 : vector<16x16xf32>
    %c89 = arith.constant 89 : index
    %550 = memref.load %arg1[%c89] : memref<504xf32, #tpu.memory_space<smem>>
    %551 = vector.broadcast %550 : f32 to vector<16x16xf32>
    %552 = arith.mulf %551, %502 : vector<16x16xf32>
    %553 = arith.addf %549, %552 : vector<16x16xf32>
    %c97 = arith.constant 97 : index
    %554 = memref.load %arg1[%c97] : memref<504xf32, #tpu.memory_space<smem>>
    %555 = vector.broadcast %554 : f32 to vector<16x16xf32>
    %556 = arith.mulf %555, %503 : vector<16x16xf32>
    %557 = arith.addf %553, %556 : vector<16x16xf32>
    %c105 = arith.constant 105 : index
    %558 = memref.load %arg1[%c105] : memref<504xf32, #tpu.memory_space<smem>>
    %559 = vector.broadcast %558 : f32 to vector<16x16xf32>
    %560 = arith.mulf %559, %504 : vector<16x16xf32>
    %561 = arith.addf %557, %560 : vector<16x16xf32>
    %c113 = arith.constant 113 : index
    %562 = memref.load %arg1[%c113] : memref<504xf32, #tpu.memory_space<smem>>
    %563 = vector.broadcast %562 : f32 to vector<16x16xf32>
    %564 = arith.mulf %563, %505 : vector<16x16xf32>
    %565 = arith.addf %561, %564 : vector<16x16xf32>
    %c121 = arith.constant 121 : index
    %566 = memref.load %arg1[%c121] : memref<504xf32, #tpu.memory_space<smem>>
    %567 = vector.broadcast %566 : f32 to vector<16x16xf32>
    %568 = arith.mulf %567, %506 : vector<16x16xf32>
    %569 = arith.addf %565, %568 : vector<16x16xf32>
    %c129 = arith.constant 129 : index
    %570 = memref.load %arg1[%c129] : memref<504xf32, #tpu.memory_space<smem>>
    %571 = vector.broadcast %570 : f32 to vector<16x16xf32>
    %572 = arith.mulf %571, %507 : vector<16x16xf32>
    %573 = arith.addf %569, %572 : vector<16x16xf32>
    %c137 = arith.constant 137 : index
    %574 = memref.load %arg1[%c137] : memref<504xf32, #tpu.memory_space<smem>>
    %575 = vector.broadcast %574 : f32 to vector<16x16xf32>
    %576 = arith.mulf %575, %508 : vector<16x16xf32>
    %577 = arith.addf %573, %576 : vector<16x16xf32>
    %c145 = arith.constant 145 : index
    %578 = memref.load %arg1[%c145] : memref<504xf32, #tpu.memory_space<smem>>
    %579 = vector.broadcast %578 : f32 to vector<16x16xf32>
    %580 = arith.mulf %579, %509 : vector<16x16xf32>
    %581 = arith.addf %577, %580 : vector<16x16xf32>
    %c1_120 = arith.constant 1 : index
    %c1_121 = arith.constant 1 : index
    %582 = vector.load %arg4[%c1_120, %c1_121] : memref<18x18xf32, #tpu.memory_space<vmem>>, vector<16x16xf32>
    tpu.vector_store %arg4[%c1_120, %c1_121], %443 {strides = array<i32>} : memref<18x18xf32, #tpu.memory_space<vmem>>, vector<16x16xf32>,
    %c0_122 = arith.constant 0 : index
    %c0_123 = arith.constant 0 : index
    %583 = vector.load %arg4[%c0_122, %c0_123] : memref<18x18xf32, #tpu.memory_space<vmem>>, vector<16x16xf32>
    %c0_124 = arith.constant 0 : index
    %c1_125 = arith.constant 1 : index
    %584 = vector.load %arg4[%c0_124, %c1_125] : memref<18x18xf32, #tpu.memory_space<vmem>>, vector<16x16xf32>
    %c0_126 = arith.constant 0 : index
    %c2_127 = arith.constant 2 : index
    %585 = vector.load %arg4[%c0_126, %c2_127] : memref<18x18xf32, #tpu.memory_space<vmem>>, vector<16x16xf32>
    %c1_128 = arith.constant 1 : index
    %c0_129 = arith.constant 0 : index
    %586 = vector.load %arg4[%c1_128, %c0_129] : memref<18x18xf32, #tpu.memory_space<vmem>>, vector<16x16xf32>
    %c1_130 = arith.constant 1 : index
    %c1_131 = arith.constant 1 : index
    %587 = vector.load %arg4[%c1_130, %c1_131] : memref<18x18xf32, #tpu.memory_space<vmem>>, vector<16x16xf32>
    %c1_132 = arith.constant 1 : index
    %c2_133 = arith.constant 2 : index
    %588 = vector.load %arg4[%c1_132, %c2_133] : memref<18x18xf32, #tpu.memory_space<vmem>>, vector<16x16xf32>
    %c2_134 = arith.constant 2 : index
    %c0_135 = arith.constant 0 : index
    %589 = vector.load %arg4[%c2_134, %c0_135] : memref<18x18xf32, #tpu.memory_space<vmem>>, vector<16x16xf32>
    %c2_136 = arith.constant 2 : index
    %c1_137 = arith.constant 1 : index
    %590 = vector.load %arg4[%c2_136, %c1_137] : memref<18x18xf32, #tpu.memory_space<vmem>>, vector<16x16xf32>
    %c2_138 = arith.constant 2 : index
    %c2_139 = arith.constant 2 : index
    %591 = vector.load %arg4[%c2_138, %c2_139] : memref<18x18xf32, #tpu.memory_space<vmem>>, vector<16x16xf32>
    %c82 = arith.constant 82 : index
    %592 = memref.load %arg1[%c82] : memref<504xf32, #tpu.memory_space<smem>>
    %593 = vector.broadcast %592 : f32 to vector<16x16xf32>
    %594 = arith.mulf %593, %583 : vector<16x16xf32>
    %595 = arith.addf %545, %594 : vector<16x16xf32>
    %c90 = arith.constant 90 : index
    %596 = memref.load %arg1[%c90] : memref<504xf32, #tpu.memory_space<smem>>
    %597 = vector.broadcast %596 : f32 to vector<16x16xf32>
    %598 = arith.mulf %597, %584 : vector<16x16xf32>
    %599 = arith.addf %595, %598 : vector<16x16xf32>
    %c98 = arith.constant 98 : index
    %600 = memref.load %arg1[%c98] : memref<504xf32, #tpu.memory_space<smem>>
    %601 = vector.broadcast %600 : f32 to vector<16x16xf32>
    %602 = arith.mulf %601, %585 : vector<16x16xf32>
    %603 = arith.addf %599, %602 : vector<16x16xf32>
    %c106 = arith.constant 106 : index
    %604 = memref.load %arg1[%c106] : memref<504xf32, #tpu.memory_space<smem>>
    %605 = vector.broadcast %604 : f32 to vector<16x16xf32>
    %606 = arith.mulf %605, %586 : vector<16x16xf32>
    %607 = arith.addf %603, %606 : vector<16x16xf32>
    %c114 = arith.constant 114 : index
    %608 = memref.load %arg1[%c114] : memref<504xf32, #tpu.memory_space<smem>>
    %609 = vector.broadcast %608 : f32 to vector<16x16xf32>
    %610 = arith.mulf %609, %587 : vector<16x16xf32>
    %611 = arith.addf %607, %610 : vector<16x16xf32>
    %c122 = arith.constant 122 : index
    %612 = memref.load %arg1[%c122] : memref<504xf32, #tpu.memory_space<smem>>
    %613 = vector.broadcast %612 : f32 to vector<16x16xf32>
    %614 = arith.mulf %613, %588 : vector<16x16xf32>
    %615 = arith.addf %611, %614 : vector<16x16xf32>
    %c130 = arith.constant 130 : index
    %616 = memref.load %arg1[%c130] : memref<504xf32, #tpu.memory_space<smem>>
    %617 = vector.broadcast %616 : f32 to vector<16x16xf32>
    %618 = arith.mulf %617, %589 : vector<16x16xf32>
    %619 = arith.addf %615, %618 : vector<16x16xf32>
    %c138 = arith.constant 138 : index
    %620 = memref.load %arg1[%c138] : memref<504xf32, #tpu.memory_space<smem>>
    %621 = vector.broadcast %620 : f32 to vector<16x16xf32>
    %622 = arith.mulf %621, %590 : vector<16x16xf32>
    %623 = arith.addf %619, %622 : vector<16x16xf32>
    %c146 = arith.constant 146 : index
    %624 = memref.load %arg1[%c146] : memref<504xf32, #tpu.memory_space<smem>>
    %625 = vector.broadcast %624 : f32 to vector<16x16xf32>
    %626 = arith.mulf %625, %591 : vector<16x16xf32>
    %627 = arith.addf %623, %626 : vector<16x16xf32>
    %c83 = arith.constant 83 : index
    %628 = memref.load %arg1[%c83] : memref<504xf32, #tpu.memory_space<smem>>
    %629 = vector.broadcast %628 : f32 to vector<16x16xf32>
    %630 = arith.mulf %629, %583 : vector<16x16xf32>
    %631 = arith.addf %581, %630 : vector<16x16xf32>
    %c91 = arith.constant 91 : index
    %632 = memref.load %arg1[%c91] : memref<504xf32, #tpu.memory_space<smem>>
    %633 = vector.broadcast %632 : f32 to vector<16x16xf32>
    %634 = arith.mulf %633, %584 : vector<16x16xf32>
    %635 = arith.addf %631, %634 : vector<16x16xf32>
    %c99 = arith.constant 99 : index
    %636 = memref.load %arg1[%c99] : memref<504xf32, #tpu.memory_space<smem>>
    %637 = vector.broadcast %636 : f32 to vector<16x16xf32>
    %638 = arith.mulf %637, %585 : vector<16x16xf32>
    %639 = arith.addf %635, %638 : vector<16x16xf32>
    %c107 = arith.constant 107 : index
    %640 = memref.load %arg1[%c107] : memref<504xf32, #tpu.memory_space<smem>>
    %641 = vector.broadcast %640 : f32 to vector<16x16xf32>
    %642 = arith.mulf %641, %586 : vector<16x16xf32>
    %643 = arith.addf %639, %642 : vector<16x16xf32>
    %c115 = arith.constant 115 : index
    %644 = memref.load %arg1[%c115] : memref<504xf32, #tpu.memory_space<smem>>
    %645 = vector.broadcast %644 : f32 to vector<16x16xf32>
    %646 = arith.mulf %645, %587 : vector<16x16xf32>
    %647 = arith.addf %643, %646 : vector<16x16xf32>
    %c123 = arith.constant 123 : index
    %648 = memref.load %arg1[%c123] : memref<504xf32, #tpu.memory_space<smem>>
    %649 = vector.broadcast %648 : f32 to vector<16x16xf32>
    %650 = arith.mulf %649, %588 : vector<16x16xf32>
    %651 = arith.addf %647, %650 : vector<16x16xf32>
    %c131 = arith.constant 131 : index
    %652 = memref.load %arg1[%c131] : memref<504xf32, #tpu.memory_space<smem>>
    %653 = vector.broadcast %652 : f32 to vector<16x16xf32>
    %654 = arith.mulf %653, %589 : vector<16x16xf32>
    %655 = arith.addf %651, %654 : vector<16x16xf32>
    %c139 = arith.constant 139 : index
    %656 = memref.load %arg1[%c139] : memref<504xf32, #tpu.memory_space<smem>>
    %657 = vector.broadcast %656 : f32 to vector<16x16xf32>
    %658 = arith.mulf %657, %590 : vector<16x16xf32>
    %659 = arith.addf %655, %658 : vector<16x16xf32>
    %c147 = arith.constant 147 : index
    %660 = memref.load %arg1[%c147] : memref<504xf32, #tpu.memory_space<smem>>
    %661 = vector.broadcast %660 : f32 to vector<16x16xf32>
    %662 = arith.mulf %661, %591 : vector<16x16xf32>
    %663 = arith.addf %659, %662 : vector<16x16xf32>
    %c1_140 = arith.constant 1 : index
    %c1_141 = arith.constant 1 : index
    %664 = vector.load %arg4[%c1_140, %c1_141] : memref<18x18xf32, #tpu.memory_space<vmem>>, vector<16x16xf32>
    tpu.vector_store %arg4[%c1_140, %c1_141], %470 {strides = array<i32>} : memref<18x18xf32, #tpu.memory_space<vmem>>, vector<16x16xf32>,
    %c0_142 = arith.constant 0 : index
    %c0_143 = arith.constant 0 : index
    %665 = vector.load %arg4[%c0_142, %c0_143] : memref<18x18xf32, #tpu.memory_space<vmem>>, vector<16x16xf32>
    %c0_144 = arith.constant 0 : index
    %c1_145 = arith.constant 1 : index
    %666 = vector.load %arg4[%c0_144, %c1_145] : memref<18x18xf32, #tpu.memory_space<vmem>>, vector<16x16xf32>
    %c0_146 = arith.constant 0 : index
    %c2_147 = arith.constant 2 : index
    %667 = vector.load %arg4[%c0_146, %c2_147] : memref<18x18xf32, #tpu.memory_space<vmem>>, vector<16x16xf32>
    %c1_148 = arith.constant 1 : index
    %c0_149 = arith.constant 0 : index
    %668 = vector.load %arg4[%c1_148, %c0_149] : memref<18x18xf32, #tpu.memory_space<vmem>>, vector<16x16xf32>
    %c1_150 = arith.constant 1 : index
    %c1_151 = arith.constant 1 : index
    %669 = vector.load %arg4[%c1_150, %c1_151] : memref<18x18xf32, #tpu.memory_space<vmem>>, vector<16x16xf32>
    %c1_152 = arith.constant 1 : index
    %c2_153 = arith.constant 2 : index
    %670 = vector.load %arg4[%c1_152, %c2_153] : memref<18x18xf32, #tpu.memory_space<vmem>>, vector<16x16xf32>
    %c2_154 = arith.constant 2 : index
    %c0_155 = arith.constant 0 : index
    %671 = vector.load %arg4[%c2_154, %c0_155] : memref<18x18xf32, #tpu.memory_space<vmem>>, vector<16x16xf32>
    %c2_156 = arith.constant 2 : index
    %c1_157 = arith.constant 1 : index
    %672 = vector.load %arg4[%c2_156, %c1_157] : memref<18x18xf32, #tpu.memory_space<vmem>>, vector<16x16xf32>
    %c2_158 = arith.constant 2 : index
    %c2_159 = arith.constant 2 : index
    %673 = vector.load %arg4[%c2_158, %c2_159] : memref<18x18xf32, #tpu.memory_space<vmem>>, vector<16x16xf32>
    %c84 = arith.constant 84 : index
    %674 = memref.load %arg1[%c84] : memref<504xf32, #tpu.memory_space<smem>>
    %675 = vector.broadcast %674 : f32 to vector<16x16xf32>
    %676 = arith.mulf %675, %665 : vector<16x16xf32>
    %677 = arith.addf %627, %676 : vector<16x16xf32>
    %c92 = arith.constant 92 : index
    %678 = memref.load %arg1[%c92] : memref<504xf32, #tpu.memory_space<smem>>
    %679 = vector.broadcast %678 : f32 to vector<16x16xf32>
    %680 = arith.mulf %679, %666 : vector<16x16xf32>
    %681 = arith.addf %677, %680 : vector<16x16xf32>
    %c100 = arith.constant 100 : index
    %682 = memref.load %arg1[%c100] : memref<504xf32, #tpu.memory_space<smem>>
    %683 = vector.broadcast %682 : f32 to vector<16x16xf32>
    %684 = arith.mulf %683, %667 : vector<16x16xf32>
    %685 = arith.addf %681, %684 : vector<16x16xf32>
    %c108 = arith.constant 108 : index
    %686 = memref.load %arg1[%c108] : memref<504xf32, #tpu.memory_space<smem>>
    %687 = vector.broadcast %686 : f32 to vector<16x16xf32>
    %688 = arith.mulf %687, %668 : vector<16x16xf32>
    %689 = arith.addf %685, %688 : vector<16x16xf32>
    %c116 = arith.constant 116 : index
    %690 = memref.load %arg1[%c116] : memref<504xf32, #tpu.memory_space<smem>>
    %691 = vector.broadcast %690 : f32 to vector<16x16xf32>
    %692 = arith.mulf %691, %669 : vector<16x16xf32>
    %693 = arith.addf %689, %692 : vector<16x16xf32>
    %c124 = arith.constant 124 : index
    %694 = memref.load %arg1[%c124] : memref<504xf32, #tpu.memory_space<smem>>
    %695 = vector.broadcast %694 : f32 to vector<16x16xf32>
    %696 = arith.mulf %695, %670 : vector<16x16xf32>
    %697 = arith.addf %693, %696 : vector<16x16xf32>
    %c132 = arith.constant 132 : index
    %698 = memref.load %arg1[%c132] : memref<504xf32, #tpu.memory_space<smem>>
    %699 = vector.broadcast %698 : f32 to vector<16x16xf32>
    %700 = arith.mulf %699, %671 : vector<16x16xf32>
    %701 = arith.addf %697, %700 : vector<16x16xf32>
    %c140 = arith.constant 140 : index
    %702 = memref.load %arg1[%c140] : memref<504xf32, #tpu.memory_space<smem>>
    %703 = vector.broadcast %702 : f32 to vector<16x16xf32>
    %704 = arith.mulf %703, %672 : vector<16x16xf32>
    %705 = arith.addf %701, %704 : vector<16x16xf32>
    %c148 = arith.constant 148 : index
    %706 = memref.load %arg1[%c148] : memref<504xf32, #tpu.memory_space<smem>>
    %707 = vector.broadcast %706 : f32 to vector<16x16xf32>
    %708 = arith.mulf %707, %673 : vector<16x16xf32>
    %709 = arith.addf %705, %708 : vector<16x16xf32>
    %c85 = arith.constant 85 : index
    %710 = memref.load %arg1[%c85] : memref<504xf32, #tpu.memory_space<smem>>
    %711 = vector.broadcast %710 : f32 to vector<16x16xf32>
    %712 = arith.mulf %711, %665 : vector<16x16xf32>
    %713 = arith.addf %663, %712 : vector<16x16xf32>
    %c93 = arith.constant 93 : index
    %714 = memref.load %arg1[%c93] : memref<504xf32, #tpu.memory_space<smem>>
    %715 = vector.broadcast %714 : f32 to vector<16x16xf32>
    %716 = arith.mulf %715, %666 : vector<16x16xf32>
    %717 = arith.addf %713, %716 : vector<16x16xf32>
    %c101 = arith.constant 101 : index
    %718 = memref.load %arg1[%c101] : memref<504xf32, #tpu.memory_space<smem>>
    %719 = vector.broadcast %718 : f32 to vector<16x16xf32>
    %720 = arith.mulf %719, %667 : vector<16x16xf32>
    %721 = arith.addf %717, %720 : vector<16x16xf32>
    %c109 = arith.constant 109 : index
    %722 = memref.load %arg1[%c109] : memref<504xf32, #tpu.memory_space<smem>>
    %723 = vector.broadcast %722 : f32 to vector<16x16xf32>
    %724 = arith.mulf %723, %668 : vector<16x16xf32>
    %725 = arith.addf %721, %724 : vector<16x16xf32>
    %c117 = arith.constant 117 : index
    %726 = memref.load %arg1[%c117] : memref<504xf32, #tpu.memory_space<smem>>
    %727 = vector.broadcast %726 : f32 to vector<16x16xf32>
    %728 = arith.mulf %727, %669 : vector<16x16xf32>
    %729 = arith.addf %725, %728 : vector<16x16xf32>
    %c125 = arith.constant 125 : index
    %730 = memref.load %arg1[%c125] : memref<504xf32, #tpu.memory_space<smem>>
    %731 = vector.broadcast %730 : f32 to vector<16x16xf32>
    %732 = arith.mulf %731, %670 : vector<16x16xf32>
    %733 = arith.addf %729, %732 : vector<16x16xf32>
    %c133 = arith.constant 133 : index
    %734 = memref.load %arg1[%c133] : memref<504xf32, #tpu.memory_space<smem>>
    %735 = vector.broadcast %734 : f32 to vector<16x16xf32>
    %736 = arith.mulf %735, %671 : vector<16x16xf32>
    %737 = arith.addf %733, %736 : vector<16x16xf32>
    %c141 = arith.constant 141 : index
    %738 = memref.load %arg1[%c141] : memref<504xf32, #tpu.memory_space<smem>>
    %739 = vector.broadcast %738 : f32 to vector<16x16xf32>
    %740 = arith.mulf %739, %672 : vector<16x16xf32>
    %741 = arith.addf %737, %740 : vector<16x16xf32>
    %c149 = arith.constant 149 : index
    %742 = memref.load %arg1[%c149] : memref<504xf32, #tpu.memory_space<smem>>
    %743 = vector.broadcast %742 : f32 to vector<16x16xf32>
    %744 = arith.mulf %743, %673 : vector<16x16xf32>
    %745 = arith.addf %741, %744 : vector<16x16xf32>
    %c1_160 = arith.constant 1 : index
    %c1_161 = arith.constant 1 : index
    %746 = vector.load %arg4[%c1_160, %c1_161] : memref<18x18xf32, #tpu.memory_space<vmem>>, vector<16x16xf32>
    tpu.vector_store %arg4[%c1_160, %c1_161], %497 {strides = array<i32>} : memref<18x18xf32, #tpu.memory_space<vmem>>, vector<16x16xf32>,
    %c0_162 = arith.constant 0 : index
    %c0_163 = arith.constant 0 : index
    %747 = vector.load %arg4[%c0_162, %c0_163] : memref<18x18xf32, #tpu.memory_space<vmem>>, vector<16x16xf32>
    %c0_164 = arith.constant 0 : index
    %c1_165 = arith.constant 1 : index
    %748 = vector.load %arg4[%c0_164, %c1_165] : memref<18x18xf32, #tpu.memory_space<vmem>>, vector<16x16xf32>
    %c0_166 = arith.constant 0 : index
    %c2_167 = arith.constant 2 : index
    %749 = vector.load %arg4[%c0_166, %c2_167] : memref<18x18xf32, #tpu.memory_space<vmem>>, vector<16x16xf32>
    %c1_168 = arith.constant 1 : index
    %c0_169 = arith.constant 0 : index
    %750 = vector.load %arg4[%c1_168, %c0_169] : memref<18x18xf32, #tpu.memory_space<vmem>>, vector<16x16xf32>
    %c1_170 = arith.constant 1 : index
    %c1_171 = arith.constant 1 : index
    %751 = vector.load %arg4[%c1_170, %c1_171] : memref<18x18xf32, #tpu.memory_space<vmem>>, vector<16x16xf32>
    %c1_172 = arith.constant 1 : index
    %c2_173 = arith.constant 2 : index
    %752 = vector.load %arg4[%c1_172, %c2_173] : memref<18x18xf32, #tpu.memory_space<vmem>>, vector<16x16xf32>
    %c2_174 = arith.constant 2 : index
    %c0_175 = arith.constant 0 : index
    %753 = vector.load %arg4[%c2_174, %c0_175] : memref<18x18xf32, #tpu.memory_space<vmem>>, vector<16x16xf32>
    %c2_176 = arith.constant 2 : index
    %c1_177 = arith.constant 1 : index
    %754 = vector.load %arg4[%c2_176, %c1_177] : memref<18x18xf32, #tpu.memory_space<vmem>>, vector<16x16xf32>
    %c2_178 = arith.constant 2 : index
    %c2_179 = arith.constant 2 : index
    %755 = vector.load %arg4[%c2_178, %c2_179] : memref<18x18xf32, #tpu.memory_space<vmem>>, vector<16x16xf32>
    %c86 = arith.constant 86 : index
    %756 = memref.load %arg1[%c86] : memref<504xf32, #tpu.memory_space<smem>>
    %757 = vector.broadcast %756 : f32 to vector<16x16xf32>
    %758 = arith.mulf %757, %747 : vector<16x16xf32>
    %759 = arith.addf %709, %758 : vector<16x16xf32>
    %c94 = arith.constant 94 : index
    %760 = memref.load %arg1[%c94] : memref<504xf32, #tpu.memory_space<smem>>
    %761 = vector.broadcast %760 : f32 to vector<16x16xf32>
    %762 = arith.mulf %761, %748 : vector<16x16xf32>
    %763 = arith.addf %759, %762 : vector<16x16xf32>
    %c102 = arith.constant 102 : index
    %764 = memref.load %arg1[%c102] : memref<504xf32, #tpu.memory_space<smem>>
    %765 = vector.broadcast %764 : f32 to vector<16x16xf32>
    %766 = arith.mulf %765, %749 : vector<16x16xf32>
    %767 = arith.addf %763, %766 : vector<16x16xf32>
    %c110 = arith.constant 110 : index
    %768 = memref.load %arg1[%c110] : memref<504xf32, #tpu.memory_space<smem>>
    %769 = vector.broadcast %768 : f32 to vector<16x16xf32>
    %770 = arith.mulf %769, %750 : vector<16x16xf32>
    %771 = arith.addf %767, %770 : vector<16x16xf32>
    %c118 = arith.constant 118 : index
    %772 = memref.load %arg1[%c118] : memref<504xf32, #tpu.memory_space<smem>>
    %773 = vector.broadcast %772 : f32 to vector<16x16xf32>
    %774 = arith.mulf %773, %751 : vector<16x16xf32>
    %775 = arith.addf %771, %774 : vector<16x16xf32>
    %c126 = arith.constant 126 : index
    %776 = memref.load %arg1[%c126] : memref<504xf32, #tpu.memory_space<smem>>
    %777 = vector.broadcast %776 : f32 to vector<16x16xf32>
    %778 = arith.mulf %777, %752 : vector<16x16xf32>
    %779 = arith.addf %775, %778 : vector<16x16xf32>
    %c134 = arith.constant 134 : index
    %780 = memref.load %arg1[%c134] : memref<504xf32, #tpu.memory_space<smem>>
    %781 = vector.broadcast %780 : f32 to vector<16x16xf32>
    %782 = arith.mulf %781, %753 : vector<16x16xf32>
    %783 = arith.addf %779, %782 : vector<16x16xf32>
    %c142 = arith.constant 142 : index
    %784 = memref.load %arg1[%c142] : memref<504xf32, #tpu.memory_space<smem>>
    %785 = vector.broadcast %784 : f32 to vector<16x16xf32>
    %786 = arith.mulf %785, %754 : vector<16x16xf32>
    %787 = arith.addf %783, %786 : vector<16x16xf32>
    %c150 = arith.constant 150 : index
    %788 = memref.load %arg1[%c150] : memref<504xf32, #tpu.memory_space<smem>>
    %789 = vector.broadcast %788 : f32 to vector<16x16xf32>
    %790 = arith.mulf %789, %755 : vector<16x16xf32>
    %791 = arith.addf %787, %790 : vector<16x16xf32>
    %c87 = arith.constant 87 : index
    %792 = memref.load %arg1[%c87] : memref<504xf32, #tpu.memory_space<smem>>
    %793 = vector.broadcast %792 : f32 to vector<16x16xf32>
    %794 = arith.mulf %793, %747 : vector<16x16xf32>
    %795 = arith.addf %745, %794 : vector<16x16xf32>
    %c95 = arith.constant 95 : index
    %796 = memref.load %arg1[%c95] : memref<504xf32, #tpu.memory_space<smem>>
    %797 = vector.broadcast %796 : f32 to vector<16x16xf32>
    %798 = arith.mulf %797, %748 : vector<16x16xf32>
    %799 = arith.addf %795, %798 : vector<16x16xf32>
    %c103 = arith.constant 103 : index
    %800 = memref.load %arg1[%c103] : memref<504xf32, #tpu.memory_space<smem>>
    %801 = vector.broadcast %800 : f32 to vector<16x16xf32>
    %802 = arith.mulf %801, %749 : vector<16x16xf32>
    %803 = arith.addf %799, %802 : vector<16x16xf32>
    %c111 = arith.constant 111 : index
    %804 = memref.load %arg1[%c111] : memref<504xf32, #tpu.memory_space<smem>>
    %805 = vector.broadcast %804 : f32 to vector<16x16xf32>
    %806 = arith.mulf %805, %750 : vector<16x16xf32>
    %807 = arith.addf %803, %806 : vector<16x16xf32>
    %c119 = arith.constant 119 : index
    %808 = memref.load %arg1[%c119] : memref<504xf32, #tpu.memory_space<smem>>
    %809 = vector.broadcast %808 : f32 to vector<16x16xf32>
    %810 = arith.mulf %809, %751 : vector<16x16xf32>
    %811 = arith.addf %807, %810 : vector<16x16xf32>
    %c127 = arith.constant 127 : index
    %812 = memref.load %arg1[%c127] : memref<504xf32, #tpu.memory_space<smem>>
    %813 = vector.broadcast %812 : f32 to vector<16x16xf32>
    %814 = arith.mulf %813, %752 : vector<16x16xf32>
    %815 = arith.addf %811, %814 : vector<16x16xf32>
    %c135 = arith.constant 135 : index
    %816 = memref.load %arg1[%c135] : memref<504xf32, #tpu.memory_space<smem>>
    %817 = vector.broadcast %816 : f32 to vector<16x16xf32>
    %818 = arith.mulf %817, %753 : vector<16x16xf32>
    %819 = arith.addf %815, %818 : vector<16x16xf32>
    %c143 = arith.constant 143 : index
    %820 = memref.load %arg1[%c143] : memref<504xf32, #tpu.memory_space<smem>>
    %821 = vector.broadcast %820 : f32 to vector<16x16xf32>
    %822 = arith.mulf %821, %754 : vector<16x16xf32>
    %823 = arith.addf %819, %822 : vector<16x16xf32>
    %c151 = arith.constant 151 : index
    %824 = memref.load %arg1[%c151] : memref<504xf32, #tpu.memory_space<smem>>
    %825 = vector.broadcast %824 : f32 to vector<16x16xf32>
    %826 = arith.mulf %825, %755 : vector<16x16xf32>
    %827 = arith.addf %823, %826 : vector<16x16xf32>
    %cst_180 = arith.constant dense<0.000000e+00> : vector<16xf32>
    %828 = vector.multi_reduction <add>, %791, %cst_180 [1] : vector<16x16xf32> to vector<16xf32>
    %829 = vector.shape_cast %828 : vector<16xf32> to vector<16x1xf32>
    %cst_181 = arith.constant dense<0.000000e+00> : vector<1xf32>
    %830 = vector.multi_reduction <add>, %829, %cst_181 [0] : vector<16x1xf32> to vector<1xf32>
    %831 = vector.shape_cast %830 : vector<1xf32> to vector<1x1xf32>
    %cst_182 = arith.constant 3.906250e-03 : f32
    %832 = vector.broadcast %cst_182 : f32 to vector<1x1xf32>
    %833 = arith.mulf %831, %832 : vector<1x1xf32>
    %834 = vector.broadcast %833 : vector<1x1xf32> to vector<16x16xf32>
    %835 = arith.subf %791, %834 : vector<16x16xf32>
    %836 = arith.mulf %835, %835 : vector<16x16xf32>
    %cst_183 = arith.constant dense<0.000000e+00> : vector<16xf32>
    %837 = vector.multi_reduction <add>, %836, %cst_183 [1] : vector<16x16xf32> to vector<16xf32>
    %838 = vector.shape_cast %837 : vector<16xf32> to vector<16x1xf32>
    %cst_184 = arith.constant dense<0.000000e+00> : vector<1xf32>
    %839 = vector.multi_reduction <add>, %838, %cst_184 [0] : vector<16x1xf32> to vector<1xf32>
    %840 = vector.shape_cast %839 : vector<1xf32> to vector<1x1xf32>
    %cst_185 = arith.constant 3.906250e-03 : f32
    %841 = vector.broadcast %cst_185 : f32 to vector<1x1xf32>
    %842 = arith.mulf %840, %841 : vector<1x1xf32>
    %c152 = arith.constant 152 : index
    %843 = memref.load %arg1[%c152] : memref<504xf32, #tpu.memory_space<smem>>
    %cst_186 = arith.constant 9.99999974E-6 : f32
    %844 = vector.broadcast %cst_186 : f32 to vector<1x1xf32>
    %845 = arith.addf %842, %844 : vector<1x1xf32>
    %846 = math.rsqrt %845 : vector<1x1xf32>
    %847 = vector.broadcast %843 : f32 to vector<1x1xf32>
    %848 = arith.mulf %847, %846 : vector<1x1xf32>
    %849 = vector.broadcast %848 : vector<1x1xf32> to vector<16x16xf32>
    %850 = arith.mulf %835, %849 : vector<16x16xf32>
    %c154 = arith.constant 154 : index
    %851 = memref.load %arg1[%c154] : memref<504xf32, #tpu.memory_space<smem>>
    %852 = vector.broadcast %851 : f32 to vector<16x16xf32>
    %853 = arith.addf %850, %852 : vector<16x16xf32>
    %854 = math.tanh %853 : vector<16x16xf32>
    %cst_187 = arith.constant dense<0.000000e+00> : vector<16xf32>
    %855 = vector.multi_reduction <add>, %827, %cst_187 [1] : vector<16x16xf32> to vector<16xf32>
    %856 = vector.shape_cast %855 : vector<16xf32> to vector<16x1xf32>
    %cst_188 = arith.constant dense<0.000000e+00> : vector<1xf32>
    %857 = vector.multi_reduction <add>, %856, %cst_188 [0] : vector<16x1xf32> to vector<1xf32>
    %858 = vector.shape_cast %857 : vector<1xf32> to vector<1x1xf32>
    %cst_189 = arith.constant 3.906250e-03 : f32
    %859 = vector.broadcast %cst_189 : f32 to vector<1x1xf32>
    %860 = arith.mulf %858, %859 : vector<1x1xf32>
    %861 = vector.broadcast %860 : vector<1x1xf32> to vector<16x16xf32>
    %862 = arith.subf %827, %861 : vector<16x16xf32>
    %863 = arith.mulf %862, %862 : vector<16x16xf32>
    %cst_190 = arith.constant dense<0.000000e+00> : vector<16xf32>
    %864 = vector.multi_reduction <add>, %863, %cst_190 [1] : vector<16x16xf32> to vector<16xf32>
    %865 = vector.shape_cast %864 : vector<16xf32> to vector<16x1xf32>
    %cst_191 = arith.constant dense<0.000000e+00> : vector<1xf32>
    %866 = vector.multi_reduction <add>, %865, %cst_191 [0] : vector<16x1xf32> to vector<1xf32>
    %867 = vector.shape_cast %866 : vector<1xf32> to vector<1x1xf32>
    %cst_192 = arith.constant 3.906250e-03 : f32
    %868 = vector.broadcast %cst_192 : f32 to vector<1x1xf32>
    %869 = arith.mulf %867, %868 : vector<1x1xf32>
    %c153 = arith.constant 153 : index
    %870 = memref.load %arg1[%c153] : memref<504xf32, #tpu.memory_space<smem>>
    %cst_193 = arith.constant 9.99999974E-6 : f32
    %871 = vector.broadcast %cst_193 : f32 to vector<1x1xf32>
    %872 = arith.addf %869, %871 : vector<1x1xf32>
    %873 = math.rsqrt %872 : vector<1x1xf32>
    %874 = vector.broadcast %870 : f32 to vector<1x1xf32>
    %875 = arith.mulf %874, %873 : vector<1x1xf32>
    %876 = vector.broadcast %875 : vector<1x1xf32> to vector<16x16xf32>
    %877 = arith.mulf %862, %876 : vector<16x16xf32>
    %c155 = arith.constant 155 : index
    %878 = memref.load %arg1[%c155] : memref<504xf32, #tpu.memory_space<smem>>
    %879 = vector.broadcast %878 : f32 to vector<16x16xf32>
    %880 = arith.addf %877, %879 : vector<16x16xf32>
    %881 = math.tanh %880 : vector<16x16xf32>
    %cst_194 = arith.constant 0.000000e+00 : f32
    %882 = vector.broadcast %cst_194 : f32 to vector<16x16xf32>
    %cst_195 = arith.constant 0.000000e+00 : f32
    %883 = vector.broadcast %cst_195 : f32 to vector<16x16xf32>
    %cst_196 = arith.constant 0.000000e+00 : f32
    %884 = vector.broadcast %cst_196 : f32 to vector<16x16xf32>
    %cst_197 = arith.constant 0.000000e+00 : f32
    %885 = vector.broadcast %cst_197 : f32 to vector<16x16xf32>
    %c1_198 = arith.constant 1 : index
    %c1_199 = arith.constant 1 : index
    %886 = vector.load %arg4[%c1_198, %c1_199] : memref<18x18xf32, #tpu.memory_space<vmem>>, vector<16x16xf32>
    tpu.vector_store %arg4[%c1_198, %c1_199], %854 {strides = array<i32>} : memref<18x18xf32, #tpu.memory_space<vmem>>, vector<16x16xf32>,
    %c0_200 = arith.constant 0 : index
    %c0_201 = arith.constant 0 : index
    %887 = vector.load %arg4[%c0_200, %c0_201] : memref<18x18xf32, #tpu.memory_space<vmem>>, vector<16x16xf32>
    %c0_202 = arith.constant 0 : index
    %c1_203 = arith.constant 1 : index
    %888 = vector.load %arg4[%c0_202, %c1_203] : memref<18x18xf32, #tpu.memory_space<vmem>>, vector<16x16xf32>
    %c0_204 = arith.constant 0 : index
    %c2_205 = arith.constant 2 : index
    %889 = vector.load %arg4[%c0_204, %c2_205] : memref<18x18xf32, #tpu.memory_space<vmem>>, vector<16x16xf32>
    %c1_206 = arith.constant 1 : index
    %c0_207 = arith.constant 0 : index
    %890 = vector.load %arg4[%c1_206, %c0_207] : memref<18x18xf32, #tpu.memory_space<vmem>>, vector<16x16xf32>
    %c1_208 = arith.constant 1 : index
    %c1_209 = arith.constant 1 : index
    %891 = vector.load %arg4[%c1_208, %c1_209] : memref<18x18xf32, #tpu.memory_space<vmem>>, vector<16x16xf32>
    %c1_210 = arith.constant 1 : index
    %c2_211 = arith.constant 2 : index
    %892 = vector.load %arg4[%c1_210, %c2_211] : memref<18x18xf32, #tpu.memory_space<vmem>>, vector<16x16xf32>
    %c2_212 = arith.constant 2 : index
    %c0_213 = arith.constant 0 : index
    %893 = vector.load %arg4[%c2_212, %c0_213] : memref<18x18xf32, #tpu.memory_space<vmem>>, vector<16x16xf32>
    %c2_214 = arith.constant 2 : index
    %c1_215 = arith.constant 1 : index
    %894 = vector.load %arg4[%c2_214, %c1_215] : memref<18x18xf32, #tpu.memory_space<vmem>>, vector<16x16xf32>
    %c2_216 = arith.constant 2 : index
    %c2_217 = arith.constant 2 : index
    %895 = vector.load %arg4[%c2_216, %c2_217] : memref<18x18xf32, #tpu.memory_space<vmem>>, vector<16x16xf32>
    %c156 = arith.constant 156 : index
    %896 = memref.load %arg1[%c156] : memref<504xf32, #tpu.memory_space<smem>>
    %897 = vector.broadcast %896 : f32 to vector<16x16xf32>
    %898 = arith.mulf %897, %887 : vector<16x16xf32>
    %899 = arith.addf %882, %898 : vector<16x16xf32>
    %c164 = arith.constant 164 : index
    %900 = memref.load %arg1[%c164] : memref<504xf32, #tpu.memory_space<smem>>
    %901 = vector.broadcast %900 : f32 to vector<16x16xf32>
    %902 = arith.mulf %901, %888 : vector<16x16xf32>
    %903 = arith.addf %899, %902 : vector<16x16xf32>
    %c172 = arith.constant 172 : index
    %904 = memref.load %arg1[%c172] : memref<504xf32, #tpu.memory_space<smem>>
    %905 = vector.broadcast %904 : f32 to vector<16x16xf32>
    %906 = arith.mulf %905, %889 : vector<16x16xf32>
    %907 = arith.addf %903, %906 : vector<16x16xf32>
    %c180 = arith.constant 180 : index
    %908 = memref.load %arg1[%c180] : memref<504xf32, #tpu.memory_space<smem>>
    %909 = vector.broadcast %908 : f32 to vector<16x16xf32>
    %910 = arith.mulf %909, %890 : vector<16x16xf32>
    %911 = arith.addf %907, %910 : vector<16x16xf32>
    %c188 = arith.constant 188 : index
    %912 = memref.load %arg1[%c188] : memref<504xf32, #tpu.memory_space<smem>>
    %913 = vector.broadcast %912 : f32 to vector<16x16xf32>
    %914 = arith.mulf %913, %891 : vector<16x16xf32>
    %915 = arith.addf %911, %914 : vector<16x16xf32>
    %c196 = arith.constant 196 : index
    %916 = memref.load %arg1[%c196] : memref<504xf32, #tpu.memory_space<smem>>
    %917 = vector.broadcast %916 : f32 to vector<16x16xf32>
    %918 = arith.mulf %917, %892 : vector<16x16xf32>
    %919 = arith.addf %915, %918 : vector<16x16xf32>
    %c204 = arith.constant 204 : index
    %920 = memref.load %arg1[%c204] : memref<504xf32, #tpu.memory_space<smem>>
    %921 = vector.broadcast %920 : f32 to vector<16x16xf32>
    %922 = arith.mulf %921, %893 : vector<16x16xf32>
    %923 = arith.addf %919, %922 : vector<16x16xf32>
    %c212 = arith.constant 212 : index
    %924 = memref.load %arg1[%c212] : memref<504xf32, #tpu.memory_space<smem>>
    %925 = vector.broadcast %924 : f32 to vector<16x16xf32>
    %926 = arith.mulf %925, %894 : vector<16x16xf32>
    %927 = arith.addf %923, %926 : vector<16x16xf32>
    %c220 = arith.constant 220 : index
    %928 = memref.load %arg1[%c220] : memref<504xf32, #tpu.memory_space<smem>>
    %929 = vector.broadcast %928 : f32 to vector<16x16xf32>
    %930 = arith.mulf %929, %895 : vector<16x16xf32>
    %931 = arith.addf %927, %930 : vector<16x16xf32>
    %c157 = arith.constant 157 : index
    %932 = memref.load %arg1[%c157] : memref<504xf32, #tpu.memory_space<smem>>
    %933 = vector.broadcast %932 : f32 to vector<16x16xf32>
    %934 = arith.mulf %933, %887 : vector<16x16xf32>
    %935 = arith.addf %883, %934 : vector<16x16xf32>
    %c165 = arith.constant 165 : index
    %936 = memref.load %arg1[%c165] : memref<504xf32, #tpu.memory_space<smem>>
    %937 = vector.broadcast %936 : f32 to vector<16x16xf32>
    %938 = arith.mulf %937, %888 : vector<16x16xf32>
    %939 = arith.addf %935, %938 : vector<16x16xf32>
    %c173 = arith.constant 173 : index
    %940 = memref.load %arg1[%c173] : memref<504xf32, #tpu.memory_space<smem>>
    %941 = vector.broadcast %940 : f32 to vector<16x16xf32>
    %942 = arith.mulf %941, %889 : vector<16x16xf32>
    %943 = arith.addf %939, %942 : vector<16x16xf32>
    %c181 = arith.constant 181 : index
    %944 = memref.load %arg1[%c181] : memref<504xf32, #tpu.memory_space<smem>>
    %945 = vector.broadcast %944 : f32 to vector<16x16xf32>
    %946 = arith.mulf %945, %890 : vector<16x16xf32>
    %947 = arith.addf %943, %946 : vector<16x16xf32>
    %c189 = arith.constant 189 : index
    %948 = memref.load %arg1[%c189] : memref<504xf32, #tpu.memory_space<smem>>
    %949 = vector.broadcast %948 : f32 to vector<16x16xf32>
    %950 = arith.mulf %949, %891 : vector<16x16xf32>
    %951 = arith.addf %947, %950 : vector<16x16xf32>
    %c197 = arith.constant 197 : index
    %952 = memref.load %arg1[%c197] : memref<504xf32, #tpu.memory_space<smem>>
    %953 = vector.broadcast %952 : f32 to vector<16x16xf32>
    %954 = arith.mulf %953, %892 : vector<16x16xf32>
    %955 = arith.addf %951, %954 : vector<16x16xf32>
    %c205 = arith.constant 205 : index
    %956 = memref.load %arg1[%c205] : memref<504xf32, #tpu.memory_space<smem>>
    %957 = vector.broadcast %956 : f32 to vector<16x16xf32>
    %958 = arith.mulf %957, %893 : vector<16x16xf32>
    %959 = arith.addf %955, %958 : vector<16x16xf32>
    %c213 = arith.constant 213 : index
    %960 = memref.load %arg1[%c213] : memref<504xf32, #tpu.memory_space<smem>>
    %961 = vector.broadcast %960 : f32 to vector<16x16xf32>
    %962 = arith.mulf %961, %894 : vector<16x16xf32>
    %963 = arith.addf %959, %962 : vector<16x16xf32>
    %c221 = arith.constant 221 : index
    %964 = memref.load %arg1[%c221] : memref<504xf32, #tpu.memory_space<smem>>
    %965 = vector.broadcast %964 : f32 to vector<16x16xf32>
    %966 = arith.mulf %965, %895 : vector<16x16xf32>
    %967 = arith.addf %963, %966 : vector<16x16xf32>
    %c158 = arith.constant 158 : index
    %968 = memref.load %arg1[%c158] : memref<504xf32, #tpu.memory_space<smem>>
    %969 = vector.broadcast %968 : f32 to vector<16x16xf32>
    %970 = arith.mulf %969, %887 : vector<16x16xf32>
    %971 = arith.addf %884, %970 : vector<16x16xf32>
    %c166 = arith.constant 166 : index
    %972 = memref.load %arg1[%c166] : memref<504xf32, #tpu.memory_space<smem>>
    %973 = vector.broadcast %972 : f32 to vector<16x16xf32>
    %974 = arith.mulf %973, %888 : vector<16x16xf32>
    %975 = arith.addf %971, %974 : vector<16x16xf32>
    %c174 = arith.constant 174 : index
    %976 = memref.load %arg1[%c174] : memref<504xf32, #tpu.memory_space<smem>>
    %977 = vector.broadcast %976 : f32 to vector<16x16xf32>
    %978 = arith.mulf %977, %889 : vector<16x16xf32>
    %979 = arith.addf %975, %978 : vector<16x16xf32>
    %c182 = arith.constant 182 : index
    %980 = memref.load %arg1[%c182] : memref<504xf32, #tpu.memory_space<smem>>
    %981 = vector.broadcast %980 : f32 to vector<16x16xf32>
    %982 = arith.mulf %981, %890 : vector<16x16xf32>
    %983 = arith.addf %979, %982 : vector<16x16xf32>
    %c190 = arith.constant 190 : index
    %984 = memref.load %arg1[%c190] : memref<504xf32, #tpu.memory_space<smem>>
    %985 = vector.broadcast %984 : f32 to vector<16x16xf32>
    %986 = arith.mulf %985, %891 : vector<16x16xf32>
    %987 = arith.addf %983, %986 : vector<16x16xf32>
    %c198 = arith.constant 198 : index
    %988 = memref.load %arg1[%c198] : memref<504xf32, #tpu.memory_space<smem>>
    %989 = vector.broadcast %988 : f32 to vector<16x16xf32>
    %990 = arith.mulf %989, %892 : vector<16x16xf32>
    %991 = arith.addf %987, %990 : vector<16x16xf32>
    %c206 = arith.constant 206 : index
    %992 = memref.load %arg1[%c206] : memref<504xf32, #tpu.memory_space<smem>>
    %993 = vector.broadcast %992 : f32 to vector<16x16xf32>
    %994 = arith.mulf %993, %893 : vector<16x16xf32>
    %995 = arith.addf %991, %994 : vector<16x16xf32>
    %c214 = arith.constant 214 : index
    %996 = memref.load %arg1[%c214] : memref<504xf32, #tpu.memory_space<smem>>
    %997 = vector.broadcast %996 : f32 to vector<16x16xf32>
    %998 = arith.mulf %997, %894 : vector<16x16xf32>
    %999 = arith.addf %995, %998 : vector<16x16xf32>
    %c222 = arith.constant 222 : index
    %1000 = memref.load %arg1[%c222] : memref<504xf32, #tpu.memory_space<smem>>
    %1001 = vector.broadcast %1000 : f32 to vector<16x16xf32>
    %1002 = arith.mulf %1001, %895 : vector<16x16xf32>
    %1003 = arith.addf %999, %1002 : vector<16x16xf32>
    %c159 = arith.constant 159 : index
    %1004 = memref.load %arg1[%c159] : memref<504xf32, #tpu.memory_space<smem>>
    %1005 = vector.broadcast %1004 : f32 to vector<16x16xf32>
    %1006 = arith.mulf %1005, %887 : vector<16x16xf32>
    %1007 = arith.addf %885, %1006 : vector<16x16xf32>
    %c167 = arith.constant 167 : index
    %1008 = memref.load %arg1[%c167] : memref<504xf32, #tpu.memory_space<smem>>
    %1009 = vector.broadcast %1008 : f32 to vector<16x16xf32>
    %1010 = arith.mulf %1009, %888 : vector<16x16xf32>
    %1011 = arith.addf %1007, %1010 : vector<16x16xf32>
    %c175 = arith.constant 175 : index
    %1012 = memref.load %arg1[%c175] : memref<504xf32, #tpu.memory_space<smem>>
    %1013 = vector.broadcast %1012 : f32 to vector<16x16xf32>
    %1014 = arith.mulf %1013, %889 : vector<16x16xf32>
    %1015 = arith.addf %1011, %1014 : vector<16x16xf32>
    %c183 = arith.constant 183 : index
    %1016 = memref.load %arg1[%c183] : memref<504xf32, #tpu.memory_space<smem>>
    %1017 = vector.broadcast %1016 : f32 to vector<16x16xf32>
    %1018 = arith.mulf %1017, %890 : vector<16x16xf32>
    %1019 = arith.addf %1015, %1018 : vector<16x16xf32>
    %c191 = arith.constant 191 : index
    %1020 = memref.load %arg1[%c191] : memref<504xf32, #tpu.memory_space<smem>>
    %1021 = vector.broadcast %1020 : f32 to vector<16x16xf32>
    %1022 = arith.mulf %1021, %891 : vector<16x16xf32>
    %1023 = arith.addf %1019, %1022 : vector<16x16xf32>
    %c199 = arith.constant 199 : index
    %1024 = memref.load %arg1[%c199] : memref<504xf32, #tpu.memory_space<smem>>
    %1025 = vector.broadcast %1024 : f32 to vector<16x16xf32>
    %1026 = arith.mulf %1025, %892 : vector<16x16xf32>
    %1027 = arith.addf %1023, %1026 : vector<16x16xf32>
    %c207 = arith.constant 207 : index
    %1028 = memref.load %arg1[%c207] : memref<504xf32, #tpu.memory_space<smem>>
    %1029 = vector.broadcast %1028 : f32 to vector<16x16xf32>
    %1030 = arith.mulf %1029, %893 : vector<16x16xf32>
    %1031 = arith.addf %1027, %1030 : vector<16x16xf32>
    %c215 = arith.constant 215 : index
    %1032 = memref.load %arg1[%c215] : memref<504xf32, #tpu.memory_space<smem>>
    %1033 = vector.broadcast %1032 : f32 to vector<16x16xf32>
    %1034 = arith.mulf %1033, %894 : vector<16x16xf32>
    %1035 = arith.addf %1031, %1034 : vector<16x16xf32>
    %c223 = arith.constant 223 : index
    %1036 = memref.load %arg1[%c223] : memref<504xf32, #tpu.memory_space<smem>>
    %1037 = vector.broadcast %1036 : f32 to vector<16x16xf32>
    %1038 = arith.mulf %1037, %895 : vector<16x16xf32>
    %1039 = arith.addf %1035, %1038 : vector<16x16xf32>
    %c1_218 = arith.constant 1 : index
    %c1_219 = arith.constant 1 : index
    %1040 = vector.load %arg4[%c1_218, %c1_219] : memref<18x18xf32, #tpu.memory_space<vmem>>, vector<16x16xf32>
    tpu.vector_store %arg4[%c1_218, %c1_219], %881 {strides = array<i32>} : memref<18x18xf32, #tpu.memory_space<vmem>>, vector<16x16xf32>,
    %c0_220 = arith.constant 0 : index
    %c0_221 = arith.constant 0 : index
    %1041 = vector.load %arg4[%c0_220, %c0_221] : memref<18x18xf32, #tpu.memory_space<vmem>>, vector<16x16xf32>
    %c0_222 = arith.constant 0 : index
    %c1_223 = arith.constant 1 : index
    %1042 = vector.load %arg4[%c0_222, %c1_223] : memref<18x18xf32, #tpu.memory_space<vmem>>, vector<16x16xf32>
    %c0_224 = arith.constant 0 : index
    %c2_225 = arith.constant 2 : index
    %1043 = vector.load %arg4[%c0_224, %c2_225] : memref<18x18xf32, #tpu.memory_space<vmem>>, vector<16x16xf32>
    %c1_226 = arith.constant 1 : index
    %c0_227 = arith.constant 0 : index
    %1044 = vector.load %arg4[%c1_226, %c0_227] : memref<18x18xf32, #tpu.memory_space<vmem>>, vector<16x16xf32>
    %c1_228 = arith.constant 1 : index
    %c1_229 = arith.constant 1 : index
    %1045 = vector.load %arg4[%c1_228, %c1_229] : memref<18x18xf32, #tpu.memory_space<vmem>>, vector<16x16xf32>
    %c1_230 = arith.constant 1 : index
    %c2_231 = arith.constant 2 : index
    %1046 = vector.load %arg4[%c1_230, %c2_231] : memref<18x18xf32, #tpu.memory_space<vmem>>, vector<16x16xf32>
    %c2_232 = arith.constant 2 : index
    %c0_233 = arith.constant 0 : index
    %1047 = vector.load %arg4[%c2_232, %c0_233] : memref<18x18xf32, #tpu.memory_space<vmem>>, vector<16x16xf32>
    %c2_234 = arith.constant 2 : index
    %c1_235 = arith.constant 1 : index
    %1048 = vector.load %arg4[%c2_234, %c1_235] : memref<18x18xf32, #tpu.memory_space<vmem>>, vector<16x16xf32>
    %c2_236 = arith.constant 2 : index
    %c2_237 = arith.constant 2 : index
    %1049 = vector.load %arg4[%c2_236, %c2_237] : memref<18x18xf32, #tpu.memory_space<vmem>>, vector<16x16xf32>
    %c160 = arith.constant 160 : index
    %1050 = memref.load %arg1[%c160] : memref<504xf32, #tpu.memory_space<smem>>
    %1051 = vector.broadcast %1050 : f32 to vector<16x16xf32>
    %1052 = arith.mulf %1051, %1041 : vector<16x16xf32>
    %1053 = arith.addf %931, %1052 : vector<16x16xf32>
    %c168 = arith.constant 168 : index
    %1054 = memref.load %arg1[%c168] : memref<504xf32, #tpu.memory_space<smem>>
    %1055 = vector.broadcast %1054 : f32 to vector<16x16xf32>
    %1056 = arith.mulf %1055, %1042 : vector<16x16xf32>
    %1057 = arith.addf %1053, %1056 : vector<16x16xf32>
    %c176 = arith.constant 176 : index
    %1058 = memref.load %arg1[%c176] : memref<504xf32, #tpu.memory_space<smem>>
    %1059 = vector.broadcast %1058 : f32 to vector<16x16xf32>
    %1060 = arith.mulf %1059, %1043 : vector<16x16xf32>
    %1061 = arith.addf %1057, %1060 : vector<16x16xf32>
    %c184 = arith.constant 184 : index
    %1062 = memref.load %arg1[%c184] : memref<504xf32, #tpu.memory_space<smem>>
    %1063 = vector.broadcast %1062 : f32 to vector<16x16xf32>
    %1064 = arith.mulf %1063, %1044 : vector<16x16xf32>
    %1065 = arith.addf %1061, %1064 : vector<16x16xf32>
    %c192 = arith.constant 192 : index
    %1066 = memref.load %arg1[%c192] : memref<504xf32, #tpu.memory_space<smem>>
    %1067 = vector.broadcast %1066 : f32 to vector<16x16xf32>
    %1068 = arith.mulf %1067, %1045 : vector<16x16xf32>
    %1069 = arith.addf %1065, %1068 : vector<16x16xf32>
    %c200 = arith.constant 200 : index
    %1070 = memref.load %arg1[%c200] : memref<504xf32, #tpu.memory_space<smem>>
    %1071 = vector.broadcast %1070 : f32 to vector<16x16xf32>
    %1072 = arith.mulf %1071, %1046 : vector<16x16xf32>
    %1073 = arith.addf %1069, %1072 : vector<16x16xf32>
    %c208 = arith.constant 208 : index
    %1074 = memref.load %arg1[%c208] : memref<504xf32, #tpu.memory_space<smem>>
    %1075 = vector.broadcast %1074 : f32 to vector<16x16xf32>
    %1076 = arith.mulf %1075, %1047 : vector<16x16xf32>
    %1077 = arith.addf %1073, %1076 : vector<16x16xf32>
    %c216 = arith.constant 216 : index
    %1078 = memref.load %arg1[%c216] : memref<504xf32, #tpu.memory_space<smem>>
    %1079 = vector.broadcast %1078 : f32 to vector<16x16xf32>
    %1080 = arith.mulf %1079, %1048 : vector<16x16xf32>
    %1081 = arith.addf %1077, %1080 : vector<16x16xf32>
    %c224 = arith.constant 224 : index
    %1082 = memref.load %arg1[%c224] : memref<504xf32, #tpu.memory_space<smem>>
    %1083 = vector.broadcast %1082 : f32 to vector<16x16xf32>
    %1084 = arith.mulf %1083, %1049 : vector<16x16xf32>
    %1085 = arith.addf %1081, %1084 : vector<16x16xf32>
    %c161 = arith.constant 161 : index
    %1086 = memref.load %arg1[%c161] : memref<504xf32, #tpu.memory_space<smem>>
    %1087 = vector.broadcast %1086 : f32 to vector<16x16xf32>
    %1088 = arith.mulf %1087, %1041 : vector<16x16xf32>
    %1089 = arith.addf %967, %1088 : vector<16x16xf32>
    %c169 = arith.constant 169 : index
    %1090 = memref.load %arg1[%c169] : memref<504xf32, #tpu.memory_space<smem>>
    %1091 = vector.broadcast %1090 : f32 to vector<16x16xf32>
    %1092 = arith.mulf %1091, %1042 : vector<16x16xf32>
    %1093 = arith.addf %1089, %1092 : vector<16x16xf32>
    %c177 = arith.constant 177 : index
    %1094 = memref.load %arg1[%c177] : memref<504xf32, #tpu.memory_space<smem>>
    %1095 = vector.broadcast %1094 : f32 to vector<16x16xf32>
    %1096 = arith.mulf %1095, %1043 : vector<16x16xf32>
    %1097 = arith.addf %1093, %1096 : vector<16x16xf32>
    %c185 = arith.constant 185 : index
    %1098 = memref.load %arg1[%c185] : memref<504xf32, #tpu.memory_space<smem>>
    %1099 = vector.broadcast %1098 : f32 to vector<16x16xf32>
    %1100 = arith.mulf %1099, %1044 : vector<16x16xf32>
    %1101 = arith.addf %1097, %1100 : vector<16x16xf32>
    %c193 = arith.constant 193 : index
    %1102 = memref.load %arg1[%c193] : memref<504xf32, #tpu.memory_space<smem>>
    %1103 = vector.broadcast %1102 : f32 to vector<16x16xf32>
    %1104 = arith.mulf %1103, %1045 : vector<16x16xf32>
    %1105 = arith.addf %1101, %1104 : vector<16x16xf32>
    %c201 = arith.constant 201 : index
    %1106 = memref.load %arg1[%c201] : memref<504xf32, #tpu.memory_space<smem>>
    %1107 = vector.broadcast %1106 : f32 to vector<16x16xf32>
    %1108 = arith.mulf %1107, %1046 : vector<16x16xf32>
    %1109 = arith.addf %1105, %1108 : vector<16x16xf32>
    %c209 = arith.constant 209 : index
    %1110 = memref.load %arg1[%c209] : memref<504xf32, #tpu.memory_space<smem>>
    %1111 = vector.broadcast %1110 : f32 to vector<16x16xf32>
    %1112 = arith.mulf %1111, %1047 : vector<16x16xf32>
    %1113 = arith.addf %1109, %1112 : vector<16x16xf32>
    %c217 = arith.constant 217 : index
    %1114 = memref.load %arg1[%c217] : memref<504xf32, #tpu.memory_space<smem>>
    %1115 = vector.broadcast %1114 : f32 to vector<16x16xf32>
    %1116 = arith.mulf %1115, %1048 : vector<16x16xf32>
    %1117 = arith.addf %1113, %1116 : vector<16x16xf32>
    %c225 = arith.constant 225 : index
    %1118 = memref.load %arg1[%c225] : memref<504xf32, #tpu.memory_space<smem>>
    %1119 = vector.broadcast %1118 : f32 to vector<16x16xf32>
    %1120 = arith.mulf %1119, %1049 : vector<16x16xf32>
    %1121 = arith.addf %1117, %1120 : vector<16x16xf32>
    %c162 = arith.constant 162 : index
    %1122 = memref.load %arg1[%c162] : memref<504xf32, #tpu.memory_space<smem>>
    %1123 = vector.broadcast %1122 : f32 to vector<16x16xf32>
    %1124 = arith.mulf %1123, %1041 : vector<16x16xf32>
    %1125 = arith.addf %1003, %1124 : vector<16x16xf32>
    %c170 = arith.constant 170 : index
    %1126 = memref.load %arg1[%c170] : memref<504xf32, #tpu.memory_space<smem>>
    %1127 = vector.broadcast %1126 : f32 to vector<16x16xf32>
    %1128 = arith.mulf %1127, %1042 : vector<16x16xf32>
    %1129 = arith.addf %1125, %1128 : vector<16x16xf32>
    %c178 = arith.constant 178 : index
    %1130 = memref.load %arg1[%c178] : memref<504xf32, #tpu.memory_space<smem>>
    %1131 = vector.broadcast %1130 : f32 to vector<16x16xf32>
    %1132 = arith.mulf %1131, %1043 : vector<16x16xf32>
    %1133 = arith.addf %1129, %1132 : vector<16x16xf32>
    %c186 = arith.constant 186 : index
    %1134 = memref.load %arg1[%c186] : memref<504xf32, #tpu.memory_space<smem>>
    %1135 = vector.broadcast %1134 : f32 to vector<16x16xf32>
    %1136 = arith.mulf %1135, %1044 : vector<16x16xf32>
    %1137 = arith.addf %1133, %1136 : vector<16x16xf32>
    %c194 = arith.constant 194 : index
    %1138 = memref.load %arg1[%c194] : memref<504xf32, #tpu.memory_space<smem>>
    %1139 = vector.broadcast %1138 : f32 to vector<16x16xf32>
    %1140 = arith.mulf %1139, %1045 : vector<16x16xf32>
    %1141 = arith.addf %1137, %1140 : vector<16x16xf32>
    %c202 = arith.constant 202 : index
    %1142 = memref.load %arg1[%c202] : memref<504xf32, #tpu.memory_space<smem>>
    %1143 = vector.broadcast %1142 : f32 to vector<16x16xf32>
    %1144 = arith.mulf %1143, %1046 : vector<16x16xf32>
    %1145 = arith.addf %1141, %1144 : vector<16x16xf32>
    %c210 = arith.constant 210 : index
    %1146 = memref.load %arg1[%c210] : memref<504xf32, #tpu.memory_space<smem>>
    %1147 = vector.broadcast %1146 : f32 to vector<16x16xf32>
    %1148 = arith.mulf %1147, %1047 : vector<16x16xf32>
    %1149 = arith.addf %1145, %1148 : vector<16x16xf32>
    %c218 = arith.constant 218 : index
    %1150 = memref.load %arg1[%c218] : memref<504xf32, #tpu.memory_space<smem>>
    %1151 = vector.broadcast %1150 : f32 to vector<16x16xf32>
    %1152 = arith.mulf %1151, %1048 : vector<16x16xf32>
    %1153 = arith.addf %1149, %1152 : vector<16x16xf32>
    %c226 = arith.constant 226 : index
    %1154 = memref.load %arg1[%c226] : memref<504xf32, #tpu.memory_space<smem>>
    %1155 = vector.broadcast %1154 : f32 to vector<16x16xf32>
    %1156 = arith.mulf %1155, %1049 : vector<16x16xf32>
    %1157 = arith.addf %1153, %1156 : vector<16x16xf32>
    %c163 = arith.constant 163 : index
    %1158 = memref.load %arg1[%c163] : memref<504xf32, #tpu.memory_space<smem>>
    %1159 = vector.broadcast %1158 : f32 to vector<16x16xf32>
    %1160 = arith.mulf %1159, %1041 : vector<16x16xf32>
    %1161 = arith.addf %1039, %1160 : vector<16x16xf32>
    %c171 = arith.constant 171 : index
    %1162 = memref.load %arg1[%c171] : memref<504xf32, #tpu.memory_space<smem>>
    %1163 = vector.broadcast %1162 : f32 to vector<16x16xf32>
    %1164 = arith.mulf %1163, %1042 : vector<16x16xf32>
    %1165 = arith.addf %1161, %1164 : vector<16x16xf32>
    %c179 = arith.constant 179 : index
    %1166 = memref.load %arg1[%c179] : memref<504xf32, #tpu.memory_space<smem>>
    %1167 = vector.broadcast %1166 : f32 to vector<16x16xf32>
    %1168 = arith.mulf %1167, %1043 : vector<16x16xf32>
    %1169 = arith.addf %1165, %1168 : vector<16x16xf32>
    %c187 = arith.constant 187 : index
    %1170 = memref.load %arg1[%c187] : memref<504xf32, #tpu.memory_space<smem>>
    %1171 = vector.broadcast %1170 : f32 to vector<16x16xf32>
    %1172 = arith.mulf %1171, %1044 : vector<16x16xf32>
    %1173 = arith.addf %1169, %1172 : vector<16x16xf32>
    %c195 = arith.constant 195 : index
    %1174 = memref.load %arg1[%c195] : memref<504xf32, #tpu.memory_space<smem>>
    %1175 = vector.broadcast %1174 : f32 to vector<16x16xf32>
    %1176 = arith.mulf %1175, %1045 : vector<16x16xf32>
    %1177 = arith.addf %1173, %1176 : vector<16x16xf32>
    %c203 = arith.constant 203 : index
    %1178 = memref.load %arg1[%c203] : memref<504xf32, #tpu.memory_space<smem>>
    %1179 = vector.broadcast %1178 : f32 to vector<16x16xf32>
    %1180 = arith.mulf %1179, %1046 : vector<16x16xf32>
    %1181 = arith.addf %1177, %1180 : vector<16x16xf32>
    %c211 = arith.constant 211 : index
    %1182 = memref.load %arg1[%c211] : memref<504xf32, #tpu.memory_space<smem>>
    %1183 = vector.broadcast %1182 : f32 to vector<16x16xf32>
    %1184 = arith.mulf %1183, %1047 : vector<16x16xf32>
    %1185 = arith.addf %1181, %1184 : vector<16x16xf32>
    %c219 = arith.constant 219 : index
    %1186 = memref.load %arg1[%c219] : memref<504xf32, #tpu.memory_space<smem>>
    %1187 = vector.broadcast %1186 : f32 to vector<16x16xf32>
    %1188 = arith.mulf %1187, %1048 : vector<16x16xf32>
    %1189 = arith.addf %1185, %1188 : vector<16x16xf32>
    %c227 = arith.constant 227 : index
    %1190 = memref.load %arg1[%c227] : memref<504xf32, #tpu.memory_space<smem>>
    %1191 = vector.broadcast %1190 : f32 to vector<16x16xf32>
    %1192 = arith.mulf %1191, %1049 : vector<16x16xf32>
    %1193 = arith.addf %1189, %1192 : vector<16x16xf32>
    %cst_238 = arith.constant dense<0.000000e+00> : vector<16xf32>
    %1194 = vector.multi_reduction <add>, %1085, %cst_238 [1] : vector<16x16xf32> to vector<16xf32>
    %1195 = vector.shape_cast %1194 : vector<16xf32> to vector<16x1xf32>
    %cst_239 = arith.constant dense<0.000000e+00> : vector<1xf32>
    %1196 = vector.multi_reduction <add>, %1195, %cst_239 [0] : vector<16x1xf32> to vector<1xf32>
    %1197 = vector.shape_cast %1196 : vector<1xf32> to vector<1x1xf32>
    %cst_240 = arith.constant 3.906250e-03 : f32
    %1198 = vector.broadcast %cst_240 : f32 to vector<1x1xf32>
    %1199 = arith.mulf %1197, %1198 : vector<1x1xf32>
    %1200 = vector.broadcast %1199 : vector<1x1xf32> to vector<16x16xf32>
    %1201 = arith.subf %1085, %1200 : vector<16x16xf32>
    %1202 = arith.mulf %1201, %1201 : vector<16x16xf32>
    %cst_241 = arith.constant dense<0.000000e+00> : vector<16xf32>
    %1203 = vector.multi_reduction <add>, %1202, %cst_241 [1] : vector<16x16xf32> to vector<16xf32>
    %1204 = vector.shape_cast %1203 : vector<16xf32> to vector<16x1xf32>
    %cst_242 = arith.constant dense<0.000000e+00> : vector<1xf32>
    %1205 = vector.multi_reduction <add>, %1204, %cst_242 [0] : vector<16x1xf32> to vector<1xf32>
    %1206 = vector.shape_cast %1205 : vector<1xf32> to vector<1x1xf32>
    %cst_243 = arith.constant 3.906250e-03 : f32
    %1207 = vector.broadcast %cst_243 : f32 to vector<1x1xf32>
    %1208 = arith.mulf %1206, %1207 : vector<1x1xf32>
    %c228 = arith.constant 228 : index
    %1209 = memref.load %arg1[%c228] : memref<504xf32, #tpu.memory_space<smem>>
    %cst_244 = arith.constant 9.99999974E-6 : f32
    %1210 = vector.broadcast %cst_244 : f32 to vector<1x1xf32>
    %1211 = arith.addf %1208, %1210 : vector<1x1xf32>
    %1212 = math.rsqrt %1211 : vector<1x1xf32>
    %1213 = vector.broadcast %1209 : f32 to vector<1x1xf32>
    %1214 = arith.mulf %1213, %1212 : vector<1x1xf32>
    %1215 = vector.broadcast %1214 : vector<1x1xf32> to vector<16x16xf32>
    %1216 = arith.mulf %1201, %1215 : vector<16x16xf32>
    %c232 = arith.constant 232 : index
    %1217 = memref.load %arg1[%c232] : memref<504xf32, #tpu.memory_space<smem>>
    %1218 = vector.broadcast %1217 : f32 to vector<16x16xf32>
    %1219 = arith.addf %1216, %1218 : vector<16x16xf32>
    %1220 = math.tanh %1219 : vector<16x16xf32>
    %cst_245 = arith.constant dense<0.000000e+00> : vector<16xf32>
    %1221 = vector.multi_reduction <add>, %1121, %cst_245 [1] : vector<16x16xf32> to vector<16xf32>
    %1222 = vector.shape_cast %1221 : vector<16xf32> to vector<16x1xf32>
    %cst_246 = arith.constant dense<0.000000e+00> : vector<1xf32>
    %1223 = vector.multi_reduction <add>, %1222, %cst_246 [0] : vector<16x1xf32> to vector<1xf32>
    %1224 = vector.shape_cast %1223 : vector<1xf32> to vector<1x1xf32>
    %cst_247 = arith.constant 3.906250e-03 : f32
    %1225 = vector.broadcast %cst_247 : f32 to vector<1x1xf32>
    %1226 = arith.mulf %1224, %1225 : vector<1x1xf32>
    %1227 = vector.broadcast %1226 : vector<1x1xf32> to vector<16x16xf32>
    %1228 = arith.subf %1121, %1227 : vector<16x16xf32>
    %1229 = arith.mulf %1228, %1228 : vector<16x16xf32>
    %cst_248 = arith.constant dense<0.000000e+00> : vector<16xf32>
    %1230 = vector.multi_reduction <add>, %1229, %cst_248 [1] : vector<16x16xf32> to vector<16xf32>
    %1231 = vector.shape_cast %1230 : vector<16xf32> to vector<16x1xf32>
    %cst_249 = arith.constant dense<0.000000e+00> : vector<1xf32>
    %1232 = vector.multi_reduction <add>, %1231, %cst_249 [0] : vector<16x1xf32> to vector<1xf32>
    %1233 = vector.shape_cast %1232 : vector<1xf32> to vector<1x1xf32>
    %cst_250 = arith.constant 3.906250e-03 : f32
    %1234 = vector.broadcast %cst_250 : f32 to vector<1x1xf32>
    %1235 = arith.mulf %1233, %1234 : vector<1x1xf32>
    %c229 = arith.constant 229 : index
    %1236 = memref.load %arg1[%c229] : memref<504xf32, #tpu.memory_space<smem>>
    %cst_251 = arith.constant 9.99999974E-6 : f32
    %1237 = vector.broadcast %cst_251 : f32 to vector<1x1xf32>
    %1238 = arith.addf %1235, %1237 : vector<1x1xf32>
    %1239 = math.rsqrt %1238 : vector<1x1xf32>
    %1240 = vector.broadcast %1236 : f32 to vector<1x1xf32>
    %1241 = arith.mulf %1240, %1239 : vector<1x1xf32>
    %1242 = vector.broadcast %1241 : vector<1x1xf32> to vector<16x16xf32>
    %1243 = arith.mulf %1228, %1242 : vector<16x16xf32>
    %c233 = arith.constant 233 : index
    %1244 = memref.load %arg1[%c233] : memref<504xf32, #tpu.memory_space<smem>>
    %1245 = vector.broadcast %1244 : f32 to vector<16x16xf32>
    %1246 = arith.addf %1243, %1245 : vector<16x16xf32>
    %1247 = math.tanh %1246 : vector<16x16xf32>
    %cst_252 = arith.constant dense<0.000000e+00> : vector<16xf32>
    %1248 = vector.multi_reduction <add>, %1157, %cst_252 [1] : vector<16x16xf32> to vector<16xf32>
    %1249 = vector.shape_cast %1248 : vector<16xf32> to vector<16x1xf32>
    %cst_253 = arith.constant dense<0.000000e+00> : vector<1xf32>
    %1250 = vector.multi_reduction <add>, %1249, %cst_253 [0] : vector<16x1xf32> to vector<1xf32>
    %1251 = vector.shape_cast %1250 : vector<1xf32> to vector<1x1xf32>
    %cst_254 = arith.constant 3.906250e-03 : f32
    %1252 = vector.broadcast %cst_254 : f32 to vector<1x1xf32>
    %1253 = arith.mulf %1251, %1252 : vector<1x1xf32>
    %1254 = vector.broadcast %1253 : vector<1x1xf32> to vector<16x16xf32>
    %1255 = arith.subf %1157, %1254 : vector<16x16xf32>
    %1256 = arith.mulf %1255, %1255 : vector<16x16xf32>
    %cst_255 = arith.constant dense<0.000000e+00> : vector<16xf32>
    %1257 = vector.multi_reduction <add>, %1256, %cst_255 [1] : vector<16x16xf32> to vector<16xf32>
    %1258 = vector.shape_cast %1257 : vector<16xf32> to vector<16x1xf32>
    %cst_256 = arith.constant dense<0.000000e+00> : vector<1xf32>
    %1259 = vector.multi_reduction <add>, %1258, %cst_256 [0] : vector<16x1xf32> to vector<1xf32>
    %1260 = vector.shape_cast %1259 : vector<1xf32> to vector<1x1xf32>
    %cst_257 = arith.constant 3.906250e-03 : f32
    %1261 = vector.broadcast %cst_257 : f32 to vector<1x1xf32>
    %1262 = arith.mulf %1260, %1261 : vector<1x1xf32>
    %c230 = arith.constant 230 : index
    %1263 = memref.load %arg1[%c230] : memref<504xf32, #tpu.memory_space<smem>>
    %cst_258 = arith.constant 9.99999974E-6 : f32
    %1264 = vector.broadcast %cst_258 : f32 to vector<1x1xf32>
    %1265 = arith.addf %1262, %1264 : vector<1x1xf32>
    %1266 = math.rsqrt %1265 : vector<1x1xf32>
    %1267 = vector.broadcast %1263 : f32 to vector<1x1xf32>
    %1268 = arith.mulf %1267, %1266 : vector<1x1xf32>
    %1269 = vector.broadcast %1268 : vector<1x1xf32> to vector<16x16xf32>
    %1270 = arith.mulf %1255, %1269 : vector<16x16xf32>
    %c234 = arith.constant 234 : index
    %1271 = memref.load %arg1[%c234] : memref<504xf32, #tpu.memory_space<smem>>
    %1272 = vector.broadcast %1271 : f32 to vector<16x16xf32>
    %1273 = arith.addf %1270, %1272 : vector<16x16xf32>
    %1274 = math.tanh %1273 : vector<16x16xf32>
    %cst_259 = arith.constant dense<0.000000e+00> : vector<16xf32>
    %1275 = vector.multi_reduction <add>, %1193, %cst_259 [1] : vector<16x16xf32> to vector<16xf32>
    %1276 = vector.shape_cast %1275 : vector<16xf32> to vector<16x1xf32>
    %cst_260 = arith.constant dense<0.000000e+00> : vector<1xf32>
    %1277 = vector.multi_reduction <add>, %1276, %cst_260 [0] : vector<16x1xf32> to vector<1xf32>
    %1278 = vector.shape_cast %1277 : vector<1xf32> to vector<1x1xf32>
    %cst_261 = arith.constant 3.906250e-03 : f32
    %1279 = vector.broadcast %cst_261 : f32 to vector<1x1xf32>
    %1280 = arith.mulf %1278, %1279 : vector<1x1xf32>
    %1281 = vector.broadcast %1280 : vector<1x1xf32> to vector<16x16xf32>
    %1282 = arith.subf %1193, %1281 : vector<16x16xf32>
    %1283 = arith.mulf %1282, %1282 : vector<16x16xf32>
    %cst_262 = arith.constant dense<0.000000e+00> : vector<16xf32>
    %1284 = vector.multi_reduction <add>, %1283, %cst_262 [1] : vector<16x16xf32> to vector<16xf32>
    %1285 = vector.shape_cast %1284 : vector<16xf32> to vector<16x1xf32>
    %cst_263 = arith.constant dense<0.000000e+00> : vector<1xf32>
    %1286 = vector.multi_reduction <add>, %1285, %cst_263 [0] : vector<16x1xf32> to vector<1xf32>
    %1287 = vector.shape_cast %1286 : vector<1xf32> to vector<1x1xf32>
    %cst_264 = arith.constant 3.906250e-03 : f32
    %1288 = vector.broadcast %cst_264 : f32 to vector<1x1xf32>
    %1289 = arith.mulf %1287, %1288 : vector<1x1xf32>
    %c231 = arith.constant 231 : index
    %1290 = memref.load %arg1[%c231] : memref<504xf32, #tpu.memory_space<smem>>
    %cst_265 = arith.constant 9.99999974E-6 : f32
    %1291 = vector.broadcast %cst_265 : f32 to vector<1x1xf32>
    %1292 = arith.addf %1289, %1291 : vector<1x1xf32>
    %1293 = math.rsqrt %1292 : vector<1x1xf32>
    %1294 = vector.broadcast %1290 : f32 to vector<1x1xf32>
    %1295 = arith.mulf %1294, %1293 : vector<1x1xf32>
    %1296 = vector.broadcast %1295 : vector<1x1xf32> to vector<16x16xf32>
    %1297 = arith.mulf %1282, %1296 : vector<16x16xf32>
    %c235 = arith.constant 235 : index
    %1298 = memref.load %arg1[%c235] : memref<504xf32, #tpu.memory_space<smem>>
    %1299 = vector.broadcast %1298 : f32 to vector<16x16xf32>
    %1300 = arith.addf %1297, %1299 : vector<16x16xf32>
    %1301 = math.tanh %1300 : vector<16x16xf32>
    %1302 = arith.addf %416, %1220 : vector<16x16xf32>
    %1303 = arith.addf %443, %1247 : vector<16x16xf32>
    %1304 = arith.addf %470, %1274 : vector<16x16xf32>
    %1305 = arith.addf %497, %1301 : vector<16x16xf32>
    %cst_266 = arith.constant 0.000000e+00 : f32
    %1306 = vector.broadcast %cst_266 : f32 to vector<16x16xf32>
    %cst_267 = arith.constant 0.000000e+00 : f32
    %1307 = vector.broadcast %cst_267 : f32 to vector<16x16xf32>
    %c1_268 = arith.constant 1 : index
    %c1_269 = arith.constant 1 : index
    %1308 = vector.load %arg4[%c1_268, %c1_269] : memref<18x18xf32, #tpu.memory_space<vmem>>, vector<16x16xf32>
    tpu.vector_store %arg4[%c1_268, %c1_269], %1302 {strides = array<i32>} : memref<18x18xf32, #tpu.memory_space<vmem>>, vector<16x16xf32>,
    %c0_270 = arith.constant 0 : index
    %c0_271 = arith.constant 0 : index
    %1309 = vector.load %arg4[%c0_270, %c0_271] : memref<18x18xf32, #tpu.memory_space<vmem>>, vector<16x16xf32>
    %c0_272 = arith.constant 0 : index
    %c1_273 = arith.constant 1 : index
    %1310 = vector.load %arg4[%c0_272, %c1_273] : memref<18x18xf32, #tpu.memory_space<vmem>>, vector<16x16xf32>
    %c0_274 = arith.constant 0 : index
    %c2_275 = arith.constant 2 : index
    %1311 = vector.load %arg4[%c0_274, %c2_275] : memref<18x18xf32, #tpu.memory_space<vmem>>, vector<16x16xf32>
    %c1_276 = arith.constant 1 : index
    %c0_277 = arith.constant 0 : index
    %1312 = vector.load %arg4[%c1_276, %c0_277] : memref<18x18xf32, #tpu.memory_space<vmem>>, vector<16x16xf32>
    %c1_278 = arith.constant 1 : index
    %c1_279 = arith.constant 1 : index
    %1313 = vector.load %arg4[%c1_278, %c1_279] : memref<18x18xf32, #tpu.memory_space<vmem>>, vector<16x16xf32>
    %c1_280 = arith.constant 1 : index
    %c2_281 = arith.constant 2 : index
    %1314 = vector.load %arg4[%c1_280, %c2_281] : memref<18x18xf32, #tpu.memory_space<vmem>>, vector<16x16xf32>
    %c2_282 = arith.constant 2 : index
    %c0_283 = arith.constant 0 : index
    %1315 = vector.load %arg4[%c2_282, %c0_283] : memref<18x18xf32, #tpu.memory_space<vmem>>, vector<16x16xf32>
    %c2_284 = arith.constant 2 : index
    %c1_285 = arith.constant 1 : index
    %1316 = vector.load %arg4[%c2_284, %c1_285] : memref<18x18xf32, #tpu.memory_space<vmem>>, vector<16x16xf32>
    %c2_286 = arith.constant 2 : index
    %c2_287 = arith.constant 2 : index
    %1317 = vector.load %arg4[%c2_286, %c2_287] : memref<18x18xf32, #tpu.memory_space<vmem>>, vector<16x16xf32>
    %c236 = arith.constant 236 : index
    %1318 = memref.load %arg1[%c236] : memref<504xf32, #tpu.memory_space<smem>>
    %1319 = vector.broadcast %1318 : f32 to vector<16x16xf32>
    %1320 = arith.mulf %1319, %1309 : vector<16x16xf32>
    %1321 = arith.addf %1306, %1320 : vector<16x16xf32>
    %c244 = arith.constant 244 : index
    %1322 = memref.load %arg1[%c244] : memref<504xf32, #tpu.memory_space<smem>>
    %1323 = vector.broadcast %1322 : f32 to vector<16x16xf32>
    %1324 = arith.mulf %1323, %1310 : vector<16x16xf32>
    %1325 = arith.addf %1321, %1324 : vector<16x16xf32>
    %c252 = arith.constant 252 : index
    %1326 = memref.load %arg1[%c252] : memref<504xf32, #tpu.memory_space<smem>>
    %1327 = vector.broadcast %1326 : f32 to vector<16x16xf32>
    %1328 = arith.mulf %1327, %1311 : vector<16x16xf32>
    %1329 = arith.addf %1325, %1328 : vector<16x16xf32>
    %c260 = arith.constant 260 : index
    %1330 = memref.load %arg1[%c260] : memref<504xf32, #tpu.memory_space<smem>>
    %1331 = vector.broadcast %1330 : f32 to vector<16x16xf32>
    %1332 = arith.mulf %1331, %1312 : vector<16x16xf32>
    %1333 = arith.addf %1329, %1332 : vector<16x16xf32>
    %c268 = arith.constant 268 : index
    %1334 = memref.load %arg1[%c268] : memref<504xf32, #tpu.memory_space<smem>>
    %1335 = vector.broadcast %1334 : f32 to vector<16x16xf32>
    %1336 = arith.mulf %1335, %1313 : vector<16x16xf32>
    %1337 = arith.addf %1333, %1336 : vector<16x16xf32>
    %c276 = arith.constant 276 : index
    %1338 = memref.load %arg1[%c276] : memref<504xf32, #tpu.memory_space<smem>>
    %1339 = vector.broadcast %1338 : f32 to vector<16x16xf32>
    %1340 = arith.mulf %1339, %1314 : vector<16x16xf32>
    %1341 = arith.addf %1337, %1340 : vector<16x16xf32>
    %c284 = arith.constant 284 : index
    %1342 = memref.load %arg1[%c284] : memref<504xf32, #tpu.memory_space<smem>>
    %1343 = vector.broadcast %1342 : f32 to vector<16x16xf32>
    %1344 = arith.mulf %1343, %1315 : vector<16x16xf32>
    %1345 = arith.addf %1341, %1344 : vector<16x16xf32>
    %c292 = arith.constant 292 : index
    %1346 = memref.load %arg1[%c292] : memref<504xf32, #tpu.memory_space<smem>>
    %1347 = vector.broadcast %1346 : f32 to vector<16x16xf32>
    %1348 = arith.mulf %1347, %1316 : vector<16x16xf32>
    %1349 = arith.addf %1345, %1348 : vector<16x16xf32>
    %c300 = arith.constant 300 : index
    %1350 = memref.load %arg1[%c300] : memref<504xf32, #tpu.memory_space<smem>>
    %1351 = vector.broadcast %1350 : f32 to vector<16x16xf32>
    %1352 = arith.mulf %1351, %1317 : vector<16x16xf32>
    %1353 = arith.addf %1349, %1352 : vector<16x16xf32>
    %c237 = arith.constant 237 : index
    %1354 = memref.load %arg1[%c237] : memref<504xf32, #tpu.memory_space<smem>>
    %1355 = vector.broadcast %1354 : f32 to vector<16x16xf32>
    %1356 = arith.mulf %1355, %1309 : vector<16x16xf32>
    %1357 = arith.addf %1307, %1356 : vector<16x16xf32>
    %c245 = arith.constant 245 : index
    %1358 = memref.load %arg1[%c245] : memref<504xf32, #tpu.memory_space<smem>>
    %1359 = vector.broadcast %1358 : f32 to vector<16x16xf32>
    %1360 = arith.mulf %1359, %1310 : vector<16x16xf32>
    %1361 = arith.addf %1357, %1360 : vector<16x16xf32>
    %c253 = arith.constant 253 : index
    %1362 = memref.load %arg1[%c253] : memref<504xf32, #tpu.memory_space<smem>>
    %1363 = vector.broadcast %1362 : f32 to vector<16x16xf32>
    %1364 = arith.mulf %1363, %1311 : vector<16x16xf32>
    %1365 = arith.addf %1361, %1364 : vector<16x16xf32>
    %c261 = arith.constant 261 : index
    %1366 = memref.load %arg1[%c261] : memref<504xf32, #tpu.memory_space<smem>>
    %1367 = vector.broadcast %1366 : f32 to vector<16x16xf32>
    %1368 = arith.mulf %1367, %1312 : vector<16x16xf32>
    %1369 = arith.addf %1365, %1368 : vector<16x16xf32>
    %c269 = arith.constant 269 : index
    %1370 = memref.load %arg1[%c269] : memref<504xf32, #tpu.memory_space<smem>>
    %1371 = vector.broadcast %1370 : f32 to vector<16x16xf32>
    %1372 = arith.mulf %1371, %1313 : vector<16x16xf32>
    %1373 = arith.addf %1369, %1372 : vector<16x16xf32>
    %c277 = arith.constant 277 : index
    %1374 = memref.load %arg1[%c277] : memref<504xf32, #tpu.memory_space<smem>>
    %1375 = vector.broadcast %1374 : f32 to vector<16x16xf32>
    %1376 = arith.mulf %1375, %1314 : vector<16x16xf32>
    %1377 = arith.addf %1373, %1376 : vector<16x16xf32>
    %c285 = arith.constant 285 : index
    %1378 = memref.load %arg1[%c285] : memref<504xf32, #tpu.memory_space<smem>>
    %1379 = vector.broadcast %1378 : f32 to vector<16x16xf32>
    %1380 = arith.mulf %1379, %1315 : vector<16x16xf32>
    %1381 = arith.addf %1377, %1380 : vector<16x16xf32>
    %c293 = arith.constant 293 : index
    %1382 = memref.load %arg1[%c293] : memref<504xf32, #tpu.memory_space<smem>>
    %1383 = vector.broadcast %1382 : f32 to vector<16x16xf32>
    %1384 = arith.mulf %1383, %1316 : vector<16x16xf32>
    %1385 = arith.addf %1381, %1384 : vector<16x16xf32>
    %c301 = arith.constant 301 : index
    %1386 = memref.load %arg1[%c301] : memref<504xf32, #tpu.memory_space<smem>>
    %1387 = vector.broadcast %1386 : f32 to vector<16x16xf32>
    %1388 = arith.mulf %1387, %1317 : vector<16x16xf32>
    %1389 = arith.addf %1385, %1388 : vector<16x16xf32>
    %c1_288 = arith.constant 1 : index
    %c1_289 = arith.constant 1 : index
    %1390 = vector.load %arg4[%c1_288, %c1_289] : memref<18x18xf32, #tpu.memory_space<vmem>>, vector<16x16xf32>
    tpu.vector_store %arg4[%c1_288, %c1_289], %1303 {strides = array<i32>} : memref<18x18xf32, #tpu.memory_space<vmem>>, vector<16x16xf32>,
    %c0_290 = arith.constant 0 : index
    %c0_291 = arith.constant 0 : index
    %1391 = vector.load %arg4[%c0_290, %c0_291] : memref<18x18xf32, #tpu.memory_space<vmem>>, vector<16x16xf32>
    %c0_292 = arith.constant 0 : index
    %c1_293 = arith.constant 1 : index
    %1392 = vector.load %arg4[%c0_292, %c1_293] : memref<18x18xf32, #tpu.memory_space<vmem>>, vector<16x16xf32>
    %c0_294 = arith.constant 0 : index
    %c2_295 = arith.constant 2 : index
    %1393 = vector.load %arg4[%c0_294, %c2_295] : memref<18x18xf32, #tpu.memory_space<vmem>>, vector<16x16xf32>
    %c1_296 = arith.constant 1 : index
    %c0_297 = arith.constant 0 : index
    %1394 = vector.load %arg4[%c1_296, %c0_297] : memref<18x18xf32, #tpu.memory_space<vmem>>, vector<16x16xf32>
    %c1_298 = arith.constant 1 : index
    %c1_299 = arith.constant 1 : index
    %1395 = vector.load %arg4[%c1_298, %c1_299] : memref<18x18xf32, #tpu.memory_space<vmem>>, vector<16x16xf32>
    %c1_300 = arith.constant 1 : index
    %c2_301 = arith.constant 2 : index
    %1396 = vector.load %arg4[%c1_300, %c2_301] : memref<18x18xf32, #tpu.memory_space<vmem>>, vector<16x16xf32>
    %c2_302 = arith.constant 2 : index
    %c0_303 = arith.constant 0 : index
    %1397 = vector.load %arg4[%c2_302, %c0_303] : memref<18x18xf32, #tpu.memory_space<vmem>>, vector<16x16xf32>
    %c2_304 = arith.constant 2 : index
    %c1_305 = arith.constant 1 : index
    %1398 = vector.load %arg4[%c2_304, %c1_305] : memref<18x18xf32, #tpu.memory_space<vmem>>, vector<16x16xf32>
    %c2_306 = arith.constant 2 : index
    %c2_307 = arith.constant 2 : index
    %1399 = vector.load %arg4[%c2_306, %c2_307] : memref<18x18xf32, #tpu.memory_space<vmem>>, vector<16x16xf32>
    %c238 = arith.constant 238 : index
    %1400 = memref.load %arg1[%c238] : memref<504xf32, #tpu.memory_space<smem>>
    %1401 = vector.broadcast %1400 : f32 to vector<16x16xf32>
    %1402 = arith.mulf %1401, %1391 : vector<16x16xf32>
    %1403 = arith.addf %1353, %1402 : vector<16x16xf32>
    %c246 = arith.constant 246 : index
    %1404 = memref.load %arg1[%c246] : memref<504xf32, #tpu.memory_space<smem>>
    %1405 = vector.broadcast %1404 : f32 to vector<16x16xf32>
    %1406 = arith.mulf %1405, %1392 : vector<16x16xf32>
    %1407 = arith.addf %1403, %1406 : vector<16x16xf32>
    %c254 = arith.constant 254 : index
    %1408 = memref.load %arg1[%c254] : memref<504xf32, #tpu.memory_space<smem>>
    %1409 = vector.broadcast %1408 : f32 to vector<16x16xf32>
    %1410 = arith.mulf %1409, %1393 : vector<16x16xf32>
    %1411 = arith.addf %1407, %1410 : vector<16x16xf32>
    %c262 = arith.constant 262 : index
    %1412 = memref.load %arg1[%c262] : memref<504xf32, #tpu.memory_space<smem>>
    %1413 = vector.broadcast %1412 : f32 to vector<16x16xf32>
    %1414 = arith.mulf %1413, %1394 : vector<16x16xf32>
    %1415 = arith.addf %1411, %1414 : vector<16x16xf32>
    %c270 = arith.constant 270 : index
    %1416 = memref.load %arg1[%c270] : memref<504xf32, #tpu.memory_space<smem>>
    %1417 = vector.broadcast %1416 : f32 to vector<16x16xf32>
    %1418 = arith.mulf %1417, %1395 : vector<16x16xf32>
    %1419 = arith.addf %1415, %1418 : vector<16x16xf32>
    %c278 = arith.constant 278 : index
    %1420 = memref.load %arg1[%c278] : memref<504xf32, #tpu.memory_space<smem>>
    %1421 = vector.broadcast %1420 : f32 to vector<16x16xf32>
    %1422 = arith.mulf %1421, %1396 : vector<16x16xf32>
    %1423 = arith.addf %1419, %1422 : vector<16x16xf32>
    %c286 = arith.constant 286 : index
    %1424 = memref.load %arg1[%c286] : memref<504xf32, #tpu.memory_space<smem>>
    %1425 = vector.broadcast %1424 : f32 to vector<16x16xf32>
    %1426 = arith.mulf %1425, %1397 : vector<16x16xf32>
    %1427 = arith.addf %1423, %1426 : vector<16x16xf32>
    %c294 = arith.constant 294 : index
    %1428 = memref.load %arg1[%c294] : memref<504xf32, #tpu.memory_space<smem>>
    %1429 = vector.broadcast %1428 : f32 to vector<16x16xf32>
    %1430 = arith.mulf %1429, %1398 : vector<16x16xf32>
    %1431 = arith.addf %1427, %1430 : vector<16x16xf32>
    %c302 = arith.constant 302 : index
    %1432 = memref.load %arg1[%c302] : memref<504xf32, #tpu.memory_space<smem>>
    %1433 = vector.broadcast %1432 : f32 to vector<16x16xf32>
    %1434 = arith.mulf %1433, %1399 : vector<16x16xf32>
    %1435 = arith.addf %1431, %1434 : vector<16x16xf32>
    %c239 = arith.constant 239 : index
    %1436 = memref.load %arg1[%c239] : memref<504xf32, #tpu.memory_space<smem>>
    %1437 = vector.broadcast %1436 : f32 to vector<16x16xf32>
    %1438 = arith.mulf %1437, %1391 : vector<16x16xf32>
    %1439 = arith.addf %1389, %1438 : vector<16x16xf32>
    %c247 = arith.constant 247 : index
    %1440 = memref.load %arg1[%c247] : memref<504xf32, #tpu.memory_space<smem>>
    %1441 = vector.broadcast %1440 : f32 to vector<16x16xf32>
    %1442 = arith.mulf %1441, %1392 : vector<16x16xf32>
    %1443 = arith.addf %1439, %1442 : vector<16x16xf32>
    %c255 = arith.constant 255 : index
    %1444 = memref.load %arg1[%c255] : memref<504xf32, #tpu.memory_space<smem>>
    %1445 = vector.broadcast %1444 : f32 to vector<16x16xf32>
    %1446 = arith.mulf %1445, %1393 : vector<16x16xf32>
    %1447 = arith.addf %1443, %1446 : vector<16x16xf32>
    %c263 = arith.constant 263 : index
    %1448 = memref.load %arg1[%c263] : memref<504xf32, #tpu.memory_space<smem>>
    %1449 = vector.broadcast %1448 : f32 to vector<16x16xf32>
    %1450 = arith.mulf %1449, %1394 : vector<16x16xf32>
    %1451 = arith.addf %1447, %1450 : vector<16x16xf32>
    %c271 = arith.constant 271 : index
    %1452 = memref.load %arg1[%c271] : memref<504xf32, #tpu.memory_space<smem>>
    %1453 = vector.broadcast %1452 : f32 to vector<16x16xf32>
    %1454 = arith.mulf %1453, %1395 : vector<16x16xf32>
    %1455 = arith.addf %1451, %1454 : vector<16x16xf32>
    %c279 = arith.constant 279 : index
    %1456 = memref.load %arg1[%c279] : memref<504xf32, #tpu.memory_space<smem>>
    %1457 = vector.broadcast %1456 : f32 to vector<16x16xf32>
    %1458 = arith.mulf %1457, %1396 : vector<16x16xf32>
    %1459 = arith.addf %1455, %1458 : vector<16x16xf32>
    %c287 = arith.constant 287 : index
    %1460 = memref.load %arg1[%c287] : memref<504xf32, #tpu.memory_space<smem>>
    %1461 = vector.broadcast %1460 : f32 to vector<16x16xf32>
    %1462 = arith.mulf %1461, %1397 : vector<16x16xf32>
    %1463 = arith.addf %1459, %1462 : vector<16x16xf32>
    %c295 = arith.constant 295 : index
    %1464 = memref.load %arg1[%c295] : memref<504xf32, #tpu.memory_space<smem>>
    %1465 = vector.broadcast %1464 : f32 to vector<16x16xf32>
    %1466 = arith.mulf %1465, %1398 : vector<16x16xf32>
    %1467 = arith.addf %1463, %1466 : vector<16x16xf32>
    %c303 = arith.constant 303 : index
    %1468 = memref.load %arg1[%c303] : memref<504xf32, #tpu.memory_space<smem>>
    %1469 = vector.broadcast %1468 : f32 to vector<16x16xf32>
    %1470 = arith.mulf %1469, %1399 : vector<16x16xf32>
    %1471 = arith.addf %1467, %1470 : vector<16x16xf32>
    %c1_308 = arith.constant 1 : index
    %c1_309 = arith.constant 1 : index
    %1472 = vector.load %arg4[%c1_308, %c1_309] : memref<18x18xf32, #tpu.memory_space<vmem>>, vector<16x16xf32>
    tpu.vector_store %arg4[%c1_308, %c1_309], %1304 {strides = array<i32>} : memref<18x18xf32, #tpu.memory_space<vmem>>, vector<16x16xf32>,
    %c0_310 = arith.constant 0 : index
    %c0_311 = arith.constant 0 : index
    %1473 = vector.load %arg4[%c0_310, %c0_311] : memref<18x18xf32, #tpu.memory_space<vmem>>, vector<16x16xf32>
    %c0_312 = arith.constant 0 : index
    %c1_313 = arith.constant 1 : index
    %1474 = vector.load %arg4[%c0_312, %c1_313] : memref<18x18xf32, #tpu.memory_space<vmem>>, vector<16x16xf32>
    %c0_314 = arith.constant 0 : index
    %c2_315 = arith.constant 2 : index
    %1475 = vector.load %arg4[%c0_314, %c2_315] : memref<18x18xf32, #tpu.memory_space<vmem>>, vector<16x16xf32>
    %c1_316 = arith.constant 1 : index
    %c0_317 = arith.constant 0 : index
    %1476 = vector.load %arg4[%c1_316, %c0_317] : memref<18x18xf32, #tpu.memory_space<vmem>>, vector<16x16xf32>
    %c1_318 = arith.constant 1 : index
    %c1_319 = arith.constant 1 : index
    %1477 = vector.load %arg4[%c1_318, %c1_319] : memref<18x18xf32, #tpu.memory_space<vmem>>, vector<16x16xf32>
    %c1_320 = arith.constant 1 : index
    %c2_321 = arith.constant 2 : index
    %1478 = vector.load %arg4[%c1_320, %c2_321] : memref<18x18xf32, #tpu.memory_space<vmem>>, vector<16x16xf32>
    %c2_322 = arith.constant 2 : index
    %c0_323 = arith.constant 0 : index
    %1479 = vector.load %arg4[%c2_322, %c0_323] : memref<18x18xf32, #tpu.memory_space<vmem>>, vector<16x16xf32>
    %c2_324 = arith.constant 2 : index
    %c1_325 = arith.constant 1 : index
    %1480 = vector.load %arg4[%c2_324, %c1_325] : memref<18x18xf32, #tpu.memory_space<vmem>>, vector<16x16xf32>
    %c2_326 = arith.constant 2 : index
    %c2_327 = arith.constant 2 : index
    %1481 = vector.load %arg4[%c2_326, %c2_327] : memref<18x18xf32, #tpu.memory_space<vmem>>, vector<16x16xf32>
    %c240 = arith.constant 240 : index
    %1482 = memref.load %arg1[%c240] : memref<504xf32, #tpu.memory_space<smem>>
    %1483 = vector.broadcast %1482 : f32 to vector<16x16xf32>
    %1484 = arith.mulf %1483, %1473 : vector<16x16xf32>
    %1485 = arith.addf %1435, %1484 : vector<16x16xf32>
    %c248 = arith.constant 248 : index
    %1486 = memref.load %arg1[%c248] : memref<504xf32, #tpu.memory_space<smem>>
    %1487 = vector.broadcast %1486 : f32 to vector<16x16xf32>
    %1488 = arith.mulf %1487, %1474 : vector<16x16xf32>
    %1489 = arith.addf %1485, %1488 : vector<16x16xf32>
    %c256 = arith.constant 256 : index
    %1490 = memref.load %arg1[%c256] : memref<504xf32, #tpu.memory_space<smem>>
    %1491 = vector.broadcast %1490 : f32 to vector<16x16xf32>
    %1492 = arith.mulf %1491, %1475 : vector<16x16xf32>
    %1493 = arith.addf %1489, %1492 : vector<16x16xf32>
    %c264 = arith.constant 264 : index
    %1494 = memref.load %arg1[%c264] : memref<504xf32, #tpu.memory_space<smem>>
    %1495 = vector.broadcast %1494 : f32 to vector<16x16xf32>
    %1496 = arith.mulf %1495, %1476 : vector<16x16xf32>
    %1497 = arith.addf %1493, %1496 : vector<16x16xf32>
    %c272 = arith.constant 272 : index
    %1498 = memref.load %arg1[%c272] : memref<504xf32, #tpu.memory_space<smem>>
    %1499 = vector.broadcast %1498 : f32 to vector<16x16xf32>
    %1500 = arith.mulf %1499, %1477 : vector<16x16xf32>
    %1501 = arith.addf %1497, %1500 : vector<16x16xf32>
    %c280 = arith.constant 280 : index
    %1502 = memref.load %arg1[%c280] : memref<504xf32, #tpu.memory_space<smem>>
    %1503 = vector.broadcast %1502 : f32 to vector<16x16xf32>
    %1504 = arith.mulf %1503, %1478 : vector<16x16xf32>
    %1505 = arith.addf %1501, %1504 : vector<16x16xf32>
    %c288 = arith.constant 288 : index
    %1506 = memref.load %arg1[%c288] : memref<504xf32, #tpu.memory_space<smem>>
    %1507 = vector.broadcast %1506 : f32 to vector<16x16xf32>
    %1508 = arith.mulf %1507, %1479 : vector<16x16xf32>
    %1509 = arith.addf %1505, %1508 : vector<16x16xf32>
    %c296 = arith.constant 296 : index
    %1510 = memref.load %arg1[%c296] : memref<504xf32, #tpu.memory_space<smem>>
    %1511 = vector.broadcast %1510 : f32 to vector<16x16xf32>
    %1512 = arith.mulf %1511, %1480 : vector<16x16xf32>
    %1513 = arith.addf %1509, %1512 : vector<16x16xf32>
    %c304 = arith.constant 304 : index
    %1514 = memref.load %arg1[%c304] : memref<504xf32, #tpu.memory_space<smem>>
    %1515 = vector.broadcast %1514 : f32 to vector<16x16xf32>
    %1516 = arith.mulf %1515, %1481 : vector<16x16xf32>
    %1517 = arith.addf %1513, %1516 : vector<16x16xf32>
    %c241 = arith.constant 241 : index
    %1518 = memref.load %arg1[%c241] : memref<504xf32, #tpu.memory_space<smem>>
    %1519 = vector.broadcast %1518 : f32 to vector<16x16xf32>
    %1520 = arith.mulf %1519, %1473 : vector<16x16xf32>
    %1521 = arith.addf %1471, %1520 : vector<16x16xf32>
    %c249 = arith.constant 249 : index
    %1522 = memref.load %arg1[%c249] : memref<504xf32, #tpu.memory_space<smem>>
    %1523 = vector.broadcast %1522 : f32 to vector<16x16xf32>
    %1524 = arith.mulf %1523, %1474 : vector<16x16xf32>
    %1525 = arith.addf %1521, %1524 : vector<16x16xf32>
    %c257 = arith.constant 257 : index
    %1526 = memref.load %arg1[%c257] : memref<504xf32, #tpu.memory_space<smem>>
    %1527 = vector.broadcast %1526 : f32 to vector<16x16xf32>
    %1528 = arith.mulf %1527, %1475 : vector<16x16xf32>
    %1529 = arith.addf %1525, %1528 : vector<16x16xf32>
    %c265 = arith.constant 265 : index
    %1530 = memref.load %arg1[%c265] : memref<504xf32, #tpu.memory_space<smem>>
    %1531 = vector.broadcast %1530 : f32 to vector<16x16xf32>
    %1532 = arith.mulf %1531, %1476 : vector<16x16xf32>
    %1533 = arith.addf %1529, %1532 : vector<16x16xf32>
    %c273 = arith.constant 273 : index
    %1534 = memref.load %arg1[%c273] : memref<504xf32, #tpu.memory_space<smem>>
    %1535 = vector.broadcast %1534 : f32 to vector<16x16xf32>
    %1536 = arith.mulf %1535, %1477 : vector<16x16xf32>
    %1537 = arith.addf %1533, %1536 : vector<16x16xf32>
    %c281 = arith.constant 281 : index
    %1538 = memref.load %arg1[%c281] : memref<504xf32, #tpu.memory_space<smem>>
    %1539 = vector.broadcast %1538 : f32 to vector<16x16xf32>
    %1540 = arith.mulf %1539, %1478 : vector<16x16xf32>
    %1541 = arith.addf %1537, %1540 : vector<16x16xf32>
    %c289 = arith.constant 289 : index
    %1542 = memref.load %arg1[%c289] : memref<504xf32, #tpu.memory_space<smem>>
    %1543 = vector.broadcast %1542 : f32 to vector<16x16xf32>
    %1544 = arith.mulf %1543, %1479 : vector<16x16xf32>
    %1545 = arith.addf %1541, %1544 : vector<16x16xf32>
    %c297 = arith.constant 297 : index
    %1546 = memref.load %arg1[%c297] : memref<504xf32, #tpu.memory_space<smem>>
    %1547 = vector.broadcast %1546 : f32 to vector<16x16xf32>
    %1548 = arith.mulf %1547, %1480 : vector<16x16xf32>
    %1549 = arith.addf %1545, %1548 : vector<16x16xf32>
    %c305 = arith.constant 305 : index
    %1550 = memref.load %arg1[%c305] : memref<504xf32, #tpu.memory_space<smem>>
    %1551 = vector.broadcast %1550 : f32 to vector<16x16xf32>
    %1552 = arith.mulf %1551, %1481 : vector<16x16xf32>
    %1553 = arith.addf %1549, %1552 : vector<16x16xf32>
    %c1_328 = arith.constant 1 : index
    %c1_329 = arith.constant 1 : index
    %1554 = vector.load %arg4[%c1_328, %c1_329] : memref<18x18xf32, #tpu.memory_space<vmem>>, vector<16x16xf32>
    tpu.vector_store %arg4[%c1_328, %c1_329], %1305 {strides = array<i32>} : memref<18x18xf32, #tpu.memory_space<vmem>>, vector<16x16xf32>,
    %c0_330 = arith.constant 0 : index
    %c0_331 = arith.constant 0 : index
    %1555 = vector.load %arg4[%c0_330, %c0_331] : memref<18x18xf32, #tpu.memory_space<vmem>>, vector<16x16xf32>
    %c0_332 = arith.constant 0 : index
    %c1_333 = arith.constant 1 : index
    %1556 = vector.load %arg4[%c0_332, %c1_333] : memref<18x18xf32, #tpu.memory_space<vmem>>, vector<16x16xf32>
    %c0_334 = arith.constant 0 : index
    %c2_335 = arith.constant 2 : index
    %1557 = vector.load %arg4[%c0_334, %c2_335] : memref<18x18xf32, #tpu.memory_space<vmem>>, vector<16x16xf32>
    %c1_336 = arith.constant 1 : index
    %c0_337 = arith.constant 0 : index
    %1558 = vector.load %arg4[%c1_336, %c0_337] : memref<18x18xf32, #tpu.memory_space<vmem>>, vector<16x16xf32>
    %c1_338 = arith.constant 1 : index
    %c1_339 = arith.constant 1 : index
    %1559 = vector.load %arg4[%c1_338, %c1_339] : memref<18x18xf32, #tpu.memory_space<vmem>>, vector<16x16xf32>
    %c1_340 = arith.constant 1 : index
    %c2_341 = arith.constant 2 : index
    %1560 = vector.load %arg4[%c1_340, %c2_341] : memref<18x18xf32, #tpu.memory_space<vmem>>, vector<16x16xf32>
    %c2_342 = arith.constant 2 : index
    %c0_343 = arith.constant 0 : index
    %1561 = vector.load %arg4[%c2_342, %c0_343] : memref<18x18xf32, #tpu.memory_space<vmem>>, vector<16x16xf32>
    %c2_344 = arith.constant 2 : index
    %c1_345 = arith.constant 1 : index
    %1562 = vector.load %arg4[%c2_344, %c1_345] : memref<18x18xf32, #tpu.memory_space<vmem>>, vector<16x16xf32>
    %c2_346 = arith.constant 2 : index
    %c2_347 = arith.constant 2 : index
    %1563 = vector.load %arg4[%c2_346, %c2_347] : memref<18x18xf32, #tpu.memory_space<vmem>>, vector<16x16xf32>
    %c242 = arith.constant 242 : index
    %1564 = memref.load %arg1[%c242] : memref<504xf32, #tpu.memory_space<smem>>
    %1565 = vector.broadcast %1564 : f32 to vector<16x16xf32>
    %1566 = arith.mulf %1565, %1555 : vector<16x16xf32>
    %1567 = arith.addf %1517, %1566 : vector<16x16xf32>
    %c250 = arith.constant 250 : index
    %1568 = memref.load %arg1[%c250] : memref<504xf32, #tpu.memory_space<smem>>
    %1569 = vector.broadcast %1568 : f32 to vector<16x16xf32>
    %1570 = arith.mulf %1569, %1556 : vector<16x16xf32>
    %1571 = arith.addf %1567, %1570 : vector<16x16xf32>
    %c258 = arith.constant 258 : index
    %1572 = memref.load %arg1[%c258] : memref<504xf32, #tpu.memory_space<smem>>
    %1573 = vector.broadcast %1572 : f32 to vector<16x16xf32>
    %1574 = arith.mulf %1573, %1557 : vector<16x16xf32>
    %1575 = arith.addf %1571, %1574 : vector<16x16xf32>
    %c266 = arith.constant 266 : index
    %1576 = memref.load %arg1[%c266] : memref<504xf32, #tpu.memory_space<smem>>
    %1577 = vector.broadcast %1576 : f32 to vector<16x16xf32>
    %1578 = arith.mulf %1577, %1558 : vector<16x16xf32>
    %1579 = arith.addf %1575, %1578 : vector<16x16xf32>
    %c274 = arith.constant 274 : index
    %1580 = memref.load %arg1[%c274] : memref<504xf32, #tpu.memory_space<smem>>
    %1581 = vector.broadcast %1580 : f32 to vector<16x16xf32>
    %1582 = arith.mulf %1581, %1559 : vector<16x16xf32>
    %1583 = arith.addf %1579, %1582 : vector<16x16xf32>
    %c282 = arith.constant 282 : index
    %1584 = memref.load %arg1[%c282] : memref<504xf32, #tpu.memory_space<smem>>
    %1585 = vector.broadcast %1584 : f32 to vector<16x16xf32>
    %1586 = arith.mulf %1585, %1560 : vector<16x16xf32>
    %1587 = arith.addf %1583, %1586 : vector<16x16xf32>
    %c290 = arith.constant 290 : index
    %1588 = memref.load %arg1[%c290] : memref<504xf32, #tpu.memory_space<smem>>
    %1589 = vector.broadcast %1588 : f32 to vector<16x16xf32>
    %1590 = arith.mulf %1589, %1561 : vector<16x16xf32>
    %1591 = arith.addf %1587, %1590 : vector<16x16xf32>
    %c298 = arith.constant 298 : index
    %1592 = memref.load %arg1[%c298] : memref<504xf32, #tpu.memory_space<smem>>
    %1593 = vector.broadcast %1592 : f32 to vector<16x16xf32>
    %1594 = arith.mulf %1593, %1562 : vector<16x16xf32>
    %1595 = arith.addf %1591, %1594 : vector<16x16xf32>
    %c306 = arith.constant 306 : index
    %1596 = memref.load %arg1[%c306] : memref<504xf32, #tpu.memory_space<smem>>
    %1597 = vector.broadcast %1596 : f32 to vector<16x16xf32>
    %1598 = arith.mulf %1597, %1563 : vector<16x16xf32>
    %1599 = arith.addf %1595, %1598 : vector<16x16xf32>
    %c243 = arith.constant 243 : index
    %1600 = memref.load %arg1[%c243] : memref<504xf32, #tpu.memory_space<smem>>
    %1601 = vector.broadcast %1600 : f32 to vector<16x16xf32>
    %1602 = arith.mulf %1601, %1555 : vector<16x16xf32>
    %1603 = arith.addf %1553, %1602 : vector<16x16xf32>
    %c251 = arith.constant 251 : index
    %1604 = memref.load %arg1[%c251] : memref<504xf32, #tpu.memory_space<smem>>
    %1605 = vector.broadcast %1604 : f32 to vector<16x16xf32>
    %1606 = arith.mulf %1605, %1556 : vector<16x16xf32>
    %1607 = arith.addf %1603, %1606 : vector<16x16xf32>
    %c259 = arith.constant 259 : index
    %1608 = memref.load %arg1[%c259] : memref<504xf32, #tpu.memory_space<smem>>
    %1609 = vector.broadcast %1608 : f32 to vector<16x16xf32>
    %1610 = arith.mulf %1609, %1557 : vector<16x16xf32>
    %1611 = arith.addf %1607, %1610 : vector<16x16xf32>
    %c267 = arith.constant 267 : index
    %1612 = memref.load %arg1[%c267] : memref<504xf32, #tpu.memory_space<smem>>
    %1613 = vector.broadcast %1612 : f32 to vector<16x16xf32>
    %1614 = arith.mulf %1613, %1558 : vector<16x16xf32>
    %1615 = arith.addf %1611, %1614 : vector<16x16xf32>
    %c275 = arith.constant 275 : index
    %1616 = memref.load %arg1[%c275] : memref<504xf32, #tpu.memory_space<smem>>
    %1617 = vector.broadcast %1616 : f32 to vector<16x16xf32>
    %1618 = arith.mulf %1617, %1559 : vector<16x16xf32>
    %1619 = arith.addf %1615, %1618 : vector<16x16xf32>
    %c283 = arith.constant 283 : index
    %1620 = memref.load %arg1[%c283] : memref<504xf32, #tpu.memory_space<smem>>
    %1621 = vector.broadcast %1620 : f32 to vector<16x16xf32>
    %1622 = arith.mulf %1621, %1560 : vector<16x16xf32>
    %1623 = arith.addf %1619, %1622 : vector<16x16xf32>
    %c291 = arith.constant 291 : index
    %1624 = memref.load %arg1[%c291] : memref<504xf32, #tpu.memory_space<smem>>
    %1625 = vector.broadcast %1624 : f32 to vector<16x16xf32>
    %1626 = arith.mulf %1625, %1561 : vector<16x16xf32>
    %1627 = arith.addf %1623, %1626 : vector<16x16xf32>
    %c299 = arith.constant 299 : index
    %1628 = memref.load %arg1[%c299] : memref<504xf32, #tpu.memory_space<smem>>
    %1629 = vector.broadcast %1628 : f32 to vector<16x16xf32>
    %1630 = arith.mulf %1629, %1562 : vector<16x16xf32>
    %1631 = arith.addf %1627, %1630 : vector<16x16xf32>
    %c307 = arith.constant 307 : index
    %1632 = memref.load %arg1[%c307] : memref<504xf32, #tpu.memory_space<smem>>
    %1633 = vector.broadcast %1632 : f32 to vector<16x16xf32>
    %1634 = arith.mulf %1633, %1563 : vector<16x16xf32>
    %1635 = arith.addf %1631, %1634 : vector<16x16xf32>
    %cst_348 = arith.constant dense<0.000000e+00> : vector<16xf32>
    %1636 = vector.multi_reduction <add>, %1599, %cst_348 [1] : vector<16x16xf32> to vector<16xf32>
    %1637 = vector.shape_cast %1636 : vector<16xf32> to vector<16x1xf32>
    %cst_349 = arith.constant dense<0.000000e+00> : vector<1xf32>
    %1638 = vector.multi_reduction <add>, %1637, %cst_349 [0] : vector<16x1xf32> to vector<1xf32>
    %1639 = vector.shape_cast %1638 : vector<1xf32> to vector<1x1xf32>
    %cst_350 = arith.constant 3.906250e-03 : f32
    %1640 = vector.broadcast %cst_350 : f32 to vector<1x1xf32>
    %1641 = arith.mulf %1639, %1640 : vector<1x1xf32>
    %1642 = vector.broadcast %1641 : vector<1x1xf32> to vector<16x16xf32>
    %1643 = arith.subf %1599, %1642 : vector<16x16xf32>
    %1644 = arith.mulf %1643, %1643 : vector<16x16xf32>
    %cst_351 = arith.constant dense<0.000000e+00> : vector<16xf32>
    %1645 = vector.multi_reduction <add>, %1644, %cst_351 [1] : vector<16x16xf32> to vector<16xf32>
    %1646 = vector.shape_cast %1645 : vector<16xf32> to vector<16x1xf32>
    %cst_352 = arith.constant dense<0.000000e+00> : vector<1xf32>
    %1647 = vector.multi_reduction <add>, %1646, %cst_352 [0] : vector<16x1xf32> to vector<1xf32>
    %1648 = vector.shape_cast %1647 : vector<1xf32> to vector<1x1xf32>
    %cst_353 = arith.constant 3.906250e-03 : f32
    %1649 = vector.broadcast %cst_353 : f32 to vector<1x1xf32>
    %1650 = arith.mulf %1648, %1649 : vector<1x1xf32>
    %c308 = arith.constant 308 : index
    %1651 = memref.load %arg1[%c308] : memref<504xf32, #tpu.memory_space<smem>>
    %cst_354 = arith.constant 9.99999974E-6 : f32
    %1652 = vector.broadcast %cst_354 : f32 to vector<1x1xf32>
    %1653 = arith.addf %1650, %1652 : vector<1x1xf32>
    %1654 = math.rsqrt %1653 : vector<1x1xf32>
    %1655 = vector.broadcast %1651 : f32 to vector<1x1xf32>
    %1656 = arith.mulf %1655, %1654 : vector<1x1xf32>
    %1657 = vector.broadcast %1656 : vector<1x1xf32> to vector<16x16xf32>
    %1658 = arith.mulf %1643, %1657 : vector<16x16xf32>
    %c310 = arith.constant 310 : index
    %1659 = memref.load %arg1[%c310] : memref<504xf32, #tpu.memory_space<smem>>
    %1660 = vector.broadcast %1659 : f32 to vector<16x16xf32>
    %1661 = arith.addf %1658, %1660 : vector<16x16xf32>
    %1662 = math.tanh %1661 : vector<16x16xf32>
    %cst_355 = arith.constant dense<0.000000e+00> : vector<16xf32>
    %1663 = vector.multi_reduction <add>, %1635, %cst_355 [1] : vector<16x16xf32> to vector<16xf32>
    %1664 = vector.shape_cast %1663 : vector<16xf32> to vector<16x1xf32>
    %cst_356 = arith.constant dense<0.000000e+00> : vector<1xf32>
    %1665 = vector.multi_reduction <add>, %1664, %cst_356 [0] : vector<16x1xf32> to vector<1xf32>
    %1666 = vector.shape_cast %1665 : vector<1xf32> to vector<1x1xf32>
    %cst_357 = arith.constant 3.906250e-03 : f32
    %1667 = vector.broadcast %cst_357 : f32 to vector<1x1xf32>
    %1668 = arith.mulf %1666, %1667 : vector<1x1xf32>
    %1669 = vector.broadcast %1668 : vector<1x1xf32> to vector<16x16xf32>
    %1670 = arith.subf %1635, %1669 : vector<16x16xf32>
    %1671 = arith.mulf %1670, %1670 : vector<16x16xf32>
    %cst_358 = arith.constant dense<0.000000e+00> : vector<16xf32>
    %1672 = vector.multi_reduction <add>, %1671, %cst_358 [1] : vector<16x16xf32> to vector<16xf32>
    %1673 = vector.shape_cast %1672 : vector<16xf32> to vector<16x1xf32>
    %cst_359 = arith.constant dense<0.000000e+00> : vector<1xf32>
    %1674 = vector.multi_reduction <add>, %1673, %cst_359 [0] : vector<16x1xf32> to vector<1xf32>
    %1675 = vector.shape_cast %1674 : vector<1xf32> to vector<1x1xf32>
    %cst_360 = arith.constant 3.906250e-03 : f32
    %1676 = vector.broadcast %cst_360 : f32 to vector<1x1xf32>
    %1677 = arith.mulf %1675, %1676 : vector<1x1xf32>
    %c309 = arith.constant 309 : index
    %1678 = memref.load %arg1[%c309] : memref<504xf32, #tpu.memory_space<smem>>
    %cst_361 = arith.constant 9.99999974E-6 : f32
    %1679 = vector.broadcast %cst_361 : f32 to vector<1x1xf32>
    %1680 = arith.addf %1677, %1679 : vector<1x1xf32>
    %1681 = math.rsqrt %1680 : vector<1x1xf32>
    %1682 = vector.broadcast %1678 : f32 to vector<1x1xf32>
    %1683 = arith.mulf %1682, %1681 : vector<1x1xf32>
    %1684 = vector.broadcast %1683 : vector<1x1xf32> to vector<16x16xf32>
    %1685 = arith.mulf %1670, %1684 : vector<16x16xf32>
    %c311 = arith.constant 311 : index
    %1686 = memref.load %arg1[%c311] : memref<504xf32, #tpu.memory_space<smem>>
    %1687 = vector.broadcast %1686 : f32 to vector<16x16xf32>
    %1688 = arith.addf %1685, %1687 : vector<16x16xf32>
    %1689 = math.tanh %1688 : vector<16x16xf32>
    %cst_362 = arith.constant 0.000000e+00 : f32
    %1690 = vector.broadcast %cst_362 : f32 to vector<16x16xf32>
    %cst_363 = arith.constant 0.000000e+00 : f32
    %1691 = vector.broadcast %cst_363 : f32 to vector<16x16xf32>
    %cst_364 = arith.constant 0.000000e+00 : f32
    %1692 = vector.broadcast %cst_364 : f32 to vector<16x16xf32>
    %cst_365 = arith.constant 0.000000e+00 : f32
    %1693 = vector.broadcast %cst_365 : f32 to vector<16x16xf32>
    %c1_366 = arith.constant 1 : index
    %c1_367 = arith.constant 1 : index
    %1694 = vector.load %arg4[%c1_366, %c1_367] : memref<18x18xf32, #tpu.memory_space<vmem>>, vector<16x16xf32>
    tpu.vector_store %arg4[%c1_366, %c1_367], %1662 {strides = array<i32>} : memref<18x18xf32, #tpu.memory_space<vmem>>, vector<16x16xf32>,
    %c0_368 = arith.constant 0 : index
    %c0_369 = arith.constant 0 : index
    %1695 = vector.load %arg4[%c0_368, %c0_369] : memref<18x18xf32, #tpu.memory_space<vmem>>, vector<16x16xf32>
    %c0_370 = arith.constant 0 : index
    %c1_371 = arith.constant 1 : index
    %1696 = vector.load %arg4[%c0_370, %c1_371] : memref<18x18xf32, #tpu.memory_space<vmem>>, vector<16x16xf32>
    %c0_372 = arith.constant 0 : index
    %c2_373 = arith.constant 2 : index
    %1697 = vector.load %arg4[%c0_372, %c2_373] : memref<18x18xf32, #tpu.memory_space<vmem>>, vector<16x16xf32>
    %c1_374 = arith.constant 1 : index
    %c0_375 = arith.constant 0 : index
    %1698 = vector.load %arg4[%c1_374, %c0_375] : memref<18x18xf32, #tpu.memory_space<vmem>>, vector<16x16xf32>
    %c1_376 = arith.constant 1 : index
    %c1_377 = arith.constant 1 : index
    %1699 = vector.load %arg4[%c1_376, %c1_377] : memref<18x18xf32, #tpu.memory_space<vmem>>, vector<16x16xf32>
    %c1_378 = arith.constant 1 : index
    %c2_379 = arith.constant 2 : index
    %1700 = vector.load %arg4[%c1_378, %c2_379] : memref<18x18xf32, #tpu.memory_space<vmem>>, vector<16x16xf32>
    %c2_380 = arith.constant 2 : index
    %c0_381 = arith.constant 0 : index
    %1701 = vector.load %arg4[%c2_380, %c0_381] : memref<18x18xf32, #tpu.memory_space<vmem>>, vector<16x16xf32>
    %c2_382 = arith.constant 2 : index
    %c1_383 = arith.constant 1 : index
    %1702 = vector.load %arg4[%c2_382, %c1_383] : memref<18x18xf32, #tpu.memory_space<vmem>>, vector<16x16xf32>
    %c2_384 = arith.constant 2 : index
    %c2_385 = arith.constant 2 : index
    %1703 = vector.load %arg4[%c2_384, %c2_385] : memref<18x18xf32, #tpu.memory_space<vmem>>, vector<16x16xf32>
    %c312 = arith.constant 312 : index
    %1704 = memref.load %arg1[%c312] : memref<504xf32, #tpu.memory_space<smem>>
    %1705 = vector.broadcast %1704 : f32 to vector<16x16xf32>
    %1706 = arith.mulf %1705, %1695 : vector<16x16xf32>
    %1707 = arith.addf %1690, %1706 : vector<16x16xf32>
    %c320 = arith.constant 320 : index
    %1708 = memref.load %arg1[%c320] : memref<504xf32, #tpu.memory_space<smem>>
    %1709 = vector.broadcast %1708 : f32 to vector<16x16xf32>
    %1710 = arith.mulf %1709, %1696 : vector<16x16xf32>
    %1711 = arith.addf %1707, %1710 : vector<16x16xf32>
    %c328 = arith.constant 328 : index
    %1712 = memref.load %arg1[%c328] : memref<504xf32, #tpu.memory_space<smem>>
    %1713 = vector.broadcast %1712 : f32 to vector<16x16xf32>
    %1714 = arith.mulf %1713, %1697 : vector<16x16xf32>
    %1715 = arith.addf %1711, %1714 : vector<16x16xf32>
    %c336 = arith.constant 336 : index
    %1716 = memref.load %arg1[%c336] : memref<504xf32, #tpu.memory_space<smem>>
    %1717 = vector.broadcast %1716 : f32 to vector<16x16xf32>
    %1718 = arith.mulf %1717, %1698 : vector<16x16xf32>
    %1719 = arith.addf %1715, %1718 : vector<16x16xf32>
    %c344 = arith.constant 344 : index
    %1720 = memref.load %arg1[%c344] : memref<504xf32, #tpu.memory_space<smem>>
    %1721 = vector.broadcast %1720 : f32 to vector<16x16xf32>
    %1722 = arith.mulf %1721, %1699 : vector<16x16xf32>
    %1723 = arith.addf %1719, %1722 : vector<16x16xf32>
    %c352 = arith.constant 352 : index
    %1724 = memref.load %arg1[%c352] : memref<504xf32, #tpu.memory_space<smem>>
    %1725 = vector.broadcast %1724 : f32 to vector<16x16xf32>
    %1726 = arith.mulf %1725, %1700 : vector<16x16xf32>
    %1727 = arith.addf %1723, %1726 : vector<16x16xf32>
    %c360 = arith.constant 360 : index
    %1728 = memref.load %arg1[%c360] : memref<504xf32, #tpu.memory_space<smem>>
    %1729 = vector.broadcast %1728 : f32 to vector<16x16xf32>
    %1730 = arith.mulf %1729, %1701 : vector<16x16xf32>
    %1731 = arith.addf %1727, %1730 : vector<16x16xf32>
    %c368 = arith.constant 368 : index
    %1732 = memref.load %arg1[%c368] : memref<504xf32, #tpu.memory_space<smem>>
    %1733 = vector.broadcast %1732 : f32 to vector<16x16xf32>
    %1734 = arith.mulf %1733, %1702 : vector<16x16xf32>
    %1735 = arith.addf %1731, %1734 : vector<16x16xf32>
    %c376 = arith.constant 376 : index
    %1736 = memref.load %arg1[%c376] : memref<504xf32, #tpu.memory_space<smem>>
    %1737 = vector.broadcast %1736 : f32 to vector<16x16xf32>
    %1738 = arith.mulf %1737, %1703 : vector<16x16xf32>
    %1739 = arith.addf %1735, %1738 : vector<16x16xf32>
    %c313 = arith.constant 313 : index
    %1740 = memref.load %arg1[%c313] : memref<504xf32, #tpu.memory_space<smem>>
    %1741 = vector.broadcast %1740 : f32 to vector<16x16xf32>
    %1742 = arith.mulf %1741, %1695 : vector<16x16xf32>
    %1743 = arith.addf %1691, %1742 : vector<16x16xf32>
    %c321 = arith.constant 321 : index
    %1744 = memref.load %arg1[%c321] : memref<504xf32, #tpu.memory_space<smem>>
    %1745 = vector.broadcast %1744 : f32 to vector<16x16xf32>
    %1746 = arith.mulf %1745, %1696 : vector<16x16xf32>
    %1747 = arith.addf %1743, %1746 : vector<16x16xf32>
    %c329 = arith.constant 329 : index
    %1748 = memref.load %arg1[%c329] : memref<504xf32, #tpu.memory_space<smem>>
    %1749 = vector.broadcast %1748 : f32 to vector<16x16xf32>
    %1750 = arith.mulf %1749, %1697 : vector<16x16xf32>
    %1751 = arith.addf %1747, %1750 : vector<16x16xf32>
    %c337 = arith.constant 337 : index
    %1752 = memref.load %arg1[%c337] : memref<504xf32, #tpu.memory_space<smem>>
    %1753 = vector.broadcast %1752 : f32 to vector<16x16xf32>
    %1754 = arith.mulf %1753, %1698 : vector<16x16xf32>
    %1755 = arith.addf %1751, %1754 : vector<16x16xf32>
    %c345 = arith.constant 345 : index
    %1756 = memref.load %arg1[%c345] : memref<504xf32, #tpu.memory_space<smem>>
    %1757 = vector.broadcast %1756 : f32 to vector<16x16xf32>
    %1758 = arith.mulf %1757, %1699 : vector<16x16xf32>
    %1759 = arith.addf %1755, %1758 : vector<16x16xf32>
    %c353 = arith.constant 353 : index
    %1760 = memref.load %arg1[%c353] : memref<504xf32, #tpu.memory_space<smem>>
    %1761 = vector.broadcast %1760 : f32 to vector<16x16xf32>
    %1762 = arith.mulf %1761, %1700 : vector<16x16xf32>
    %1763 = arith.addf %1759, %1762 : vector<16x16xf32>
    %c361 = arith.constant 361 : index
    %1764 = memref.load %arg1[%c361] : memref<504xf32, #tpu.memory_space<smem>>
    %1765 = vector.broadcast %1764 : f32 to vector<16x16xf32>
    %1766 = arith.mulf %1765, %1701 : vector<16x16xf32>
    %1767 = arith.addf %1763, %1766 : vector<16x16xf32>
    %c369 = arith.constant 369 : index
    %1768 = memref.load %arg1[%c369] : memref<504xf32, #tpu.memory_space<smem>>
    %1769 = vector.broadcast %1768 : f32 to vector<16x16xf32>
    %1770 = arith.mulf %1769, %1702 : vector<16x16xf32>
    %1771 = arith.addf %1767, %1770 : vector<16x16xf32>
    %c377 = arith.constant 377 : index
    %1772 = memref.load %arg1[%c377] : memref<504xf32, #tpu.memory_space<smem>>
    %1773 = vector.broadcast %1772 : f32 to vector<16x16xf32>
    %1774 = arith.mulf %1773, %1703 : vector<16x16xf32>
    %1775 = arith.addf %1771, %1774 : vector<16x16xf32>
    %c314 = arith.constant 314 : index
    %1776 = memref.load %arg1[%c314] : memref<504xf32, #tpu.memory_space<smem>>
    %1777 = vector.broadcast %1776 : f32 to vector<16x16xf32>
    %1778 = arith.mulf %1777, %1695 : vector<16x16xf32>
    %1779 = arith.addf %1692, %1778 : vector<16x16xf32>
    %c322 = arith.constant 322 : index
    %1780 = memref.load %arg1[%c322] : memref<504xf32, #tpu.memory_space<smem>>
    %1781 = vector.broadcast %1780 : f32 to vector<16x16xf32>
    %1782 = arith.mulf %1781, %1696 : vector<16x16xf32>
    %1783 = arith.addf %1779, %1782 : vector<16x16xf32>
    %c330 = arith.constant 330 : index
    %1784 = memref.load %arg1[%c330] : memref<504xf32, #tpu.memory_space<smem>>
    %1785 = vector.broadcast %1784 : f32 to vector<16x16xf32>
    %1786 = arith.mulf %1785, %1697 : vector<16x16xf32>
    %1787 = arith.addf %1783, %1786 : vector<16x16xf32>
    %c338 = arith.constant 338 : index
    %1788 = memref.load %arg1[%c338] : memref<504xf32, #tpu.memory_space<smem>>
    %1789 = vector.broadcast %1788 : f32 to vector<16x16xf32>
    %1790 = arith.mulf %1789, %1698 : vector<16x16xf32>
    %1791 = arith.addf %1787, %1790 : vector<16x16xf32>
    %c346 = arith.constant 346 : index
    %1792 = memref.load %arg1[%c346] : memref<504xf32, #tpu.memory_space<smem>>
    %1793 = vector.broadcast %1792 : f32 to vector<16x16xf32>
    %1794 = arith.mulf %1793, %1699 : vector<16x16xf32>
    %1795 = arith.addf %1791, %1794 : vector<16x16xf32>
    %c354 = arith.constant 354 : index
    %1796 = memref.load %arg1[%c354] : memref<504xf32, #tpu.memory_space<smem>>
    %1797 = vector.broadcast %1796 : f32 to vector<16x16xf32>
    %1798 = arith.mulf %1797, %1700 : vector<16x16xf32>
    %1799 = arith.addf %1795, %1798 : vector<16x16xf32>
    %c362 = arith.constant 362 : index
    %1800 = memref.load %arg1[%c362] : memref<504xf32, #tpu.memory_space<smem>>
    %1801 = vector.broadcast %1800 : f32 to vector<16x16xf32>
    %1802 = arith.mulf %1801, %1701 : vector<16x16xf32>
    %1803 = arith.addf %1799, %1802 : vector<16x16xf32>
    %c370 = arith.constant 370 : index
    %1804 = memref.load %arg1[%c370] : memref<504xf32, #tpu.memory_space<smem>>
    %1805 = vector.broadcast %1804 : f32 to vector<16x16xf32>
    %1806 = arith.mulf %1805, %1702 : vector<16x16xf32>
    %1807 = arith.addf %1803, %1806 : vector<16x16xf32>
    %c378 = arith.constant 378 : index
    %1808 = memref.load %arg1[%c378] : memref<504xf32, #tpu.memory_space<smem>>
    %1809 = vector.broadcast %1808 : f32 to vector<16x16xf32>
    %1810 = arith.mulf %1809, %1703 : vector<16x16xf32>
    %1811 = arith.addf %1807, %1810 : vector<16x16xf32>
    %c315 = arith.constant 315 : index
    %1812 = memref.load %arg1[%c315] : memref<504xf32, #tpu.memory_space<smem>>
    %1813 = vector.broadcast %1812 : f32 to vector<16x16xf32>
    %1814 = arith.mulf %1813, %1695 : vector<16x16xf32>
    %1815 = arith.addf %1693, %1814 : vector<16x16xf32>
    %c323 = arith.constant 323 : index
    %1816 = memref.load %arg1[%c323] : memref<504xf32, #tpu.memory_space<smem>>
    %1817 = vector.broadcast %1816 : f32 to vector<16x16xf32>
    %1818 = arith.mulf %1817, %1696 : vector<16x16xf32>
    %1819 = arith.addf %1815, %1818 : vector<16x16xf32>
    %c331 = arith.constant 331 : index
    %1820 = memref.load %arg1[%c331] : memref<504xf32, #tpu.memory_space<smem>>
    %1821 = vector.broadcast %1820 : f32 to vector<16x16xf32>
    %1822 = arith.mulf %1821, %1697 : vector<16x16xf32>
    %1823 = arith.addf %1819, %1822 : vector<16x16xf32>
    %c339 = arith.constant 339 : index
    %1824 = memref.load %arg1[%c339] : memref<504xf32, #tpu.memory_space<smem>>
    %1825 = vector.broadcast %1824 : f32 to vector<16x16xf32>
    %1826 = arith.mulf %1825, %1698 : vector<16x16xf32>
    %1827 = arith.addf %1823, %1826 : vector<16x16xf32>
    %c347 = arith.constant 347 : index
    %1828 = memref.load %arg1[%c347] : memref<504xf32, #tpu.memory_space<smem>>
    %1829 = vector.broadcast %1828 : f32 to vector<16x16xf32>
    %1830 = arith.mulf %1829, %1699 : vector<16x16xf32>
    %1831 = arith.addf %1827, %1830 : vector<16x16xf32>
    %c355 = arith.constant 355 : index
    %1832 = memref.load %arg1[%c355] : memref<504xf32, #tpu.memory_space<smem>>
    %1833 = vector.broadcast %1832 : f32 to vector<16x16xf32>
    %1834 = arith.mulf %1833, %1700 : vector<16x16xf32>
    %1835 = arith.addf %1831, %1834 : vector<16x16xf32>
    %c363 = arith.constant 363 : index
    %1836 = memref.load %arg1[%c363] : memref<504xf32, #tpu.memory_space<smem>>
    %1837 = vector.broadcast %1836 : f32 to vector<16x16xf32>
    %1838 = arith.mulf %1837, %1701 : vector<16x16xf32>
    %1839 = arith.addf %1835, %1838 : vector<16x16xf32>
    %c371 = arith.constant 371 : index
    %1840 = memref.load %arg1[%c371] : memref<504xf32, #tpu.memory_space<smem>>
    %1841 = vector.broadcast %1840 : f32 to vector<16x16xf32>
    %1842 = arith.mulf %1841, %1702 : vector<16x16xf32>
    %1843 = arith.addf %1839, %1842 : vector<16x16xf32>
    %c379 = arith.constant 379 : index
    %1844 = memref.load %arg1[%c379] : memref<504xf32, #tpu.memory_space<smem>>
    %1845 = vector.broadcast %1844 : f32 to vector<16x16xf32>
    %1846 = arith.mulf %1845, %1703 : vector<16x16xf32>
    %1847 = arith.addf %1843, %1846 : vector<16x16xf32>
    %c1_386 = arith.constant 1 : index
    %c1_387 = arith.constant 1 : index
    %1848 = vector.load %arg4[%c1_386, %c1_387] : memref<18x18xf32, #tpu.memory_space<vmem>>, vector<16x16xf32>
    tpu.vector_store %arg4[%c1_386, %c1_387], %1689 {strides = array<i32>} : memref<18x18xf32, #tpu.memory_space<vmem>>, vector<16x16xf32>,
    %c0_388 = arith.constant 0 : index
    %c0_389 = arith.constant 0 : index
    %1849 = vector.load %arg4[%c0_388, %c0_389] : memref<18x18xf32, #tpu.memory_space<vmem>>, vector<16x16xf32>
    %c0_390 = arith.constant 0 : index
    %c1_391 = arith.constant 1 : index
    %1850 = vector.load %arg4[%c0_390, %c1_391] : memref<18x18xf32, #tpu.memory_space<vmem>>, vector<16x16xf32>
    %c0_392 = arith.constant 0 : index
    %c2_393 = arith.constant 2 : index
    %1851 = vector.load %arg4[%c0_392, %c2_393] : memref<18x18xf32, #tpu.memory_space<vmem>>, vector<16x16xf32>
    %c1_394 = arith.constant 1 : index
    %c0_395 = arith.constant 0 : index
    %1852 = vector.load %arg4[%c1_394, %c0_395] : memref<18x18xf32, #tpu.memory_space<vmem>>, vector<16x16xf32>
    %c1_396 = arith.constant 1 : index
    %c1_397 = arith.constant 1 : index
    %1853 = vector.load %arg4[%c1_396, %c1_397] : memref<18x18xf32, #tpu.memory_space<vmem>>, vector<16x16xf32>
    %c1_398 = arith.constant 1 : index
    %c2_399 = arith.constant 2 : index
    %1854 = vector.load %arg4[%c1_398, %c2_399] : memref<18x18xf32, #tpu.memory_space<vmem>>, vector<16x16xf32>
    %c2_400 = arith.constant 2 : index
    %c0_401 = arith.constant 0 : index
    %1855 = vector.load %arg4[%c2_400, %c0_401] : memref<18x18xf32, #tpu.memory_space<vmem>>, vector<16x16xf32>
    %c2_402 = arith.constant 2 : index
    %c1_403 = arith.constant 1 : index
    %1856 = vector.load %arg4[%c2_402, %c1_403] : memref<18x18xf32, #tpu.memory_space<vmem>>, vector<16x16xf32>
    %c2_404 = arith.constant 2 : index
    %c2_405 = arith.constant 2 : index
    %1857 = vector.load %arg4[%c2_404, %c2_405] : memref<18x18xf32, #tpu.memory_space<vmem>>, vector<16x16xf32>
    %c316 = arith.constant 316 : index
    %1858 = memref.load %arg1[%c316] : memref<504xf32, #tpu.memory_space<smem>>
    %1859 = vector.broadcast %1858 : f32 to vector<16x16xf32>
    %1860 = arith.mulf %1859, %1849 : vector<16x16xf32>
    %1861 = arith.addf %1739, %1860 : vector<16x16xf32>
    %c324 = arith.constant 324 : index
    %1862 = memref.load %arg1[%c324] : memref<504xf32, #tpu.memory_space<smem>>
    %1863 = vector.broadcast %1862 : f32 to vector<16x16xf32>
    %1864 = arith.mulf %1863, %1850 : vector<16x16xf32>
    %1865 = arith.addf %1861, %1864 : vector<16x16xf32>
    %c332 = arith.constant 332 : index
    %1866 = memref.load %arg1[%c332] : memref<504xf32, #tpu.memory_space<smem>>
    %1867 = vector.broadcast %1866 : f32 to vector<16x16xf32>
    %1868 = arith.mulf %1867, %1851 : vector<16x16xf32>
    %1869 = arith.addf %1865, %1868 : vector<16x16xf32>
    %c340 = arith.constant 340 : index
    %1870 = memref.load %arg1[%c340] : memref<504xf32, #tpu.memory_space<smem>>
    %1871 = vector.broadcast %1870 : f32 to vector<16x16xf32>
    %1872 = arith.mulf %1871, %1852 : vector<16x16xf32>
    %1873 = arith.addf %1869, %1872 : vector<16x16xf32>
    %c348 = arith.constant 348 : index
    %1874 = memref.load %arg1[%c348] : memref<504xf32, #tpu.memory_space<smem>>
    %1875 = vector.broadcast %1874 : f32 to vector<16x16xf32>
    %1876 = arith.mulf %1875, %1853 : vector<16x16xf32>
    %1877 = arith.addf %1873, %1876 : vector<16x16xf32>
    %c356 = arith.constant 356 : index
    %1878 = memref.load %arg1[%c356] : memref<504xf32, #tpu.memory_space<smem>>
    %1879 = vector.broadcast %1878 : f32 to vector<16x16xf32>
    %1880 = arith.mulf %1879, %1854 : vector<16x16xf32>
    %1881 = arith.addf %1877, %1880 : vector<16x16xf32>
    %c364 = arith.constant 364 : index
    %1882 = memref.load %arg1[%c364] : memref<504xf32, #tpu.memory_space<smem>>
    %1883 = vector.broadcast %1882 : f32 to vector<16x16xf32>
    %1884 = arith.mulf %1883, %1855 : vector<16x16xf32>
    %1885 = arith.addf %1881, %1884 : vector<16x16xf32>
    %c372 = arith.constant 372 : index
    %1886 = memref.load %arg1[%c372] : memref<504xf32, #tpu.memory_space<smem>>
    %1887 = vector.broadcast %1886 : f32 to vector<16x16xf32>
    %1888 = arith.mulf %1887, %1856 : vector<16x16xf32>
    %1889 = arith.addf %1885, %1888 : vector<16x16xf32>
    %c380 = arith.constant 380 : index
    %1890 = memref.load %arg1[%c380] : memref<504xf32, #tpu.memory_space<smem>>
    %1891 = vector.broadcast %1890 : f32 to vector<16x16xf32>
    %1892 = arith.mulf %1891, %1857 : vector<16x16xf32>
    %1893 = arith.addf %1889, %1892 : vector<16x16xf32>
    %c317 = arith.constant 317 : index
    %1894 = memref.load %arg1[%c317] : memref<504xf32, #tpu.memory_space<smem>>
    %1895 = vector.broadcast %1894 : f32 to vector<16x16xf32>
    %1896 = arith.mulf %1895, %1849 : vector<16x16xf32>
    %1897 = arith.addf %1775, %1896 : vector<16x16xf32>
    %c325 = arith.constant 325 : index
    %1898 = memref.load %arg1[%c325] : memref<504xf32, #tpu.memory_space<smem>>
    %1899 = vector.broadcast %1898 : f32 to vector<16x16xf32>
    %1900 = arith.mulf %1899, %1850 : vector<16x16xf32>
    %1901 = arith.addf %1897, %1900 : vector<16x16xf32>
    %c333 = arith.constant 333 : index
    %1902 = memref.load %arg1[%c333] : memref<504xf32, #tpu.memory_space<smem>>
    %1903 = vector.broadcast %1902 : f32 to vector<16x16xf32>
    %1904 = arith.mulf %1903, %1851 : vector<16x16xf32>
    %1905 = arith.addf %1901, %1904 : vector<16x16xf32>
    %c341 = arith.constant 341 : index
    %1906 = memref.load %arg1[%c341] : memref<504xf32, #tpu.memory_space<smem>>
    %1907 = vector.broadcast %1906 : f32 to vector<16x16xf32>
    %1908 = arith.mulf %1907, %1852 : vector<16x16xf32>
    %1909 = arith.addf %1905, %1908 : vector<16x16xf32>
    %c349 = arith.constant 349 : index
    %1910 = memref.load %arg1[%c349] : memref<504xf32, #tpu.memory_space<smem>>
    %1911 = vector.broadcast %1910 : f32 to vector<16x16xf32>
    %1912 = arith.mulf %1911, %1853 : vector<16x16xf32>
    %1913 = arith.addf %1909, %1912 : vector<16x16xf32>
    %c357 = arith.constant 357 : index
    %1914 = memref.load %arg1[%c357] : memref<504xf32, #tpu.memory_space<smem>>
    %1915 = vector.broadcast %1914 : f32 to vector<16x16xf32>
    %1916 = arith.mulf %1915, %1854 : vector<16x16xf32>
    %1917 = arith.addf %1913, %1916 : vector<16x16xf32>
    %c365 = arith.constant 365 : index
    %1918 = memref.load %arg1[%c365] : memref<504xf32, #tpu.memory_space<smem>>
    %1919 = vector.broadcast %1918 : f32 to vector<16x16xf32>
    %1920 = arith.mulf %1919, %1855 : vector<16x16xf32>
    %1921 = arith.addf %1917, %1920 : vector<16x16xf32>
    %c373 = arith.constant 373 : index
    %1922 = memref.load %arg1[%c373] : memref<504xf32, #tpu.memory_space<smem>>
    %1923 = vector.broadcast %1922 : f32 to vector<16x16xf32>
    %1924 = arith.mulf %1923, %1856 : vector<16x16xf32>
    %1925 = arith.addf %1921, %1924 : vector<16x16xf32>
    %c381 = arith.constant 381 : index
    %1926 = memref.load %arg1[%c381] : memref<504xf32, #tpu.memory_space<smem>>
    %1927 = vector.broadcast %1926 : f32 to vector<16x16xf32>
    %1928 = arith.mulf %1927, %1857 : vector<16x16xf32>
    %1929 = arith.addf %1925, %1928 : vector<16x16xf32>
    %c318 = arith.constant 318 : index
    %1930 = memref.load %arg1[%c318] : memref<504xf32, #tpu.memory_space<smem>>
    %1931 = vector.broadcast %1930 : f32 to vector<16x16xf32>
    %1932 = arith.mulf %1931, %1849 : vector<16x16xf32>
    %1933 = arith.addf %1811, %1932 : vector<16x16xf32>
    %c326 = arith.constant 326 : index
    %1934 = memref.load %arg1[%c326] : memref<504xf32, #tpu.memory_space<smem>>
    %1935 = vector.broadcast %1934 : f32 to vector<16x16xf32>
    %1936 = arith.mulf %1935, %1850 : vector<16x16xf32>
    %1937 = arith.addf %1933, %1936 : vector<16x16xf32>
    %c334 = arith.constant 334 : index
    %1938 = memref.load %arg1[%c334] : memref<504xf32, #tpu.memory_space<smem>>
    %1939 = vector.broadcast %1938 : f32 to vector<16x16xf32>
    %1940 = arith.mulf %1939, %1851 : vector<16x16xf32>
    %1941 = arith.addf %1937, %1940 : vector<16x16xf32>
    %c342 = arith.constant 342 : index
    %1942 = memref.load %arg1[%c342] : memref<504xf32, #tpu.memory_space<smem>>
    %1943 = vector.broadcast %1942 : f32 to vector<16x16xf32>
    %1944 = arith.mulf %1943, %1852 : vector<16x16xf32>
    %1945 = arith.addf %1941, %1944 : vector<16x16xf32>
    %c350 = arith.constant 350 : index
    %1946 = memref.load %arg1[%c350] : memref<504xf32, #tpu.memory_space<smem>>
    %1947 = vector.broadcast %1946 : f32 to vector<16x16xf32>
    %1948 = arith.mulf %1947, %1853 : vector<16x16xf32>
    %1949 = arith.addf %1945, %1948 : vector<16x16xf32>
    %c358 = arith.constant 358 : index
    %1950 = memref.load %arg1[%c358] : memref<504xf32, #tpu.memory_space<smem>>
    %1951 = vector.broadcast %1950 : f32 to vector<16x16xf32>
    %1952 = arith.mulf %1951, %1854 : vector<16x16xf32>
    %1953 = arith.addf %1949, %1952 : vector<16x16xf32>
    %c366 = arith.constant 366 : index
    %1954 = memref.load %arg1[%c366] : memref<504xf32, #tpu.memory_space<smem>>
    %1955 = vector.broadcast %1954 : f32 to vector<16x16xf32>
    %1956 = arith.mulf %1955, %1855 : vector<16x16xf32>
    %1957 = arith.addf %1953, %1956 : vector<16x16xf32>
    %c374 = arith.constant 374 : index
    %1958 = memref.load %arg1[%c374] : memref<504xf32, #tpu.memory_space<smem>>
    %1959 = vector.broadcast %1958 : f32 to vector<16x16xf32>
    %1960 = arith.mulf %1959, %1856 : vector<16x16xf32>
    %1961 = arith.addf %1957, %1960 : vector<16x16xf32>
    %c382 = arith.constant 382 : index
    %1962 = memref.load %arg1[%c382] : memref<504xf32, #tpu.memory_space<smem>>
    %1963 = vector.broadcast %1962 : f32 to vector<16x16xf32>
    %1964 = arith.mulf %1963, %1857 : vector<16x16xf32>
    %1965 = arith.addf %1961, %1964 : vector<16x16xf32>
    %c319 = arith.constant 319 : index
    %1966 = memref.load %arg1[%c319] : memref<504xf32, #tpu.memory_space<smem>>
    %1967 = vector.broadcast %1966 : f32 to vector<16x16xf32>
    %1968 = arith.mulf %1967, %1849 : vector<16x16xf32>
    %1969 = arith.addf %1847, %1968 : vector<16x16xf32>
    %c327 = arith.constant 327 : index
    %1970 = memref.load %arg1[%c327] : memref<504xf32, #tpu.memory_space<smem>>
    %1971 = vector.broadcast %1970 : f32 to vector<16x16xf32>
    %1972 = arith.mulf %1971, %1850 : vector<16x16xf32>
    %1973 = arith.addf %1969, %1972 : vector<16x16xf32>
    %c335 = arith.constant 335 : index
    %1974 = memref.load %arg1[%c335] : memref<504xf32, #tpu.memory_space<smem>>
    %1975 = vector.broadcast %1974 : f32 to vector<16x16xf32>
    %1976 = arith.mulf %1975, %1851 : vector<16x16xf32>
    %1977 = arith.addf %1973, %1976 : vector<16x16xf32>
    %c343 = arith.constant 343 : index
    %1978 = memref.load %arg1[%c343] : memref<504xf32, #tpu.memory_space<smem>>
    %1979 = vector.broadcast %1978 : f32 to vector<16x16xf32>
    %1980 = arith.mulf %1979, %1852 : vector<16x16xf32>
    %1981 = arith.addf %1977, %1980 : vector<16x16xf32>
    %c351 = arith.constant 351 : index
    %1982 = memref.load %arg1[%c351] : memref<504xf32, #tpu.memory_space<smem>>
    %1983 = vector.broadcast %1982 : f32 to vector<16x16xf32>
    %1984 = arith.mulf %1983, %1853 : vector<16x16xf32>
    %1985 = arith.addf %1981, %1984 : vector<16x16xf32>
    %c359 = arith.constant 359 : index
    %1986 = memref.load %arg1[%c359] : memref<504xf32, #tpu.memory_space<smem>>
    %1987 = vector.broadcast %1986 : f32 to vector<16x16xf32>
    %1988 = arith.mulf %1987, %1854 : vector<16x16xf32>
    %1989 = arith.addf %1985, %1988 : vector<16x16xf32>
    %c367 = arith.constant 367 : index
    %1990 = memref.load %arg1[%c367] : memref<504xf32, #tpu.memory_space<smem>>
    %1991 = vector.broadcast %1990 : f32 to vector<16x16xf32>
    %1992 = arith.mulf %1991, %1855 : vector<16x16xf32>
    %1993 = arith.addf %1989, %1992 : vector<16x16xf32>
    %c375 = arith.constant 375 : index
    %1994 = memref.load %arg1[%c375] : memref<504xf32, #tpu.memory_space<smem>>
    %1995 = vector.broadcast %1994 : f32 to vector<16x16xf32>
    %1996 = arith.mulf %1995, %1856 : vector<16x16xf32>
    %1997 = arith.addf %1993, %1996 : vector<16x16xf32>
    %c383 = arith.constant 383 : index
    %1998 = memref.load %arg1[%c383] : memref<504xf32, #tpu.memory_space<smem>>
    %1999 = vector.broadcast %1998 : f32 to vector<16x16xf32>
    %2000 = arith.mulf %1999, %1857 : vector<16x16xf32>
    %2001 = arith.addf %1997, %2000 : vector<16x16xf32>
    %cst_406 = arith.constant dense<0.000000e+00> : vector<16xf32>
    %2002 = vector.multi_reduction <add>, %1893, %cst_406 [1] : vector<16x16xf32> to vector<16xf32>
    %2003 = vector.shape_cast %2002 : vector<16xf32> to vector<16x1xf32>
    %cst_407 = arith.constant dense<0.000000e+00> : vector<1xf32>
    %2004 = vector.multi_reduction <add>, %2003, %cst_407 [0] : vector<16x1xf32> to vector<1xf32>
    %2005 = vector.shape_cast %2004 : vector<1xf32> to vector<1x1xf32>
    %cst_408 = arith.constant 3.906250e-03 : f32
    %2006 = vector.broadcast %cst_408 : f32 to vector<1x1xf32>
    %2007 = arith.mulf %2005, %2006 : vector<1x1xf32>
    %2008 = vector.broadcast %2007 : vector<1x1xf32> to vector<16x16xf32>
    %2009 = arith.subf %1893, %2008 : vector<16x16xf32>
    %2010 = arith.mulf %2009, %2009 : vector<16x16xf32>
    %cst_409 = arith.constant dense<0.000000e+00> : vector<16xf32>
    %2011 = vector.multi_reduction <add>, %2010, %cst_409 [1] : vector<16x16xf32> to vector<16xf32>
    %2012 = vector.shape_cast %2011 : vector<16xf32> to vector<16x1xf32>
    %cst_410 = arith.constant dense<0.000000e+00> : vector<1xf32>
    %2013 = vector.multi_reduction <add>, %2012, %cst_410 [0] : vector<16x1xf32> to vector<1xf32>
    %2014 = vector.shape_cast %2013 : vector<1xf32> to vector<1x1xf32>
    %cst_411 = arith.constant 3.906250e-03 : f32
    %2015 = vector.broadcast %cst_411 : f32 to vector<1x1xf32>
    %2016 = arith.mulf %2014, %2015 : vector<1x1xf32>
    %c384 = arith.constant 384 : index
    %2017 = memref.load %arg1[%c384] : memref<504xf32, #tpu.memory_space<smem>>
    %cst_412 = arith.constant 9.99999974E-6 : f32
    %2018 = vector.broadcast %cst_412 : f32 to vector<1x1xf32>
    %2019 = arith.addf %2016, %2018 : vector<1x1xf32>
    %2020 = math.rsqrt %2019 : vector<1x1xf32>
    %2021 = vector.broadcast %2017 : f32 to vector<1x1xf32>
    %2022 = arith.mulf %2021, %2020 : vector<1x1xf32>
    %2023 = vector.broadcast %2022 : vector<1x1xf32> to vector<16x16xf32>
    %2024 = arith.mulf %2009, %2023 : vector<16x16xf32>
    %c388 = arith.constant 388 : index
    %2025 = memref.load %arg1[%c388] : memref<504xf32, #tpu.memory_space<smem>>
    %2026 = vector.broadcast %2025 : f32 to vector<16x16xf32>
    %2027 = arith.addf %2024, %2026 : vector<16x16xf32>
    %2028 = math.tanh %2027 : vector<16x16xf32>
    %cst_413 = arith.constant dense<0.000000e+00> : vector<16xf32>
    %2029 = vector.multi_reduction <add>, %1929, %cst_413 [1] : vector<16x16xf32> to vector<16xf32>
    %2030 = vector.shape_cast %2029 : vector<16xf32> to vector<16x1xf32>
    %cst_414 = arith.constant dense<0.000000e+00> : vector<1xf32>
    %2031 = vector.multi_reduction <add>, %2030, %cst_414 [0] : vector<16x1xf32> to vector<1xf32>
    %2032 = vector.shape_cast %2031 : vector<1xf32> to vector<1x1xf32>
    %cst_415 = arith.constant 3.906250e-03 : f32
    %2033 = vector.broadcast %cst_415 : f32 to vector<1x1xf32>
    %2034 = arith.mulf %2032, %2033 : vector<1x1xf32>
    %2035 = vector.broadcast %2034 : vector<1x1xf32> to vector<16x16xf32>
    %2036 = arith.subf %1929, %2035 : vector<16x16xf32>
    %2037 = arith.mulf %2036, %2036 : vector<16x16xf32>
    %cst_416 = arith.constant dense<0.000000e+00> : vector<16xf32>
    %2038 = vector.multi_reduction <add>, %2037, %cst_416 [1] : vector<16x16xf32> to vector<16xf32>
    %2039 = vector.shape_cast %2038 : vector<16xf32> to vector<16x1xf32>
    %cst_417 = arith.constant dense<0.000000e+00> : vector<1xf32>
    %2040 = vector.multi_reduction <add>, %2039, %cst_417 [0] : vector<16x1xf32> to vector<1xf32>
    %2041 = vector.shape_cast %2040 : vector<1xf32> to vector<1x1xf32>
    %cst_418 = arith.constant 3.906250e-03 : f32
    %2042 = vector.broadcast %cst_418 : f32 to vector<1x1xf32>
    %2043 = arith.mulf %2041, %2042 : vector<1x1xf32>
    %c385 = arith.constant 385 : index
    %2044 = memref.load %arg1[%c385] : memref<504xf32, #tpu.memory_space<smem>>
    %cst_419 = arith.constant 9.99999974E-6 : f32
    %2045 = vector.broadcast %cst_419 : f32 to vector<1x1xf32>
    %2046 = arith.addf %2043, %2045 : vector<1x1xf32>
    %2047 = math.rsqrt %2046 : vector<1x1xf32>
    %2048 = vector.broadcast %2044 : f32 to vector<1x1xf32>
    %2049 = arith.mulf %2048, %2047 : vector<1x1xf32>
    %2050 = vector.broadcast %2049 : vector<1x1xf32> to vector<16x16xf32>
    %2051 = arith.mulf %2036, %2050 : vector<16x16xf32>
    %c389 = arith.constant 389 : index
    %2052 = memref.load %arg1[%c389] : memref<504xf32, #tpu.memory_space<smem>>
    %2053 = vector.broadcast %2052 : f32 to vector<16x16xf32>
    %2054 = arith.addf %2051, %2053 : vector<16x16xf32>
    %2055 = math.tanh %2054 : vector<16x16xf32>
    %cst_420 = arith.constant dense<0.000000e+00> : vector<16xf32>
    %2056 = vector.multi_reduction <add>, %1965, %cst_420 [1] : vector<16x16xf32> to vector<16xf32>
    %2057 = vector.shape_cast %2056 : vector<16xf32> to vector<16x1xf32>
    %cst_421 = arith.constant dense<0.000000e+00> : vector<1xf32>
    %2058 = vector.multi_reduction <add>, %2057, %cst_421 [0] : vector<16x1xf32> to vector<1xf32>
    %2059 = vector.shape_cast %2058 : vector<1xf32> to vector<1x1xf32>
    %cst_422 = arith.constant 3.906250e-03 : f32
    %2060 = vector.broadcast %cst_422 : f32 to vector<1x1xf32>
    %2061 = arith.mulf %2059, %2060 : vector<1x1xf32>
    %2062 = vector.broadcast %2061 : vector<1x1xf32> to vector<16x16xf32>
    %2063 = arith.subf %1965, %2062 : vector<16x16xf32>
    %2064 = arith.mulf %2063, %2063 : vector<16x16xf32>
    %cst_423 = arith.constant dense<0.000000e+00> : vector<16xf32>
    %2065 = vector.multi_reduction <add>, %2064, %cst_423 [1] : vector<16x16xf32> to vector<16xf32>
    %2066 = vector.shape_cast %2065 : vector<16xf32> to vector<16x1xf32>
    %cst_424 = arith.constant dense<0.000000e+00> : vector<1xf32>
    %2067 = vector.multi_reduction <add>, %2066, %cst_424 [0] : vector<16x1xf32> to vector<1xf32>
    %2068 = vector.shape_cast %2067 : vector<1xf32> to vector<1x1xf32>
    %cst_425 = arith.constant 3.906250e-03 : f32
    %2069 = vector.broadcast %cst_425 : f32 to vector<1x1xf32>
    %2070 = arith.mulf %2068, %2069 : vector<1x1xf32>
    %c386 = arith.constant 386 : index
    %2071 = memref.load %arg1[%c386] : memref<504xf32, #tpu.memory_space<smem>>
    %cst_426 = arith.constant 9.99999974E-6 : f32
    %2072 = vector.broadcast %cst_426 : f32 to vector<1x1xf32>
    %2073 = arith.addf %2070, %2072 : vector<1x1xf32>
    %2074 = math.rsqrt %2073 : vector<1x1xf32>
    %2075 = vector.broadcast %2071 : f32 to vector<1x1xf32>
    %2076 = arith.mulf %2075, %2074 : vector<1x1xf32>
    %2077 = vector.broadcast %2076 : vector<1x1xf32> to vector<16x16xf32>
    %2078 = arith.mulf %2063, %2077 : vector<16x16xf32>
    %c390 = arith.constant 390 : index
    %2079 = memref.load %arg1[%c390] : memref<504xf32, #tpu.memory_space<smem>>
    %2080 = vector.broadcast %2079 : f32 to vector<16x16xf32>
    %2081 = arith.addf %2078, %2080 : vector<16x16xf32>
    %2082 = math.tanh %2081 : vector<16x16xf32>
    %cst_427 = arith.constant dense<0.000000e+00> : vector<16xf32>
    %2083 = vector.multi_reduction <add>, %2001, %cst_427 [1] : vector<16x16xf32> to vector<16xf32>
    %2084 = vector.shape_cast %2083 : vector<16xf32> to vector<16x1xf32>
    %cst_428 = arith.constant dense<0.000000e+00> : vector<1xf32>
    %2085 = vector.multi_reduction <add>, %2084, %cst_428 [0] : vector<16x1xf32> to vector<1xf32>
    %2086 = vector.shape_cast %2085 : vector<1xf32> to vector<1x1xf32>
    %cst_429 = arith.constant 3.906250e-03 : f32
    %2087 = vector.broadcast %cst_429 : f32 to vector<1x1xf32>
    %2088 = arith.mulf %2086, %2087 : vector<1x1xf32>
    %2089 = vector.broadcast %2088 : vector<1x1xf32> to vector<16x16xf32>
    %2090 = arith.subf %2001, %2089 : vector<16x16xf32>
    %2091 = arith.mulf %2090, %2090 : vector<16x16xf32>
    %cst_430 = arith.constant dense<0.000000e+00> : vector<16xf32>
    %2092 = vector.multi_reduction <add>, %2091, %cst_430 [1] : vector<16x16xf32> to vector<16xf32>
    %2093 = vector.shape_cast %2092 : vector<16xf32> to vector<16x1xf32>
    %cst_431 = arith.constant dense<0.000000e+00> : vector<1xf32>
    %2094 = vector.multi_reduction <add>, %2093, %cst_431 [0] : vector<16x1xf32> to vector<1xf32>
    %2095 = vector.shape_cast %2094 : vector<1xf32> to vector<1x1xf32>
    %cst_432 = arith.constant 3.906250e-03 : f32
    %2096 = vector.broadcast %cst_432 : f32 to vector<1x1xf32>
    %2097 = arith.mulf %2095, %2096 : vector<1x1xf32>
    %c387 = arith.constant 387 : index
    %2098 = memref.load %arg1[%c387] : memref<504xf32, #tpu.memory_space<smem>>
    %cst_433 = arith.constant 9.99999974E-6 : f32
    %2099 = vector.broadcast %cst_433 : f32 to vector<1x1xf32>
    %2100 = arith.addf %2097, %2099 : vector<1x1xf32>
    %2101 = math.rsqrt %2100 : vector<1x1xf32>
    %2102 = vector.broadcast %2098 : f32 to vector<1x1xf32>
    %2103 = arith.mulf %2102, %2101 : vector<1x1xf32>
    %2104 = vector.broadcast %2103 : vector<1x1xf32> to vector<16x16xf32>
    %2105 = arith.mulf %2090, %2104 : vector<16x16xf32>
    %c391 = arith.constant 391 : index
    %2106 = memref.load %arg1[%c391] : memref<504xf32, #tpu.memory_space<smem>>
    %2107 = vector.broadcast %2106 : f32 to vector<16x16xf32>
    %2108 = arith.addf %2105, %2107 : vector<16x16xf32>
    %2109 = math.tanh %2108 : vector<16x16xf32>
    %2110 = arith.addf %1302, %2028 : vector<16x16xf32>
    %2111 = arith.addf %1303, %2055 : vector<16x16xf32>
    %2112 = arith.addf %1304, %2082 : vector<16x16xf32>
    %2113 = arith.addf %1305, %2109 : vector<16x16xf32>
    %cst_434 = arith.constant 0.000000e+00 : f32
    %2114 = vector.broadcast %cst_434 : f32 to vector<16x16xf32>
    %cst_435 = arith.constant 0.000000e+00 : f32
    %2115 = vector.broadcast %cst_435 : f32 to vector<16x16xf32>
    %cst_436 = arith.constant 0.000000e+00 : f32
    %2116 = vector.broadcast %cst_436 : f32 to vector<16x16xf32>
    %cst_437 = arith.constant 0.000000e+00 : f32
    %2117 = vector.broadcast %cst_437 : f32 to vector<16x16xf32>
    %cst_438 = arith.constant 0.000000e+00 : f32
    %2118 = vector.broadcast %cst_438 : f32 to vector<16x16xf32>
    %cst_439 = arith.constant 0.000000e+00 : f32
    %2119 = vector.broadcast %cst_439 : f32 to vector<16x16xf32>
    %cst_440 = arith.constant 0.000000e+00 : f32
    %2120 = vector.broadcast %cst_440 : f32 to vector<16x16xf32>
    %cst_441 = arith.constant 0.000000e+00 : f32
    %2121 = vector.broadcast %cst_441 : f32 to vector<16x16xf32>
    %c392 = arith.constant 392 : index
    %2122 = memref.load %arg1[%c392] : memref<504xf32, #tpu.memory_space<smem>>
    %2123 = vector.broadcast %2122 : f32 to vector<16x16xf32>
    %2124 = arith.mulf %2123, %308 : vector<16x16xf32>
    %2125 = arith.addf %2114, %2124 : vector<16x16xf32>
    %c393 = arith.constant 393 : index
    %2126 = memref.load %arg1[%c393] : memref<504xf32, #tpu.memory_space<smem>>
    %2127 = vector.broadcast %2126 : f32 to vector<16x16xf32>
    %2128 = arith.mulf %2127, %308 : vector<16x16xf32>
    %2129 = arith.addf %2115, %2128 : vector<16x16xf32>
    %c394 = arith.constant 394 : index
    %2130 = memref.load %arg1[%c394] : memref<504xf32, #tpu.memory_space<smem>>
    %2131 = vector.broadcast %2130 : f32 to vector<16x16xf32>
    %2132 = arith.mulf %2131, %308 : vector<16x16xf32>
    %2133 = arith.addf %2116, %2132 : vector<16x16xf32>
    %c395 = arith.constant 395 : index
    %2134 = memref.load %arg1[%c395] : memref<504xf32, #tpu.memory_space<smem>>
    %2135 = vector.broadcast %2134 : f32 to vector<16x16xf32>
    %2136 = arith.mulf %2135, %308 : vector<16x16xf32>
    %2137 = arith.addf %2117, %2136 : vector<16x16xf32>
    %c396 = arith.constant 396 : index
    %2138 = memref.load %arg1[%c396] : memref<504xf32, #tpu.memory_space<smem>>
    %2139 = vector.broadcast %2138 : f32 to vector<16x16xf32>
    %2140 = arith.mulf %2139, %308 : vector<16x16xf32>
    %2141 = arith.addf %2118, %2140 : vector<16x16xf32>
    %c397 = arith.constant 397 : index
    %2142 = memref.load %arg1[%c397] : memref<504xf32, #tpu.memory_space<smem>>
    %2143 = vector.broadcast %2142 : f32 to vector<16x16xf32>
    %2144 = arith.mulf %2143, %308 : vector<16x16xf32>
    %2145 = arith.addf %2119, %2144 : vector<16x16xf32>
    %c398 = arith.constant 398 : index
    %2146 = memref.load %arg1[%c398] : memref<504xf32, #tpu.memory_space<smem>>
    %2147 = vector.broadcast %2146 : f32 to vector<16x16xf32>
    %2148 = arith.mulf %2147, %308 : vector<16x16xf32>
    %2149 = arith.addf %2120, %2148 : vector<16x16xf32>
    %c399 = arith.constant 399 : index
    %2150 = memref.load %arg1[%c399] : memref<504xf32, #tpu.memory_space<smem>>
    %2151 = vector.broadcast %2150 : f32 to vector<16x16xf32>
    %2152 = arith.mulf %2151, %308 : vector<16x16xf32>
    %2153 = arith.addf %2121, %2152 : vector<16x16xf32>
    %c400 = arith.constant 400 : index
    %2154 = memref.load %arg1[%c400] : memref<504xf32, #tpu.memory_space<smem>>
    %2155 = vector.broadcast %2154 : f32 to vector<16x16xf32>
    %2156 = arith.mulf %2155, %335 : vector<16x16xf32>
    %2157 = arith.addf %2125, %2156 : vector<16x16xf32>
    %c401 = arith.constant 401 : index
    %2158 = memref.load %arg1[%c401] : memref<504xf32, #tpu.memory_space<smem>>
    %2159 = vector.broadcast %2158 : f32 to vector<16x16xf32>
    %2160 = arith.mulf %2159, %335 : vector<16x16xf32>
    %2161 = arith.addf %2129, %2160 : vector<16x16xf32>
    %c402 = arith.constant 402 : index
    %2162 = memref.load %arg1[%c402] : memref<504xf32, #tpu.memory_space<smem>>
    %2163 = vector.broadcast %2162 : f32 to vector<16x16xf32>
    %2164 = arith.mulf %2163, %335 : vector<16x16xf32>
    %2165 = arith.addf %2133, %2164 : vector<16x16xf32>
    %c403 = arith.constant 403 : index
    %2166 = memref.load %arg1[%c403] : memref<504xf32, #tpu.memory_space<smem>>
    %2167 = vector.broadcast %2166 : f32 to vector<16x16xf32>
    %2168 = arith.mulf %2167, %335 : vector<16x16xf32>
    %2169 = arith.addf %2137, %2168 : vector<16x16xf32>
    %c404 = arith.constant 404 : index
    %2170 = memref.load %arg1[%c404] : memref<504xf32, #tpu.memory_space<smem>>
    %2171 = vector.broadcast %2170 : f32 to vector<16x16xf32>
    %2172 = arith.mulf %2171, %335 : vector<16x16xf32>
    %2173 = arith.addf %2141, %2172 : vector<16x16xf32>
    %c405 = arith.constant 405 : index
    %2174 = memref.load %arg1[%c405] : memref<504xf32, #tpu.memory_space<smem>>
    %2175 = vector.broadcast %2174 : f32 to vector<16x16xf32>
    %2176 = arith.mulf %2175, %335 : vector<16x16xf32>
    %2177 = arith.addf %2145, %2176 : vector<16x16xf32>
    %c406 = arith.constant 406 : index
    %2178 = memref.load %arg1[%c406] : memref<504xf32, #tpu.memory_space<smem>>
    %2179 = vector.broadcast %2178 : f32 to vector<16x16xf32>
    %2180 = arith.mulf %2179, %335 : vector<16x16xf32>
    %2181 = arith.addf %2149, %2180 : vector<16x16xf32>
    %c407 = arith.constant 407 : index
    %2182 = memref.load %arg1[%c407] : memref<504xf32, #tpu.memory_space<smem>>
    %2183 = vector.broadcast %2182 : f32 to vector<16x16xf32>
    %2184 = arith.mulf %2183, %335 : vector<16x16xf32>
    %2185 = arith.addf %2153, %2184 : vector<16x16xf32>
    %c408 = arith.constant 408 : index
    %2186 = memref.load %arg1[%c408] : memref<504xf32, #tpu.memory_space<smem>>
    %2187 = vector.broadcast %2186 : f32 to vector<16x16xf32>
    %2188 = arith.mulf %2187, %362 : vector<16x16xf32>
    %2189 = arith.addf %2157, %2188 : vector<16x16xf32>
    %c409 = arith.constant 409 : index
    %2190 = memref.load %arg1[%c409] : memref<504xf32, #tpu.memory_space<smem>>
    %2191 = vector.broadcast %2190 : f32 to vector<16x16xf32>
    %2192 = arith.mulf %2191, %362 : vector<16x16xf32>
    %2193 = arith.addf %2161, %2192 : vector<16x16xf32>
    %c410 = arith.constant 410 : index
    %2194 = memref.load %arg1[%c410] : memref<504xf32, #tpu.memory_space<smem>>
    %2195 = vector.broadcast %2194 : f32 to vector<16x16xf32>
    %2196 = arith.mulf %2195, %362 : vector<16x16xf32>
    %2197 = arith.addf %2165, %2196 : vector<16x16xf32>
    %c411 = arith.constant 411 : index
    %2198 = memref.load %arg1[%c411] : memref<504xf32, #tpu.memory_space<smem>>
    %2199 = vector.broadcast %2198 : f32 to vector<16x16xf32>
    %2200 = arith.mulf %2199, %362 : vector<16x16xf32>
    %2201 = arith.addf %2169, %2200 : vector<16x16xf32>
    %c412 = arith.constant 412 : index
    %2202 = memref.load %arg1[%c412] : memref<504xf32, #tpu.memory_space<smem>>
    %2203 = vector.broadcast %2202 : f32 to vector<16x16xf32>
    %2204 = arith.mulf %2203, %362 : vector<16x16xf32>
    %2205 = arith.addf %2173, %2204 : vector<16x16xf32>
    %c413 = arith.constant 413 : index
    %2206 = memref.load %arg1[%c413] : memref<504xf32, #tpu.memory_space<smem>>
    %2207 = vector.broadcast %2206 : f32 to vector<16x16xf32>
    %2208 = arith.mulf %2207, %362 : vector<16x16xf32>
    %2209 = arith.addf %2177, %2208 : vector<16x16xf32>
    %c414 = arith.constant 414 : index
    %2210 = memref.load %arg1[%c414] : memref<504xf32, #tpu.memory_space<smem>>
    %2211 = vector.broadcast %2210 : f32 to vector<16x16xf32>
    %2212 = arith.mulf %2211, %362 : vector<16x16xf32>
    %2213 = arith.addf %2181, %2212 : vector<16x16xf32>
    %c415 = arith.constant 415 : index
    %2214 = memref.load %arg1[%c415] : memref<504xf32, #tpu.memory_space<smem>>
    %2215 = vector.broadcast %2214 : f32 to vector<16x16xf32>
    %2216 = arith.mulf %2215, %362 : vector<16x16xf32>
    %2217 = arith.addf %2185, %2216 : vector<16x16xf32>
    %c416 = arith.constant 416 : index
    %2218 = memref.load %arg1[%c416] : memref<504xf32, #tpu.memory_space<smem>>
    %2219 = vector.broadcast %2218 : f32 to vector<16x16xf32>
    %2220 = arith.mulf %2219, %389 : vector<16x16xf32>
    %2221 = arith.addf %2189, %2220 : vector<16x16xf32>
    %c417 = arith.constant 417 : index
    %2222 = memref.load %arg1[%c417] : memref<504xf32, #tpu.memory_space<smem>>
    %2223 = vector.broadcast %2222 : f32 to vector<16x16xf32>
    %2224 = arith.mulf %2223, %389 : vector<16x16xf32>
    %2225 = arith.addf %2193, %2224 : vector<16x16xf32>
    %c418 = arith.constant 418 : index
    %2226 = memref.load %arg1[%c418] : memref<504xf32, #tpu.memory_space<smem>>
    %2227 = vector.broadcast %2226 : f32 to vector<16x16xf32>
    %2228 = arith.mulf %2227, %389 : vector<16x16xf32>
    %2229 = arith.addf %2197, %2228 : vector<16x16xf32>
    %c419 = arith.constant 419 : index
    %2230 = memref.load %arg1[%c419] : memref<504xf32, #tpu.memory_space<smem>>
    %2231 = vector.broadcast %2230 : f32 to vector<16x16xf32>
    %2232 = arith.mulf %2231, %389 : vector<16x16xf32>
    %2233 = arith.addf %2201, %2232 : vector<16x16xf32>
    %c420 = arith.constant 420 : index
    %2234 = memref.load %arg1[%c420] : memref<504xf32, #tpu.memory_space<smem>>
    %2235 = vector.broadcast %2234 : f32 to vector<16x16xf32>
    %2236 = arith.mulf %2235, %389 : vector<16x16xf32>
    %2237 = arith.addf %2205, %2236 : vector<16x16xf32>
    %c421 = arith.constant 421 : index
    %2238 = memref.load %arg1[%c421] : memref<504xf32, #tpu.memory_space<smem>>
    %2239 = vector.broadcast %2238 : f32 to vector<16x16xf32>
    %2240 = arith.mulf %2239, %389 : vector<16x16xf32>
    %2241 = arith.addf %2209, %2240 : vector<16x16xf32>
    %c422 = arith.constant 422 : index
    %2242 = memref.load %arg1[%c422] : memref<504xf32, #tpu.memory_space<smem>>
    %2243 = vector.broadcast %2242 : f32 to vector<16x16xf32>
    %2244 = arith.mulf %2243, %389 : vector<16x16xf32>
    %2245 = arith.addf %2213, %2244 : vector<16x16xf32>
    %c423 = arith.constant 423 : index
    %2246 = memref.load %arg1[%c423] : memref<504xf32, #tpu.memory_space<smem>>
    %2247 = vector.broadcast %2246 : f32 to vector<16x16xf32>
    %2248 = arith.mulf %2247, %389 : vector<16x16xf32>
    %2249 = arith.addf %2217, %2248 : vector<16x16xf32>
    %c424 = arith.constant 424 : index
    %2250 = memref.load %arg1[%c424] : memref<504xf32, #tpu.memory_space<smem>>
    %2251 = vector.broadcast %2250 : f32 to vector<16x16xf32>
    %2252 = arith.mulf %2251, %2110 : vector<16x16xf32>
    %2253 = arith.addf %2221, %2252 : vector<16x16xf32>
    %c425 = arith.constant 425 : index
    %2254 = memref.load %arg1[%c425] : memref<504xf32, #tpu.memory_space<smem>>
    %2255 = vector.broadcast %2254 : f32 to vector<16x16xf32>
    %2256 = arith.mulf %2255, %2110 : vector<16x16xf32>
    %2257 = arith.addf %2225, %2256 : vector<16x16xf32>
    %c426 = arith.constant 426 : index
    %2258 = memref.load %arg1[%c426] : memref<504xf32, #tpu.memory_space<smem>>
    %2259 = vector.broadcast %2258 : f32 to vector<16x16xf32>
    %2260 = arith.mulf %2259, %2110 : vector<16x16xf32>
    %2261 = arith.addf %2229, %2260 : vector<16x16xf32>
    %c427 = arith.constant 427 : index
    %2262 = memref.load %arg1[%c427] : memref<504xf32, #tpu.memory_space<smem>>
    %2263 = vector.broadcast %2262 : f32 to vector<16x16xf32>
    %2264 = arith.mulf %2263, %2110 : vector<16x16xf32>
    %2265 = arith.addf %2233, %2264 : vector<16x16xf32>
    %c428 = arith.constant 428 : index
    %2266 = memref.load %arg1[%c428] : memref<504xf32, #tpu.memory_space<smem>>
    %2267 = vector.broadcast %2266 : f32 to vector<16x16xf32>
    %2268 = arith.mulf %2267, %2110 : vector<16x16xf32>
    %2269 = arith.addf %2237, %2268 : vector<16x16xf32>
    %c429 = arith.constant 429 : index
    %2270 = memref.load %arg1[%c429] : memref<504xf32, #tpu.memory_space<smem>>
    %2271 = vector.broadcast %2270 : f32 to vector<16x16xf32>
    %2272 = arith.mulf %2271, %2110 : vector<16x16xf32>
    %2273 = arith.addf %2241, %2272 : vector<16x16xf32>
    %c430 = arith.constant 430 : index
    %2274 = memref.load %arg1[%c430] : memref<504xf32, #tpu.memory_space<smem>>
    %2275 = vector.broadcast %2274 : f32 to vector<16x16xf32>
    %2276 = arith.mulf %2275, %2110 : vector<16x16xf32>
    %2277 = arith.addf %2245, %2276 : vector<16x16xf32>
    %c431 = arith.constant 431 : index
    %2278 = memref.load %arg1[%c431] : memref<504xf32, #tpu.memory_space<smem>>
    %2279 = vector.broadcast %2278 : f32 to vector<16x16xf32>
    %2280 = arith.mulf %2279, %2110 : vector<16x16xf32>
    %2281 = arith.addf %2249, %2280 : vector<16x16xf32>
    %c432 = arith.constant 432 : index
    %2282 = memref.load %arg1[%c432] : memref<504xf32, #tpu.memory_space<smem>>
    %2283 = vector.broadcast %2282 : f32 to vector<16x16xf32>
    %2284 = arith.mulf %2283, %2111 : vector<16x16xf32>
    %2285 = arith.addf %2253, %2284 : vector<16x16xf32>
    %c433 = arith.constant 433 : index
    %2286 = memref.load %arg1[%c433] : memref<504xf32, #tpu.memory_space<smem>>
    %2287 = vector.broadcast %2286 : f32 to vector<16x16xf32>
    %2288 = arith.mulf %2287, %2111 : vector<16x16xf32>
    %2289 = arith.addf %2257, %2288 : vector<16x16xf32>
    %c434 = arith.constant 434 : index
    %2290 = memref.load %arg1[%c434] : memref<504xf32, #tpu.memory_space<smem>>
    %2291 = vector.broadcast %2290 : f32 to vector<16x16xf32>
    %2292 = arith.mulf %2291, %2111 : vector<16x16xf32>
    %2293 = arith.addf %2261, %2292 : vector<16x16xf32>
    %c435 = arith.constant 435 : index
    %2294 = memref.load %arg1[%c435] : memref<504xf32, #tpu.memory_space<smem>>
    %2295 = vector.broadcast %2294 : f32 to vector<16x16xf32>
    %2296 = arith.mulf %2295, %2111 : vector<16x16xf32>
    %2297 = arith.addf %2265, %2296 : vector<16x16xf32>
    %c436 = arith.constant 436 : index
    %2298 = memref.load %arg1[%c436] : memref<504xf32, #tpu.memory_space<smem>>
    %2299 = vector.broadcast %2298 : f32 to vector<16x16xf32>
    %2300 = arith.mulf %2299, %2111 : vector<16x16xf32>
    %2301 = arith.addf %2269, %2300 : vector<16x16xf32>
    %c437 = arith.constant 437 : index
    %2302 = memref.load %arg1[%c437] : memref<504xf32, #tpu.memory_space<smem>>
    %2303 = vector.broadcast %2302 : f32 to vector<16x16xf32>
    %2304 = arith.mulf %2303, %2111 : vector<16x16xf32>
    %2305 = arith.addf %2273, %2304 : vector<16x16xf32>
    %c438 = arith.constant 438 : index
    %2306 = memref.load %arg1[%c438] : memref<504xf32, #tpu.memory_space<smem>>
    %2307 = vector.broadcast %2306 : f32 to vector<16x16xf32>
    %2308 = arith.mulf %2307, %2111 : vector<16x16xf32>
    %2309 = arith.addf %2277, %2308 : vector<16x16xf32>
    %c439 = arith.constant 439 : index
    %2310 = memref.load %arg1[%c439] : memref<504xf32, #tpu.memory_space<smem>>
    %2311 = vector.broadcast %2310 : f32 to vector<16x16xf32>
    %2312 = arith.mulf %2311, %2111 : vector<16x16xf32>
    %2313 = arith.addf %2281, %2312 : vector<16x16xf32>
    %c440 = arith.constant 440 : index
    %2314 = memref.load %arg1[%c440] : memref<504xf32, #tpu.memory_space<smem>>
    %2315 = vector.broadcast %2314 : f32 to vector<16x16xf32>
    %2316 = arith.mulf %2315, %2112 : vector<16x16xf32>
    %2317 = arith.addf %2285, %2316 : vector<16x16xf32>
    %c441 = arith.constant 441 : index
    %2318 = memref.load %arg1[%c441] : memref<504xf32, #tpu.memory_space<smem>>
    %2319 = vector.broadcast %2318 : f32 to vector<16x16xf32>
    %2320 = arith.mulf %2319, %2112 : vector<16x16xf32>
    %2321 = arith.addf %2289, %2320 : vector<16x16xf32>
    %c442 = arith.constant 442 : index
    %2322 = memref.load %arg1[%c442] : memref<504xf32, #tpu.memory_space<smem>>
    %2323 = vector.broadcast %2322 : f32 to vector<16x16xf32>
    %2324 = arith.mulf %2323, %2112 : vector<16x16xf32>
    %2325 = arith.addf %2293, %2324 : vector<16x16xf32>
    %c443 = arith.constant 443 : index
    %2326 = memref.load %arg1[%c443] : memref<504xf32, #tpu.memory_space<smem>>
    %2327 = vector.broadcast %2326 : f32 to vector<16x16xf32>
    %2328 = arith.mulf %2327, %2112 : vector<16x16xf32>
    %2329 = arith.addf %2297, %2328 : vector<16x16xf32>
    %c444 = arith.constant 444 : index
    %2330 = memref.load %arg1[%c444] : memref<504xf32, #tpu.memory_space<smem>>
    %2331 = vector.broadcast %2330 : f32 to vector<16x16xf32>
    %2332 = arith.mulf %2331, %2112 : vector<16x16xf32>
    %2333 = arith.addf %2301, %2332 : vector<16x16xf32>
    %c445 = arith.constant 445 : index
    %2334 = memref.load %arg1[%c445] : memref<504xf32, #tpu.memory_space<smem>>
    %2335 = vector.broadcast %2334 : f32 to vector<16x16xf32>
    %2336 = arith.mulf %2335, %2112 : vector<16x16xf32>
    %2337 = arith.addf %2305, %2336 : vector<16x16xf32>
    %c446 = arith.constant 446 : index
    %2338 = memref.load %arg1[%c446] : memref<504xf32, #tpu.memory_space<smem>>
    %2339 = vector.broadcast %2338 : f32 to vector<16x16xf32>
    %2340 = arith.mulf %2339, %2112 : vector<16x16xf32>
    %2341 = arith.addf %2309, %2340 : vector<16x16xf32>
    %c447 = arith.constant 447 : index
    %2342 = memref.load %arg1[%c447] : memref<504xf32, #tpu.memory_space<smem>>
    %2343 = vector.broadcast %2342 : f32 to vector<16x16xf32>
    %2344 = arith.mulf %2343, %2112 : vector<16x16xf32>
    %2345 = arith.addf %2313, %2344 : vector<16x16xf32>
    %c448 = arith.constant 448 : index
    %2346 = memref.load %arg1[%c448] : memref<504xf32, #tpu.memory_space<smem>>
    %2347 = vector.broadcast %2346 : f32 to vector<16x16xf32>
    %2348 = arith.mulf %2347, %2113 : vector<16x16xf32>
    %2349 = arith.addf %2317, %2348 : vector<16x16xf32>
    %c449 = arith.constant 449 : index
    %2350 = memref.load %arg1[%c449] : memref<504xf32, #tpu.memory_space<smem>>
    %2351 = vector.broadcast %2350 : f32 to vector<16x16xf32>
    %2352 = arith.mulf %2351, %2113 : vector<16x16xf32>
    %2353 = arith.addf %2321, %2352 : vector<16x16xf32>
    %c450 = arith.constant 450 : index
    %2354 = memref.load %arg1[%c450] : memref<504xf32, #tpu.memory_space<smem>>
    %2355 = vector.broadcast %2354 : f32 to vector<16x16xf32>
    %2356 = arith.mulf %2355, %2113 : vector<16x16xf32>
    %2357 = arith.addf %2325, %2356 : vector<16x16xf32>
    %c451 = arith.constant 451 : index
    %2358 = memref.load %arg1[%c451] : memref<504xf32, #tpu.memory_space<smem>>
    %2359 = vector.broadcast %2358 : f32 to vector<16x16xf32>
    %2360 = arith.mulf %2359, %2113 : vector<16x16xf32>
    %2361 = arith.addf %2329, %2360 : vector<16x16xf32>
    %c452 = arith.constant 452 : index
    %2362 = memref.load %arg1[%c452] : memref<504xf32, #tpu.memory_space<smem>>
    %2363 = vector.broadcast %2362 : f32 to vector<16x16xf32>
    %2364 = arith.mulf %2363, %2113 : vector<16x16xf32>
    %2365 = arith.addf %2333, %2364 : vector<16x16xf32>
    %c453 = arith.constant 453 : index
    %2366 = memref.load %arg1[%c453] : memref<504xf32, #tpu.memory_space<smem>>
    %2367 = vector.broadcast %2366 : f32 to vector<16x16xf32>
    %2368 = arith.mulf %2367, %2113 : vector<16x16xf32>
    %2369 = arith.addf %2337, %2368 : vector<16x16xf32>
    %c454 = arith.constant 454 : index
    %2370 = memref.load %arg1[%c454] : memref<504xf32, #tpu.memory_space<smem>>
    %2371 = vector.broadcast %2370 : f32 to vector<16x16xf32>
    %2372 = arith.mulf %2371, %2113 : vector<16x16xf32>
    %2373 = arith.addf %2341, %2372 : vector<16x16xf32>
    %c455 = arith.constant 455 : index
    %2374 = memref.load %arg1[%c455] : memref<504xf32, #tpu.memory_space<smem>>
    %2375 = vector.broadcast %2374 : f32 to vector<16x16xf32>
    %2376 = arith.mulf %2375, %2113 : vector<16x16xf32>
    %2377 = arith.addf %2345, %2376 : vector<16x16xf32>
    %c456 = arith.constant 456 : index
    %2378 = memref.load %arg1[%c456] : memref<504xf32, #tpu.memory_space<smem>>
    %2379 = vector.broadcast %2378 : f32 to vector<16x16xf32>
    %2380 = arith.mulf %2379, %1220 : vector<16x16xf32>
    %2381 = arith.addf %2349, %2380 : vector<16x16xf32>
    %c457 = arith.constant 457 : index
    %2382 = memref.load %arg1[%c457] : memref<504xf32, #tpu.memory_space<smem>>
    %2383 = vector.broadcast %2382 : f32 to vector<16x16xf32>
    %2384 = arith.mulf %2383, %1220 : vector<16x16xf32>
    %2385 = arith.addf %2353, %2384 : vector<16x16xf32>
    %c458 = arith.constant 458 : index
    %2386 = memref.load %arg1[%c458] : memref<504xf32, #tpu.memory_space<smem>>
    %2387 = vector.broadcast %2386 : f32 to vector<16x16xf32>
    %2388 = arith.mulf %2387, %1220 : vector<16x16xf32>
    %2389 = arith.addf %2357, %2388 : vector<16x16xf32>
    %c459 = arith.constant 459 : index
    %2390 = memref.load %arg1[%c459] : memref<504xf32, #tpu.memory_space<smem>>
    %2391 = vector.broadcast %2390 : f32 to vector<16x16xf32>
    %2392 = arith.mulf %2391, %1220 : vector<16x16xf32>
    %2393 = arith.addf %2361, %2392 : vector<16x16xf32>
    %c460 = arith.constant 460 : index
    %2394 = memref.load %arg1[%c460] : memref<504xf32, #tpu.memory_space<smem>>
    %2395 = vector.broadcast %2394 : f32 to vector<16x16xf32>
    %2396 = arith.mulf %2395, %1220 : vector<16x16xf32>
    %2397 = arith.addf %2365, %2396 : vector<16x16xf32>
    %c461 = arith.constant 461 : index
    %2398 = memref.load %arg1[%c461] : memref<504xf32, #tpu.memory_space<smem>>
    %2399 = vector.broadcast %2398 : f32 to vector<16x16xf32>
    %2400 = arith.mulf %2399, %1220 : vector<16x16xf32>
    %2401 = arith.addf %2369, %2400 : vector<16x16xf32>
    %c462 = arith.constant 462 : index
    %2402 = memref.load %arg1[%c462] : memref<504xf32, #tpu.memory_space<smem>>
    %2403 = vector.broadcast %2402 : f32 to vector<16x16xf32>
    %2404 = arith.mulf %2403, %1220 : vector<16x16xf32>
    %2405 = arith.addf %2373, %2404 : vector<16x16xf32>
    %c463 = arith.constant 463 : index
    %2406 = memref.load %arg1[%c463] : memref<504xf32, #tpu.memory_space<smem>>
    %2407 = vector.broadcast %2406 : f32 to vector<16x16xf32>
    %2408 = arith.mulf %2407, %1220 : vector<16x16xf32>
    %2409 = arith.addf %2377, %2408 : vector<16x16xf32>
    %c464 = arith.constant 464 : index
    %2410 = memref.load %arg1[%c464] : memref<504xf32, #tpu.memory_space<smem>>
    %2411 = vector.broadcast %2410 : f32 to vector<16x16xf32>
    %2412 = arith.mulf %2411, %1247 : vector<16x16xf32>
    %2413 = arith.addf %2381, %2412 : vector<16x16xf32>
    %c465 = arith.constant 465 : index
    %2414 = memref.load %arg1[%c465] : memref<504xf32, #tpu.memory_space<smem>>
    %2415 = vector.broadcast %2414 : f32 to vector<16x16xf32>
    %2416 = arith.mulf %2415, %1247 : vector<16x16xf32>
    %2417 = arith.addf %2385, %2416 : vector<16x16xf32>
    %c466 = arith.constant 466 : index
    %2418 = memref.load %arg1[%c466] : memref<504xf32, #tpu.memory_space<smem>>
    %2419 = vector.broadcast %2418 : f32 to vector<16x16xf32>
    %2420 = arith.mulf %2419, %1247 : vector<16x16xf32>
    %2421 = arith.addf %2389, %2420 : vector<16x16xf32>
    %c467 = arith.constant 467 : index
    %2422 = memref.load %arg1[%c467] : memref<504xf32, #tpu.memory_space<smem>>
    %2423 = vector.broadcast %2422 : f32 to vector<16x16xf32>
    %2424 = arith.mulf %2423, %1247 : vector<16x16xf32>
    %2425 = arith.addf %2393, %2424 : vector<16x16xf32>
    %c468 = arith.constant 468 : index
    %2426 = memref.load %arg1[%c468] : memref<504xf32, #tpu.memory_space<smem>>
    %2427 = vector.broadcast %2426 : f32 to vector<16x16xf32>
    %2428 = arith.mulf %2427, %1247 : vector<16x16xf32>
    %2429 = arith.addf %2397, %2428 : vector<16x16xf32>
    %c469 = arith.constant 469 : index
    %2430 = memref.load %arg1[%c469] : memref<504xf32, #tpu.memory_space<smem>>
    %2431 = vector.broadcast %2430 : f32 to vector<16x16xf32>
    %2432 = arith.mulf %2431, %1247 : vector<16x16xf32>
    %2433 = arith.addf %2401, %2432 : vector<16x16xf32>
    %c470 = arith.constant 470 : index
    %2434 = memref.load %arg1[%c470] : memref<504xf32, #tpu.memory_space<smem>>
    %2435 = vector.broadcast %2434 : f32 to vector<16x16xf32>
    %2436 = arith.mulf %2435, %1247 : vector<16x16xf32>
    %2437 = arith.addf %2405, %2436 : vector<16x16xf32>
    %c471 = arith.constant 471 : index
    %2438 = memref.load %arg1[%c471] : memref<504xf32, #tpu.memory_space<smem>>
    %2439 = vector.broadcast %2438 : f32 to vector<16x16xf32>
    %2440 = arith.mulf %2439, %1247 : vector<16x16xf32>
    %2441 = arith.addf %2409, %2440 : vector<16x16xf32>
    %c472 = arith.constant 472 : index
    %2442 = memref.load %arg1[%c472] : memref<504xf32, #tpu.memory_space<smem>>
    %2443 = vector.broadcast %2442 : f32 to vector<16x16xf32>
    %2444 = arith.mulf %2443, %1274 : vector<16x16xf32>
    %2445 = arith.addf %2413, %2444 : vector<16x16xf32>
    %c473 = arith.constant 473 : index
    %2446 = memref.load %arg1[%c473] : memref<504xf32, #tpu.memory_space<smem>>
    %2447 = vector.broadcast %2446 : f32 to vector<16x16xf32>
    %2448 = arith.mulf %2447, %1274 : vector<16x16xf32>
    %2449 = arith.addf %2417, %2448 : vector<16x16xf32>
    %c474 = arith.constant 474 : index
    %2450 = memref.load %arg1[%c474] : memref<504xf32, #tpu.memory_space<smem>>
    %2451 = vector.broadcast %2450 : f32 to vector<16x16xf32>
    %2452 = arith.mulf %2451, %1274 : vector<16x16xf32>
    %2453 = arith.addf %2421, %2452 : vector<16x16xf32>
    %c475 = arith.constant 475 : index
    %2454 = memref.load %arg1[%c475] : memref<504xf32, #tpu.memory_space<smem>>
    %2455 = vector.broadcast %2454 : f32 to vector<16x16xf32>
    %2456 = arith.mulf %2455, %1274 : vector<16x16xf32>
    %2457 = arith.addf %2425, %2456 : vector<16x16xf32>
    %c476 = arith.constant 476 : index
    %2458 = memref.load %arg1[%c476] : memref<504xf32, #tpu.memory_space<smem>>
    %2459 = vector.broadcast %2458 : f32 to vector<16x16xf32>
    %2460 = arith.mulf %2459, %1274 : vector<16x16xf32>
    %2461 = arith.addf %2429, %2460 : vector<16x16xf32>
    %c477 = arith.constant 477 : index
    %2462 = memref.load %arg1[%c477] : memref<504xf32, #tpu.memory_space<smem>>
    %2463 = vector.broadcast %2462 : f32 to vector<16x16xf32>
    %2464 = arith.mulf %2463, %1274 : vector<16x16xf32>
    %2465 = arith.addf %2433, %2464 : vector<16x16xf32>
    %c478 = arith.constant 478 : index
    %2466 = memref.load %arg1[%c478] : memref<504xf32, #tpu.memory_space<smem>>
    %2467 = vector.broadcast %2466 : f32 to vector<16x16xf32>
    %2468 = arith.mulf %2467, %1274 : vector<16x16xf32>
    %2469 = arith.addf %2437, %2468 : vector<16x16xf32>
    %c479 = arith.constant 479 : index
    %2470 = memref.load %arg1[%c479] : memref<504xf32, #tpu.memory_space<smem>>
    %2471 = vector.broadcast %2470 : f32 to vector<16x16xf32>
    %2472 = arith.mulf %2471, %1274 : vector<16x16xf32>
    %2473 = arith.addf %2441, %2472 : vector<16x16xf32>
    %c480 = arith.constant 480 : index
    %2474 = memref.load %arg1[%c480] : memref<504xf32, #tpu.memory_space<smem>>
    %2475 = vector.broadcast %2474 : f32 to vector<16x16xf32>
    %2476 = arith.mulf %2475, %1301 : vector<16x16xf32>
    %2477 = arith.addf %2445, %2476 : vector<16x16xf32>
    %c481 = arith.constant 481 : index
    %2478 = memref.load %arg1[%c481] : memref<504xf32, #tpu.memory_space<smem>>
    %2479 = vector.broadcast %2478 : f32 to vector<16x16xf32>
    %2480 = arith.mulf %2479, %1301 : vector<16x16xf32>
    %2481 = arith.addf %2449, %2480 : vector<16x16xf32>
    %c482 = arith.constant 482 : index
    %2482 = memref.load %arg1[%c482] : memref<504xf32, #tpu.memory_space<smem>>
    %2483 = vector.broadcast %2482 : f32 to vector<16x16xf32>
    %2484 = arith.mulf %2483, %1301 : vector<16x16xf32>
    %2485 = arith.addf %2453, %2484 : vector<16x16xf32>
    %c483 = arith.constant 483 : index
    %2486 = memref.load %arg1[%c483] : memref<504xf32, #tpu.memory_space<smem>>
    %2487 = vector.broadcast %2486 : f32 to vector<16x16xf32>
    %2488 = arith.mulf %2487, %1301 : vector<16x16xf32>
    %2489 = arith.addf %2457, %2488 : vector<16x16xf32>
    %c484 = arith.constant 484 : index
    %2490 = memref.load %arg1[%c484] : memref<504xf32, #tpu.memory_space<smem>>
    %2491 = vector.broadcast %2490 : f32 to vector<16x16xf32>
    %2492 = arith.mulf %2491, %1301 : vector<16x16xf32>
    %2493 = arith.addf %2461, %2492 : vector<16x16xf32>
    %c485 = arith.constant 485 : index
    %2494 = memref.load %arg1[%c485] : memref<504xf32, #tpu.memory_space<smem>>
    %2495 = vector.broadcast %2494 : f32 to vector<16x16xf32>
    %2496 = arith.mulf %2495, %1301 : vector<16x16xf32>
    %2497 = arith.addf %2465, %2496 : vector<16x16xf32>
    %c486 = arith.constant 486 : index
    %2498 = memref.load %arg1[%c486] : memref<504xf32, #tpu.memory_space<smem>>
    %2499 = vector.broadcast %2498 : f32 to vector<16x16xf32>
    %2500 = arith.mulf %2499, %1301 : vector<16x16xf32>
    %2501 = arith.addf %2469, %2500 : vector<16x16xf32>
    %c487 = arith.constant 487 : index
    %2502 = memref.load %arg1[%c487] : memref<504xf32, #tpu.memory_space<smem>>
    %2503 = vector.broadcast %2502 : f32 to vector<16x16xf32>
    %2504 = arith.mulf %2503, %1301 : vector<16x16xf32>
    %2505 = arith.addf %2473, %2504 : vector<16x16xf32>
    %cst_442 = arith.constant dense<0.000000e+00> : vector<16xf32>
    %2506 = vector.multi_reduction <add>, %2477, %cst_442 [1] : vector<16x16xf32> to vector<16xf32>
    %2507 = vector.shape_cast %2506 : vector<16xf32> to vector<16x1xf32>
    %cst_443 = arith.constant dense<0.000000e+00> : vector<1xf32>
    %2508 = vector.multi_reduction <add>, %2507, %cst_443 [0] : vector<16x1xf32> to vector<1xf32>
    %2509 = vector.shape_cast %2508 : vector<1xf32> to vector<1x1xf32>
    %cst_444 = arith.constant 3.906250e-03 : f32
    %2510 = vector.broadcast %cst_444 : f32 to vector<1x1xf32>
    %2511 = arith.mulf %2509, %2510 : vector<1x1xf32>
    %2512 = vector.broadcast %2511 : vector<1x1xf32> to vector<16x16xf32>
    %2513 = arith.subf %2477, %2512 : vector<16x16xf32>
    %2514 = arith.mulf %2513, %2513 : vector<16x16xf32>
    %cst_445 = arith.constant dense<0.000000e+00> : vector<16xf32>
    %2515 = vector.multi_reduction <add>, %2514, %cst_445 [1] : vector<16x16xf32> to vector<16xf32>
    %2516 = vector.shape_cast %2515 : vector<16xf32> to vector<16x1xf32>
    %cst_446 = arith.constant dense<0.000000e+00> : vector<1xf32>
    %2517 = vector.multi_reduction <add>, %2516, %cst_446 [0] : vector<16x1xf32> to vector<1xf32>
    %2518 = vector.shape_cast %2517 : vector<1xf32> to vector<1x1xf32>
    %cst_447 = arith.constant 3.906250e-03 : f32
    %2519 = vector.broadcast %cst_447 : f32 to vector<1x1xf32>
    %2520 = arith.mulf %2518, %2519 : vector<1x1xf32>
    %c488 = arith.constant 488 : index
    %2521 = memref.load %arg1[%c488] : memref<504xf32, #tpu.memory_space<smem>>
    %cst_448 = arith.constant 9.99999974E-6 : f32
    %2522 = vector.broadcast %cst_448 : f32 to vector<1x1xf32>
    %2523 = arith.addf %2520, %2522 : vector<1x1xf32>
    %2524 = math.rsqrt %2523 : vector<1x1xf32>
    %2525 = vector.broadcast %2521 : f32 to vector<1x1xf32>
    %2526 = arith.mulf %2525, %2524 : vector<1x1xf32>
    %2527 = vector.broadcast %2526 : vector<1x1xf32> to vector<16x16xf32>
    %2528 = arith.mulf %2513, %2527 : vector<16x16xf32>
    %c496 = arith.constant 496 : index
    %2529 = memref.load %arg1[%c496] : memref<504xf32, #tpu.memory_space<smem>>
    %2530 = vector.broadcast %2529 : f32 to vector<16x16xf32>
    %2531 = arith.addf %2528, %2530 : vector<16x16xf32>
    %2532 = math.tanh %2531 : vector<16x16xf32>
    %cst_449 = arith.constant dense<0.000000e+00> : vector<16xf32>
    %2533 = vector.multi_reduction <add>, %2481, %cst_449 [1] : vector<16x16xf32> to vector<16xf32>
    %2534 = vector.shape_cast %2533 : vector<16xf32> to vector<16x1xf32>
    %cst_450 = arith.constant dense<0.000000e+00> : vector<1xf32>
    %2535 = vector.multi_reduction <add>, %2534, %cst_450 [0] : vector<16x1xf32> to vector<1xf32>
    %2536 = vector.shape_cast %2535 : vector<1xf32> to vector<1x1xf32>
    %cst_451 = arith.constant 3.906250e-03 : f32
    %2537 = vector.broadcast %cst_451 : f32 to vector<1x1xf32>
    %2538 = arith.mulf %2536, %2537 : vector<1x1xf32>
    %2539 = vector.broadcast %2538 : vector<1x1xf32> to vector<16x16xf32>
    %2540 = arith.subf %2481, %2539 : vector<16x16xf32>
    %2541 = arith.mulf %2540, %2540 : vector<16x16xf32>
    %cst_452 = arith.constant dense<0.000000e+00> : vector<16xf32>
    %2542 = vector.multi_reduction <add>, %2541, %cst_452 [1] : vector<16x16xf32> to vector<16xf32>
    %2543 = vector.shape_cast %2542 : vector<16xf32> to vector<16x1xf32>
    %cst_453 = arith.constant dense<0.000000e+00> : vector<1xf32>
    %2544 = vector.multi_reduction <add>, %2543, %cst_453 [0] : vector<16x1xf32> to vector<1xf32>
    %2545 = vector.shape_cast %2544 : vector<1xf32> to vector<1x1xf32>
    %cst_454 = arith.constant 3.906250e-03 : f32
    %2546 = vector.broadcast %cst_454 : f32 to vector<1x1xf32>
    %2547 = arith.mulf %2545, %2546 : vector<1x1xf32>
    %c489 = arith.constant 489 : index
    %2548 = memref.load %arg1[%c489] : memref<504xf32, #tpu.memory_space<smem>>
    %cst_455 = arith.constant 9.99999974E-6 : f32
    %2549 = vector.broadcast %cst_455 : f32 to vector<1x1xf32>
    %2550 = arith.addf %2547, %2549 : vector<1x1xf32>
    %2551 = math.rsqrt %2550 : vector<1x1xf32>
    %2552 = vector.broadcast %2548 : f32 to vector<1x1xf32>
    %2553 = arith.mulf %2552, %2551 : vector<1x1xf32>
    %2554 = vector.broadcast %2553 : vector<1x1xf32> to vector<16x16xf32>
    %2555 = arith.mulf %2540, %2554 : vector<16x16xf32>
    %c497 = arith.constant 497 : index
    %2556 = memref.load %arg1[%c497] : memref<504xf32, #tpu.memory_space<smem>>
    %2557 = vector.broadcast %2556 : f32 to vector<16x16xf32>
    %2558 = arith.addf %2555, %2557 : vector<16x16xf32>
    %2559 = math.tanh %2558 : vector<16x16xf32>
    %cst_456 = arith.constant dense<0.000000e+00> : vector<16xf32>
    %2560 = vector.multi_reduction <add>, %2485, %cst_456 [1] : vector<16x16xf32> to vector<16xf32>
    %2561 = vector.shape_cast %2560 : vector<16xf32> to vector<16x1xf32>
    %cst_457 = arith.constant dense<0.000000e+00> : vector<1xf32>
    %2562 = vector.multi_reduction <add>, %2561, %cst_457 [0] : vector<16x1xf32> to vector<1xf32>
    %2563 = vector.shape_cast %2562 : vector<1xf32> to vector<1x1xf32>
    %cst_458 = arith.constant 3.906250e-03 : f32
    %2564 = vector.broadcast %cst_458 : f32 to vector<1x1xf32>
    %2565 = arith.mulf %2563, %2564 : vector<1x1xf32>
    %2566 = vector.broadcast %2565 : vector<1x1xf32> to vector<16x16xf32>
    %2567 = arith.subf %2485, %2566 : vector<16x16xf32>
    %2568 = arith.mulf %2567, %2567 : vector<16x16xf32>
    %cst_459 = arith.constant dense<0.000000e+00> : vector<16xf32>
    %2569 = vector.multi_reduction <add>, %2568, %cst_459 [1] : vector<16x16xf32> to vector<16xf32>
    %2570 = vector.shape_cast %2569 : vector<16xf32> to vector<16x1xf32>
    %cst_460 = arith.constant dense<0.000000e+00> : vector<1xf32>
    %2571 = vector.multi_reduction <add>, %2570, %cst_460 [0] : vector<16x1xf32> to vector<1xf32>
    %2572 = vector.shape_cast %2571 : vector<1xf32> to vector<1x1xf32>
    %cst_461 = arith.constant 3.906250e-03 : f32
    %2573 = vector.broadcast %cst_461 : f32 to vector<1x1xf32>
    %2574 = arith.mulf %2572, %2573 : vector<1x1xf32>
    %c490 = arith.constant 490 : index
    %2575 = memref.load %arg1[%c490] : memref<504xf32, #tpu.memory_space<smem>>
    %cst_462 = arith.constant 9.99999974E-6 : f32
    %2576 = vector.broadcast %cst_462 : f32 to vector<1x1xf32>
    %2577 = arith.addf %2574, %2576 : vector<1x1xf32>
    %2578 = math.rsqrt %2577 : vector<1x1xf32>
    %2579 = vector.broadcast %2575 : f32 to vector<1x1xf32>
    %2580 = arith.mulf %2579, %2578 : vector<1x1xf32>
    %2581 = vector.broadcast %2580 : vector<1x1xf32> to vector<16x16xf32>
    %2582 = arith.mulf %2567, %2581 : vector<16x16xf32>
    %c498 = arith.constant 498 : index
    %2583 = memref.load %arg1[%c498] : memref<504xf32, #tpu.memory_space<smem>>
    %2584 = vector.broadcast %2583 : f32 to vector<16x16xf32>
    %2585 = arith.addf %2582, %2584 : vector<16x16xf32>
    %2586 = math.tanh %2585 : vector<16x16xf32>
    %cst_463 = arith.constant dense<0.000000e+00> : vector<16xf32>
    %2587 = vector.multi_reduction <add>, %2489, %cst_463 [1] : vector<16x16xf32> to vector<16xf32>
    %2588 = vector.shape_cast %2587 : vector<16xf32> to vector<16x1xf32>
    %cst_464 = arith.constant dense<0.000000e+00> : vector<1xf32>
    %2589 = vector.multi_reduction <add>, %2588, %cst_464 [0] : vector<16x1xf32> to vector<1xf32>
    %2590 = vector.shape_cast %2589 : vector<1xf32> to vector<1x1xf32>
    %cst_465 = arith.constant 3.906250e-03 : f32
    %2591 = vector.broadcast %cst_465 : f32 to vector<1x1xf32>
    %2592 = arith.mulf %2590, %2591 : vector<1x1xf32>
    %2593 = vector.broadcast %2592 : vector<1x1xf32> to vector<16x16xf32>
    %2594 = arith.subf %2489, %2593 : vector<16x16xf32>
    %2595 = arith.mulf %2594, %2594 : vector<16x16xf32>
    %cst_466 = arith.constant dense<0.000000e+00> : vector<16xf32>
    %2596 = vector.multi_reduction <add>, %2595, %cst_466 [1] : vector<16x16xf32> to vector<16xf32>
    %2597 = vector.shape_cast %2596 : vector<16xf32> to vector<16x1xf32>
    %cst_467 = arith.constant dense<0.000000e+00> : vector<1xf32>
    %2598 = vector.multi_reduction <add>, %2597, %cst_467 [0] : vector<16x1xf32> to vector<1xf32>
    %2599 = vector.shape_cast %2598 : vector<1xf32> to vector<1x1xf32>
    %cst_468 = arith.constant 3.906250e-03 : f32
    %2600 = vector.broadcast %cst_468 : f32 to vector<1x1xf32>
    %2601 = arith.mulf %2599, %2600 : vector<1x1xf32>
    %c491 = arith.constant 491 : index
    %2602 = memref.load %arg1[%c491] : memref<504xf32, #tpu.memory_space<smem>>
    %cst_469 = arith.constant 9.99999974E-6 : f32
    %2603 = vector.broadcast %cst_469 : f32 to vector<1x1xf32>
    %2604 = arith.addf %2601, %2603 : vector<1x1xf32>
    %2605 = math.rsqrt %2604 : vector<1x1xf32>
    %2606 = vector.broadcast %2602 : f32 to vector<1x1xf32>
    %2607 = arith.mulf %2606, %2605 : vector<1x1xf32>
    %2608 = vector.broadcast %2607 : vector<1x1xf32> to vector<16x16xf32>
    %2609 = arith.mulf %2594, %2608 : vector<16x16xf32>
    %c499 = arith.constant 499 : index
    %2610 = memref.load %arg1[%c499] : memref<504xf32, #tpu.memory_space<smem>>
    %2611 = vector.broadcast %2610 : f32 to vector<16x16xf32>
    %2612 = arith.addf %2609, %2611 : vector<16x16xf32>
    %2613 = math.tanh %2612 : vector<16x16xf32>
    %cst_470 = arith.constant dense<0.000000e+00> : vector<16xf32>
    %2614 = vector.multi_reduction <add>, %2493, %cst_470 [1] : vector<16x16xf32> to vector<16xf32>
    %2615 = vector.shape_cast %2614 : vector<16xf32> to vector<16x1xf32>
    %cst_471 = arith.constant dense<0.000000e+00> : vector<1xf32>
    %2616 = vector.multi_reduction <add>, %2615, %cst_471 [0] : vector<16x1xf32> to vector<1xf32>
    %2617 = vector.shape_cast %2616 : vector<1xf32> to vector<1x1xf32>
    %cst_472 = arith.constant 3.906250e-03 : f32
    %2618 = vector.broadcast %cst_472 : f32 to vector<1x1xf32>
    %2619 = arith.mulf %2617, %2618 : vector<1x1xf32>
    %2620 = vector.broadcast %2619 : vector<1x1xf32> to vector<16x16xf32>
    %2621 = arith.subf %2493, %2620 : vector<16x16xf32>
    %2622 = arith.mulf %2621, %2621 : vector<16x16xf32>
    %cst_473 = arith.constant dense<0.000000e+00> : vector<16xf32>
    %2623 = vector.multi_reduction <add>, %2622, %cst_473 [1] : vector<16x16xf32> to vector<16xf32>
    %2624 = vector.shape_cast %2623 : vector<16xf32> to vector<16x1xf32>
    %cst_474 = arith.constant dense<0.000000e+00> : vector<1xf32>
    %2625 = vector.multi_reduction <add>, %2624, %cst_474 [0] : vector<16x1xf32> to vector<1xf32>
    %2626 = vector.shape_cast %2625 : vector<1xf32> to vector<1x1xf32>
    %cst_475 = arith.constant 3.906250e-03 : f32
    %2627 = vector.broadcast %cst_475 : f32 to vector<1x1xf32>
    %2628 = arith.mulf %2626, %2627 : vector<1x1xf32>
    %c492 = arith.constant 492 : index
    %2629 = memref.load %arg1[%c492] : memref<504xf32, #tpu.memory_space<smem>>
    %cst_476 = arith.constant 9.99999974E-6 : f32
    %2630 = vector.broadcast %cst_476 : f32 to vector<1x1xf32>
    %2631 = arith.addf %2628, %2630 : vector<1x1xf32>
    %2632 = math.rsqrt %2631 : vector<1x1xf32>
    %2633 = vector.broadcast %2629 : f32 to vector<1x1xf32>
    %2634 = arith.mulf %2633, %2632 : vector<1x1xf32>
    %2635 = vector.broadcast %2634 : vector<1x1xf32> to vector<16x16xf32>
    %2636 = arith.mulf %2621, %2635 : vector<16x16xf32>
    %c500 = arith.constant 500 : index
    %2637 = memref.load %arg1[%c500] : memref<504xf32, #tpu.memory_space<smem>>
    %2638 = vector.broadcast %2637 : f32 to vector<16x16xf32>
    %2639 = arith.addf %2636, %2638 : vector<16x16xf32>
    %2640 = math.tanh %2639 : vector<16x16xf32>
    %cst_477 = arith.constant dense<0.000000e+00> : vector<16xf32>
    %2641 = vector.multi_reduction <add>, %2497, %cst_477 [1] : vector<16x16xf32> to vector<16xf32>
    %2642 = vector.shape_cast %2641 : vector<16xf32> to vector<16x1xf32>
    %cst_478 = arith.constant dense<0.000000e+00> : vector<1xf32>
    %2643 = vector.multi_reduction <add>, %2642, %cst_478 [0] : vector<16x1xf32> to vector<1xf32>
    %2644 = vector.shape_cast %2643 : vector<1xf32> to vector<1x1xf32>
    %cst_479 = arith.constant 3.906250e-03 : f32
    %2645 = vector.broadcast %cst_479 : f32 to vector<1x1xf32>
    %2646 = arith.mulf %2644, %2645 : vector<1x1xf32>
    %2647 = vector.broadcast %2646 : vector<1x1xf32> to vector<16x16xf32>
    %2648 = arith.subf %2497, %2647 : vector<16x16xf32>
    %2649 = arith.mulf %2648, %2648 : vector<16x16xf32>
    %cst_480 = arith.constant dense<0.000000e+00> : vector<16xf32>
    %2650 = vector.multi_reduction <add>, %2649, %cst_480 [1] : vector<16x16xf32> to vector<16xf32>
    %2651 = vector.shape_cast %2650 : vector<16xf32> to vector<16x1xf32>
    %cst_481 = arith.constant dense<0.000000e+00> : vector<1xf32>
    %2652 = vector.multi_reduction <add>, %2651, %cst_481 [0] : vector<16x1xf32> to vector<1xf32>
    %2653 = vector.shape_cast %2652 : vector<1xf32> to vector<1x1xf32>
    %cst_482 = arith.constant 3.906250e-03 : f32
    %2654 = vector.broadcast %cst_482 : f32 to vector<1x1xf32>
    %2655 = arith.mulf %2653, %2654 : vector<1x1xf32>
    %c493 = arith.constant 493 : index
    %2656 = memref.load %arg1[%c493] : memref<504xf32, #tpu.memory_space<smem>>
    %cst_483 = arith.constant 9.99999974E-6 : f32
    %2657 = vector.broadcast %cst_483 : f32 to vector<1x1xf32>
    %2658 = arith.addf %2655, %2657 : vector<1x1xf32>
    %2659 = math.rsqrt %2658 : vector<1x1xf32>
    %2660 = vector.broadcast %2656 : f32 to vector<1x1xf32>
    %2661 = arith.mulf %2660, %2659 : vector<1x1xf32>
    %2662 = vector.broadcast %2661 : vector<1x1xf32> to vector<16x16xf32>
    %2663 = arith.mulf %2648, %2662 : vector<16x16xf32>
    %c501 = arith.constant 501 : index
    %2664 = memref.load %arg1[%c501] : memref<504xf32, #tpu.memory_space<smem>>
    %2665 = vector.broadcast %2664 : f32 to vector<16x16xf32>
    %2666 = arith.addf %2663, %2665 : vector<16x16xf32>
    %2667 = math.tanh %2666 : vector<16x16xf32>
    %cst_484 = arith.constant dense<0.000000e+00> : vector<16xf32>
    %2668 = vector.multi_reduction <add>, %2501, %cst_484 [1] : vector<16x16xf32> to vector<16xf32>
    %2669 = vector.shape_cast %2668 : vector<16xf32> to vector<16x1xf32>
    %cst_485 = arith.constant dense<0.000000e+00> : vector<1xf32>
    %2670 = vector.multi_reduction <add>, %2669, %cst_485 [0] : vector<16x1xf32> to vector<1xf32>
    %2671 = vector.shape_cast %2670 : vector<1xf32> to vector<1x1xf32>
    %cst_486 = arith.constant 3.906250e-03 : f32
    %2672 = vector.broadcast %cst_486 : f32 to vector<1x1xf32>
    %2673 = arith.mulf %2671, %2672 : vector<1x1xf32>
    %2674 = vector.broadcast %2673 : vector<1x1xf32> to vector<16x16xf32>
    %2675 = arith.subf %2501, %2674 : vector<16x16xf32>
    %2676 = arith.mulf %2675, %2675 : vector<16x16xf32>
    %cst_487 = arith.constant dense<0.000000e+00> : vector<16xf32>
    %2677 = vector.multi_reduction <add>, %2676, %cst_487 [1] : vector<16x16xf32> to vector<16xf32>
    %2678 = vector.shape_cast %2677 : vector<16xf32> to vector<16x1xf32>
    %cst_488 = arith.constant dense<0.000000e+00> : vector<1xf32>
    %2679 = vector.multi_reduction <add>, %2678, %cst_488 [0] : vector<16x1xf32> to vector<1xf32>
    %2680 = vector.shape_cast %2679 : vector<1xf32> to vector<1x1xf32>
    %cst_489 = arith.constant 3.906250e-03 : f32
    %2681 = vector.broadcast %cst_489 : f32 to vector<1x1xf32>
    %2682 = arith.mulf %2680, %2681 : vector<1x1xf32>
    %c494 = arith.constant 494 : index
    %2683 = memref.load %arg1[%c494] : memref<504xf32, #tpu.memory_space<smem>>
    %cst_490 = arith.constant 9.99999974E-6 : f32
    %2684 = vector.broadcast %cst_490 : f32 to vector<1x1xf32>
    %2685 = arith.addf %2682, %2684 : vector<1x1xf32>
    %2686 = math.rsqrt %2685 : vector<1x1xf32>
    %2687 = vector.broadcast %2683 : f32 to vector<1x1xf32>
    %2688 = arith.mulf %2687, %2686 : vector<1x1xf32>
    %2689 = vector.broadcast %2688 : vector<1x1xf32> to vector<16x16xf32>
    %2690 = arith.mulf %2675, %2689 : vector<16x16xf32>
    %c502 = arith.constant 502 : index
    %2691 = memref.load %arg1[%c502] : memref<504xf32, #tpu.memory_space<smem>>
    %2692 = vector.broadcast %2691 : f32 to vector<16x16xf32>
    %2693 = arith.addf %2690, %2692 : vector<16x16xf32>
    %2694 = math.tanh %2693 : vector<16x16xf32>
    %cst_491 = arith.constant dense<0.000000e+00> : vector<16xf32>
    %2695 = vector.multi_reduction <add>, %2505, %cst_491 [1] : vector<16x16xf32> to vector<16xf32>
    %2696 = vector.shape_cast %2695 : vector<16xf32> to vector<16x1xf32>
    %cst_492 = arith.constant dense<0.000000e+00> : vector<1xf32>
    %2697 = vector.multi_reduction <add>, %2696, %cst_492 [0] : vector<16x1xf32> to vector<1xf32>
    %2698 = vector.shape_cast %2697 : vector<1xf32> to vector<1x1xf32>
    %cst_493 = arith.constant 3.906250e-03 : f32
    %2699 = vector.broadcast %cst_493 : f32 to vector<1x1xf32>
    %2700 = arith.mulf %2698, %2699 : vector<1x1xf32>
    %2701 = vector.broadcast %2700 : vector<1x1xf32> to vector<16x16xf32>
    %2702 = arith.subf %2505, %2701 : vector<16x16xf32>
    %2703 = arith.mulf %2702, %2702 : vector<16x16xf32>
    %cst_494 = arith.constant dense<0.000000e+00> : vector<16xf32>
    %2704 = vector.multi_reduction <add>, %2703, %cst_494 [1] : vector<16x16xf32> to vector<16xf32>
    %2705 = vector.shape_cast %2704 : vector<16xf32> to vector<16x1xf32>
    %cst_495 = arith.constant dense<0.000000e+00> : vector<1xf32>
    %2706 = vector.multi_reduction <add>, %2705, %cst_495 [0] : vector<16x1xf32> to vector<1xf32>
    %2707 = vector.shape_cast %2706 : vector<1xf32> to vector<1x1xf32>
    %cst_496 = arith.constant 3.906250e-03 : f32
    %2708 = vector.broadcast %cst_496 : f32 to vector<1x1xf32>
    %2709 = arith.mulf %2707, %2708 : vector<1x1xf32>
    %c495 = arith.constant 495 : index
    %2710 = memref.load %arg1[%c495] : memref<504xf32, #tpu.memory_space<smem>>
    %cst_497 = arith.constant 9.99999974E-6 : f32
    %2711 = vector.broadcast %cst_497 : f32 to vector<1x1xf32>
    %2712 = arith.addf %2709, %2711 : vector<1x1xf32>
    %2713 = math.rsqrt %2712 : vector<1x1xf32>
    %2714 = vector.broadcast %2710 : f32 to vector<1x1xf32>
    %2715 = arith.mulf %2714, %2713 : vector<1x1xf32>
    %2716 = vector.broadcast %2715 : vector<1x1xf32> to vector<16x16xf32>
    %2717 = arith.mulf %2702, %2716 : vector<16x16xf32>
    %c503 = arith.constant 503 : index
    %2718 = memref.load %arg1[%c503] : memref<504xf32, #tpu.memory_space<smem>>
    %2719 = vector.broadcast %2718 : f32 to vector<16x16xf32>
    %2720 = arith.addf %2717, %2719 : vector<16x16xf32>
    %2721 = math.tanh %2720 : vector<16x16xf32>
    %c0_498 = arith.constant 0 : index
    %c0_499 = arith.constant 0 : index
    %c0_500 = arith.constant 0 : index
    %c0_501 = arith.constant 0 : index
    %2722 = vector.load %arg3[%c0_498, %c0_499, %c0_500, %c0_501] : memref<1x8x16x16xf32, #tpu.memory_space<vmem>>, vector<1x1x16x16xf32>
    %2723 = vector.shape_cast %2722 : vector<1x1x16x16xf32> to vector<16x16xf32>
    %2724 = vector.shape_cast %2532 : vector<16x16xf32> to vector<1x1x16x16xf32>
    tpu.vector_store %arg3[%c0_498, %c0_499, %c0_500, %c0_501], %2724 {strides = array<i32>} : memref<1x8x16x16xf32, #tpu.memory_space<vmem>>, vector<1x1x16x16xf32>,
    %c0_502 = arith.constant 0 : index
    %c1_503 = arith.constant 1 : index
    %c0_504 = arith.constant 0 : index
    %c0_505 = arith.constant 0 : index
    %2725 = vector.load %arg3[%c0_502, %c1_503, %c0_504, %c0_505] : memref<1x8x16x16xf32, #tpu.memory_space<vmem>>, vector<1x1x16x16xf32>
    %2726 = vector.shape_cast %2725 : vector<1x1x16x16xf32> to vector<16x16xf32>
    %2727 = vector.shape_cast %2559 : vector<16x16xf32> to vector<1x1x16x16xf32>
    tpu.vector_store %arg3[%c0_502, %c1_503, %c0_504, %c0_505], %2727 {strides = array<i32>} : memref<1x8x16x16xf32, #tpu.memory_space<vmem>>, vector<1x1x16x16xf32>,
    %c0_506 = arith.constant 0 : index
    %c2_507 = arith.constant 2 : index
    %c0_508 = arith.constant 0 : index
    %c0_509 = arith.constant 0 : index
    %2728 = vector.load %arg3[%c0_506, %c2_507, %c0_508, %c0_509] : memref<1x8x16x16xf32, #tpu.memory_space<vmem>>, vector<1x1x16x16xf32>
    %2729 = vector.shape_cast %2728 : vector<1x1x16x16xf32> to vector<16x16xf32>
    %2730 = vector.shape_cast %2586 : vector<16x16xf32> to vector<1x1x16x16xf32>
    tpu.vector_store %arg3[%c0_506, %c2_507, %c0_508, %c0_509], %2730 {strides = array<i32>} : memref<1x8x16x16xf32, #tpu.memory_space<vmem>>, vector<1x1x16x16xf32>,
    %c0_510 = arith.constant 0 : index
    %c3_511 = arith.constant 3 : index
    %c0_512 = arith.constant 0 : index
    %c0_513 = arith.constant 0 : index
    %2731 = vector.load %arg3[%c0_510, %c3_511, %c0_512, %c0_513] : memref<1x8x16x16xf32, #tpu.memory_space<vmem>>, vector<1x1x16x16xf32>
    %2732 = vector.shape_cast %2731 : vector<1x1x16x16xf32> to vector<16x16xf32>
    %2733 = vector.shape_cast %2613 : vector<16x16xf32> to vector<1x1x16x16xf32>
    tpu.vector_store %arg3[%c0_510, %c3_511, %c0_512, %c0_513], %2733 {strides = array<i32>} : memref<1x8x16x16xf32, #tpu.memory_space<vmem>>, vector<1x1x16x16xf32>,
    %c0_514 = arith.constant 0 : index
    %c4_515 = arith.constant 4 : index
    %c0_516 = arith.constant 0 : index
    %c0_517 = arith.constant 0 : index
    %2734 = vector.load %arg3[%c0_514, %c4_515, %c0_516, %c0_517] : memref<1x8x16x16xf32, #tpu.memory_space<vmem>>, vector<1x1x16x16xf32>
    %2735 = vector.shape_cast %2734 : vector<1x1x16x16xf32> to vector<16x16xf32>
    %2736 = vector.shape_cast %2640 : vector<16x16xf32> to vector<1x1x16x16xf32>
    tpu.vector_store %arg3[%c0_514, %c4_515, %c0_516, %c0_517], %2736 {strides = array<i32>} : memref<1x8x16x16xf32, #tpu.memory_space<vmem>>, vector<1x1x16x16xf32>,
    %c0_518 = arith.constant 0 : index
    %c5_519 = arith.constant 5 : index
    %c0_520 = arith.constant 0 : index
    %c0_521 = arith.constant 0 : index
    %2737 = vector.load %arg3[%c0_518, %c5_519, %c0_520, %c0_521] : memref<1x8x16x16xf32, #tpu.memory_space<vmem>>, vector<1x1x16x16xf32>
    %2738 = vector.shape_cast %2737 : vector<1x1x16x16xf32> to vector<16x16xf32>
    %2739 = vector.shape_cast %2667 : vector<16x16xf32> to vector<1x1x16x16xf32>
    tpu.vector_store %arg3[%c0_518, %c5_519, %c0_520, %c0_521], %2739 {strides = array<i32>} : memref<1x8x16x16xf32, #tpu.memory_space<vmem>>, vector<1x1x16x16xf32>,
    %c0_522 = arith.constant 0 : index
    %c6_523 = arith.constant 6 : index
    %c0_524 = arith.constant 0 : index
    %c0_525 = arith.constant 0 : index
    %2740 = vector.load %arg3[%c0_522, %c6_523, %c0_524, %c0_525] : memref<1x8x16x16xf32, #tpu.memory_space<vmem>>, vector<1x1x16x16xf32>
    %2741 = vector.shape_cast %2740 : vector<1x1x16x16xf32> to vector<16x16xf32>
    %2742 = vector.shape_cast %2694 : vector<16x16xf32> to vector<1x1x16x16xf32>
    tpu.vector_store %arg3[%c0_522, %c6_523, %c0_524, %c0_525], %2742 {strides = array<i32>} : memref<1x8x16x16xf32, #tpu.memory_space<vmem>>, vector<1x1x16x16xf32>,
    %c0_526 = arith.constant 0 : index
    %c7_527 = arith.constant 7 : index
    %c0_528 = arith.constant 0 : index
    %c0_529 = arith.constant 0 : index
    %2743 = vector.load %arg3[%c0_526, %c7_527, %c0_528, %c0_529] : memref<1x8x16x16xf32, #tpu.memory_space<vmem>>, vector<1x1x16x16xf32>
    %2744 = vector.shape_cast %2743 : vector<1x1x16x16xf32> to vector<16x16xf32>
    %2745 = vector.shape_cast %2721 : vector<16x16xf32> to vector<1x1x16x16xf32>
    tpu.vector_store %arg3[%c0_526, %c7_527, %c0_528, %c0_529], %2745 {strides = array<i32>} : memref<1x8x16x16xf32, #tpu.memory_space<vmem>>, vector<1x1x16x16xf32>,
    return
  }
  func.func @transform_0(%arg0: i32) -> i32 {
    %c0_i32 = arith.constant 0 : i32
    %c0_i32_0 = arith.constant 0 : i32
    return %c0_i32 : i32
  }
  func.func @transform_1(%arg0: i32) -> (i32, i32, i32, i32) {
    %c0_i32 = arith.constant 0 : i32
    %c0_i32_0 = arith.constant 0 : i32
    %c0_i32_1 = arith.constant 0 : i32
    %c0_i32_2 = arith.constant 0 : i32
    return %arg0, %c0_i32, %c0_i32_0, %c0_i32_1 : i32, i32, i32, i32
  }
  func.func @transform_2(%arg0: i32) -> (i32, i32, i32, i32) {
    %c0_i32 = arith.constant 0 : i32
    %c0_i32_0 = arith.constant 0 : i32
    %c0_i32_1 = arith.constant 0 : i32
    %c0_i32_2 = arith.constant 0 : i32
    return %arg0, %c0_i32, %c0_i32_0, %c0_i32_1 : i32, i32, i32, i32
  }
}

</mosaic_0001>

<llo_original>
// kernel: c2f1_pallas.1
$region0: #{c2f1_pallas.1}
  #allocation0 [shape = 'u32[]', space=smem, size = 0x4, offset = 0x4, fixed_abs, tag = 'smem constant byte address 0x4 - core index']
  #allocation1 [shape = 'u32[144,128]{1,0:T(1,128)}', space=vmem, size = 0x12000, scoped, tag = 'internal scratch']
  #allocation2 [shape = 'f32[18,18]{1,0:T(8,128)}', space=vmem, size = 0x3000, scoped, tag = 'scratch operand']
  %s0 = inlined_call_operand.vmem [shape: f32[504], index: 0, kind: input, shape index: {}]
  %s1 = inlined_call_operand.vmem [shape: f32[2,8,16,16], index: 1, kind: input, shape index: {}]
  %s2 = inlined_call_operand.hbm [shape: f32[2,8,16,16], index: 2, kind: output, shape index: {}]
  %s3 = sld [smem:[#allocation0]]
  $region45: #{c2f1_pallas.1} parent=0
    _
  %s5 = ssub.s32 1, %s3
  %s6 = scalar_select 0, %s5, %s3
  $region1: #{c2f1_pallas.1} parent=0
    #allocation3 [shape = 'u8[2048]{0}', space=smem, size = 0x800, scoped, tag = 'input window, operand 0, single buffered']
    #allocation4 [shape = 's32[2]{0}', space=sflag, size = 0x8, scoped, tag = 'scoped memory for c2f1_pallas.1']
    #allocation5 [shape = 's32[2]{0}', space=sflag, size = 0x8, scoped, tag = 'scoped memory for c2f1_pallas.1']
    #allocation6 [shape = 'u8[131072]{0}', space=vmem, size = 0x20000, scoped, tag = 'output window, operand 0']
    %7 = vsyncpa [#allocation5], 0
    %8 = vsyncpa [#allocation4], 0
    %s9 = scalar_lea.sflag [#allocation4], 1
    %10 = vsyncpa %s9, 0
    loop: start=0, step=1, limit=4
    $region2: #{c2f1_pallas.1} parent=1 // loop_pre_header
      _
    $region3: #{c2f1_pallas.1} parent=1 // loop_header
      %s12 = sphi 0, %s16
      %p13 = scmp.ge.s32.totalorder %s12, 4
      %s20 = sphi 0, %s20
      %s22 = sphi 0, %s20
      %s23 = sphi 0, %s22
      %s37 = sphi 0, %s23
      %s43 = sphi 0, %s45
      %s46 = sphi 0, %s43
      %s47 = sphi 0, %s46
      %s63 = sphi 0, %s47
      %s69 = sphi 0, %s71
      %s72 = sphi 0, %s69
      %s73 = sphi 0, %s72
      %s89 = sphi 0, %s73
    $region4: #{c2f1_pallas.1} parent=1 // loop_header_branch
      %15 = sbr.rel (%p13) target = $region8
    $region5: #{c2f1_pallas.1} parent=1 // loop_body
      %s17 = ssub.s32 %s12, 1
      %s18 = ssub.s32 %s12, 2
      %s19 = sadd.s32 %s12, 1
      %s21 = sadd.s32 %s20, 1
      %p24 = scmp.eq.s32.totalorder %s12, 1
      %p25 = scmp.ne.s32.totalorder %s20, %s22
      %p26 = scmp.eq.s32.totalorder %s12, 0
      %p27 = por %p25, %p26
      %p28 = scmp.ne.s32.totalorder %s20, %s22
      %p29 = scmp.eq.s32.totalorder %s17, 1
      %p30 = por %p28, %p29
      %p31 = scmp.ne.s32.totalorder %s22, %s23
      %p32 = scmp.eq.s32.totalorder %s17, 0
      %p33 = por %p31, %p32
      %p34 = scmp.ne.s32.totalorder %s22, %s23
      %p35 = scmp.eq.s32.totalorder %s18, 1
      %p36 = por %p34, %p35
      %p38 = scmp.ne.s32.totalorder %s23, %s37
      %p39 = scmp.eq.s32.totalorder %s18, 0
      %p40 = por %p38, %p39
      %s41 = ssub.s32 %s12, %s19
      %p42 = scmp.eq.s32.totalorder %s41, 0
      %s44 = sadd.s32 %s43, 1
      %s45 = scalar_select %p42, %s43, %s44
      %p48 = pneg %p42
      %p49 = scmp.eq.s32.totalorder %s12, 1
      %p50 = por %p48, %p49
      %p51 = scmp.ne.s32.totalorder %s43, %s46
      %p52 = scmp.eq.s32.totalorder %s12, 0
      %p53 = por %p51, %p52
      %p54 = scmp.ne.s32.totalorder %s43, %s46
      %p55 = scmp.eq.s32.totalorder %s17, 1
      %p56 = por %p54, %p55
      %p57 = scmp.ne.s32.totalorder %s46, %s47
      %p58 = scmp.eq.s32.totalorder %s17, 0
      %p59 = por %p57, %p58
      %p60 = scmp.ne.s32.totalorder %s46, %s47
      %p61 = scmp.eq.s32.totalorder %s18, 1
      %p62 = por %p60, %p61
      %p64 = scmp.ne.s32.totalorder %s47, %s63
      %p65 = scmp.eq.s32.totalorder %s18, 0
      %p66 = por %p64, %p65
      %s67 = ssub.s32 %s12, %s19
      %p68 = scmp.eq.s32.totalorder %s67, 0
      %s70 = sadd.s32 %s69, 1
      %s71 = scalar_select %p68, %s69, %s70
      %p74 = pneg %p68
      %p75 = scmp.eq.s32.totalorder %s12, 1
      %p76 = por %p74, %p75
      %p77 = scmp.ne.s32.totalorder %s69, %s72
      %p78 = scmp.eq.s32.totalorder %s12, 0
      %p79 = por %p77, %p78
      %p80 = scmp.ne.s32.totalorder %s69, %s72
      %p81 = scmp.eq.s32.totalorder %s17, 1
      %p82 = por %p80, %p81
      %p83 = scmp.ne.s32.totalorder %s72, %s73
      %p84 = scmp.eq.s32.totalorder %s17, 0
      %p85 = por %p83, %p84
      %p86 = scmp.ne.s32.totalorder %s72, %s73
      %p87 = scmp.eq.s32.totalorder %s18, 1
      %p88 = por %p86, %p87
      %p90 = scmp.ne.s32.totalorder %s73, %s89
      %p91 = scmp.eq.s32.totalorder %s18, 0
      %p92 = por %p90, %p91
      %p93 = scmp.le.s32.totalorder 1, %s12
      %p94 = scmp.lt.s32.totalorder %s12, 3
      %p95 = pnand %p93, %p94
      %p96 = pneg %p95
      // Predicated region
      $region9: #{c2f1_pallas.1} parent=5 // pred_check
        _
      $region10: #{c2f1_pallas.1} parent=5 // pred_check_branch
        %98 = sbr.rel (%p95) target = $region12
      $region11: #{c2f1_pallas.1} parent=5 // pred_region
        %s99 = ssub.s32 %s12, 1
        // Predicated region
        $region13: #{c2f1_pallas.1} parent=11 // pred_check
          %p100 = pneg %p33
        $region14: #{c2f1_pallas.1} parent=11 // pred_check_branch
          %102 = sbr.rel (%p100) target = $region16
        $region15: #{c2f1_pallas.1} parent=11 // pred_region
          %s104 = ssub.s32 64, 64
          %105 = vsyncadd [#allocation5], %s104
          %s107 = sshll.u32 %s0, 4
          %s108 = int_to_ptr.vmem [resolvable:$true] %s107
          %110 = dma.vmem_to_smem %s108, 64, [#allocation3], [#allocation5]
        $region16: #{c2f1_pallas.1} parent=11 // pred_fallthru
          _
      $region12: #{c2f1_pallas.1} parent=5 // pred_fallthru
        _
      %p111 = scmp.lt.s32.totalorder %s12, 2
      // Predicated region
      $region17: #{c2f1_pallas.1} parent=5 // pred_check
        %p112 = pneg %p111
      $region18: #{c2f1_pallas.1} parent=5 // pred_check_branch
        %114 = sbr.rel (%p112) target = $region20
      $region19: #{c2f1_pallas.1} parent=5 // pred_region
        // Predicated region
        $region21: #{c2f1_pallas.1} parent=19 // pred_check
          %p115 = pneg %p53
        $region22: #{c2f1_pallas.1} parent=19 // pred_check_branch
          %117 = sbr.rel (%p115) target = $region24
        $region23: #{c2f1_pallas.1} parent=19 // pred_region
          %p118 = scmp.lt.s32.totalorder %s12, 1
          %s119 = scalar_select %p118, %s12, 1
          %s120 = smul.addr %s119, 16
          %s121 = smul.addr %s120, 8
          %s122 = scalar_lea.vmem %s1, %s121
        $region24: #{c2f1_pallas.1} parent=19 // pred_fallthru
          _
      $region20: #{c2f1_pallas.1} parent=5 // pred_fallthru
        _
      %p123 = scmp.le.s32.totalorder 1, %s12
      %p124 = scmp.lt.s32.totalorder %s12, 3
      %p125 = pnand %p123, %p124
      %p126 = pneg %p125
      // Predicated region
      $region25: #{c2f1_pallas.1} parent=5 // pred_check
        _
      $region26: #{c2f1_pallas.1} parent=5 // pred_check_branch
        %128 = sbr.rel (%p125) target = $region28
      $region27: #{c2f1_pallas.1} parent=5 // pred_region
        %s129 = ssub.s32 %s12, 1
        // Predicated region
        $region29: #{c2f1_pallas.1} parent=27 // pred_check
          %p130 = pneg %p33
        $region30: #{c2f1_pallas.1} parent=27 // pred_check_branch
          %132 = sbr.rel (%p130) target = $region32
        $region31: #{c2f1_pallas.1} parent=27 // pred_region
          %133 = dma.done [#allocation5], 64
        $region32: #{c2f1_pallas.1} parent=27 // pred_fallthru
          _
        %134 = sfence
        %p135 = pneg %p33
        %p136 = pneg %p30
        %p137 = scmp.lt.s32.totalorder %s17, 1
        %s138 = scalar_select %p137, %s17, 1
        %s139 = smul.addr %s138, 16
        %s140 = smul.addr %s139, 8
        %s141 = scalar_lea.vmem %s1, %s140
        %p142 = pneg %p59
        %p143 = pneg %p56
        %p144 = pneg %p85
        %p145 = pneg %p82
        %s146 = sand.u32 %s72, 1
        %s147 = scalar_lea.sflag [#allocation4], %s146
        %s148 = sand.u32 %s72, 1
        %s149 = smul.addr %s148, 128
        %s150 = scalar_lea.vmem [#allocation6], %s149
        %p151 = scmp.lt.s32.totalorder %s17, 1
        %s152 = scalar_select %p151, %s17, 1
        %s153 = smul.addr %s152, 16
        %s154 = smul.addr %s153, 8
        %s155 = scalar_lea.vmem %s1, %s154
        %vm156 = vcmask 146432
        %157 = vst.msk [vmem:[#allocation2] sm:$0xff] %vm156, 0.0
        %158 = vst.msk [vmem:[#allocation2 + $0x8] sm:$0xff] %vm156, 0.0
        %vm159 = vcmask 140288
        %160 = vst.msk [vmem:[#allocation2 + $0x10] sm:$0x3] %vm159, 0.0
        %v161 = vld [vmem:[%s155] sm:$0xff]
        %v162 = vld [vmem:[%s155 + $0x8] sm:$0xff]
        %s163 = scalar_lea.vmem %s155, 16
        %v164 = vld [vmem:[%s163] sm:$0xff]
        %v165 = vld [vmem:[%s163 + $0x8] sm:$0xff]
        %s166 = scalar_lea.vmem %s155, 32
        %v167 = vld [vmem:[%s166] sm:$0xff]
        %v168 = vld [vmem:[%s166 + $0x8] sm:$0xff]
        %s169 = scalar_lea.vmem %s155, 48
        %v170 = vld [vmem:[%s169] sm:$0xff]
        %v171 = vld [vmem:[%s169 + $0x8] sm:$0xff]
        %s172 = scalar_lea.vmem %s155, 64
        %v173 = vld [vmem:[%s172] sm:$0xff]
        %v174 = vld [vmem:[%s172 + $0x8] sm:$0xff]
        %s175 = scalar_lea.vmem %s155, 80
        %v176 = vld [vmem:[%s175] sm:$0xff]
        %v177 = vld [vmem:[%s175 + $0x8] sm:$0xff]
        %s178 = scalar_lea.vmem %s155, 96
        %v179 = vld [vmem:[%s178] sm:$0xff]
        %v180 = vld [vmem:[%s178 + $0x8] sm:$0xff]
        %s181 = scalar_lea.vmem %s155, 112
        %v182 = vld [vmem:[%s181] sm:$0xff]
        %v183 = vld [vmem:[%s181 + $0x8] sm:$0xff]
        %s184 = sld [smem:[#allocation3]]
        %v185 = vstv %s184
        %v186 = vmul.f32 %v185, %v161
        %v187 = vmul.f32 %v185, %v162
        %v188 = vadd.f32 %v186, 0.0
        %v189 = vadd.f32 %v187, 0.0
        %s190 = sld [smem:[#allocation3 + $0x1]]
        %v191 = vstv %s190
        %v192 = vmul.f32 %v191, %v161
        %v193 = vmul.f32 %v191, %v162
        %v194 = vadd.f32 %v192, 0.0
        %v195 = vadd.f32 %v193, 0.0
        %s196 = sld [smem:[#allocation3 + $0x2]]
        %v197 = vstv %s196
        %v198 = vmul.f32 %v197, %v161
        %v199 = vmul.f32 %v197, %v162
        %v200 = vadd.f32 %v198, 0.0
        %v201 = vadd.f32 %v199, 0.0
        %s202 = sld [smem:[#allocation3 + $0x3]]
        %v203 = vstv %s202
        %v204 = vmul.f32 %v203, %v161
        %v205 = vmul.f32 %v203, %v162
        %v206 = vadd.f32 %v204, 0.0
        %v207 = vadd.f32 %v205, 0.0
        %s208 = sld [smem:[#allocation3 + $0x4]]
        %v209 = vstv %s208
        %v210 = vmul.f32 %v209, %v161
        %v211 = vmul.f32 %v209, %v162
        %v212 = vadd.f32 %v210, 0.0
        %v213 = vadd.f32 %v211, 0.0
        %s214 = sld [smem:[#allocation3 + $0x5]]
        %v215 = vstv %s214
        %v216 = vmul.f32 %v215, %v161
        %v217 = vmul.f32 %v215, %v162
        %v218 = vadd.f32 %v216, 0.0
        %v219 = vadd.f32 %v217, 0.0
        %s220 = sld [smem:[#allocation3 + $0x6]]
        %v221 = vstv %s220
        %v222 = vmul.f32 %v221, %v161
        %v223 = vmul.f32 %v221, %v162
        %v224 = vadd.f32 %v222, 0.0
        %v225 = vadd.f32 %v223, 0.0
        %s226 = sld [smem:[#allocation3 + $0x7]]
        %v227 = vstv %s226
        %v228 = vmul.f32 %v227, %v161
        %v229 = vmul.f32 %v227, %v162
        %v230 = vadd.f32 %v228, 0.0
        %v231 = vadd.f32 %v229, 0.0
        %s232 = sld [smem:[#allocation3 + $0x8]]
        %v233 = vstv %s232
        %v234 = vmul.f32 %v233, %v164
        %v235 = vmul.f32 %v233, %v165
        %v236 = vadd.f32 %v188, %v234
        %v237 = vadd.f32 %v189, %v235
        %s238 = sld [smem:[#allocation3 + $0x9]]
        %v239 = vstv %s238
        %v240 = vmul.f32 %v239, %v164
        %v241 = vmul.f32 %v239, %v165
        %v242 = vadd.f32 %v194, %v240
        %v243 = vadd.f32 %v195, %v241
        %s244 = sld [smem:[#allocation3 + $0xa]]
        %v245 = vstv %s244
        %v246 = vmul.f32 %v245, %v164
        %v247 = vmul.f32 %v245, %v165
        %v248 = vadd.f32 %v200, %v246
        %v249 = vadd.f32 %v201, %v247
        %s250 = sld [smem:[#allocation3 + $0xb]]
        %v251 = vstv %s250
        %v252 = vmul.f32 %v251, %v164
        %v253 = vmul.f32 %v251, %v165
        %v254 = vadd.f32 %v206, %v252
        %v255 = vadd.f32 %v207, %v253
        %s256 = sld [smem:[#allocation3 + $0xc]]
        %v257 = vstv %s256
        %v258 = vmul.f32 %v257, %v164
        %v259 = vmul.f32 %v257, %v165
        %v260 = vadd.f32 %v212, %v258
        %v261 = vadd.f32 %v213, %v259
        %s262 = sld [smem:[#allocation3 + $0xd]]
        %v263 = vstv %s262
        %v264 = vmul.f32 %v263, %v164
        %v265 = vmul.f32 %v263, %v165
        %v266 = vadd.f32 %v218, %v264
        %v267 = vadd.f32 %v219, %v265
        %s268 = sld [smem:[#allocation3 + $0xe]]
        %v269 = vstv %s268
        %v270 = vmul.f32 %v269, %v164
        %v271 = vmul.f32 %v269, %v165
        %v272 = vadd.f32 %v224, %v270
        %v273 = vadd.f32 %v225, %v271
        %s274 = sld [smem:[#allocation3 + $0xf]]
        %v275 = vstv %s274
        %v276 = vmul.f32 %v275, %v164
        %v277 = vmul.f32 %v275, %v165
        %v278 = vadd.f32 %v230, %v276
        %v279 = vadd.f32 %v231, %v277
        %s280 = sld [smem:[#allocation3 + $0x10]]
        %v281 = vstv %s280
        %v282 = vmul.f32 %v281, %v167
        %v283 = vmul.f32 %v281, %v168
        %v284 = vadd.f32 %v236, %v282
        %v285 = vadd.f32 %v237, %v283
        %s286 = sld [smem:[#allocation3 + $0x11]]
        %v287 = vstv %s286
        %v288 = vmul.f32 %v287, %v167
        %v289 = vmul.f32 %v287, %v168
        %v290 = vadd.f32 %v242, %v288
        %v291 = vadd.f32 %v243, %v289
        %s292 = sld [smem:[#allocation3 + $0x12]]
        %v293 = vstv %s292
        %v294 = vmul.f32 %v293, %v167
        %v295 = vmul.f32 %v293, %v168
        %v296 = vadd.f32 %v248, %v294
        %v297 = vadd.f32 %v249, %v295
        %s298 = sld [smem:[#allocation3 + $0x13]]
        %v299 = vstv %s298
        %v300 = vmul.f32 %v299, %v167
        %v301 = vmul.f32 %v299, %v168
        %v302 = vadd.f32 %v254, %v300
        %v303 = vadd.f32 %v255, %v301
        %s304 = sld [smem:[#allocation3 + $0x14]]
        %v305 = vstv %s304
        %v306 = vmul.f32 %v305, %v167
        %v307 = vmul.f32 %v305, %v168
        %v308 = vadd.f32 %v260, %v306
        %v309 = vadd.f32 %v261, %v307
        %s310 = sld [smem:[#allocation3 + $0x15]]
        %v311 = vstv %s310
        %v312 = vmul.f32 %v311, %v167
        %v313 = vmul.f32 %v311, %v168
        %v314 = vadd.f32 %v266, %v312
        %v315 = vadd.f32 %v267, %v313
        %s316 = sld [smem:[#allocation3 + $0x16]]
        %v317 = vstv %s316
        %v318 = vmul.f32 %v317, %v167
        %v319 = vmul.f32 %v317, %v168
        %v320 = vadd.f32 %v272, %v318
        %v321 = vadd.f32 %v273, %v319
        %s322 = sld [smem:[#allocation3 + $0x17]]
        %v323 = vstv %s322
        %v324 = vmul.f32 %v323, %v167
        %v325 = vmul.f32 %v323, %v168
        %v326 = vadd.f32 %v278, %v324
        %v327 = vadd.f32 %v279, %v325
        %s328 = sld [smem:[#allocation3 + $0x18]]
        %v329 = vstv %s328
        %v330 = vmul.f32 %v329, %v170
        %v331 = vmul.f32 %v329, %v171
        %v332 = vadd.f32 %v284, %v330
        %v333 = vadd.f32 %v285, %v331
        %s334 = sld [smem:[#allocation3 + $0x19]]
        %v335 = vstv %s334
        %v336 = vmul.f32 %v335, %v170
        %v337 = vmul.f32 %v335, %v171
        %v338 = vadd.f32 %v290, %v336
        %v339 = vadd.f32 %v291, %v337
        %s340 = sld [smem:[#allocation3 + $0x1a]]
        %v341 = vstv %s340
        %v342 = vmul.f32 %v341, %v170
        %v343 = vmul.f32 %v341, %v171
        %v344 = vadd.f32 %v296, %v342
        %v345 = vadd.f32 %v297, %v343
        %s346 = sld [smem:[#allocation3 + $0x1b]]
        %v347 = vstv %s346
        %v348 = vmul.f32 %v347, %v170
        %v349 = vmul.f32 %v347, %v171
        %v350 = vadd.f32 %v302, %v348
        %v351 = vadd.f32 %v303, %v349
        %s352 = sld [smem:[#allocation3 + $0x1c]]
        %v353 = vstv %s352
        %v354 = vmul.f32 %v353, %v170
        %v355 = vmul.f32 %v353, %v171
        %v356 = vadd.f32 %v308, %v354
        %v357 = vadd.f32 %v309, %v355
        %s358 = sld [smem:[#allocation3 + $0x1d]]
        %v359 = vstv %s358
        %v360 = vmul.f32 %v359, %v170
        %v361 = vmul.f32 %v359, %v171
        %v362 = vadd.f32 %v314, %v360
        %v363 = vadd.f32 %v315, %v361
        %s364 = sld [smem:[#allocation3 + $0x1e]]
        %v365 = vstv %s364
        %v366 = vmul.f32 %v365, %v170
        %v367 = vmul.f32 %v365, %v171
        %v368 = vadd.f32 %v320, %v366
        %v369 = vadd.f32 %v321, %v367
        %s370 = sld [smem:[#allocation3 + $0x1f]]
        %v371 = vstv %s370
        %v372 = vmul.f32 %v371, %v170
        %v373 = vmul.f32 %v371, %v171
        %v374 = vadd.f32 %v326, %v372
        %v375 = vadd.f32 %v327, %v373
        %s376 = sld [smem:[#allocation3 + $0x20]]
        %v377 = vstv %s376
        %v378 = vmul.f32 %v377, %v173
        %v379 = vmul.f32 %v377, %v174
        %v380 = vadd.f32 %v332, %v378
        %v381 = vadd.f32 %v333, %v379
        %s382 = sld [smem:[#allocation3 + $0x21]]
        %v383 = vstv %s382
        %v384 = vmul.f32 %v383, %v173
        %v385 = vmul.f32 %v383, %v174
        %v386 = vadd.f32 %v338, %v384
        %v387 = vadd.f32 %v339, %v385
        %s388 = sld [smem:[#allocation3 + $0x22]]
        %v389 = vstv %s388
        %v390 = vmul.f32 %v389, %v173
        %v391 = vmul.f32 %v389, %v174
        %v392 = vadd.f32 %v344, %v390
        %v393 = vadd.f32 %v345, %v391
        %s394 = sld [smem:[#allocation3 + $0x23]]
        %v395 = vstv %s394
        %v396 = vmul.f32 %v395, %v173
        %v397 = vmul.f32 %v395, %v174
        %v398 = vadd.f32 %v350, %v396
        %v399 = vadd.f32 %v351, %v397
        %s400 = sld [smem:[#allocation3 + $0x24]]
        %v401 = vstv %s400
        %v402 = vmul.f32 %v401, %v173
        %v403 = vmul.f32 %v401, %v174
        %v404 = vadd.f32 %v356, %v402
        %v405 = vadd.f32 %v357, %v403
        %s406 = sld [smem:[#allocation3 + $0x25]]
        %v407 = vstv %s406
        %v408 = vmul.f32 %v407, %v173
        %v409 = vmul.f32 %v407, %v174
        %v410 = vadd.f32 %v362, %v408
        %v411 = vadd.f32 %v363, %v409
        %s412 = sld [smem:[#allocation3 + $0x26]]
        %v413 = vstv %s412
        %v414 = vmul.f32 %v413, %v173
        %v415 = vmul.f32 %v413, %v174
        %v416 = vadd.f32 %v368, %v414
        %v417 = vadd.f32 %v369, %v415
        %s418 = sld [smem:[#allocation3 + $0x27]]
        %v419 = vstv %s418
        %v420 = vmul.f32 %v419, %v173
        %v421 = vmul.f32 %v419, %v174
        %v422 = vadd.f32 %v374, %v420
        %v423 = vadd.f32 %v375, %v421
        %s424 = sld [smem:[#allocation3 + $0x28]]
        %v425 = vstv %s424
        %v426 = vmul.f32 %v425, %v176
        %v427 = vmul.f32 %v425, %v177
        %v428 = vadd.f32 %v380, %v426
        %v429 = vadd.f32 %v381, %v427
        %s430 = sld [smem:[#allocation3 + $0x29]]
        %v431 = vstv %s430
        %v432 = vmul.f32 %v431, %v176
        %v433 = vmul.f32 %v431, %v177
        %v434 = vadd.f32 %v386, %v432
        %v435 = vadd.f32 %v387, %v433
        %s436 = sld [smem:[#allocation3 + $0x2a]]
        %v437 = vstv %s436
        %v438 = vmul.f32 %v437, %v176
        %v439 = vmul.f32 %v437, %v177
        %v440 = vadd.f32 %v392, %v438
        %v441 = vadd.f32 %v393, %v439
        %s442 = sld [smem:[#allocation3 + $0x2b]]
        %v443 = vstv %s442
        %v444 = vmul.f32 %v443, %v176
        %v445 = vmul.f32 %v443, %v177
        %v446 = vadd.f32 %v398, %v444
        %v447 = vadd.f32 %v399, %v445
        %s448 = sld [smem:[#allocation3 + $0x2c]]
        %v449 = vstv %s448
        %v450 = vmul.f32 %v449, %v176
        %v451 = vmul.f32 %v449, %v177
        %v452 = vadd.f32 %v404, %v450
        %v453 = vadd.f32 %v405, %v451
        %s454 = sld [smem:[#allocation3 + $0x2d]]
        %v455 = vstv %s454
        %v456 = vmul.f32 %v455, %v176
        %v457 = vmul.f32 %v455, %v177
        %v458 = vadd.f32 %v410, %v456
        %v459 = vadd.f32 %v411, %v457
        %s460 = sld [smem:[#allocation3 + $0x2e]]
        %v461 = vstv %s460
        %v462 = vmul.f32 %v461, %v176
        %v463 = vmul.f32 %v461, %v177
        %v464 = vadd.f32 %v416, %v462
        %v465 = vadd.f32 %v417, %v463
        %s466 = sld [smem:[#allocation3 + $0x2f]]
        %v467 = vstv %s466
        %v468 = vmul.f32 %v467, %v176
        %v469 = vmul.f32 %v467, %v177
        %v470 = vadd.f32 %v422, %v468
        %v471 = vadd.f32 %v423, %v469
        %s472 = sld [smem:[#allocation3 + $0x30]]
        %v473 = vstv %s472
        %v474 = vmul.f32 %v473, %v179
        %v475 = vmul.f32 %v473, %v180
        %v476 = vadd.f32 %v428, %v474
        %v477 = vadd.f32 %v429, %v475
        %s478 = sld [smem:[#allocation3 + $0x31]]
        %v479 = vstv %s478
        %v480 = vmul.f32 %v479, %v179
        %v481 = vmul.f32 %v479, %v180
        %v482 = vadd.f32 %v434, %v480
        %v483 = vadd.f32 %v435, %v481
        %s484 = sld [smem:[#allocation3 + $0x32]]
        %v485 = vstv %s484
        %v486 = vmul.f32 %v485, %v179
        %v487 = vmul.f32 %v485, %v180
        %v488 = vadd.f32 %v440, %v486
        %v489 = vadd.f32 %v441, %v487
        %s490 = sld [smem:[#allocation3 + $0x33]]
        %v491 = vstv %s490
        %v492 = vmul.f32 %v491, %v179
        %v493 = vmul.f32 %v491, %v180
        %v494 = vadd.f32 %v446, %v492
        %v495 = vadd.f32 %v447, %v493
        %s496 = sld [smem:[#allocation3 + $0x34]]
        %v497 = vstv %s496
        %v498 = vmul.f32 %v497, %v179
        %v499 = vmul.f32 %v497, %v180
        %v500 = vadd.f32 %v452, %v498
        %v501 = vadd.f32 %v453, %v499
        %s502 = sld [smem:[#allocation3 + $0x35]]
        %v503 = vstv %s502
        %v504 = vmul.f32 %v503, %v179
        %v505 = vmul.f32 %v503, %v180
        %v506 = vadd.f32 %v458, %v504
        %v507 = vadd.f32 %v459, %v505
        %s508 = sld [smem:[#allocation3 + $0x36]]
        %v509 = vstv %s508
        %v510 = vmul.f32 %v509, %v179
        %v511 = vmul.f32 %v509, %v180
        %v512 = vadd.f32 %v464, %v510
        %v513 = vadd.f32 %v465, %v511
        %s514 = sld [smem:[#allocation3 + $0x37]]
        %v515 = vstv %s514
        %v516 = vmul.f32 %v515, %v179
        %v517 = vmul.f32 %v515, %v180
        %v518 = vadd.f32 %v470, %v516
        %v519 = vadd.f32 %v471, %v517
        %s520 = sld [smem:[#allocation3 + $0x38]]
        %v521 = vstv %s520
        %v522 = vmul.f32 %v521, %v182
        %v523 = vmul.f32 %v521, %v183
        %v524 = vadd.f32 %v476, %v522
        %v525 = vadd.f32 %v477, %v523
        %s526 = sld [smem:[#allocation3 + $0x39]]
        %v527 = vstv %s526
        %v528 = vmul.f32 %v527, %v182
        %v529 = vmul.f32 %v527, %v183
        %v530 = vadd.f32 %v482, %v528
        %v531 = vadd.f32 %v483, %v529
        %s532 = sld [smem:[#allocation3 + $0x3a]]
        %v533 = vstv %s532
        %v534 = vmul.f32 %v533, %v182
        %v535 = vmul.f32 %v533, %v183
        %v536 = vadd.f32 %v488, %v534
        %v537 = vadd.f32 %v489, %v535
        %s538 = sld [smem:[#allocation3 + $0x3b]]
        %v539 = vstv %s538
        %v540 = vmul.f32 %v539, %v182
        %v541 = vmul.f32 %v539, %v183
        %v542 = vadd.f32 %v494, %v540
        %v543 = vadd.f32 %v495, %v541
        %s544 = sld [smem:[#allocation3 + $0x3c]]
        %v545 = vstv %s544
        %v546 = vmul.f32 %v545, %v182
        %v547 = vmul.f32 %v545, %v183
        %v548 = vadd.f32 %v500, %v546
        %v549 = vadd.f32 %v501, %v547
        %s550 = sld [smem:[#allocation3 + $0x3d]]
        %v551 = vstv %s550
        %v552 = vmul.f32 %v551, %v182
        %v553 = vmul.f32 %v551, %v183
        %v554 = vadd.f32 %v506, %v552
        %v555 = vadd.f32 %v507, %v553
        %s556 = sld [smem:[#allocation3 + $0x3e]]
        %v557 = vstv %s556
        %v558 = vmul.f32 %v557, %v182
        %v559 = vmul.f32 %v557, %v183
        %v560 = vadd.f32 %v512, %v558
        %v561 = vadd.f32 %v513, %v559
        %s562 = sld [smem:[#allocation3 + $0x3f]]
        %v563 = vstv %s562
        %v564 = vmul.f32 %v563, %v182
        %v565 = vmul.f32 %v563, %v183
        %v566 = vadd.f32 %v518, %v564
        %v567 = vadd.f32 %v519, %v565
        %vm568 = vcmask 130048
        %v569 = vsel %vm568, %v524, 0.0
        %570 = vadd.xlane.f32.xlu0 %v569
        %v571 = vpop.xlane.xlu0 %570
        %v572 = vsel %vm568, %v525, 0.0
        %573 = vadd.xlane.f32.xlu0 %v572
        %v574 = vpop.xlane.xlu0 %573
        %v575 = vadd.f32 %v571, %v574
        %v576 = vrot.slane %v575, 4
        %v577 = vadd.f32 %v575, %v576
        %v578 = vrot.slane %v577, 2
        %v579 = vadd.f32 %v577, %v578
        %v580 = vrot.slane %v579, 1
        %v581 = vadd.f32 %v579, %v580
        %v582 = vmul.f32 %v581, 0.00390625
        %v583 = vsub.f32 %v524, %v582
        %v584 = vsub.f32 %v525, %v582
        %v585 = vmul.f32 %v583, %v583
        %v586 = vmul.f32 %v584, %v584
        %v587 = vsel %vm568, %v585, 0.0
        %588 = vadd.xlane.f32.xlu0 %v587
        %v589 = vpop.xlane.xlu0 %588
        %v590 = vsel %vm568, %v586, 0.0
        %591 = vadd.xlane.f32.xlu0 %v590
        %v592 = vpop.xlane.xlu0 %591
        %v593 = vadd.f32 %v589, %v592
        %v594 = vrot.slane %v593, 4
        %v595 = vadd.f32 %v593, %v594
        %v596 = vrot.slane %v595, 2
        %v597 = vadd.f32 %v595, %v596
        %v598 = vrot.slane %v597, 1
        %v599 = vadd.f32 %v597, %v598
        %v600 = vmul.f32 %v599, 0.00390625
        %s601 = sld [smem:[#allocation3 + $0x40]]
        %v602 = vadd.f32 %v600, 1e-05
        %v603 = vrsqrt.pop %v602
        %v604 = vstv %s601
        %v605 = vmul.f32 %v604, %v603
        %v606 = vmul.f32 %v583, %v605
        %v607 = vmul.f32 %v584, %v605
        %s608 = sld [smem:[#allocation3 + $0x48]]
        %v609 = vstv %s608
        %v610 = vadd.f32 %v606, %v609
        %v611 = vadd.f32 %v607, %v609
        %v612 = vtanh.pop %v610
        %v613 = vtanh.pop %v611
        %v614 = vsel %vm568, %v530, 0.0
        %615 = vadd.xlane.f32.xlu0 %v614
        %v616 = vpop.xlane.xlu0 %615
        %v617 = vsel %vm568, %v531, 0.0
        %618 = vadd.xlane.f32.xlu0 %v617
        %v619 = vpop.xlane.xlu0 %618
        %v620 = vadd.f32 %v616, %v619
        %v621 = vrot.slane %v620, 4
        %v622 = vadd.f32 %v620, %v621
        %v623 = vrot.slane %v622, 2
        %v624 = vadd.f32 %v622, %v623
        %v625 = vrot.slane %v624, 1
        %v626 = vadd.f32 %v624, %v625
        %v627 = vmul.f32 %v626, 0.00390625
        %v628 = vsub.f32 %v530, %v627
        %v629 = vsub.f32 %v531, %v627
        %v630 = vmul.f32 %v628, %v628
        %v631 = vmul.f32 %v629, %v629
        %v632 = vsel %vm568, %v630, 0.0
        %633 = vadd.xlane.f32.xlu0 %v632
        %v634 = vpop.xlane.xlu0 %633
        %v635 = vsel %vm568, %v631, 0.0
        %636 = vadd.xlane.f32.xlu0 %v635
        %v637 = vpop.xlane.xlu0 %636
        %v638 = vadd.f32 %v634, %v637
        %v639 = vrot.slane %v638, 4
        %v640 = vadd.f32 %v638, %v639
        %v641 = vrot.slane %v640, 2
        %v642 = vadd.f32 %v640, %v641
        %v643 = vrot.slane %v642, 1
        %v644 = vadd.f32 %v642, %v643
        %v645 = vmul.f32 %v644, 0.00390625
        %s646 = sld [smem:[#allocation3 + $0x41]]
        %v647 = vadd.f32 %v645, 1e-05
        %v648 = vrsqrt.pop %v647
        %v649 = vstv %s646
        %v650 = vmul.f32 %v649, %v648
        %v651 = vmul.f32 %v628, %v650
        %v652 = vmul.f32 %v629, %v650
        %s653 = sld [smem:[#allocation3 + $0x49]]
        %v654 = vstv %s653
        %v655 = vadd.f32 %v651, %v654
        %v656 = vadd.f32 %v652, %v654
        %v657 = vtanh.pop %v655
        %v658 = vtanh.pop %v656
        %v659 = vsel %vm568, %v536, 0.0
        %660 = vadd.xlane.f32.xlu0 %v659
        %v661 = vpop.xlane.xlu0 %660
        %v662 = vsel %vm568, %v537, 0.0
        %663 = vadd.xlane.f32.xlu0 %v662
        %v664 = vpop.xlane.xlu0 %663
        %v665 = vadd.f32 %v661, %v664
        %v666 = vrot.slane %v665, 4
        %v667 = vadd.f32 %v665, %v666
        %v668 = vrot.slane %v667, 2
        %v669 = vadd.f32 %v667, %v668
        %v670 = vrot.slane %v669, 1
        %v671 = vadd.f32 %v669, %v670
        %v672 = vmul.f32 %v671, 0.00390625
        %v673 = vsub.f32 %v536, %v672
        %v674 = vsub.f32 %v537, %v672
        %v675 = vmul.f32 %v673, %v673
        %v676 = vmul.f32 %v674, %v674
        %v677 = vsel %vm568, %v675, 0.0
        %678 = vadd.xlane.f32.xlu0 %v677
        %v679 = vpop.xlane.xlu0 %678
        %v680 = vsel %vm568, %v676, 0.0
        %681 = vadd.xlane.f32.xlu0 %v680
        %v682 = vpop.xlane.xlu0 %681
        %v683 = vadd.f32 %v679, %v682
        %v684 = vrot.slane %v683, 4
        %v685 = vadd.f32 %v683, %v684
        %v686 = vrot.slane %v685, 2
        %v687 = vadd.f32 %v685, %v686
        %v688 = vrot.slane %v687, 1
        %v689 = vadd.f32 %v687, %v688
        %v690 = vmul.f32 %v689, 0.00390625
        %s691 = sld [smem:[#allocation3 + $0x42]]
        %v692 = vadd.f32 %v690, 1e-05
        %v693 = vrsqrt.pop %v692
        %v694 = vstv %s691
        %v695 = vmul.f32 %v694, %v693
        %v696 = vmul.f32 %v673, %v695
        %v697 = vmul.f32 %v674, %v695
        %s698 = sld [smem:[#allocation3 + $0x4a]]
        %v699 = vstv %s698
        %v700 = vadd.f32 %v696, %v699
        %v701 = vadd.f32 %v697, %v699
        %v702 = vtanh.pop %v700
        %v703 = vtanh.pop %v701
        %v704 = vsel %vm568, %v542, 0.0
        %705 = vadd.xlane.f32.xlu0 %v704
        %v706 = vpop.xlane.xlu0 %705
        %v707 = vsel %vm568, %v543, 0.0
        %708 = vadd.xlane.f32.xlu0 %v707
        %v709 = vpop.xlane.xlu0 %708
        %v710 = vadd.f32 %v706, %v709
        %v711 = vrot.slane %v710, 4
        %v712 = vadd.f32 %v710, %v711
        %v713 = vrot.slane %v712, 2
        %v714 = vadd.f32 %v712, %v713
        %v715 = vrot.slane %v714, 1
        %v716 = vadd.f32 %v714, %v715
        %v717 = vmul.f32 %v716, 0.00390625
        %v718 = vsub.f32 %v542, %v717
        %v719 = vsub.f32 %v543, %v717
        %v720 = vmul.f32 %v718, %v718
        %v721 = vmul.f32 %v719, %v719
        %v722 = vsel %vm568, %v720, 0.0
        %723 = vadd.xlane.f32.xlu0 %v722
        %v724 = vpop.xlane.xlu0 %723
        %v725 = vsel %vm568, %v721, 0.0
        %726 = vadd.xlane.f32.xlu0 %v725
        %v727 = vpop.xlane.xlu0 %726
        %v728 = vadd.f32 %v724, %v727
        %v729 = vrot.slane %v728, 4
        %v730 = vadd.f32 %v728, %v729
        %v731 = vrot.slane %v730, 2
        %v732 = vadd.f32 %v730, %v731
        %v733 = vrot.slane %v732, 1
        %v734 = vadd.f32 %v732, %v733
        %v735 = vmul.f32 %v734, 0.00390625
        %s736 = sld [smem:[#allocation3 + $0x43]]
        %v737 = vadd.f32 %v735, 1e-05
        %v738 = vrsqrt.pop %v737
        %v739 = vstv %s736
        %v740 = vmul.f32 %v739, %v738
        %v741 = vmul.f32 %v718, %v740
        %v742 = vmul.f32 %v719, %v740
        %s743 = sld [smem:[#allocation3 + $0x4b]]
        %v744 = vstv %s743
        %v745 = vadd.f32 %v741, %v744
        %v746 = vadd.f32 %v742, %v744
        %v747 = vtanh.pop %v745
        %v748 = vtanh.pop %v746
        %v749 = vsel %vm568, %v548, 0.0
        %750 = vadd.xlane.f32.xlu0 %v749
        %v751 = vpop.xlane.xlu0 %750
        %v752 = vsel %vm568, %v549, 0.0
        %753 = vadd.xlane.f32.xlu0 %v752
        %v754 = vpop.xlane.xlu0 %753
        %v755 = vadd.f32 %v751, %v754
        %v756 = vrot.slane %v755, 4
        %v757 = vadd.f32 %v755, %v756
        %v758 = vrot.slane %v757, 2
        %v759 = vadd.f32 %v757, %v758
        %v760 = vrot.slane %v759, 1
        %v761 = vadd.f32 %v759, %v760
        %v762 = vmul.f32 %v761, 0.00390625
        %v763 = vsub.f32 %v548, %v762
        %v764 = vsub.f32 %v549, %v762
        %v765 = vmul.f32 %v763, %v763
        %v766 = vmul.f32 %v764, %v764
        %v767 = vsel %vm568, %v765, 0.0
        %768 = vadd.xlane.f32.xlu0 %v767
        %v769 = vpop.xlane.xlu0 %768
        %v770 = vsel %vm568, %v766, 0.0
        %771 = vadd.xlane.f32.xlu0 %v770
        %v772 = vpop.xlane.xlu0 %771
        %v773 = vadd.f32 %v769, %v772
        %v774 = vrot.slane %v773, 4
        %v775 = vadd.f32 %v773, %v774
        %v776 = vrot.slane %v775, 2
        %v777 = vadd.f32 %v775, %v776
        %v778 = vrot.slane %v777, 1
        %v779 = vadd.f32 %v777, %v778
        %v780 = vmul.f32 %v779, 0.00390625
        %s781 = sld [smem:[#allocation3 + $0x44]]
        %v782 = vadd.f32 %v780, 1e-05
        %v783 = vrsqrt.pop %v782
        %v784 = vstv %s781
        %v785 = vmul.f32 %v784, %v783
        %v786 = vmul.f32 %v763, %v785
        %v787 = vmul.f32 %v764, %v785
        %s788 = sld [smem:[#allocation3 + $0x4c]]
        %v789 = vstv %s788
        %v790 = vadd.f32 %v786, %v789
        %v791 = vadd.f32 %v787, %v789
        %v792 = vtanh.pop %v790
        %v793 = vtanh.pop %v791
        %v794 = vsel %vm568, %v554, 0.0
        %795 = vadd.xlane.f32.xlu0 %v794
        %v796 = vpop.xlane.xlu0 %795
        %v797 = vsel %vm568, %v555, 0.0
        %798 = vadd.xlane.f32.xlu0 %v797
        %v799 = vpop.xlane.xlu0 %798
        %v800 = vadd.f32 %v796, %v799
        %v801 = vrot.slane %v800, 4
        %v802 = vadd.f32 %v800, %v801
        %v803 = vrot.slane %v802, 2
        %v804 = vadd.f32 %v802, %v803
        %v805 = vrot.slane %v804, 1
        %v806 = vadd.f32 %v804, %v805
        %v807 = vmul.f32 %v806, 0.00390625
        %v808 = vsub.f32 %v554, %v807
        %v809 = vsub.f32 %v555, %v807
        %v810 = vmul.f32 %v808, %v808
        %v811 = vmul.f32 %v809, %v809
        %v812 = vsel %vm568, %v810, 0.0
        %813 = vadd.xlane.f32.xlu0 %v812
        %v814 = vpop.xlane.xlu0 %813
        %v815 = vsel %vm568, %v811, 0.0
        %816 = vadd.xlane.f32.xlu0 %v815
        %v817 = vpop.xlane.xlu0 %816
        %v818 = vadd.f32 %v814, %v817
        %v819 = vrot.slane %v818, 4
        %v820 = vadd.f32 %v818, %v819
        %v821 = vrot.slane %v820, 2
        %v822 = vadd.f32 %v820, %v821
        %v823 = vrot.slane %v822, 1
        %v824 = vadd.f32 %v822, %v823
        %v825 = vmul.f32 %v824, 0.00390625
        %s826 = sld [smem:[#allocation3 + $0x45]]
        %v827 = vadd.f32 %v825, 1e-05
        %v828 = vrsqrt.pop %v827
        %v829 = vstv %s826
        %v830 = vmul.f32 %v829, %v828
        %v831 = vmul.f32 %v808, %v830
        %v832 = vmul.f32 %v809, %v830
        %s833 = sld [smem:[#allocation3 + $0x4d]]
        %v834 = vstv %s833
        %v835 = vadd.f32 %v831, %v834
        %v836 = vadd.f32 %v832, %v834
        %v837 = vtanh.pop %v835
        %v838 = vtanh.pop %v836
        %v839 = vsel %vm568, %v560, 0.0
        %840 = vadd.xlane.f32.xlu0 %v839
        %v841 = vpop.xlane.xlu0 %840
        %v842 = vsel %vm568, %v561, 0.0
        %843 = vadd.xlane.f32.xlu0 %v842
        %v844 = vpop.xlane.xlu0 %843
        %v845 = vadd.f32 %v841, %v844
        %v846 = vrot.slane %v845, 4
        %v847 = vadd.f32 %v845, %v846
        %v848 = vrot.slane %v847, 2
        %v849 = vadd.f32 %v847, %v848
        %v850 = vrot.slane %v849, 1
        %v851 = vadd.f32 %v849, %v850
        %v852 = vmul.f32 %v851, 0.00390625
        %v853 = vsub.f32 %v560, %v852
        %v854 = vsub.f32 %v561, %v852
        %v855 = vmul.f32 %v853, %v853
        %v856 = vmul.f32 %v854, %v854
        %v857 = vsel %vm568, %v855, 0.0
        %858 = vadd.xlane.f32.xlu0 %v857
        %v859 = vpop.xlane.xlu0 %858
        %v860 = vsel %vm568, %v856, 0.0
        %861 = vadd.xlane.f32.xlu0 %v860
        %v862 = vpop.xlane.xlu0 %861
        %v863 = vadd.f32 %v859, %v862
        %v864 = vrot.slane %v863, 4
        %v865 = vadd.f32 %v863, %v864
        %v866 = vrot.slane %v865, 2
        %v867 = vadd.f32 %v865, %v866
        %v868 = vrot.slane %v867, 1
        %v869 = vadd.f32 %v867, %v868
        %v870 = vmul.f32 %v869, 0.00390625
        %s871 = sld [smem:[#allocation3 + $0x46]]
        %v872 = vadd.f32 %v870, 1e-05
        %v873 = vrsqrt.pop %v872
        %v874 = vstv %s871
        %v875 = vmul.f32 %v874, %v873
        %v876 = vmul.f32 %v853, %v875
        %v877 = vmul.f32 %v854, %v875
        %s878 = sld [smem:[#allocation3 + $0x4e]]
        %v879 = vstv %s878
        %v880 = vadd.f32 %v876, %v879
        %v881 = vadd.f32 %v877, %v879
        %v882 = vtanh.pop %v880
        %v883 = vtanh.pop %v881
        %v884 = vsel %vm568, %v566, 0.0
        %885 = vadd.xlane.f32.xlu0 %v884
        %v886 = vpop.xlane.xlu0 %885
        %v887 = vsel %vm568, %v567, 0.0
        %888 = vadd.xlane.f32.xlu0 %v887
        %v889 = vpop.xlane.xlu0 %888
        %v890 = vadd.f32 %v886, %v889
        %v891 = vrot.slane %v890, 4
        %v892 = vadd.f32 %v890, %v891
        %v893 = vrot.slane %v892, 2
        %v894 = vadd.f32 %v892, %v893
        %v895 = vrot.slane %v894, 1
        %v896 = vadd.f32 %v894, %v895
        %v897 = vmul.f32 %v896, 0.00390625
        %v898 = vsub.f32 %v566, %v897
        %v899 = vsub.f32 %v567, %v897
        %v900 = vmul.f32 %v898, %v898
        %v901 = vmul.f32 %v899, %v899
        %v902 = vsel %vm568, %v900, 0.0
        %903 = vadd.xlane.f32.xlu0 %v902
        %v904 = vpop.xlane.xlu0 %903
        %v905 = vsel %vm568, %v901, 0.0
        %906 = vadd.xlane.f32.xlu0 %v905
        %v907 = vpop.xlane.xlu0 %906
        %v908 = vadd.f32 %v904, %v907
        %v909 = vrot.slane %v908, 4
        %v910 = vadd.f32 %v908, %v909
        %v911 = vrot.slane %v910, 2
        %v912 = vadd.f32 %v910, %v911
        %v913 = vrot.slane %v912, 1
        %v914 = vadd.f32 %v912, %v913
        %v915 = vmul.f32 %v914, 0.00390625
        %s916 = sld [smem:[#allocation3 + $0x47]]
        %v917 = vadd.f32 %v915, 1e-05
        %v918 = vrsqrt.pop %v917
        %v919 = vstv %s916
        %v920 = vmul.f32 %v919, %v918
        %v921 = vmul.f32 %v898, %v920
        %v922 = vmul.f32 %v899, %v920
        %s923 = sld [smem:[#allocation3 + $0x4f]]
        %v924 = vstv %s923
        %v925 = vadd.f32 %v921, %v924
        %v926 = vadd.f32 %v922, %v924
        %v927 = vtanh.pop %v925
        %v928 = vtanh.pop %v926
        %931 = vrot.lane.b32.xlu0 %v792, 1
        %v932 = vpop.permute.xlu0 %931
        %933 = vrot.lane.b32.xlu0 %v793, 1
        %v934 = vpop.permute.xlu0 %933
        %vm937 = vcmask 138248
        %938 = vst.msk [vmem:[#allocation2 + $0x1] sm:$0xff] %vm937, %v932
        %939 = vst.msk [vmem:[#allocation2 + $0x9] sm:$0xff] %vm937, %v934
        %v940 = vld [vmem:[#allocation2] sm:$0xff]
        %v941 = vld [vmem:[#allocation2 + $0x8] sm:$0xff]
        %v942 = vld [vmem:[#allocation2 + $0x1] sm:$0xff]
        %v943 = vld [vmem:[#allocation2 + $0x9] sm:$0xff]
        %v944 = vld [vmem:[#allocation2 + $0x2] sm:$0xff]
        %v945 = vld [vmem:[#allocation2 + $0xa] sm:$0xff]
        %s946 = sld [smem:[#allocation3 + $0x50]]
        %v947 = vstv %s946
        %v948 = vmul.f32 %v947, %v940
        %v949 = vmul.f32 %v947, %v941
        %v950 = vadd.f32 %v948, 0.0
        %v951 = vadd.f32 %v949, 0.0
        %s952 = sld [smem:[#allocation3 + $0x58]]
        %v953 = vstv %s952
        %v954 = vmul.f32 %v953, %v940
        %v955 = vmul.f32 %v953, %v941
        %958 = vrot.lane.b32.xlu0 %v954, 127
        %v959 = vpop.permute.xlu0 %958
        %960 = vrot.lane.b32.xlu0 %v955, 127
        %v961 = vpop.permute.xlu0 %960
        %v964 = vadd.f32 %v950, %v959
        %v965 = vadd.f32 %v951, %v961
        %s966 = sld [smem:[#allocation3 + $0x60]]
        %v967 = vstv %s966
        %v968 = vmul.f32 %v967, %v940
        %v969 = vmul.f32 %v967, %v941
        %972 = vrot.lane.b32.xlu0 %v968, 126
        %v973 = vpop.permute.xlu0 %972
        %974 = vrot.lane.b32.xlu0 %v969, 126
        %v975 = vpop.permute.xlu0 %974
        %v978 = vadd.f32 %v964, %v973
        %v979 = vadd.f32 %v965, %v975
        %s980 = sld [smem:[#allocation3 + $0x68]]
        %v981 = vstv %s980
        %v982 = vmul.f32 %v981, %v942
        %v983 = vmul.f32 %v981, %v943
        %v984 = vadd.f32 %v978, %v982
        %v985 = vadd.f32 %v979, %v983
        %s986 = sld [smem:[#allocation3 + $0x70]]
        %v987 = vstv %s986
        %v988 = vmul.f32 %v987, %v942
        %v989 = vmul.f32 %v987, %v943
        %992 = vrot.lane.b32.xlu0 %v988, 127
        %v993 = vpop.permute.xlu0 %992
        %994 = vrot.lane.b32.xlu0 %v989, 127
        %v995 = vpop.permute.xlu0 %994
        %v998 = vadd.f32 %v984, %v993
        %v999 = vadd.f32 %v985, %v995
        %s1000 = sld [smem:[#allocation3 + $0x78]]
        %v1001 = vstv %s1000
        %v1002 = vmul.f32 %v1001, %v942
        %v1003 = vmul.f32 %v1001, %v943
        %1006 = vrot.lane.b32.xlu0 %v1002, 126
        %v1007 = vpop.permute.xlu0 %1006
        %1008 = vrot.lane.b32.xlu0 %v1003, 126
        %v1009 = vpop.permute.xlu0 %1008
        %v1012 = vadd.f32 %v998, %v1007
        %v1013 = vadd.f32 %v999, %v1009
        %s1014 = sld [smem:[#allocation3 + $0x80]]
        %v1015 = vstv %s1014
        %v1016 = vmul.f32 %v1015, %v944
        %v1017 = vmul.f32 %v1015, %v945
        %v1018 = vadd.f32 %v1012, %v1016
        %v1019 = vadd.f32 %v1013, %v1017
        %s1020 = sld [smem:[#allocation3 + $0x88]]
        %v1021 = vstv %s1020
        %v1022 = vmul.f32 %v1021, %v944
        %v1023 = vmul.f32 %v1021, %v945
        %1026 = vrot.lane.b32.xlu0 %v1022, 127
        %v1027 = vpop.permute.xlu0 %1026
        %1028 = vrot.lane.b32.xlu0 %v1023, 127
        %v1029 = vpop.permute.xlu0 %1028
        %v1032 = vadd.f32 %v1018, %v1027
        %v1033 = vadd.f32 %v1019, %v1029
        %s1034 = sld [smem:[#allocation3 + $0x90]]
        %v1035 = vstv %s1034
        %v1036 = vmul.f32 %v1035, %v944
        %v1037 = vmul.f32 %v1035, %v945
        %1040 = vrot.lane.b32.xlu0 %v1036, 126
        %v1041 = vpop.permute.xlu0 %1040
        %1042 = vrot.lane.b32.xlu0 %v1037, 126
        %v1043 = vpop.permute.xlu0 %1042
        %v1046 = vadd.f32 %v1032, %v1041
        %v1047 = vadd.f32 %v1033, %v1043
        %s1048 = sld [smem:[#allocation3 + $0x51]]
        %v1049 = vstv %s1048
        %v1050 = vmul.f32 %v1049, %v940
        %v1051 = vmul.f32 %v1049, %v941
        %v1052 = vadd.f32 %v1050, 0.0
        %v1053 = vadd.f32 %v1051, 0.0
        %s1054 = sld [smem:[#allocation3 + $0x59]]
        %v1055 = vstv %s1054
        %v1056 = vmul.f32 %v1055, %v940
        %v1057 = vmul.f32 %v1055, %v941
        %1060 = vrot.lane.b32.xlu0 %v1056, 127
        %v1061 = vpop.permute.xlu0 %1060
        %1062 = vrot.lane.b32.xlu0 %v1057, 127
        %v1063 = vpop.permute.xlu0 %1062
        %v1066 = vadd.f32 %v1052, %v1061
        %v1067 = vadd.f32 %v1053, %v1063
        %s1068 = sld [smem:[#allocation3 + $0x61]]
        %v1069 = vstv %s1068
        %v1070 = vmul.f32 %v1069, %v940
        %v1071 = vmul.f32 %v1069, %v941
        %1074 = vrot.lane.b32.xlu0 %v1070, 126
        %v1075 = vpop.permute.xlu0 %1074
        %1076 = vrot.lane.b32.xlu0 %v1071, 126
        %v1077 = vpop.permute.xlu0 %1076
        %v1080 = vadd.f32 %v1066, %v1075
        %v1081 = vadd.f32 %v1067, %v1077
        %s1082 = sld [smem:[#allocation3 + $0x69]]
        %v1083 = vstv %s1082
        %v1084 = vmul.f32 %v1083, %v942
        %v1085 = vmul.f32 %v1083, %v943
        %v1086 = vadd.f32 %v1080, %v1084
        %v1087 = vadd.f32 %v1081, %v1085
        %s1088 = sld [smem:[#allocation3 + $0x71]]
        %v1089 = vstv %s1088
        %v1090 = vmul.f32 %v1089, %v942
        %v1091 = vmul.f32 %v1089, %v943
        %1094 = vrot.lane.b32.xlu0 %v1090, 127
        %v1095 = vpop.permute.xlu0 %1094
        %1096 = vrot.lane.b32.xlu0 %v1091, 127
        %v1097 = vpop.permute.xlu0 %1096
        %v1100 = vadd.f32 %v1086, %v1095
        %v1101 = vadd.f32 %v1087, %v1097
        %s1102 = sld [smem:[#allocation3 + $0x79]]
        %v1103 = vstv %s1102
        %v1104 = vmul.f32 %v1103, %v942
        %v1105 = vmul.f32 %v1103, %v943
        %1108 = vrot.lane.b32.xlu0 %v1104, 126
        %v1109 = vpop.permute.xlu0 %1108
        %1110 = vrot.lane.b32.xlu0 %v1105, 126
        %v1111 = vpop.permute.xlu0 %1110
        %v1114 = vadd.f32 %v1100, %v1109
        %v1115 = vadd.f32 %v1101, %v1111
        %s1116 = sld [smem:[#allocation3 + $0x81]]
        %v1117 = vstv %s1116
        %v1118 = vmul.f32 %v1117, %v944
        %v1119 = vmul.f32 %v1117, %v945
        %v1120 = vadd.f32 %v1114, %v1118
        %v1121 = vadd.f32 %v1115, %v1119
        %s1122 = sld [smem:[#allocation3 + $0x89]]
        %v1123 = vstv %s1122
        %v1124 = vmul.f32 %v1123, %v944
        %v1125 = vmul.f32 %v1123, %v945
        %1128 = vrot.lane.b32.xlu0 %v1124, 127
        %v1129 = vpop.permute.xlu0 %1128
        %1130 = vrot.lane.b32.xlu0 %v1125, 127
        %v1131 = vpop.permute.xlu0 %1130
        %v1134 = vadd.f32 %v1120, %v1129
        %v1135 = vadd.f32 %v1121, %v1131
        %s1136 = sld [smem:[#allocation3 + $0x91]]
        %v1137 = vstv %s1136
        %v1138 = vmul.f32 %v1137, %v944
        %v1139 = vmul.f32 %v1137, %v945
        %1142 = vrot.lane.b32.xlu0 %v1138, 126
        %v1143 = vpop.permute.xlu0 %1142
        %1144 = vrot.lane.b32.xlu0 %v1139, 126
        %v1145 = vpop.permute.xlu0 %1144
        %v1148 = vadd.f32 %v1134, %v1143
        %v1149 = vadd.f32 %v1135, %v1145
        %1152 = vrot.lane.b32.xlu0 %v837, 1
        %v1153 = vpop.permute.xlu0 %1152
        %1154 = vrot.lane.b32.xlu0 %v838, 1
        %v1155 = vpop.permute.xlu0 %1154
        %1158 = vst.msk [vmem:[#allocation2 + $0x1] sm:$0xff] %vm937, %v1153
        %1159 = vst.msk [vmem:[#allocation2 + $0x9] sm:$0xff] %vm937, %v1155
        %v1160 = vld [vmem:[#allocation2] sm:$0xff]
        %v1161 = vld [vmem:[#allocation2 + $0x8] sm:$0xff]
        %v1162 = vld [vmem:[#allocation2 + $0x1] sm:$0xff]
        %v1163 = vld [vmem:[#allocation2 + $0x9] sm:$0xff]
        %v1164 = vld [vmem:[#allocation2 + $0x2] sm:$0xff]
        %v1165 = vld [vmem:[#allocation2 + $0xa] sm:$0xff]
        %s1166 = sld [smem:[#allocation3 + $0x52]]
        %v1167 = vstv %s1166
        %v1168 = vmul.f32 %v1167, %v1160
        %v1169 = vmul.f32 %v1167, %v1161
        %v1170 = vadd.f32 %v1046, %v1168
        %v1171 = vadd.f32 %v1047, %v1169
        %s1172 = sld [smem:[#allocation3 + $0x5a]]
        %v1173 = vstv %s1172
        %v1174 = vmul.f32 %v1173, %v1160
        %v1175 = vmul.f32 %v1173, %v1161
        %1178 = vrot.lane.b32.xlu0 %v1174, 127
        %v1179 = vpop.permute.xlu0 %1178
        %1180 = vrot.lane.b32.xlu0 %v1175, 127
        %v1181 = vpop.permute.xlu0 %1180
        %v1184 = vadd.f32 %v1170, %v1179
        %v1185 = vadd.f32 %v1171, %v1181
        %s1186 = sld [smem:[#allocation3 + $0x62]]
        %v1187 = vstv %s1186
        %v1188 = vmul.f32 %v1187, %v1160
        %v1189 = vmul.f32 %v1187, %v1161
        %1192 = vrot.lane.b32.xlu0 %v1188, 126
        %v1193 = vpop.permute.xlu0 %1192
        %1194 = vrot.lane.b32.xlu0 %v1189, 126
        %v1195 = vpop.permute.xlu0 %1194
        %v1198 = vadd.f32 %v1184, %v1193
        %v1199 = vadd.f32 %v1185, %v1195
        %s1200 = sld [smem:[#allocation3 + $0x6a]]
        %v1201 = vstv %s1200
        %v1202 = vmul.f32 %v1201, %v1162
        %v1203 = vmul.f32 %v1201, %v1163
        %v1204 = vadd.f32 %v1198, %v1202
        %v1205 = vadd.f32 %v1199, %v1203
        %s1206 = sld [smem:[#allocation3 + $0x72]]
        %v1207 = vstv %s1206
        %v1208 = vmul.f32 %v1207, %v1162
        %v1209 = vmul.f32 %v1207, %v1163
        %1212 = vrot.lane.b32.xlu0 %v1208, 127
        %v1213 = vpop.permute.xlu0 %1212
        %1214 = vrot.lane.b32.xlu0 %v1209, 127
        %v1215 = vpop.permute.xlu0 %1214
        %v1218 = vadd.f32 %v1204, %v1213
        %v1219 = vadd.f32 %v1205, %v1215
        %s1220 = sld [smem:[#allocation3 + $0x7a]]
        %v1221 = vstv %s1220
        %v1222 = vmul.f32 %v1221, %v1162
        %v1223 = vmul.f32 %v1221, %v1163
        %1226 = vrot.lane.b32.xlu0 %v1222, 126
        %v1227 = vpop.permute.xlu0 %1226
        %1228 = vrot.lane.b32.xlu0 %v1223, 126
        %v1229 = vpop.permute.xlu0 %1228
        %v1232 = vadd.f32 %v1218, %v1227
        %v1233 = vadd.f32 %v1219, %v1229
        %s1234 = sld [smem:[#allocation3 + $0x82]]
        %v1235 = vstv %s1234
        %v1236 = vmul.f32 %v1235, %v1164
        %v1237 = vmul.f32 %v1235, %v1165
        %v1238 = vadd.f32 %v1232, %v1236
        %v1239 = vadd.f32 %v1233, %v1237
        %s1240 = sld [smem:[#allocation3 + $0x8a]]
        %v1241 = vstv %s1240
        %v1242 = vmul.f32 %v1241, %v1164
        %v1243 = vmul.f32 %v1241, %v1165
        %1246 = vrot.lane.b32.xlu0 %v1242, 127
        %v1247 = vpop.permute.xlu0 %1246
        %1248 = vrot.lane.b32.xlu0 %v1243, 127
        %v1249 = vpop.permute.xlu0 %1248
        %v1252 = vadd.f32 %v1238, %v1247
        %v1253 = vadd.f32 %v1239, %v1249
        %s1254 = sld [smem:[#allocation3 + $0x92]]
        %v1255 = vstv %s1254
        %v1256 = vmul.f32 %v1255, %v1164
        %v1257 = vmul.f32 %v1255, %v1165
        %1260 = vrot.lane.b32.xlu0 %v1256, 126
        %v1261 = vpop.permute.xlu0 %1260
        %1262 = vrot.lane.b32.xlu0 %v1257, 126
        %v1263 = vpop.permute.xlu0 %1262
        %v1266 = vadd.f32 %v1252, %v1261
        %v1267 = vadd.f32 %v1253, %v1263
        %s1268 = sld [smem:[#allocation3 + $0x53]]
        %v1269 = vstv %s1268
        %v1270 = vmul.f32 %v1269, %v1160
        %v1271 = vmul.f32 %v1269, %v1161
        %v1272 = vadd.f32 %v1148, %v1270
        %v1273 = vadd.f32 %v1149, %v1271
        %s1274 = sld [smem:[#allocation3 + $0x5b]]
        %v1275 = vstv %s1274
        %v1276 = vmul.f32 %v1275, %v1160
        %v1277 = vmul.f32 %v1275, %v1161
        %1280 = vrot.lane.b32.xlu0 %v1276, 127
        %v1281 = vpop.permute.xlu0 %1280
        %1282 = vrot.lane.b32.xlu0 %v1277, 127
        %v1283 = vpop.permute.xlu0 %1282
        %v1286 = vadd.f32 %v1272, %v1281
        %v1287 = vadd.f32 %v1273, %v1283
        %s1288 = sld [smem:[#allocation3 + $0x63]]
        %v1289 = vstv %s1288
        %v1290 = vmul.f32 %v1289, %v1160
        %v1291 = vmul.f32 %v1289, %v1161
        %1294 = vrot.lane.b32.xlu0 %v1290, 126
        %v1295 = vpop.permute.xlu0 %1294
        %1296 = vrot.lane.b32.xlu0 %v1291, 126
        %v1297 = vpop.permute.xlu0 %1296
        %v1300 = vadd.f32 %v1286, %v1295
        %v1301 = vadd.f32 %v1287, %v1297
        %s1302 = sld [smem:[#allocation3 + $0x6b]]
        %v1303 = vstv %s1302
        %v1304 = vmul.f32 %v1303, %v1162
        %v1305 = vmul.f32 %v1303, %v1163
        %v1306 = vadd.f32 %v1300, %v1304
        %v1307 = vadd.f32 %v1301, %v1305
        %s1308 = sld [smem:[#allocation3 + $0x73]]
        %v1309 = vstv %s1308
        %v1310 = vmul.f32 %v1309, %v1162
        %v1311 = vmul.f32 %v1309, %v1163
        %1314 = vrot.lane.b32.xlu0 %v1310, 127
        %v1315 = vpop.permute.xlu0 %1314
        %1316 = vrot.lane.b32.xlu0 %v1311, 127
        %v1317 = vpop.permute.xlu0 %1316
        %v1320 = vadd.f32 %v1306, %v1315
        %v1321 = vadd.f32 %v1307, %v1317
        %s1322 = sld [smem:[#allocation3 + $0x7b]]
        %v1323 = vstv %s1322
        %v1324 = vmul.f32 %v1323, %v1162
        %v1325 = vmul.f32 %v1323, %v1163
        %1328 = vrot.lane.b32.xlu0 %v1324, 126
        %v1329 = vpop.permute.xlu0 %1328
        %1330 = vrot.lane.b32.xlu0 %v1325, 126
        %v1331 = vpop.permute.xlu0 %1330
        %v1334 = vadd.f32 %v1320, %v1329
        %v1335 = vadd.f32 %v1321, %v1331
        %s1336 = sld [smem:[#allocation3 + $0x83]]
        %v1337 = vstv %s1336
        %v1338 = vmul.f32 %v1337, %v1164
        %v1339 = vmul.f32 %v1337, %v1165
        %v1340 = vadd.f32 %v1334, %v1338
        %v1341 = vadd.f32 %v1335, %v1339
        %s1342 = sld [smem:[#allocation3 + $0x8b]]
        %v1343 = vstv %s1342
        %v1344 = vmul.f32 %v1343, %v1164
        %v1345 = vmul.f32 %v1343, %v1165
        %1348 = vrot.lane.b32.xlu0 %v1344, 127
        %v1349 = vpop.permute.xlu0 %1348
        %1350 = vrot.lane.b32.xlu0 %v1345, 127
        %v1351 = vpop.permute.xlu0 %1350
        %v1354 = vadd.f32 %v1340, %v1349
        %v1355 = vadd.f32 %v1341, %v1351
        %s1356 = sld [smem:[#allocation3 + $0x93]]
        %v1357 = vstv %s1356
        %v1358 = vmul.f32 %v1357, %v1164
        %v1359 = vmul.f32 %v1357, %v1165
        %1362 = vrot.lane.b32.xlu0 %v1358, 126
        %v1363 = vpop.permute.xlu0 %1362
        %1364 = vrot.lane.b32.xlu0 %v1359, 126
        %v1365 = vpop.permute.xlu0 %1364
        %v1368 = vadd.f32 %v1354, %v1363
        %v1369 = vadd.f32 %v1355, %v1365
        %1372 = vrot.lane.b32.xlu0 %v882, 1
        %v1373 = vpop.permute.xlu0 %1372
        %1374 = vrot.lane.b32.xlu0 %v883, 1
        %v1375 = vpop.permute.xlu0 %1374
        %1378 = vst.msk [vmem:[#allocation2 + $0x1] sm:$0xff] %vm937, %v1373
        %1379 = vst.msk [vmem:[#allocation2 + $0x9] sm:$0xff] %vm937, %v1375
        %v1380 = vld [vmem:[#allocation2] sm:$0xff]
        %v1381 = vld [vmem:[#allocation2 + $0x8] sm:$0xff]
        %v1382 = vld [vmem:[#allocation2 + $0x1] sm:$0xff]
        %v1383 = vld [vmem:[#allocation2 + $0x9] sm:$0xff]
        %v1384 = vld [vmem:[#allocation2 + $0x2] sm:$0xff]
        %v1385 = vld [vmem:[#allocation2 + $0xa] sm:$0xff]
        %s1386 = sld [smem:[#allocation3 + $0x54]]
        %v1387 = vstv %s1386
        %v1388 = vmul.f32 %v1387, %v1380
        %v1389 = vmul.f32 %v1387, %v1381
        %v1390 = vadd.f32 %v1266, %v1388
        %v1391 = vadd.f32 %v1267, %v1389
        %s1392 = sld [smem:[#allocation3 + $0x5c]]
        %v1393 = vstv %s1392
        %v1394 = vmul.f32 %v1393, %v1380
        %v1395 = vmul.f32 %v1393, %v1381
        %1398 = vrot.lane.b32.xlu0 %v1394, 127
        %v1399 = vpop.permute.xlu0 %1398
        %1400 = vrot.lane.b32.xlu0 %v1395, 127
        %v1401 = vpop.permute.xlu0 %1400
        %v1404 = vadd.f32 %v1390, %v1399
        %v1405 = vadd.f32 %v1391, %v1401
        %s1406 = sld [smem:[#allocation3 + $0x64]]
        %v1407 = vstv %s1406
        %v1408 = vmul.f32 %v1407, %v1380
        %v1409 = vmul.f32 %v1407, %v1381
        %1412 = vrot.lane.b32.xlu0 %v1408, 126
        %v1413 = vpop.permute.xlu0 %1412
        %1414 = vrot.lane.b32.xlu0 %v1409, 126
        %v1415 = vpop.permute.xlu0 %1414
        %v1418 = vadd.f32 %v1404, %v1413
        %v1419 = vadd.f32 %v1405, %v1415
        %s1420 = sld [smem:[#allocation3 + $0x6c]]
        %v1421 = vstv %s1420
        %v1422 = vmul.f32 %v1421, %v1382
        %v1423 = vmul.f32 %v1421, %v1383
        %v1424 = vadd.f32 %v1418, %v1422
        %v1425 = vadd.f32 %v1419, %v1423
        %s1426 = sld [smem:[#allocation3 + $0x74]]
        %v1427 = vstv %s1426
        %v1428 = vmul.f32 %v1427, %v1382
        %v1429 = vmul.f32 %v1427, %v1383
        %1432 = vrot.lane.b32.xlu0 %v1428, 127
        %v1433 = vpop.permute.xlu0 %1432
        %1434 = vrot.lane.b32.xlu0 %v1429, 127
        %v1435 = vpop.permute.xlu0 %1434
        %v1438 = vadd.f32 %v1424, %v1433
        %v1439 = vadd.f32 %v1425, %v1435
        %s1440 = sld [smem:[#allocation3 + $0x7c]]
        %v1441 = vstv %s1440
        %v1442 = vmul.f32 %v1441, %v1382
        %v1443 = vmul.f32 %v1441, %v1383
        %1446 = vrot.lane.b32.xlu0 %v1442, 126
        %v1447 = vpop.permute.xlu0 %1446
        %1448 = vrot.lane.b32.xlu0 %v1443, 126
        %v1449 = vpop.permute.xlu0 %1448
        %v1452 = vadd.f32 %v1438, %v1447
        %v1453 = vadd.f32 %v1439, %v1449
        %s1454 = sld [smem:[#allocation3 + $0x84]]
        %v1455 = vstv %s1454
        %v1456 = vmul.f32 %v1455, %v1384
        %v1457 = vmul.f32 %v1455, %v1385
        %v1458 = vadd.f32 %v1452, %v1456
        %v1459 = vadd.f32 %v1453, %v1457
        %s1460 = sld [smem:[#allocation3 + $0x8c]]
        %v1461 = vstv %s1460
        %v1462 = vmul.f32 %v1461, %v1384
        %v1463 = vmul.f32 %v1461, %v1385
        %1466 = vrot.lane.b32.xlu0 %v1462, 127
        %v1467 = vpop.permute.xlu0 %1466
        %1468 = vrot.lane.b32.xlu0 %v1463, 127
        %v1469 = vpop.permute.xlu0 %1468
        %v1472 = vadd.f32 %v1458, %v1467
        %v1473 = vadd.f32 %v1459, %v1469
        %s1474 = sld [smem:[#allocation3 + $0x94]]
        %v1475 = vstv %s1474
        %v1476 = vmul.f32 %v1475, %v1384
        %v1477 = vmul.f32 %v1475, %v1385
        %1480 = vrot.lane.b32.xlu0 %v1476, 126
        %v1481 = vpop.permute.xlu0 %1480
        %1482 = vrot.lane.b32.xlu0 %v1477, 126
        %v1483 = vpop.permute.xlu0 %1482
        %v1486 = vadd.f32 %v1472, %v1481
        %v1487 = vadd.f32 %v1473, %v1483
        %s1488 = sld [smem:[#allocation3 + $0x55]]
        %v1489 = vstv %s1488
        %v1490 = vmul.f32 %v1489, %v1380
        %v1491 = vmul.f32 %v1489, %v1381
        %v1492 = vadd.f32 %v1368, %v1490
        %v1493 = vadd.f32 %v1369, %v1491
        %s1494 = sld [smem:[#allocation3 + $0x5d]]
        %v1495 = vstv %s1494
        %v1496 = vmul.f32 %v1495, %v1380
        %v1497 = vmul.f32 %v1495, %v1381
        %1500 = vrot.lane.b32.xlu0 %v1496, 127
        %v1501 = vpop.permute.xlu0 %1500
        %1502 = vrot.lane.b32.xlu0 %v1497, 127
        %v1503 = vpop.permute.xlu0 %1502
        %v1506 = vadd.f32 %v1492, %v1501
        %v1507 = vadd.f32 %v1493, %v1503
        %s1508 = sld [smem:[#allocation3 + $0x65]]
        %v1509 = vstv %s1508
        %v1510 = vmul.f32 %v1509, %v1380
        %v1511 = vmul.f32 %v1509, %v1381
        %1514 = vrot.lane.b32.xlu0 %v1510, 126
        %v1515 = vpop.permute.xlu0 %1514
        %1516 = vrot.lane.b32.xlu0 %v1511, 126
        %v1517 = vpop.permute.xlu0 %1516
        %v1520 = vadd.f32 %v1506, %v1515
        %v1521 = vadd.f32 %v1507, %v1517
        %s1522 = sld [smem:[#allocation3 + $0x6d]]
        %v1523 = vstv %s1522
        %v1524 = vmul.f32 %v1523, %v1382
        %v1525 = vmul.f32 %v1523, %v1383
        %v1526 = vadd.f32 %v1520, %v1524
        %v1527 = vadd.f32 %v1521, %v1525
        %s1528 = sld [smem:[#allocation3 + $0x75]]
        %v1529 = vstv %s1528
        %v1530 = vmul.f32 %v1529, %v1382
        %v1531 = vmul.f32 %v1529, %v1383
        %1534 = vrot.lane.b32.xlu0 %v1530, 127
        %v1535 = vpop.permute.xlu0 %1534
        %1536 = vrot.lane.b32.xlu0 %v1531, 127
        %v1537 = vpop.permute.xlu0 %1536
        %v1540 = vadd.f32 %v1526, %v1535
        %v1541 = vadd.f32 %v1527, %v1537
        %s1542 = sld [smem:[#allocation3 + $0x7d]]
        %v1543 = vstv %s1542
        %v1544 = vmul.f32 %v1543, %v1382
        %v1545 = vmul.f32 %v1543, %v1383
        %1548 = vrot.lane.b32.xlu0 %v1544, 126
        %v1549 = vpop.permute.xlu0 %1548
        %1550 = vrot.lane.b32.xlu0 %v1545, 126
        %v1551 = vpop.permute.xlu0 %1550
        %v1554 = vadd.f32 %v1540, %v1549
        %v1555 = vadd.f32 %v1541, %v1551
        %s1556 = sld [smem:[#allocation3 + $0x85]]
        %v1557 = vstv %s1556
        %v1558 = vmul.f32 %v1557, %v1384
        %v1559 = vmul.f32 %v1557, %v1385
        %v1560 = vadd.f32 %v1554, %v1558
        %v1561 = vadd.f32 %v1555, %v1559
        %s1562 = sld [smem:[#allocation3 + $0x8d]]
        %v1563 = vstv %s1562
        %v1564 = vmul.f32 %v1563, %v1384
        %v1565 = vmul.f32 %v1563, %v1385
        %1568 = vrot.lane.b32.xlu0 %v1564, 127
        %v1569 = vpop.permute.xlu0 %1568
        %1570 = vrot.lane.b32.xlu0 %v1565, 127
        %v1571 = vpop.permute.xlu0 %1570
        %v1574 = vadd.f32 %v1560, %v1569
        %v1575 = vadd.f32 %v1561, %v1571
        %s1576 = sld [smem:[#allocation3 + $0x95]]
        %v1577 = vstv %s1576
        %v1578 = vmul.f32 %v1577, %v1384
        %v1579 = vmul.f32 %v1577, %v1385
        %1582 = vrot.lane.b32.xlu0 %v1578, 126
        %v1583 = vpop.permute.xlu0 %1582
        %1584 = vrot.lane.b32.xlu0 %v1579, 126
        %v1585 = vpop.permute.xlu0 %1584
        %v1588 = vadd.f32 %v1574, %v1583
        %v1589 = vadd.f32 %v1575, %v1585
        %1592 = vrot.lane.b32.xlu0 %v927, 1
        %v1593 = vpop.permute.xlu0 %1592
        %1594 = vrot.lane.b32.xlu0 %v928, 1
        %v1595 = vpop.permute.xlu0 %1594
        %1598 = vst.msk [vmem:[#allocation2 + $0x1] sm:$0xff] %vm937, %v1593
        %1599 = vst.msk [vmem:[#allocation2 + $0x9] sm:$0xff] %vm937, %v1595
        %v1600 = vld [vmem:[#allocation2] sm:$0xff]
        %v1601 = vld [vmem:[#allocation2 + $0x8] sm:$0xff]
        %v1602 = vld [vmem:[#allocation2 + $0x1] sm:$0xff]
        %v1603 = vld [vmem:[#allocation2 + $0x9] sm:$0xff]
        %v1604 = vld [vmem:[#allocation2 + $0x2] sm:$0xff]
        %v1605 = vld [vmem:[#allocation2 + $0xa] sm:$0xff]
        %s1606 = sld [smem:[#allocation3 + $0x56]]
        %v1607 = vstv %s1606
        %v1608 = vmul.f32 %v1607, %v1600
        %v1609 = vmul.f32 %v1607, %v1601
        %v1610 = vadd.f32 %v1486, %v1608
        %v1611 = vadd.f32 %v1487, %v1609
        %s1612 = sld [smem:[#allocation3 + $0x5e]]
        %v1613 = vstv %s1612
        %v1614 = vmul.f32 %v1613, %v1600
        %v1615 = vmul.f32 %v1613, %v1601
        %1618 = vrot.lane.b32.xlu0 %v1614, 127
        %v1619 = vpop.permute.xlu0 %1618
        %1620 = vrot.lane.b32.xlu0 %v1615, 127
        %v1621 = vpop.permute.xlu0 %1620
        %v1624 = vadd.f32 %v1610, %v1619
        %v1625 = vadd.f32 %v1611, %v1621
        %s1626 = sld [smem:[#allocation3 + $0x66]]
        %v1627 = vstv %s1626
        %v1628 = vmul.f32 %v1627, %v1600
        %v1629 = vmul.f32 %v1627, %v1601
        %1632 = vrot.lane.b32.xlu0 %v1628, 126
        %v1633 = vpop.permute.xlu0 %1632
        %1634 = vrot.lane.b32.xlu0 %v1629, 126
        %v1635 = vpop.permute.xlu0 %1634
        %v1638 = vadd.f32 %v1624, %v1633
        %v1639 = vadd.f32 %v1625, %v1635
        %s1640 = sld [smem:[#allocation3 + $0x6e]]
        %v1641 = vstv %s1640
        %v1642 = vmul.f32 %v1641, %v1602
        %v1643 = vmul.f32 %v1641, %v1603
        %v1644 = vadd.f32 %v1638, %v1642
        %v1645 = vadd.f32 %v1639, %v1643
        %s1646 = sld [smem:[#allocation3 + $0x76]]
        %v1647 = vstv %s1646
        %v1648 = vmul.f32 %v1647, %v1602
        %v1649 = vmul.f32 %v1647, %v1603
        %1652 = vrot.lane.b32.xlu0 %v1648, 127
        %v1653 = vpop.permute.xlu0 %1652
        %1654 = vrot.lane.b32.xlu0 %v1649, 127
        %v1655 = vpop.permute.xlu0 %1654
        %v1658 = vadd.f32 %v1644, %v1653
        %v1659 = vadd.f32 %v1645, %v1655
        %s1660 = sld [smem:[#allocation3 + $0x7e]]
        %v1661 = vstv %s1660
        %v1662 = vmul.f32 %v1661, %v1602
        %v1663 = vmul.f32 %v1661, %v1603
        %1666 = vrot.lane.b32.xlu0 %v1662, 126
        %v1667 = vpop.permute.xlu0 %1666
        %1668 = vrot.lane.b32.xlu0 %v1663, 126
        %v1669 = vpop.permute.xlu0 %1668
        %v1672 = vadd.f32 %v1658, %v1667
        %v1673 = vadd.f32 %v1659, %v1669
        %s1674 = sld [smem:[#allocation3 + $0x86]]
        %v1675 = vstv %s1674
        %v1676 = vmul.f32 %v1675, %v1604
        %v1677 = vmul.f32 %v1675, %v1605
        %v1678 = vadd.f32 %v1672, %v1676
        %v1679 = vadd.f32 %v1673, %v1677
        %s1680 = sld [smem:[#allocation3 + $0x8e]]
        %v1681 = vstv %s1680
        %v1682 = vmul.f32 %v1681, %v1604
        %v1683 = vmul.f32 %v1681, %v1605
        %1686 = vrot.lane.b32.xlu0 %v1682, 127
        %v1687 = vpop.permute.xlu0 %1686
        %1688 = vrot.lane.b32.xlu0 %v1683, 127
        %v1689 = vpop.permute.xlu0 %1688
        %v1692 = vadd.f32 %v1678, %v1687
        %v1693 = vadd.f32 %v1679, %v1689
        %s1694 = sld [smem:[#allocation3 + $0x96]]
        %v1695 = vstv %s1694
        %v1696 = vmul.f32 %v1695, %v1604
        %v1697 = vmul.f32 %v1695, %v1605
        %1700 = vrot.lane.b32.xlu0 %v1696, 126
        %v1701 = vpop.permute.xlu0 %1700
        %1702 = vrot.lane.b32.xlu0 %v1697, 126
        %v1703 = vpop.permute.xlu0 %1702
        %v1706 = vadd.f32 %v1692, %v1701
        %v1707 = vadd.f32 %v1693, %v1703
        %s1708 = sld [smem:[#allocation3 + $0x57]]
        %v1709 = vstv %s1708
        %v1710 = vmul.f32 %v1709, %v1600
        %v1711 = vmul.f32 %v1709, %v1601
        %v1712 = vadd.f32 %v1588, %v1710
        %v1713 = vadd.f32 %v1589, %v1711
        %s1714 = sld [smem:[#allocation3 + $0x5f]]
        %v1715 = vstv %s1714
        %v1716 = vmul.f32 %v1715, %v1600
        %v1717 = vmul.f32 %v1715, %v1601
        %1720 = vrot.lane.b32.xlu0 %v1716, 127
        %v1721 = vpop.permute.xlu0 %1720
        %1722 = vrot.lane.b32.xlu0 %v1717, 127
        %v1723 = vpop.permute.xlu0 %1722
        %v1726 = vadd.f32 %v1712, %v1721
        %v1727 = vadd.f32 %v1713, %v1723
        %s1728 = sld [smem:[#allocation3 + $0x67]]
        %v1729 = vstv %s1728
        %v1730 = vmul.f32 %v1729, %v1600
        %v1731 = vmul.f32 %v1729, %v1601
        %1734 = vrot.lane.b32.xlu0 %v1730, 126
        %v1735 = vpop.permute.xlu0 %1734
        %1736 = vrot.lane.b32.xlu0 %v1731, 126
        %v1737 = vpop.permute.xlu0 %1736
        %v1740 = vadd.f32 %v1726, %v1735
        %v1741 = vadd.f32 %v1727, %v1737
        %s1742 = sld [smem:[#allocation3 + $0x6f]]
        %v1743 = vstv %s1742
        %v1744 = vmul.f32 %v1743, %v1602
        %v1745 = vmul.f32 %v1743, %v1603
        %v1746 = vadd.f32 %v1740, %v1744
        %v1747 = vadd.f32 %v1741, %v1745
        %s1748 = sld [smem:[#allocation3 + $0x77]]
        %v1749 = vstv %s1748
        %v1750 = vmul.f32 %v1749, %v1602
        %v1751 = vmul.f32 %v1749, %v1603
        %1754 = vrot.lane.b32.xlu0 %v1750, 127
        %v1755 = vpop.permute.xlu0 %1754
        %1756 = vrot.lane.b32.xlu0 %v1751, 127
        %v1757 = vpop.permute.xlu0 %1756
        %v1760 = vadd.f32 %v1746, %v1755
        %v1761 = vadd.f32 %v1747, %v1757
        %s1762 = sld [smem:[#allocation3 + $0x7f]]
        %v1763 = vstv %s1762
        %v1764 = vmul.f32 %v1763, %v1602
        %v1765 = vmul.f32 %v1763, %v1603
        %1768 = vrot.lane.b32.xlu0 %v1764, 126
        %v1769 = vpop.permute.xlu0 %1768
        %1770 = vrot.lane.b32.xlu0 %v1765, 126
        %v1771 = vpop.permute.xlu0 %1770
        %v1774 = vadd.f32 %v1760, %v1769
        %v1775 = vadd.f32 %v1761, %v1771
        %s1776 = sld [smem:[#allocation3 + $0x87]]
        %v1777 = vstv %s1776
        %v1778 = vmul.f32 %v1777, %v1604
        %v1779 = vmul.f32 %v1777, %v1605
        %v1780 = vadd.f32 %v1774, %v1778
        %v1781 = vadd.f32 %v1775, %v1779
        %s1782 = sld [smem:[#allocation3 + $0x8f]]
        %v1783 = vstv %s1782
        %v1784 = vmul.f32 %v1783, %v1604
        %v1785 = vmul.f32 %v1783, %v1605
        %1788 = vrot.lane.b32.xlu0 %v1784, 127
        %v1789 = vpop.permute.xlu0 %1788
        %1790 = vrot.lane.b32.xlu0 %v1785, 127
        %v1791 = vpop.permute.xlu0 %1790
        %v1794 = vadd.f32 %v1780, %v1789
        %v1795 = vadd.f32 %v1781, %v1791
        %s1796 = sld [smem:[#allocation3 + $0x97]]
        %v1797 = vstv %s1796
        %v1798 = vmul.f32 %v1797, %v1604
        %v1799 = vmul.f32 %v1797, %v1605
        %1802 = vrot.lane.b32.xlu0 %v1798, 126
        %v1803 = vpop.permute.xlu0 %1802
        %1804 = vrot.lane.b32.xlu0 %v1799, 126
        %v1805 = vpop.permute.xlu0 %1804
        %v1808 = vadd.f32 %v1794, %v1803
        %v1809 = vadd.f32 %v1795, %v1805
        %v1810 = vsel %vm568, %v1706, 0.0
        %1811 = vadd.xlane.f32.xlu0 %v1810
        %v1812 = vpop.xlane.xlu0 %1811
        %v1813 = vsel %vm568, %v1707, 0.0
        %1814 = vadd.xlane.f32.xlu0 %v1813
        %v1815 = vpop.xlane.xlu0 %1814
        %v1816 = vadd.f32 %v1812, %v1815
        %v1817 = vrot.slane %v1816, 4
        %v1818 = vadd.f32 %v1816, %v1817
        %v1819 = vrot.slane %v1818, 2
        %v1820 = vadd.f32 %v1818, %v1819
        %v1821 = vrot.slane %v1820, 1
        %v1822 = vadd.f32 %v1820, %v1821
        %v1823 = vmul.f32 %v1822, 0.00390625
        %v1824 = vsub.f32 %v1706, %v1823
        %v1825 = vsub.f32 %v1707, %v1823
        %v1826 = vmul.f32 %v1824, %v1824
        %v1827 = vmul.f32 %v1825, %v1825
        %v1828 = vsel %vm568, %v1826, 0.0
        %1829 = vadd.xlane.f32.xlu0 %v1828
        %v1830 = vpop.xlane.xlu0 %1829
        %v1831 = vsel %vm568, %v1827, 0.0
        %1832 = vadd.xlane.f32.xlu0 %v1831
        %v1833 = vpop.xlane.xlu0 %1832
        %v1834 = vadd.f32 %v1830, %v1833
        %v1835 = vrot.slane %v1834, 4
        %v1836 = vadd.f32 %v1834, %v1835
        %v1837 = vrot.slane %v1836, 2
        %v1838 = vadd.f32 %v1836, %v1837
        %v1839 = vrot.slane %v1838, 1
        %v1840 = vadd.f32 %v1838, %v1839
        %v1841 = vmul.f32 %v1840, 0.00390625
        %s1842 = sld [smem:[#allocation3 + $0x98]]
        %v1843 = vadd.f32 %v1841, 1e-05
        %v1844 = vrsqrt.pop %v1843
        %v1845 = vstv %s1842
        %v1846 = vmul.f32 %v1845, %v1844
        %v1847 = vmul.f32 %v1824, %v1846
        %v1848 = vmul.f32 %v1825, %v1846
        %s1849 = sld [smem:[#allocation3 + $0x9a]]
        %v1850 = vstv %s1849
        %v1851 = vadd.f32 %v1847, %v1850
        %v1852 = vadd.f32 %v1848, %v1850
        %v1853 = vtanh.pop %v1851
        %v1854 = vtanh.pop %v1852
        %v1855 = vsel %vm568, %v1808, 0.0
        %1856 = vadd.xlane.f32.xlu0 %v1855
        %v1857 = vpop.xlane.xlu0 %1856
        %v1858 = vsel %vm568, %v1809, 0.0
        %1859 = vadd.xlane.f32.xlu0 %v1858
        %v1860 = vpop.xlane.xlu0 %1859
        %v1861 = vadd.f32 %v1857, %v1860
        %v1862 = vrot.slane %v1861, 4
        %v1863 = vadd.f32 %v1861, %v1862
        %v1864 = vrot.slane %v1863, 2
        %v1865 = vadd.f32 %v1863, %v1864
        %v1866 = vrot.slane %v1865, 1
        %v1867 = vadd.f32 %v1865, %v1866
        %v1868 = vmul.f32 %v1867, 0.00390625
        %v1869 = vsub.f32 %v1808, %v1868
        %v1870 = vsub.f32 %v1809, %v1868
        %v1871 = vmul.f32 %v1869, %v1869
        %v1872 = vmul.f32 %v1870, %v1870
        %v1873 = vsel %vm568, %v1871, 0.0
        %1874 = vadd.xlane.f32.xlu0 %v1873
        %v1875 = vpop.xlane.xlu0 %1874
        %v1876 = vsel %vm568, %v1872, 0.0
        %1877 = vadd.xlane.f32.xlu0 %v1876
        %v1878 = vpop.xlane.xlu0 %1877
        %v1879 = vadd.f32 %v1875, %v1878
        %v1880 = vrot.slane %v1879, 4
        %v1881 = vadd.f32 %v1879, %v1880
        %v1882 = vrot.slane %v1881, 2
        %v1883 = vadd.f32 %v1881, %v1882
        %v1884 = vrot.slane %v1883, 1
        %v1885 = vadd.f32 %v1883, %v1884
        %v1886 = vmul.f32 %v1885, 0.00390625
        %s1887 = sld [smem:[#allocation3 + $0x99]]
        %v1888 = vadd.f32 %v1886, 1e-05
        %v1889 = vrsqrt.pop %v1888
        %v1890 = vstv %s1887
        %v1891 = vmul.f32 %v1890, %v1889
        %v1892 = vmul.f32 %v1869, %v1891
        %v1893 = vmul.f32 %v1870, %v1891
        %s1894 = sld [smem:[#allocation3 + $0x9b]]
        %v1895 = vstv %s1894
        %v1896 = vadd.f32 %v1892, %v1895
        %v1897 = vadd.f32 %v1893, %v1895
        %v1898 = vtanh.pop %v1896
        %v1899 = vtanh.pop %v1897
        %1902 = vrot.lane.b32.xlu0 %v1853, 1
        %v1903 = vpop.permute.xlu0 %1902
        %1904 = vrot.lane.b32.xlu0 %v1854, 1
        %v1905 = vpop.permute.xlu0 %1904
        %1908 = vst.msk [vmem:[#allocation2 + $0x1] sm:$0xff] %vm937, %v1903
        %1909 = vst.msk [vmem:[#allocation2 + $0x9] sm:$0xff] %vm937, %v1905
        %v1910 = vld [vmem:[#allocation2] sm:$0xff]
        %v1911 = vld [vmem:[#allocation2 + $0x8] sm:$0xff]
        %v1912 = vld [vmem:[#allocation2 + $0x1] sm:$0xff]
        %v1913 = vld [vmem:[#allocation2 + $0x9] sm:$0xff]
        %v1914 = vld [vmem:[#allocation2 + $0x2] sm:$0xff]
        %v1915 = vld [vmem:[#allocation2 + $0xa] sm:$0xff]
        %s1916 = sld [smem:[#allocation3 + $0x9c]]
        %v1917 = vstv %s1916
        %v1918 = vmul.f32 %v1917, %v1910
        %v1919 = vmul.f32 %v1917, %v1911
        %v1920 = vadd.f32 %v1918, 0.0
        %v1921 = vadd.f32 %v1919, 0.0
        %s1922 = sld [smem:[#allocation3 + $0xa4]]
        %v1923 = vstv %s1922
        %v1924 = vmul.f32 %v1923, %v1910
        %v1925 = vmul.f32 %v1923, %v1911
        %1928 = vrot.lane.b32.xlu0 %v1924, 127
        %v1929 = vpop.permute.xlu0 %1928
        %1930 = vrot.lane.b32.xlu0 %v1925, 127
        %v1931 = vpop.permute.xlu0 %1930
        %v1934 = vadd.f32 %v1920, %v1929
        %v1935 = vadd.f32 %v1921, %v1931
        %s1936 = sld [smem:[#allocation3 + $0xac]]
        %v1937 = vstv %s1936
        %v1938 = vmul.f32 %v1937, %v1910
        %v1939 = vmul.f32 %v1937, %v1911
        %1942 = vrot.lane.b32.xlu0 %v1938, 126
        %v1943 = vpop.permute.xlu0 %1942
        %1944 = vrot.lane.b32.xlu0 %v1939, 126
        %v1945 = vpop.permute.xlu0 %1944
        %v1948 = vadd.f32 %v1934, %v1943
        %v1949 = vadd.f32 %v1935, %v1945
        %s1950 = sld [smem:[#allocation3 + $0xb4]]
        %v1951 = vstv %s1950
        %v1952 = vmul.f32 %v1951, %v1912
        %v1953 = vmul.f32 %v1951, %v1913
        %v1954 = vadd.f32 %v1948, %v1952
        %v1955 = vadd.f32 %v1949, %v1953
        %s1956 = sld [smem:[#allocation3 + $0xbc]]
        %v1957 = vstv %s1956
        %v1958 = vmul.f32 %v1957, %v1912
        %v1959 = vmul.f32 %v1957, %v1913
        %1962 = vrot.lane.b32.xlu0 %v1958, 127
        %v1963 = vpop.permute.xlu0 %1962
        %1964 = vrot.lane.b32.xlu0 %v1959, 127
        %v1965 = vpop.permute.xlu0 %1964
        %v1968 = vadd.f32 %v1954, %v1963
        %v1969 = vadd.f32 %v1955, %v1965
        %s1970 = sld [smem:[#allocation3 + $0xc4]]
        %v1971 = vstv %s1970
        %v1972 = vmul.f32 %v1971, %v1912
        %v1973 = vmul.f32 %v1971, %v1913
        %1976 = vrot.lane.b32.xlu0 %v1972, 126
        %v1977 = vpop.permute.xlu0 %1976
        %1978 = vrot.lane.b32.xlu0 %v1973, 126
        %v1979 = vpop.permute.xlu0 %1978
        %v1982 = vadd.f32 %v1968, %v1977
        %v1983 = vadd.f32 %v1969, %v1979
        %s1984 = sld [smem:[#allocation3 + $0xcc]]
        %v1985 = vstv %s1984
        %v1986 = vmul.f32 %v1985, %v1914
        %v1987 = vmul.f32 %v1985, %v1915
        %v1988 = vadd.f32 %v1982, %v1986
        %v1989 = vadd.f32 %v1983, %v1987
        %s1990 = sld [smem:[#allocation3 + $0xd4]]
        %v1991 = vstv %s1990
        %v1992 = vmul.f32 %v1991, %v1914
        %v1993 = vmul.f32 %v1991, %v1915
        %1996 = vrot.lane.b32.xlu0 %v1992, 127
        %v1997 = vpop.permute.xlu0 %1996
        %1998 = vrot.lane.b32.xlu0 %v1993, 127
        %v1999 = vpop.permute.xlu0 %1998
        %v2002 = vadd.f32 %v1988, %v1997
        %v2003 = vadd.f32 %v1989, %v1999
        %s2004 = sld [smem:[#allocation3 + $0xdc]]
        %v2005 = vstv %s2004
        %v2006 = vmul.f32 %v2005, %v1914
        %v2007 = vmul.f32 %v2005, %v1915
        %2010 = vrot.lane.b32.xlu0 %v2006, 126
        %v2011 = vpop.permute.xlu0 %2010
        %2012 = vrot.lane.b32.xlu0 %v2007, 126
        %v2013 = vpop.permute.xlu0 %2012
        %v2016 = vadd.f32 %v2002, %v2011
        %v2017 = vadd.f32 %v2003, %v2013
        %s2018 = sld [smem:[#allocation3 + $0x9d]]
        %v2019 = vstv %s2018
        %v2020 = vmul.f32 %v2019, %v1910
        %v2021 = vmul.f32 %v2019, %v1911
        %v2022 = vadd.f32 %v2020, 0.0
        %v2023 = vadd.f32 %v2021, 0.0
        %s2024 = sld [smem:[#allocation3 + $0xa5]]
        %v2025 = vstv %s2024
        %v2026 = vmul.f32 %v2025, %v1910
        %v2027 = vmul.f32 %v2025, %v1911
        %2030 = vrot.lane.b32.xlu0 %v2026, 127
        %v2031 = vpop.permute.xlu0 %2030
        %2032 = vrot.lane.b32.xlu0 %v2027, 127
        %v2033 = vpop.permute.xlu0 %2032
        %v2036 = vadd.f32 %v2022, %v2031
        %v2037 = vadd.f32 %v2023, %v2033
        %s2038 = sld [smem:[#allocation3 + $0xad]]
        %v2039 = vstv %s2038
        %v2040 = vmul.f32 %v2039, %v1910
        %v2041 = vmul.f32 %v2039, %v1911
        %2044 = vrot.lane.b32.xlu0 %v2040, 126
        %v2045 = vpop.permute.xlu0 %2044
        %2046 = vrot.lane.b32.xlu0 %v2041, 126
        %v2047 = vpop.permute.xlu0 %2046
        %v2050 = vadd.f32 %v2036, %v2045
        %v2051 = vadd.f32 %v2037, %v2047
        %s2052 = sld [smem:[#allocation3 + $0xb5]]
        %v2053 = vstv %s2052
        %v2054 = vmul.f32 %v2053, %v1912
        %v2055 = vmul.f32 %v2053, %v1913
        %v2056 = vadd.f32 %v2050, %v2054
        %v2057 = vadd.f32 %v2051, %v2055
        %s2058 = sld [smem:[#allocation3 + $0xbd]]
        %v2059 = vstv %s2058
        %v2060 = vmul.f32 %v2059, %v1912
        %v2061 = vmul.f32 %v2059, %v1913
        %2064 = vrot.lane.b32.xlu0 %v2060, 127
        %v2065 = vpop.permute.xlu0 %2064
        %2066 = vrot.lane.b32.xlu0 %v2061, 127
        %v2067 = vpop.permute.xlu0 %2066
        %v2070 = vadd.f32 %v2056, %v2065
        %v2071 = vadd.f32 %v2057, %v2067
        %s2072 = sld [smem:[#allocation3 + $0xc5]]
        %v2073 = vstv %s2072
        %v2074 = vmul.f32 %v2073, %v1912
        %v2075 = vmul.f32 %v2073, %v1913
        %2078 = vrot.lane.b32.xlu0 %v2074, 126
        %v2079 = vpop.permute.xlu0 %2078
        %2080 = vrot.lane.b32.xlu0 %v2075, 126
        %v2081 = vpop.permute.xlu0 %2080
        %v2084 = vadd.f32 %v2070, %v2079
        %v2085 = vadd.f32 %v2071, %v2081
        %s2086 = sld [smem:[#allocation3 + $0xcd]]
        %v2087 = vstv %s2086
        %v2088 = vmul.f32 %v2087, %v1914
        %v2089 = vmul.f32 %v2087, %v1915
        %v2090 = vadd.f32 %v2084, %v2088
        %v2091 = vadd.f32 %v2085, %v2089
        %s2092 = sld [smem:[#allocation3 + $0xd5]]
        %v2093 = vstv %s2092
        %v2094 = vmul.f32 %v2093, %v1914
        %v2095 = vmul.f32 %v2093, %v1915
        %2098 = vrot.lane.b32.xlu0 %v2094, 127
        %v2099 = vpop.permute.xlu0 %2098
        %2100 = vrot.lane.b32.xlu0 %v2095, 127
        %v2101 = vpop.permute.xlu0 %2100
        %v2104 = vadd.f32 %v2090, %v2099
        %v2105 = vadd.f32 %v2091, %v2101
        %s2106 = sld [smem:[#allocation3 + $0xdd]]
        %v2107 = vstv %s2106
        %v2108 = vmul.f32 %v2107, %v1914
        %v2109 = vmul.f32 %v2107, %v1915
        %2112 = vrot.lane.b32.xlu0 %v2108, 126
        %v2113 = vpop.permute.xlu0 %2112
        %2114 = vrot.lane.b32.xlu0 %v2109, 126
        %v2115 = vpop.permute.xlu0 %2114
        %v2118 = vadd.f32 %v2104, %v2113
        %v2119 = vadd.f32 %v2105, %v2115
        %s2120 = sld [smem:[#allocation3 + $0x9e]]
        %v2121 = vstv %s2120
        %v2122 = vmul.f32 %v2121, %v1910
        %v2123 = vmul.f32 %v2121, %v1911
        %v2124 = vadd.f32 %v2122, 0.0
        %v2125 = vadd.f32 %v2123, 0.0
        %s2126 = sld [smem:[#allocation3 + $0xa6]]
        %v2127 = vstv %s2126
        %v2128 = vmul.f32 %v2127, %v1910
        %v2129 = vmul.f32 %v2127, %v1911
        %2132 = vrot.lane.b32.xlu0 %v2128, 127
        %v2133 = vpop.permute.xlu0 %2132
        %2134 = vrot.lane.b32.xlu0 %v2129, 127
        %v2135 = vpop.permute.xlu0 %2134
        %v2138 = vadd.f32 %v2124, %v2133
        %v2139 = vadd.f32 %v2125, %v2135
        %s2140 = sld [smem:[#allocation3 + $0xae]]
        %v2141 = vstv %s2140
        %v2142 = vmul.f32 %v2141, %v1910
        %v2143 = vmul.f32 %v2141, %v1911
        %2146 = vrot.lane.b32.xlu0 %v2142, 126
        %v2147 = vpop.permute.xlu0 %2146
        %2148 = vrot.lane.b32.xlu0 %v2143, 126
        %v2149 = vpop.permute.xlu0 %2148
        %v2152 = vadd.f32 %v2138, %v2147
        %v2153 = vadd.f32 %v2139, %v2149
        %s2154 = sld [smem:[#allocation3 + $0xb6]]
        %v2155 = vstv %s2154
        %v2156 = vmul.f32 %v2155, %v1912
        %v2157 = vmul.f32 %v2155, %v1913
        %v2158 = vadd.f32 %v2152, %v2156
        %v2159 = vadd.f32 %v2153, %v2157
        %s2160 = sld [smem:[#allocation3 + $0xbe]]
        %v2161 = vstv %s2160
        %v2162 = vmul.f32 %v2161, %v1912
        %v2163 = vmul.f32 %v2161, %v1913
        %2166 = vrot.lane.b32.xlu0 %v2162, 127
        %v2167 = vpop.permute.xlu0 %2166
        %2168 = vrot.lane.b32.xlu0 %v2163, 127
        %v2169 = vpop.permute.xlu0 %2168
        %v2172 = vadd.f32 %v2158, %v2167
        %v2173 = vadd.f32 %v2159, %v2169
        %s2174 = sld [smem:[#allocation3 + $0xc6]]
        %v2175 = vstv %s2174
        %v2176 = vmul.f32 %v2175, %v1912
        %v2177 = vmul.f32 %v2175, %v1913
        %2180 = vrot.lane.b32.xlu0 %v2176, 126
        %v2181 = vpop.permute.xlu0 %2180
        %2182 = vrot.lane.b32.xlu0 %v2177, 126
        %v2183 = vpop.permute.xlu0 %2182
        %v2186 = vadd.f32 %v2172, %v2181
        %v2187 = vadd.f32 %v2173, %v2183
        %s2188 = sld [smem:[#allocation3 + $0xce]]
        %v2189 = vstv %s2188
        %v2190 = vmul.f32 %v2189, %v1914
        %v2191 = vmul.f32 %v2189, %v1915
        %v2192 = vadd.f32 %v2186, %v2190
        %v2193 = vadd.f32 %v2187, %v2191
        %s2194 = sld [smem:[#allocation3 + $0xd6]]
        %v2195 = vstv %s2194
        %v2196 = vmul.f32 %v2195, %v1914
        %v2197 = vmul.f32 %v2195, %v1915
        %2200 = vrot.lane.b32.xlu0 %v2196, 127
        %v2201 = vpop.permute.xlu0 %2200
        %2202 = vrot.lane.b32.xlu0 %v2197, 127
        %v2203 = vpop.permute.xlu0 %2202
        %v2206 = vadd.f32 %v2192, %v2201
        %v2207 = vadd.f32 %v2193, %v2203
        %s2208 = sld [smem:[#allocation3 + $0xde]]
        %v2209 = vstv %s2208
        %v2210 = vmul.f32 %v2209, %v1914
        %v2211 = vmul.f32 %v2209, %v1915
        %2214 = vrot.lane.b32.xlu0 %v2210, 126
        %v2215 = vpop.permute.xlu0 %2214
        %2216 = vrot.lane.b32.xlu0 %v2211, 126
        %v2217 = vpop.permute.xlu0 %2216
        %v2220 = vadd.f32 %v2206, %v2215
        %v2221 = vadd.f32 %v2207, %v2217
        %s2222 = sld [smem:[#allocation3 + $0x9f]]
        %v2223 = vstv %s2222
        %v2224 = vmul.f32 %v2223, %v1910
        %v2225 = vmul.f32 %v2223, %v1911
        %v2226 = vadd.f32 %v2224, 0.0
        %v2227 = vadd.f32 %v2225, 0.0
        %s2228 = sld [smem:[#allocation3 + $0xa7]]
        %v2229 = vstv %s2228
        %v2230 = vmul.f32 %v2229, %v1910
        %v2231 = vmul.f32 %v2229, %v1911
        %2234 = vrot.lane.b32.xlu0 %v2230, 127
        %v2235 = vpop.permute.xlu0 %2234
        %2236 = vrot.lane.b32.xlu0 %v2231, 127
        %v2237 = vpop.permute.xlu0 %2236
        %v2240 = vadd.f32 %v2226, %v2235
        %v2241 = vadd.f32 %v2227, %v2237
        %s2242 = sld [smem:[#allocation3 + $0xaf]]
        %v2243 = vstv %s2242
        %v2244 = vmul.f32 %v2243, %v1910
        %v2245 = vmul.f32 %v2243, %v1911
        %2248 = vrot.lane.b32.xlu0 %v2244, 126
        %v2249 = vpop.permute.xlu0 %2248
        %2250 = vrot.lane.b32.xlu0 %v2245, 126
        %v2251 = vpop.permute.xlu0 %2250
        %v2254 = vadd.f32 %v2240, %v2249
        %v2255 = vadd.f32 %v2241, %v2251
        %s2256 = sld [smem:[#allocation3 + $0xb7]]
        %v2257 = vstv %s2256
        %v2258 = vmul.f32 %v2257, %v1912
        %v2259 = vmul.f32 %v2257, %v1913
        %v2260 = vadd.f32 %v2254, %v2258
        %v2261 = vadd.f32 %v2255, %v2259
        %s2262 = sld [smem:[#allocation3 + $0xbf]]
        %v2263 = vstv %s2262
        %v2264 = vmul.f32 %v2263, %v1912
        %v2265 = vmul.f32 %v2263, %v1913
        %2268 = vrot.lane.b32.xlu0 %v2264, 127
        %v2269 = vpop.permute.xlu0 %2268
        %2270 = vrot.lane.b32.xlu0 %v2265, 127
        %v2271 = vpop.permute.xlu0 %2270
        %v2274 = vadd.f32 %v2260, %v2269
        %v2275 = vadd.f32 %v2261, %v2271
        %s2276 = sld [smem:[#allocation3 + $0xc7]]
        %v2277 = vstv %s2276
        %v2278 = vmul.f32 %v2277, %v1912
        %v2279 = vmul.f32 %v2277, %v1913
        %2282 = vrot.lane.b32.xlu0 %v2278, 126
        %v2283 = vpop.permute.xlu0 %2282
        %2284 = vrot.lane.b32.xlu0 %v2279, 126
        %v2285 = vpop.permute.xlu0 %2284
        %v2288 = vadd.f32 %v2274, %v2283
        %v2289 = vadd.f32 %v2275, %v2285
        %s2290 = sld [smem:[#allocation3 + $0xcf]]
        %v2291 = vstv %s2290
        %v2292 = vmul.f32 %v2291, %v1914
        %v2293 = vmul.f32 %v2291, %v1915
        %v2294 = vadd.f32 %v2288, %v2292
        %v2295 = vadd.f32 %v2289, %v2293
        %s2296 = sld [smem:[#allocation3 + $0xd7]]
        %v2297 = vstv %s2296
        %v2298 = vmul.f32 %v2297, %v1914
        %v2299 = vmul.f32 %v2297, %v1915
        %2302 = vrot.lane.b32.xlu0 %v2298, 127
        %v2303 = vpop.permute.xlu0 %2302
        %2304 = vrot.lane.b32.xlu0 %v2299, 127
        %v2305 = vpop.permute.xlu0 %2304
        %v2308 = vadd.f32 %v2294, %v2303
        %v2309 = vadd.f32 %v2295, %v2305
        %s2310 = sld [smem:[#allocation3 + $0xdf]]
        %v2311 = vstv %s2310
        %v2312 = vmul.f32 %v2311, %v1914
        %v2313 = vmul.f32 %v2311, %v1915
        %2316 = vrot.lane.b32.xlu0 %v2312, 126
        %v2317 = vpop.permute.xlu0 %2316
        %2318 = vrot.lane.b32.xlu0 %v2313, 126
        %v2319 = vpop.permute.xlu0 %2318
        %v2322 = vadd.f32 %v2308, %v2317
        %v2323 = vadd.f32 %v2309, %v2319
        %2326 = vrot.lane.b32.xlu0 %v1898, 1
        %v2327 = vpop.permute.xlu0 %2326
        %2328 = vrot.lane.b32.xlu0 %v1899, 1
        %v2329 = vpop.permute.xlu0 %2328
        %2332 = vst.msk [vmem:[#allocation2 + $0x1] sm:$0xff] %vm937, %v2327
        %2333 = vst.msk [vmem:[#allocation2 + $0x9] sm:$0xff] %vm937, %v2329
        %v2334 = vld [vmem:[#allocation2] sm:$0xff]
        %v2335 = vld [vmem:[#allocation2 + $0x8] sm:$0xff]
        %v2336 = vld [vmem:[#allocation2 + $0x1] sm:$0xff]
        %v2337 = vld [vmem:[#allocation2 + $0x9] sm:$0xff]
        %v2338 = vld [vmem:[#allocation2 + $0x2] sm:$0xff]
        %v2339 = vld [vmem:[#allocation2 + $0xa] sm:$0xff]
        %s2340 = sld [smem:[#allocation3 + $0xa0]]
        %v2341 = vstv %s2340
        %v2342 = vmul.f32 %v2341, %v2334
        %v2343 = vmul.f32 %v2341, %v2335
        %v2344 = vadd.f32 %v2016, %v2342
        %v2345 = vadd.f32 %v2017, %v2343
        %s2346 = sld [smem:[#allocation3 + $0xa8]]
        %v2347 = vstv %s2346
        %v2348 = vmul.f32 %v2347, %v2334
        %v2349 = vmul.f32 %v2347, %v2335
        %2352 = vrot.lane.b32.xlu0 %v2348, 127
        %v2353 = vpop.permute.xlu0 %2352
        %2354 = vrot.lane.b32.xlu0 %v2349, 127
        %v2355 = vpop.permute.xlu0 %2354
        %v2358 = vadd.f32 %v2344, %v2353
        %v2359 = vadd.f32 %v2345, %v2355
        %s2360 = sld [smem:[#allocation3 + $0xb0]]
        %v2361 = vstv %s2360
        %v2362 = vmul.f32 %v2361, %v2334
        %v2363 = vmul.f32 %v2361, %v2335
        %2366 = vrot.lane.b32.xlu0 %v2362, 126
        %v2367 = vpop.permute.xlu0 %2366
        %2368 = vrot.lane.b32.xlu0 %v2363, 126
        %v2369 = vpop.permute.xlu0 %2368
        %v2372 = vadd.f32 %v2358, %v2367
        %v2373 = vadd.f32 %v2359, %v2369
        %s2374 = sld [smem:[#allocation3 + $0xb8]]
        %v2375 = vstv %s2374
        %v2376 = vmul.f32 %v2375, %v2336
        %v2377 = vmul.f32 %v2375, %v2337
        %v2378 = vadd.f32 %v2372, %v2376
        %v2379 = vadd.f32 %v2373, %v2377
        %s2380 = sld [smem:[#allocation3 + $0xc0]]
        %v2381 = vstv %s2380
        %v2382 = vmul.f32 %v2381, %v2336
        %v2383 = vmul.f32 %v2381, %v2337
        %2386 = vrot.lane.b32.xlu0 %v2382, 127
        %v2387 = vpop.permute.xlu0 %2386
        %2388 = vrot.lane.b32.xlu0 %v2383, 127
        %v2389 = vpop.permute.xlu0 %2388
        %v2392 = vadd.f32 %v2378, %v2387
        %v2393 = vadd.f32 %v2379, %v2389
        %s2394 = sld [smem:[#allocation3 + $0xc8]]
        %v2395 = vstv %s2394
        %v2396 = vmul.f32 %v2395, %v2336
        %v2397 = vmul.f32 %v2395, %v2337
        %2400 = vrot.lane.b32.xlu0 %v2396, 126
        %v2401 = vpop.permute.xlu0 %2400
        %2402 = vrot.lane.b32.xlu0 %v2397, 126
        %v2403 = vpop.permute.xlu0 %2402
        %v2406 = vadd.f32 %v2392, %v2401
        %v2407 = vadd.f32 %v2393, %v2403
        %s2408 = sld [smem:[#allocation3 + $0xd0]]
        %v2409 = vstv %s2408
        %v2410 = vmul.f32 %v2409, %v2338
        %v2411 = vmul.f32 %v2409, %v2339
        %v2412 = vadd.f32 %v2406, %v2410
        %v2413 = vadd.f32 %v2407, %v2411
        %s2414 = sld [smem:[#allocation3 + $0xd8]]
        %v2415 = vstv %s2414
        %v2416 = vmul.f32 %v2415, %v2338
        %v2417 = vmul.f32 %v2415, %v2339
        %2420 = vrot.lane.b32.xlu0 %v2416, 127
        %v2421 = vpop.permute.xlu0 %2420
        %2422 = vrot.lane.b32.xlu0 %v2417, 127
        %v2423 = vpop.permute.xlu0 %2422
        %v2426 = vadd.f32 %v2412, %v2421
        %v2427 = vadd.f32 %v2413, %v2423
        %s2428 = sld [smem:[#allocation3 + $0xe0]]
        %v2429 = vstv %s2428
        %v2430 = vmul.f32 %v2429, %v2338
        %v2431 = vmul.f32 %v2429, %v2339
        %2434 = vrot.lane.b32.xlu0 %v2430, 126
        %v2435 = vpop.permute.xlu0 %2434
        %2436 = vrot.lane.b32.xlu0 %v2431, 126
        %v2437 = vpop.permute.xlu0 %2436
        %v2440 = vadd.f32 %v2426, %v2435
        %v2441 = vadd.f32 %v2427, %v2437
        %s2442 = sld [smem:[#allocation3 + $0xa1]]
        %v2443 = vstv %s2442
        %v2444 = vmul.f32 %v2443, %v2334
        %v2445 = vmul.f32 %v2443, %v2335
        %v2446 = vadd.f32 %v2118, %v2444
        %v2447 = vadd.f32 %v2119, %v2445
        %s2448 = sld [smem:[#allocation3 + $0xa9]]
        %v2449 = vstv %s2448
        %v2450 = vmul.f32 %v2449, %v2334
        %v2451 = vmul.f32 %v2449, %v2335
        %2454 = vrot.lane.b32.xlu0 %v2450, 127
        %v2455 = vpop.permute.xlu0 %2454
        %2456 = vrot.lane.b32.xlu0 %v2451, 127
        %v2457 = vpop.permute.xlu0 %2456
        %v2460 = vadd.f32 %v2446, %v2455
        %v2461 = vadd.f32 %v2447, %v2457
        %s2462 = sld [smem:[#allocation3 + $0xb1]]
        %v2463 = vstv %s2462
        %v2464 = vmul.f32 %v2463, %v2334
        %v2465 = vmul.f32 %v2463, %v2335
        %2468 = vrot.lane.b32.xlu0 %v2464, 126
        %v2469 = vpop.permute.xlu0 %2468
        %2470 = vrot.lane.b32.xlu0 %v2465, 126
        %v2471 = vpop.permute.xlu0 %2470
        %v2474 = vadd.f32 %v2460, %v2469
        %v2475 = vadd.f32 %v2461, %v2471
        %s2476 = sld [smem:[#allocation3 + $0xb9]]
        %v2477 = vstv %s2476
        %v2478 = vmul.f32 %v2477, %v2336
        %v2479 = vmul.f32 %v2477, %v2337
        %v2480 = vadd.f32 %v2474, %v2478
        %v2481 = vadd.f32 %v2475, %v2479
        %s2482 = sld [smem:[#allocation3 + $0xc1]]
        %v2483 = vstv %s2482
        %v2484 = vmul.f32 %v2483, %v2336
        %v2485 = vmul.f32 %v2483, %v2337
        %2488 = vrot.lane.b32.xlu0 %v2484, 127
        %v2489 = vpop.permute.xlu0 %2488
        %2490 = vrot.lane.b32.xlu0 %v2485, 127
        %v2491 = vpop.permute.xlu0 %2490
        %v2494 = vadd.f32 %v2480, %v2489
        %v2495 = vadd.f32 %v2481, %v2491
        %s2496 = sld [smem:[#allocation3 + $0xc9]]
        %v2497 = vstv %s2496
        %v2498 = vmul.f32 %v2497, %v2336
        %v2499 = vmul.f32 %v2497, %v2337
        %2502 = vrot.lane.b32.xlu0 %v2498, 126
        %v2503 = vpop.permute.xlu0 %2502
        %2504 = vrot.lane.b32.xlu0 %v2499, 126
        %v2505 = vpop.permute.xlu0 %2504
        %v2508 = vadd.f32 %v2494, %v2503
        %v2509 = vadd.f32 %v2495, %v2505
        %s2510 = sld [smem:[#allocation3 + $0xd1]]
        %v2511 = vstv %s2510
        %v2512 = vmul.f32 %v2511, %v2338
        %v2513 = vmul.f32 %v2511, %v2339
        %v2514 = vadd.f32 %v2508, %v2512
        %v2515 = vadd.f32 %v2509, %v2513
        %s2516 = sld [smem:[#allocation3 + $0xd9]]
        %v2517 = vstv %s2516
        %v2518 = vmul.f32 %v2517, %v2338
        %v2519 = vmul.f32 %v2517, %v2339
        %2522 = vrot.lane.b32.xlu0 %v2518, 127
        %v2523 = vpop.permute.xlu0 %2522
        %2524 = vrot.lane.b32.xlu0 %v2519, 127
        %v2525 = vpop.permute.xlu0 %2524
        %v2528 = vadd.f32 %v2514, %v2523
        %v2529 = vadd.f32 %v2515, %v2525
        %s2530 = sld [smem:[#allocation3 + $0xe1]]
        %v2531 = vstv %s2530
        %v2532 = vmul.f32 %v2531, %v2338
        %v2533 = vmul.f32 %v2531, %v2339
        %2536 = vrot.lane.b32.xlu0 %v2532, 126
        %v2537 = vpop.permute.xlu0 %2536
        %2538 = vrot.lane.b32.xlu0 %v2533, 126
        %v2539 = vpop.permute.xlu0 %2538
        %v2542 = vadd.f32 %v2528, %v2537
        %v2543 = vadd.f32 %v2529, %v2539
        %s2544 = sld [smem:[#allocation3 + $0xa2]]
        %v2545 = vstv %s2544
        %v2546 = vmul.f32 %v2545, %v2334
        %v2547 = vmul.f32 %v2545, %v2335
        %v2548 = vadd.f32 %v2220, %v2546
        %v2549 = vadd.f32 %v2221, %v2547
        %s2550 = sld [smem:[#allocation3 + $0xaa]]
        %v2551 = vstv %s2550
        %v2552 = vmul.f32 %v2551, %v2334
        %v2553 = vmul.f32 %v2551, %v2335
        %2556 = vrot.lane.b32.xlu0 %v2552, 127
        %v2557 = vpop.permute.xlu0 %2556
        %2558 = vrot.lane.b32.xlu0 %v2553, 127
        %v2559 = vpop.permute.xlu0 %2558
        %v2562 = vadd.f32 %v2548, %v2557
        %v2563 = vadd.f32 %v2549, %v2559
        %s2564 = sld [smem:[#allocation3 + $0xb2]]
        %v2565 = vstv %s2564
        %v2566 = vmul.f32 %v2565, %v2334
        %v2567 = vmul.f32 %v2565, %v2335
        %2570 = vrot.lane.b32.xlu0 %v2566, 126
        %v2571 = vpop.permute.xlu0 %2570
        %2572 = vrot.lane.b32.xlu0 %v2567, 126
        %v2573 = vpop.permute.xlu0 %2572
        %v2576 = vadd.f32 %v2562, %v2571
        %v2577 = vadd.f32 %v2563, %v2573
        %s2578 = sld [smem:[#allocation3 + $0xba]]
        %v2579 = vstv %s2578
        %v2580 = vmul.f32 %v2579, %v2336
        %v2581 = vmul.f32 %v2579, %v2337
        %v2582 = vadd.f32 %v2576, %v2580
        %v2583 = vadd.f32 %v2577, %v2581
        %s2584 = sld [smem:[#allocation3 + $0xc2]]
        %v2585 = vstv %s2584
        %v2586 = vmul.f32 %v2585, %v2336
        %v2587 = vmul.f32 %v2585, %v2337
        %2590 = vrot.lane.b32.xlu0 %v2586, 127
        %v2591 = vpop.permute.xlu0 %2590
        %2592 = vrot.lane.b32.xlu0 %v2587, 127
        %v2593 = vpop.permute.xlu0 %2592
        %v2596 = vadd.f32 %v2582, %v2591
        %v2597 = vadd.f32 %v2583, %v2593
        %s2598 = sld [smem:[#allocation3 + $0xca]]
        %v2599 = vstv %s2598
        %v2600 = vmul.f32 %v2599, %v2336
        %v2601 = vmul.f32 %v2599, %v2337
        %2604 = vrot.lane.b32.xlu0 %v2600, 126
        %v2605 = vpop.permute.xlu0 %2604
        %2606 = vrot.lane.b32.xlu0 %v2601, 126
        %v2607 = vpop.permute.xlu0 %2606
        %v2610 = vadd.f32 %v2596, %v2605
        %v2611 = vadd.f32 %v2597, %v2607
        %s2612 = sld [smem:[#allocation3 + $0xd2]]
        %v2613 = vstv %s2612
        %v2614 = vmul.f32 %v2613, %v2338
        %v2615 = vmul.f32 %v2613, %v2339
        %v2616 = vadd.f32 %v2610, %v2614
        %v2617 = vadd.f32 %v2611, %v2615
        %s2618 = sld [smem:[#allocation3 + $0xda]]
        %v2619 = vstv %s2618
        %v2620 = vmul.f32 %v2619, %v2338
        %v2621 = vmul.f32 %v2619, %v2339
        %2624 = vrot.lane.b32.xlu0 %v2620, 127
        %v2625 = vpop.permute.xlu0 %2624
        %2626 = vrot.lane.b32.xlu0 %v2621, 127
        %v2627 = vpop.permute.xlu0 %2626
        %v2630 = vadd.f32 %v2616, %v2625
        %v2631 = vadd.f32 %v2617, %v2627
        %s2632 = sld [smem:[#allocation3 + $0xe2]]
        %v2633 = vstv %s2632
        %v2634 = vmul.f32 %v2633, %v2338
        %v2635 = vmul.f32 %v2633, %v2339
        %2638 = vrot.lane.b32.xlu0 %v2634, 126
        %v2639 = vpop.permute.xlu0 %2638
        %2640 = vrot.lane.b32.xlu0 %v2635, 126
        %v2641 = vpop.permute.xlu0 %2640
        %v2644 = vadd.f32 %v2630, %v2639
        %v2645 = vadd.f32 %v2631, %v2641
        %s2646 = sld [smem:[#allocation3 + $0xa3]]
        %v2647 = vstv %s2646
        %v2648 = vmul.f32 %v2647, %v2334
        %v2649 = vmul.f32 %v2647, %v2335
        %v2650 = vadd.f32 %v2322, %v2648
        %v2651 = vadd.f32 %v2323, %v2649
        %s2652 = sld [smem:[#allocation3 + $0xab]]
        %v2653 = vstv %s2652
        %v2654 = vmul.f32 %v2653, %v2334
        %v2655 = vmul.f32 %v2653, %v2335
        %2658 = vrot.lane.b32.xlu0 %v2654, 127
        %v2659 = vpop.permute.xlu0 %2658
        %2660 = vrot.lane.b32.xlu0 %v2655, 127
        %v2661 = vpop.permute.xlu0 %2660
        %v2664 = vadd.f32 %v2650, %v2659
        %v2665 = vadd.f32 %v2651, %v2661
        %s2666 = sld [smem:[#allocation3 + $0xb3]]
        %v2667 = vstv %s2666
        %v2668 = vmul.f32 %v2667, %v2334
        %v2669 = vmul.f32 %v2667, %v2335
        %2672 = vrot.lane.b32.xlu0 %v2668, 126
        %v2673 = vpop.permute.xlu0 %2672
        %2674 = vrot.lane.b32.xlu0 %v2669, 126
        %v2675 = vpop.permute.xlu0 %2674
        %v2678 = vadd.f32 %v2664, %v2673
        %v2679 = vadd.f32 %v2665, %v2675
        %s2680 = sld [smem:[#allocation3 + $0xbb]]
        %v2681 = vstv %s2680
        %v2682 = vmul.f32 %v2681, %v2336
        %v2683 = vmul.f32 %v2681, %v2337
        %v2684 = vadd.f32 %v2678, %v2682
        %v2685 = vadd.f32 %v2679, %v2683
        %s2686 = sld [smem:[#allocation3 + $0xc3]]
        %v2687 = vstv %s2686
        %v2688 = vmul.f32 %v2687, %v2336
        %v2689 = vmul.f32 %v2687, %v2337
        %2692 = vrot.lane.b32.xlu0 %v2688, 127
        %v2693 = vpop.permute.xlu0 %2692
        %2694 = vrot.lane.b32.xlu0 %v2689, 127
        %v2695 = vpop.permute.xlu0 %2694
        %v2698 = vadd.f32 %v2684, %v2693
        %v2699 = vadd.f32 %v2685, %v2695
        %s2700 = sld [smem:[#allocation3 + $0xcb]]
        %v2701 = vstv %s2700
        %v2702 = vmul.f32 %v2701, %v2336
        %v2703 = vmul.f32 %v2701, %v2337
        %2706 = vrot.lane.b32.xlu0 %v2702, 126
        %v2707 = vpop.permute.xlu0 %2706
        %2708 = vrot.lane.b32.xlu0 %v2703, 126
        %v2709 = vpop.permute.xlu0 %2708
        %v2712 = vadd.f32 %v2698, %v2707
        %v2713 = vadd.f32 %v2699, %v2709
        %s2714 = sld [smem:[#allocation3 + $0xd3]]
        %v2715 = vstv %s2714
        %v2716 = vmul.f32 %v2715, %v2338
        %v2717 = vmul.f32 %v2715, %v2339
        %v2718 = vadd.f32 %v2712, %v2716
        %v2719 = vadd.f32 %v2713, %v2717
        %s2720 = sld [smem:[#allocation3 + $0xdb]]
        %v2721 = vstv %s2720
        %v2722 = vmul.f32 %v2721, %v2338
        %v2723 = vmul.f32 %v2721, %v2339
        %2726 = vrot.lane.b32.xlu0 %v2722, 127
        %v2727 = vpop.permute.xlu0 %2726
        %2728 = vrot.lane.b32.xlu0 %v2723, 127
        %v2729 = vpop.permute.xlu0 %2728
        %v2732 = vadd.f32 %v2718, %v2727
        %v2733 = vadd.f32 %v2719, %v2729
        %s2734 = sld [smem:[#allocation3 + $0xe3]]
        %v2735 = vstv %s2734
        %v2736 = vmul.f32 %v2735, %v2338
        %v2737 = vmul.f32 %v2735, %v2339
        %2740 = vrot.lane.b32.xlu0 %v2736, 126
        %v2741 = vpop.permute.xlu0 %2740
        %2742 = vrot.lane.b32.xlu0 %v2737, 126
        %v2743 = vpop.permute.xlu0 %2742
        %v2746 = vadd.f32 %v2732, %v2741
        %v2747 = vadd.f32 %v2733, %v2743
        %v2748 = vsel %vm568, %v2440, 0.0
        %2749 = vadd.xlane.f32.xlu0 %v2748
        %v2750 = vpop.xlane.xlu0 %2749
        %v2751 = vsel %vm568, %v2441, 0.0
        %2752 = vadd.xlane.f32.xlu0 %v2751
        %v2753 = vpop.xlane.xlu0 %2752
        %v2754 = vadd.f32 %v2750, %v2753
        %v2755 = vrot.slane %v2754, 4
        %v2756 = vadd.f32 %v2754, %v2755
        %v2757 = vrot.slane %v2756, 2
        %v2758 = vadd.f32 %v2756, %v2757
        %v2759 = vrot.slane %v2758, 1
        %v2760 = vadd.f32 %v2758, %v2759
        %v2761 = vmul.f32 %v2760, 0.00390625
        %v2762 = vsub.f32 %v2440, %v2761
        %v2763 = vsub.f32 %v2441, %v2761
        %v2764 = vmul.f32 %v2762, %v2762
        %v2765 = vmul.f32 %v2763, %v2763
        %v2766 = vsel %vm568, %v2764, 0.0
        %2767 = vadd.xlane.f32.xlu0 %v2766
        %v2768 = vpop.xlane.xlu0 %2767
        %v2769 = vsel %vm568, %v2765, 0.0
        %2770 = vadd.xlane.f32.xlu0 %v2769
        %v2771 = vpop.xlane.xlu0 %2770
        %v2772 = vadd.f32 %v2768, %v2771
        %v2773 = vrot.slane %v2772, 4
        %v2774 = vadd.f32 %v2772, %v2773
        %v2775 = vrot.slane %v2774, 2
        %v2776 = vadd.f32 %v2774, %v2775
        %v2777 = vrot.slane %v2776, 1
        %v2778 = vadd.f32 %v2776, %v2777
        %v2779 = vmul.f32 %v2778, 0.00390625
        %s2780 = sld [smem:[#allocation3 + $0xe4]]
        %v2781 = vadd.f32 %v2779, 1e-05
        %v2782 = vrsqrt.pop %v2781
        %v2783 = vstv %s2780
        %v2784 = vmul.f32 %v2783, %v2782
        %v2785 = vmul.f32 %v2762, %v2784
        %v2786 = vmul.f32 %v2763, %v2784
        %s2787 = sld [smem:[#allocation3 + $0xe8]]
        %v2788 = vstv %s2787
        %v2789 = vadd.f32 %v2785, %v2788
        %v2790 = vadd.f32 %v2786, %v2788
        %v2791 = vtanh.pop %v2789
        %v2792 = vtanh.pop %v2790
        %v2793 = vsel %vm568, %v2542, 0.0
        %2794 = vadd.xlane.f32.xlu0 %v2793
        %v2795 = vpop.xlane.xlu0 %2794
        %v2796 = vsel %vm568, %v2543, 0.0
        %2797 = vadd.xlane.f32.xlu0 %v2796
        %v2798 = vpop.xlane.xlu0 %2797
        %v2799 = vadd.f32 %v2795, %v2798
        %v2800 = vrot.slane %v2799, 4
        %v2801 = vadd.f32 %v2799, %v2800
        %v2802 = vrot.slane %v2801, 2
        %v2803 = vadd.f32 %v2801, %v2802
        %v2804 = vrot.slane %v2803, 1
        %v2805 = vadd.f32 %v2803, %v2804
        %v2806 = vmul.f32 %v2805, 0.00390625
        %v2807 = vsub.f32 %v2542, %v2806
        %v2808 = vsub.f32 %v2543, %v2806
        %v2809 = vmul.f32 %v2807, %v2807
        %v2810 = vmul.f32 %v2808, %v2808
        %v2811 = vsel %vm568, %v2809, 0.0
        %2812 = vadd.xlane.f32.xlu0 %v2811
        %v2813 = vpop.xlane.xlu0 %2812
        %v2814 = vsel %vm568, %v2810, 0.0
        %2815 = vadd.xlane.f32.xlu0 %v2814
        %v2816 = vpop.xlane.xlu0 %2815
        %v2817 = vadd.f32 %v2813, %v2816
        %v2818 = vrot.slane %v2817, 4
        %v2819 = vadd.f32 %v2817, %v2818
        %v2820 = vrot.slane %v2819, 2
        %v2821 = vadd.f32 %v2819, %v2820
        %v2822 = vrot.slane %v2821, 1
        %v2823 = vadd.f32 %v2821, %v2822
        %v2824 = vmul.f32 %v2823, 0.00390625
        %s2825 = sld [smem:[#allocation3 + $0xe5]]
        %v2826 = vadd.f32 %v2824, 1e-05
        %v2827 = vrsqrt.pop %v2826
        %v2828 = vstv %s2825
        %v2829 = vmul.f32 %v2828, %v2827
        %v2830 = vmul.f32 %v2807, %v2829
        %v2831 = vmul.f32 %v2808, %v2829
        %s2832 = sld [smem:[#allocation3 + $0xe9]]
        %v2833 = vstv %s2832
        %v2834 = vadd.f32 %v2830, %v2833
        %v2835 = vadd.f32 %v2831, %v2833
        %v2836 = vtanh.pop %v2834
        %v2837 = vtanh.pop %v2835
        %v2838 = vsel %vm568, %v2644, 0.0
        %2839 = vadd.xlane.f32.xlu0 %v2838
        %v2840 = vpop.xlane.xlu0 %2839
        %v2841 = vsel %vm568, %v2645, 0.0
        %2842 = vadd.xlane.f32.xlu0 %v2841
        %v2843 = vpop.xlane.xlu0 %2842
        %v2844 = vadd.f32 %v2840, %v2843
        %v2845 = vrot.slane %v2844, 4
        %v2846 = vadd.f32 %v2844, %v2845
        %v2847 = vrot.slane %v2846, 2
        %v2848 = vadd.f32 %v2846, %v2847
        %v2849 = vrot.slane %v2848, 1
        %v2850 = vadd.f32 %v2848, %v2849
        %v2851 = vmul.f32 %v2850, 0.00390625
        %v2852 = vsub.f32 %v2644, %v2851
        %v2853 = vsub.f32 %v2645, %v2851
        %v2854 = vmul.f32 %v2852, %v2852
        %v2855 = vmul.f32 %v2853, %v2853
        %v2856 = vsel %vm568, %v2854, 0.0
        %2857 = vadd.xlane.f32.xlu0 %v2856
        %v2858 = vpop.xlane.xlu0 %2857
        %v2859 = vsel %vm568, %v2855, 0.0
        %2860 = vadd.xlane.f32.xlu0 %v2859
        %v2861 = vpop.xlane.xlu0 %2860
        %v2862 = vadd.f32 %v2858, %v2861
        %v2863 = vrot.slane %v2862, 4
        %v2864 = vadd.f32 %v2862, %v2863
        %v2865 = vrot.slane %v2864, 2
        %v2866 = vadd.f32 %v2864, %v2865
        %v2867 = vrot.slane %v2866, 1
        %v2868 = vadd.f32 %v2866, %v2867
        %v2869 = vmul.f32 %v2868, 0.00390625
        %s2870 = sld [smem:[#allocation3 + $0xe6]]
        %v2871 = vadd.f32 %v2869, 1e-05
        %v2872 = vrsqrt.pop %v2871
        %v2873 = vstv %s2870
        %v2874 = vmul.f32 %v2873, %v2872
        %v2875 = vmul.f32 %v2852, %v2874
        %v2876 = vmul.f32 %v2853, %v2874
        %s2877 = sld [smem:[#allocation3 + $0xea]]
        %v2878 = vstv %s2877
        %v2879 = vadd.f32 %v2875, %v2878
        %v2880 = vadd.f32 %v2876, %v2878
        %v2881 = vtanh.pop %v2879
        %v2882 = vtanh.pop %v2880
        %v2883 = vsel %vm568, %v2746, 0.0
        %2884 = vadd.xlane.f32.xlu0 %v2883
        %v2885 = vpop.xlane.xlu0 %2884
        %v2886 = vsel %vm568, %v2747, 0.0
        %2887 = vadd.xlane.f32.xlu0 %v2886
        %v2888 = vpop.xlane.xlu0 %2887
        %v2889 = vadd.f32 %v2885, %v2888
        %v2890 = vrot.slane %v2889, 4
        %v2891 = vadd.f32 %v2889, %v2890
        %v2892 = vrot.slane %v2891, 2
        %v2893 = vadd.f32 %v2891, %v2892
        %v2894 = vrot.slane %v2893, 1
        %v2895 = vadd.f32 %v2893, %v2894
        %v2896 = vmul.f32 %v2895, 0.00390625
        %v2897 = vsub.f32 %v2746, %v2896
        %v2898 = vsub.f32 %v2747, %v2896
        %v2899 = vmul.f32 %v2897, %v2897
        %v2900 = vmul.f32 %v2898, %v2898
        %v2901 = vsel %vm568, %v2899, 0.0
        %2902 = vadd.xlane.f32.xlu0 %v2901
        %v2903 = vpop.xlane.xlu0 %2902
        %v2904 = vsel %vm568, %v2900, 0.0
        %2905 = vadd.xlane.f32.xlu0 %v2904
        %v2906 = vpop.xlane.xlu0 %2905
        %v2907 = vadd.f32 %v2903, %v2906
        %v2908 = vrot.slane %v2907, 4
        %v2909 = vadd.f32 %v2907, %v2908
        %v2910 = vrot.slane %v2909, 2
        %v2911 = vadd.f32 %v2909, %v2910
        %v2912 = vrot.slane %v2911, 1
        %v2913 = vadd.f32 %v2911, %v2912
        %v2914 = vmul.f32 %v2913, 0.00390625
        %s2915 = sld [smem:[#allocation3 + $0xe7]]
        %v2916 = vadd.f32 %v2914, 1e-05
        %v2917 = vrsqrt.pop %v2916
        %v2918 = vstv %s2915
        %v2919 = vmul.f32 %v2918, %v2917
        %v2920 = vmul.f32 %v2897, %v2919
        %v2921 = vmul.f32 %v2898, %v2919
        %s2922 = sld [smem:[#allocation3 + $0xeb]]
        %v2923 = vstv %s2922
        %v2924 = vadd.f32 %v2920, %v2923
        %v2925 = vadd.f32 %v2921, %v2923
        %v2926 = vtanh.pop %v2924
        %v2927 = vtanh.pop %v2925
        %v2928 = vadd.f32 %v792, %v2791
        %v2929 = vadd.f32 %v793, %v2792
        %v2930 = vadd.f32 %v837, %v2836
        %v2931 = vadd.f32 %v838, %v2837
        %v2932 = vadd.f32 %v882, %v2881
        %v2933 = vadd.f32 %v883, %v2882
        %v2934 = vadd.f32 %v927, %v2926
        %v2935 = vadd.f32 %v928, %v2927
        %2938 = vrot.lane.b32.xlu0 %v2928, 1
        %v2939 = vpop.permute.xlu0 %2938
        %2940 = vrot.lane.b32.xlu0 %v2929, 1
        %v2941 = vpop.permute.xlu0 %2940
        %2944 = vst.msk [vmem:[#allocation2 + $0x1] sm:$0xff] %vm937, %v2939
        %2945 = vst.msk [vmem:[#allocation2 + $0x9] sm:$0xff] %vm937, %v2941
        %v2946 = vld [vmem:[#allocation2] sm:$0xff]
        %v2947 = vld [vmem:[#allocation2 + $0x8] sm:$0xff]
        %v2948 = vld [vmem:[#allocation2 + $0x1] sm:$0xff]
        %v2949 = vld [vmem:[#allocation2 + $0x9] sm:$0xff]
        %v2950 = vld [vmem:[#allocation2 + $0x2] sm:$0xff]
        %v2951 = vld [vmem:[#allocation2 + $0xa] sm:$0xff]
        %s2952 = sld [smem:[#allocation3 + $0xec]]
        %v2953 = vstv %s2952
        %v2954 = vmul.f32 %v2953, %v2946
        %v2955 = vmul.f32 %v2953, %v2947
        %v2956 = vadd.f32 %v2954, 0.0
        %v2957 = vadd.f32 %v2955, 0.0
        %s2958 = sld [smem:[#allocation3 + $0xf4]]
        %v2959 = vstv %s2958
        %v2960 = vmul.f32 %v2959, %v2946
        %v2961 = vmul.f32 %v2959, %v2947
        %2964 = vrot.lane.b32.xlu0 %v2960, 127
        %v2965 = vpop.permute.xlu0 %2964
        %2966 = vrot.lane.b32.xlu0 %v2961, 127
        %v2967 = vpop.permute.xlu0 %2966
        %v2970 = vadd.f32 %v2956, %v2965
        %v2971 = vadd.f32 %v2957, %v2967
        %s2972 = sld [smem:[#allocation3 + $0xfc]]
        %v2973 = vstv %s2972
        %v2974 = vmul.f32 %v2973, %v2946
        %v2975 = vmul.f32 %v2973, %v2947
        %2978 = vrot.lane.b32.xlu0 %v2974, 126
        %v2979 = vpop.permute.xlu0 %2978
        %2980 = vrot.lane.b32.xlu0 %v2975, 126
        %v2981 = vpop.permute.xlu0 %2980
        %v2984 = vadd.f32 %v2970, %v2979
        %v2985 = vadd.f32 %v2971, %v2981
        %s2986 = sld [smem:[#allocation3 + $0x104]]
        %v2987 = vstv %s2986
        %v2988 = vmul.f32 %v2987, %v2948
        %v2989 = vmul.f32 %v2987, %v2949
        %v2990 = vadd.f32 %v2984, %v2988
        %v2991 = vadd.f32 %v2985, %v2989
        %s2992 = sld [smem:[#allocation3 + $0x10c]]
        %v2993 = vstv %s2992
        %v2994 = vmul.f32 %v2993, %v2948
        %v2995 = vmul.f32 %v2993, %v2949
        %2998 = vrot.lane.b32.xlu0 %v2994, 127
        %v2999 = vpop.permute.xlu0 %2998
        %3000 = vrot.lane.b32.xlu0 %v2995, 127
        %v3001 = vpop.permute.xlu0 %3000
        %v3004 = vadd.f32 %v2990, %v2999
        %v3005 = vadd.f32 %v2991, %v3001
        %s3006 = sld [smem:[#allocation3 + $0x114]]
        %v3007 = vstv %s3006
        %v3008 = vmul.f32 %v3007, %v2948
        %v3009 = vmul.f32 %v3007, %v2949
        %3012 = vrot.lane.b32.xlu0 %v3008, 126
        %v3013 = vpop.permute.xlu0 %3012
        %3014 = vrot.lane.b32.xlu0 %v3009, 126
        %v3015 = vpop.permute.xlu0 %3014
        %v3018 = vadd.f32 %v3004, %v3013
        %v3019 = vadd.f32 %v3005, %v3015
        %s3020 = sld [smem:[#allocation3 + $0x11c]]
        %v3021 = vstv %s3020
        %v3022 = vmul.f32 %v3021, %v2950
        %v3023 = vmul.f32 %v3021, %v2951
        %v3024 = vadd.f32 %v3018, %v3022
        %v3025 = vadd.f32 %v3019, %v3023
        %s3026 = sld [smem:[#allocation3 + $0x124]]
        %v3027 = vstv %s3026
        %v3028 = vmul.f32 %v3027, %v2950
        %v3029 = vmul.f32 %v3027, %v2951
        %3032 = vrot.lane.b32.xlu0 %v3028, 127
        %v3033 = vpop.permute.xlu0 %3032
        %3034 = vrot.lane.b32.xlu0 %v3029, 127
        %v3035 = vpop.permute.xlu0 %3034
        %v3038 = vadd.f32 %v3024, %v3033
        %v3039 = vadd.f32 %v3025, %v3035
        %s3040 = sld [smem:[#allocation3 + $0x12c]]
        %v3041 = vstv %s3040
        %v3042 = vmul.f32 %v3041, %v2950
        %v3043 = vmul.f32 %v3041, %v2951
        %3046 = vrot.lane.b32.xlu0 %v3042, 126
        %v3047 = vpop.permute.xlu0 %3046
        %3048 = vrot.lane.b32.xlu0 %v3043, 126
        %v3049 = vpop.permute.xlu0 %3048
        %v3052 = vadd.f32 %v3038, %v3047
        %v3053 = vadd.f32 %v3039, %v3049
        %s3054 = sld [smem:[#allocation3 + $0xed]]
        %v3055 = vstv %s3054
        %v3056 = vmul.f32 %v3055, %v2946
        %v3057 = vmul.f32 %v3055, %v2947
        %v3058 = vadd.f32 %v3056, 0.0
        %v3059 = vadd.f32 %v3057, 0.0
        %s3060 = sld [smem:[#allocation3 + $0xf5]]
        %v3061 = vstv %s3060
        %v3062 = vmul.f32 %v3061, %v2946
        %v3063 = vmul.f32 %v3061, %v2947
        %3066 = vrot.lane.b32.xlu0 %v3062, 127
        %v3067 = vpop.permute.xlu0 %3066
        %3068 = vrot.lane.b32.xlu0 %v3063, 127
        %v3069 = vpop.permute.xlu0 %3068
        %v3072 = vadd.f32 %v3058, %v3067
        %v3073 = vadd.f32 %v3059, %v3069
        %s3074 = sld [smem:[#allocation3 + $0xfd]]
        %v3075 = vstv %s3074
        %v3076 = vmul.f32 %v3075, %v2946
        %v3077 = vmul.f32 %v3075, %v2947
        %3080 = vrot.lane.b32.xlu0 %v3076, 126
        %v3081 = vpop.permute.xlu0 %3080
        %3082 = vrot.lane.b32.xlu0 %v3077, 126
        %v3083 = vpop.permute.xlu0 %3082
        %v3086 = vadd.f32 %v3072, %v3081
        %v3087 = vadd.f32 %v3073, %v3083
        %s3088 = sld [smem:[#allocation3 + $0x105]]
        %v3089 = vstv %s3088
        %v3090 = vmul.f32 %v3089, %v2948
        %v3091 = vmul.f32 %v3089, %v2949
        %v3092 = vadd.f32 %v3086, %v3090
        %v3093 = vadd.f32 %v3087, %v3091
        %s3094 = sld [smem:[#allocation3 + $0x10d]]
        %v3095 = vstv %s3094
        %v3096 = vmul.f32 %v3095, %v2948
        %v3097 = vmul.f32 %v3095, %v2949
        %3100 = vrot.lane.b32.xlu0 %v3096, 127
        %v3101 = vpop.permute.xlu0 %3100
        %3102 = vrot.lane.b32.xlu0 %v3097, 127
        %v3103 = vpop.permute.xlu0 %3102
        %v3106 = vadd.f32 %v3092, %v3101
        %v3107 = vadd.f32 %v3093, %v3103
        %s3108 = sld [smem:[#allocation3 + $0x115]]
        %v3109 = vstv %s3108
        %v3110 = vmul.f32 %v3109, %v2948
        %v3111 = vmul.f32 %v3109, %v2949
        %3114 = vrot.lane.b32.xlu0 %v3110, 126
        %v3115 = vpop.permute.xlu0 %3114
        %3116 = vrot.lane.b32.xlu0 %v3111, 126
        %v3117 = vpop.permute.xlu0 %3116
        %v3120 = vadd.f32 %v3106, %v3115
        %v3121 = vadd.f32 %v3107, %v3117
        %s3122 = sld [smem:[#allocation3 + $0x11d]]
        %v3123 = vstv %s3122
        %v3124 = vmul.f32 %v3123, %v2950
        %v3125 = vmul.f32 %v3123, %v2951
        %v3126 = vadd.f32 %v3120, %v3124
        %v3127 = vadd.f32 %v3121, %v3125
        %s3128 = sld [smem:[#allocation3 + $0x125]]
        %v3129 = vstv %s3128
        %v3130 = vmul.f32 %v3129, %v2950
        %v3131 = vmul.f32 %v3129, %v2951
        %3134 = vrot.lane.b32.xlu0 %v3130, 127
        %v3135 = vpop.permute.xlu0 %3134
        %3136 = vrot.lane.b32.xlu0 %v3131, 127
        %v3137 = vpop.permute.xlu0 %3136
        %v3140 = vadd.f32 %v3126, %v3135
        %v3141 = vadd.f32 %v3127, %v3137
        %s3142 = sld [smem:[#allocation3 + $0x12d]]
        %v3143 = vstv %s3142
        %v3144 = vmul.f32 %v3143, %v2950
        %v3145 = vmul.f32 %v3143, %v2951
        %3148 = vrot.lane.b32.xlu0 %v3144, 126
        %v3149 = vpop.permute.xlu0 %3148
        %3150 = vrot.lane.b32.xlu0 %v3145, 126
        %v3151 = vpop.permute.xlu0 %3150
        %v3154 = vadd.f32 %v3140, %v3149
        %v3155 = vadd.f32 %v3141, %v3151
        %3158 = vrot.lane.b32.xlu0 %v2930, 1
        %v3159 = vpop.permute.xlu0 %3158
        %3160 = vrot.lane.b32.xlu0 %v2931, 1
        %v3161 = vpop.permute.xlu0 %3160
        %3164 = vst.msk [vmem:[#allocation2 + $0x1] sm:$0xff] %vm937, %v3159
        %3165 = vst.msk [vmem:[#allocation2 + $0x9] sm:$0xff] %vm937, %v3161
        %v3166 = vld [vmem:[#allocation2] sm:$0xff]
        %v3167 = vld [vmem:[#allocation2 + $0x8] sm:$0xff]
        %v3168 = vld [vmem:[#allocation2 + $0x1] sm:$0xff]
        %v3169 = vld [vmem:[#allocation2 + $0x9] sm:$0xff]
        %v3170 = vld [vmem:[#allocation2 + $0x2] sm:$0xff]
        %v3171 = vld [vmem:[#allocation2 + $0xa] sm:$0xff]
        %s3172 = sld [smem:[#allocation3 + $0xee]]
        %v3173 = vstv %s3172
        %v3174 = vmul.f32 %v3173, %v3166
        %v3175 = vmul.f32 %v3173, %v3167
        %v3176 = vadd.f32 %v3052, %v3174
        %v3177 = vadd.f32 %v3053, %v3175
        %s3178 = sld [smem:[#allocation3 + $0xf6]]
        %v3179 = vstv %s3178
        %v3180 = vmul.f32 %v3179, %v3166
        %v3181 = vmul.f32 %v3179, %v3167
        %3184 = vrot.lane.b32.xlu0 %v3180, 127
        %v3185 = vpop.permute.xlu0 %3184
        %3186 = vrot.lane.b32.xlu0 %v3181, 127
        %v3187 = vpop.permute.xlu0 %3186
        %v3190 = vadd.f32 %v3176, %v3185
        %v3191 = vadd.f32 %v3177, %v3187
        %s3192 = sld [smem:[#allocation3 + $0xfe]]
        %v3193 = vstv %s3192
        %v3194 = vmul.f32 %v3193, %v3166
        %v3195 = vmul.f32 %v3193, %v3167
        %3198 = vrot.lane.b32.xlu0 %v3194, 126
        %v3199 = vpop.permute.xlu0 %3198
        %3200 = vrot.lane.b32.xlu0 %v3195, 126
        %v3201 = vpop.permute.xlu0 %3200
        %v3204 = vadd.f32 %v3190, %v3199
        %v3205 = vadd.f32 %v3191, %v3201
        %s3206 = sld [smem:[#allocation3 + $0x106]]
        %v3207 = vstv %s3206
        %v3208 = vmul.f32 %v3207, %v3168
        %v3209 = vmul.f32 %v3207, %v3169
        %v3210 = vadd.f32 %v3204, %v3208
        %v3211 = vadd.f32 %v3205, %v3209
        %s3212 = sld [smem:[#allocation3 + $0x10e]]
        %v3213 = vstv %s3212
        %v3214 = vmul.f32 %v3213, %v3168
        %v3215 = vmul.f32 %v3213, %v3169
        %3218 = vrot.lane.b32.xlu0 %v3214, 127
        %v3219 = vpop.permute.xlu0 %3218
        %3220 = vrot.lane.b32.xlu0 %v3215, 127
        %v3221 = vpop.permute.xlu0 %3220
        %v3224 = vadd.f32 %v3210, %v3219
        %v3225 = vadd.f32 %v3211, %v3221
        %s3226 = sld [smem:[#allocation3 + $0x116]]
        %v3227 = vstv %s3226
        %v3228 = vmul.f32 %v3227, %v3168
        %v3229 = vmul.f32 %v3227, %v3169
        %3232 = vrot.lane.b32.xlu0 %v3228, 126
        %v3233 = vpop.permute.xlu0 %3232
        %3234 = vrot.lane.b32.xlu0 %v3229, 126
        %v3235 = vpop.permute.xlu0 %3234
        %v3238 = vadd.f32 %v3224, %v3233
        %v3239 = vadd.f32 %v3225, %v3235
        %s3240 = sld [smem:[#allocation3 + $0x11e]]
        %v3241 = vstv %s3240
        %v3242 = vmul.f32 %v3241, %v3170
        %v3243 = vmul.f32 %v3241, %v3171
        %v3244 = vadd.f32 %v3238, %v3242
        %v3245 = vadd.f32 %v3239, %v3243
        %s3246 = sld [smem:[#allocation3 + $0x126]]
        %v3247 = vstv %s3246
        %v3248 = vmul.f32 %v3247, %v3170
        %v3249 = vmul.f32 %v3247, %v3171
        %3252 = vrot.lane.b32.xlu0 %v3248, 127
        %v3253 = vpop.permute.xlu0 %3252
        %3254 = vrot.lane.b32.xlu0 %v3249, 127
        %v3255 = vpop.permute.xlu0 %3254
        %v3258 = vadd.f32 %v3244, %v3253
        %v3259 = vadd.f32 %v3245, %v3255
        %s3260 = sld [smem:[#allocation3 + $0x12e]]
        %v3261 = vstv %s3260
        %v3262 = vmul.f32 %v3261, %v3170
        %v3263 = vmul.f32 %v3261, %v3171
        %3266 = vrot.lane.b32.xlu0 %v3262, 126
        %v3267 = vpop.permute.xlu0 %3266
        %3268 = vrot.lane.b32.xlu0 %v3263, 126
        %v3269 = vpop.permute.xlu0 %3268
        %v3272 = vadd.f32 %v3258, %v3267
        %v3273 = vadd.f32 %v3259, %v3269
        %s3274 = sld [smem:[#allocation3 + $0xef]]
        %v3275 = vstv %s3274
        %v3276 = vmul.f32 %v3275, %v3166
        %v3277 = vmul.f32 %v3275, %v3167
        %v3278 = vadd.f32 %v3154, %v3276
        %v3279 = vadd.f32 %v3155, %v3277
        %s3280 = sld [smem:[#allocation3 + $0xf7]]
        %v3281 = vstv %s3280
        %v3282 = vmul.f32 %v3281, %v3166
        %v3283 = vmul.f32 %v3281, %v3167
        %3286 = vrot.lane.b32.xlu0 %v3282, 127
        %v3287 = vpop.permute.xlu0 %3286
        %3288 = vrot.lane.b32.xlu0 %v3283, 127
        %v3289 = vpop.permute.xlu0 %3288
        %v3292 = vadd.f32 %v3278, %v3287
        %v3293 = vadd.f32 %v3279, %v3289
        %s3294 = sld [smem:[#allocation3 + $0xff]]
        %v3295 = vstv %s3294
        %v3296 = vmul.f32 %v3295, %v3166
        %v3297 = vmul.f32 %v3295, %v3167
        %3300 = vrot.lane.b32.xlu0 %v3296, 126
        %v3301 = vpop.permute.xlu0 %3300
        %3302 = vrot.lane.b32.xlu0 %v3297, 126
        %v3303 = vpop.permute.xlu0 %3302
        %v3306 = vadd.f32 %v3292, %v3301
        %v3307 = vadd.f32 %v3293, %v3303
        %s3308 = sld [smem:[#allocation3 + $0x107]]
        %v3309 = vstv %s3308
        %v3310 = vmul.f32 %v3309, %v3168
        %v3311 = vmul.f32 %v3309, %v3169
        %v3312 = vadd.f32 %v3306, %v3310
        %v3313 = vadd.f32 %v3307, %v3311
        %s3314 = sld [smem:[#allocation3 + $0x10f]]
        %v3315 = vstv %s3314
        %v3316 = vmul.f32 %v3315, %v3168
        %v3317 = vmul.f32 %v3315, %v3169
        %3320 = vrot.lane.b32.xlu0 %v3316, 127
        %v3321 = vpop.permute.xlu0 %3320
        %3322 = vrot.lane.b32.xlu0 %v3317, 127
        %v3323 = vpop.permute.xlu0 %3322
        %v3326 = vadd.f32 %v3312, %v3321
        %v3327 = vadd.f32 %v3313, %v3323
        %s3328 = sld [smem:[#allocation3 + $0x117]]
        %v3329 = vstv %s3328
        %v3330 = vmul.f32 %v3329, %v3168
        %v3331 = vmul.f32 %v3329, %v3169
        %3334 = vrot.lane.b32.xlu0 %v3330, 126
        %v3335 = vpop.permute.xlu0 %3334
        %3336 = vrot.lane.b32.xlu0 %v3331, 126
        %v3337 = vpop.permute.xlu0 %3336
        %v3340 = vadd.f32 %v3326, %v3335
        %v3341 = vadd.f32 %v3327, %v3337
        %s3342 = sld [smem:[#allocation3 + $0x11f]]
        %v3343 = vstv %s3342
        %v3344 = vmul.f32 %v3343, %v3170
        %v3345 = vmul.f32 %v3343, %v3171
        %v3346 = vadd.f32 %v3340, %v3344
        %v3347 = vadd.f32 %v3341, %v3345
        %s3348 = sld [smem:[#allocation3 + $0x127]]
        %v3349 = vstv %s3348
        %v3350 = vmul.f32 %v3349, %v3170
        %v3351 = vmul.f32 %v3349, %v3171
        %3354 = vrot.lane.b32.xlu0 %v3350, 127
        %v3355 = vpop.permute.xlu0 %3354
        %3356 = vrot.lane.b32.xlu0 %v3351, 127
        %v3357 = vpop.permute.xlu0 %3356
        %v3360 = vadd.f32 %v3346, %v3355
        %v3361 = vadd.f32 %v3347, %v3357
        %s3362 = sld [smem:[#allocation3 + $0x12f]]
        %v3363 = vstv %s3362
        %v3364 = vmul.f32 %v3363, %v3170
        %v3365 = vmul.f32 %v3363, %v3171
        %3368 = vrot.lane.b32.xlu0 %v3364, 126
        %v3369 = vpop.permute.xlu0 %3368
        %3370 = vrot.lane.b32.xlu0 %v3365, 126
        %v3371 = vpop.permute.xlu0 %3370
        %v3374 = vadd.f32 %v3360, %v3369
        %v3375 = vadd.f32 %v3361, %v3371
        %3378 = vrot.lane.b32.xlu0 %v2932, 1
        %v3379 = vpop.permute.xlu0 %3378
        %3380 = vrot.lane.b32.xlu0 %v2933, 1
        %v3381 = vpop.permute.xlu0 %3380
        %3384 = vst.msk [vmem:[#allocation2 + $0x1] sm:$0xff] %vm937, %v3379
        %3385 = vst.msk [vmem:[#allocation2 + $0x9] sm:$0xff] %vm937, %v3381
        %v3386 = vld [vmem:[#allocation2] sm:$0xff]
        %v3387 = vld [vmem:[#allocation2 + $0x8] sm:$0xff]
        %v3388 = vld [vmem:[#allocation2 + $0x1] sm:$0xff]
        %v3389 = vld [vmem:[#allocation2 + $0x9] sm:$0xff]
        %v3390 = vld [vmem:[#allocation2 + $0x2] sm:$0xff]
        %v3391 = vld [vmem:[#allocation2 + $0xa] sm:$0xff]
        %s3392 = sld [smem:[#allocation3 + $0xf0]]
        %v3393 = vstv %s3392
        %v3394 = vmul.f32 %v3393, %v3386
        %v3395 = vmul.f32 %v3393, %v3387
        %v3396 = vadd.f32 %v3272, %v3394
        %v3397 = vadd.f32 %v3273, %v3395
        %s3398 = sld [smem:[#allocation3 + $0xf8]]
        %v3399 = vstv %s3398
        %v3400 = vmul.f32 %v3399, %v3386
        %v3401 = vmul.f32 %v3399, %v3387
        %3404 = vrot.lane.b32.xlu0 %v3400, 127
        %v3405 = vpop.permute.xlu0 %3404
        %3406 = vrot.lane.b32.xlu0 %v3401, 127
        %v3407 = vpop.permute.xlu0 %3406
        %v3410 = vadd.f32 %v3396, %v3405
        %v3411 = vadd.f32 %v3397, %v3407
        %s3412 = sld [smem:[#allocation3 + $0x100]]
        %v3413 = vstv %s3412
        %v3414 = vmul.f32 %v3413, %v3386
        %v3415 = vmul.f32 %v3413, %v3387
        %3418 = vrot.lane.b32.xlu0 %v3414, 126
        %v3419 = vpop.permute.xlu0 %3418
        %3420 = vrot.lane.b32.xlu0 %v3415, 126
        %v3421 = vpop.permute.xlu0 %3420
        %v3424 = vadd.f32 %v3410, %v3419
        %v3425 = vadd.f32 %v3411, %v3421
        %s3426 = sld [smem:[#allocation3 + $0x108]]
        %v3427 = vstv %s3426
        %v3428 = vmul.f32 %v3427, %v3388
        %v3429 = vmul.f32 %v3427, %v3389
        %v3430 = vadd.f32 %v3424, %v3428
        %v3431 = vadd.f32 %v3425, %v3429
        %s3432 = sld [smem:[#allocation3 + $0x110]]
        %v3433 = vstv %s3432
        %v3434 = vmul.f32 %v3433, %v3388
        %v3435 = vmul.f32 %v3433, %v3389
        %3438 = vrot.lane.b32.xlu0 %v3434, 127
        %v3439 = vpop.permute.xlu0 %3438
        %3440 = vrot.lane.b32.xlu0 %v3435, 127
        %v3441 = vpop.permute.xlu0 %3440
        %v3444 = vadd.f32 %v3430, %v3439
        %v3445 = vadd.f32 %v3431, %v3441
        %s3446 = sld [smem:[#allocation3 + $0x118]]
        %v3447 = vstv %s3446
        %v3448 = vmul.f32 %v3447, %v3388
        %v3449 = vmul.f32 %v3447, %v3389
        %3452 = vrot.lane.b32.xlu0 %v3448, 126
        %v3453 = vpop.permute.xlu0 %3452
        %3454 = vrot.lane.b32.xlu0 %v3449, 126
        %v3455 = vpop.permute.xlu0 %3454
        %v3458 = vadd.f32 %v3444, %v3453
        %v3459 = vadd.f32 %v3445, %v3455
        %s3460 = sld [smem:[#allocation3 + $0x120]]
        %v3461 = vstv %s3460
        %v3462 = vmul.f32 %v3461, %v3390
        %v3463 = vmul.f32 %v3461, %v3391
        %v3464 = vadd.f32 %v3458, %v3462
        %v3465 = vadd.f32 %v3459, %v3463
        %s3466 = sld [smem:[#allocation3 + $0x128]]
        %v3467 = vstv %s3466
        %v3468 = vmul.f32 %v3467, %v3390
        %v3469 = vmul.f32 %v3467, %v3391
        %3472 = vrot.lane.b32.xlu0 %v3468, 127
        %v3473 = vpop.permute.xlu0 %3472
        %3474 = vrot.lane.b32.xlu0 %v3469, 127
        %v3475 = vpop.permute.xlu0 %3474
        %v3478 = vadd.f32 %v3464, %v3473
        %v3479 = vadd.f32 %v3465, %v3475
        %s3480 = sld [smem:[#allocation3 + $0x130]]
        %v3481 = vstv %s3480
        %v3482 = vmul.f32 %v3481, %v3390
        %v3483 = vmul.f32 %v3481, %v3391
        %3486 = vrot.lane.b32.xlu0 %v3482, 126
        %v3487 = vpop.permute.xlu0 %3486
        %3488 = vrot.lane.b32.xlu0 %v3483, 126
        %v3489 = vpop.permute.xlu0 %3488
        %v3492 = vadd.f32 %v3478, %v3487
        %v3493 = vadd.f32 %v3479, %v3489
        %s3494 = sld [smem:[#allocation3 + $0xf1]]
        %v3495 = vstv %s3494
        %v3496 = vmul.f32 %v3495, %v3386
        %v3497 = vmul.f32 %v3495, %v3387
        %v3498 = vadd.f32 %v3374, %v3496
        %v3499 = vadd.f32 %v3375, %v3497
        %s3500 = sld [smem:[#allocation3 + $0xf9]]
        %v3501 = vstv %s3500
        %v3502 = vmul.f32 %v3501, %v3386
        %v3503 = vmul.f32 %v3501, %v3387
        %3506 = vrot.lane.b32.xlu0 %v3502, 127
        %v3507 = vpop.permute.xlu0 %3506
        %3508 = vrot.lane.b32.xlu0 %v3503, 127
        %v3509 = vpop.permute.xlu0 %3508
        %v3512 = vadd.f32 %v3498, %v3507
        %v3513 = vadd.f32 %v3499, %v3509
        %s3514 = sld [smem:[#allocation3 + $0x101]]
        %v3515 = vstv %s3514
        %v3516 = vmul.f32 %v3515, %v3386
        %v3517 = vmul.f32 %v3515, %v3387
        %3520 = vrot.lane.b32.xlu0 %v3516, 126
        %v3521 = vpop.permute.xlu0 %3520
        %3522 = vrot.lane.b32.xlu0 %v3517, 126
        %v3523 = vpop.permute.xlu0 %3522
        %v3526 = vadd.f32 %v3512, %v3521
        %v3527 = vadd.f32 %v3513, %v3523
        %s3528 = sld [smem:[#allocation3 + $0x109]]
        %v3529 = vstv %s3528
        %v3530 = vmul.f32 %v3529, %v3388
        %v3531 = vmul.f32 %v3529, %v3389
        %v3532 = vadd.f32 %v3526, %v3530
        %v3533 = vadd.f32 %v3527, %v3531
        %s3534 = sld [smem:[#allocation3 + $0x111]]
        %v3535 = vstv %s3534
        %v3536 = vmul.f32 %v3535, %v3388
        %v3537 = vmul.f32 %v3535, %v3389
        %3540 = vrot.lane.b32.xlu0 %v3536, 127
        %v3541 = vpop.permute.xlu0 %3540
        %3542 = vrot.lane.b32.xlu0 %v3537, 127
        %v3543 = vpop.permute.xlu0 %3542
        %v3546 = vadd.f32 %v3532, %v3541
        %v3547 = vadd.f32 %v3533, %v3543
        %s3548 = sld [smem:[#allocation3 + $0x119]]
        %v3549 = vstv %s3548
        %v3550 = vmul.f32 %v3549, %v3388
        %v3551 = vmul.f32 %v3549, %v3389
        %3554 = vrot.lane.b32.xlu0 %v3550, 126
        %v3555 = vpop.permute.xlu0 %3554
        %3556 = vrot.lane.b32.xlu0 %v3551, 126
        %v3557 = vpop.permute.xlu0 %3556
        %v3560 = vadd.f32 %v3546, %v3555
        %v3561 = vadd.f32 %v3547, %v3557
        %s3562 = sld [smem:[#allocation3 + $0x121]]
        %v3563 = vstv %s3562
        %v3564 = vmul.f32 %v3563, %v3390
        %v3565 = vmul.f32 %v3563, %v3391
        %v3566 = vadd.f32 %v3560, %v3564
        %v3567 = vadd.f32 %v3561, %v3565
        %s3568 = sld [smem:[#allocation3 + $0x129]]
        %v3569 = vstv %s3568
        %v3570 = vmul.f32 %v3569, %v3390
        %v3571 = vmul.f32 %v3569, %v3391
        %3574 = vrot.lane.b32.xlu0 %v3570, 127
        %v3575 = vpop.permute.xlu0 %3574
        %3576 = vrot.lane.b32.xlu0 %v3571, 127
        %v3577 = vpop.permute.xlu0 %3576
        %v3580 = vadd.f32 %v3566, %v3575
        %v3581 = vadd.f32 %v3567, %v3577
        %s3582 = sld [smem:[#allocation3 + $0x131]]
        %v3583 = vstv %s3582
        %v3584 = vmul.f32 %v3583, %v3390
        %v3585 = vmul.f32 %v3583, %v3391
        %3588 = vrot.lane.b32.xlu0 %v3584, 126
        %v3589 = vpop.permute.xlu0 %3588
        %3590 = vrot.lane.b32.xlu0 %v3585, 126
        %v3591 = vpop.permute.xlu0 %3590
        %v3594 = vadd.f32 %v3580, %v3589
        %v3595 = vadd.f32 %v3581, %v3591
        %3598 = vrot.lane.b32.xlu0 %v2934, 1
        %v3599 = vpop.permute.xlu0 %3598
        %3600 = vrot.lane.b32.xlu0 %v2935, 1
        %v3601 = vpop.permute.xlu0 %3600
        %3604 = vst.msk [vmem:[#allocation2 + $0x1] sm:$0xff] %vm937, %v3599
        %3605 = vst.msk [vmem:[#allocation2 + $0x9] sm:$0xff] %vm937, %v3601
        %v3606 = vld [vmem:[#allocation2] sm:$0xff]
        %v3607 = vld [vmem:[#allocation2 + $0x8] sm:$0xff]
        %v3608 = vld [vmem:[#allocation2 + $0x1] sm:$0xff]
        %v3609 = vld [vmem:[#allocation2 + $0x9] sm:$0xff]
        %v3610 = vld [vmem:[#allocation2 + $0x2] sm:$0xff]
        %v3611 = vld [vmem:[#allocation2 + $0xa] sm:$0xff]
        %s3612 = sld [smem:[#allocation3 + $0xf2]]
        %v3613 = vstv %s3612
        %v3614 = vmul.f32 %v3613, %v3606
        %v3615 = vmul.f32 %v3613, %v3607
        %v3616 = vadd.f32 %v3492, %v3614
        %v3617 = vadd.f32 %v3493, %v3615
        %s3618 = sld [smem:[#allocation3 + $0xfa]]
        %v3619 = vstv %s3618
        %v3620 = vmul.f32 %v3619, %v3606
        %v3621 = vmul.f32 %v3619, %v3607
        %3624 = vrot.lane.b32.xlu0 %v3620, 127
        %v3625 = vpop.permute.xlu0 %3624
        %3626 = vrot.lane.b32.xlu0 %v3621, 127
        %v3627 = vpop.permute.xlu0 %3626
        %v3630 = vadd.f32 %v3616, %v3625
        %v3631 = vadd.f32 %v3617, %v3627
        %s3632 = sld [smem:[#allocation3 + $0x102]]
        %v3633 = vstv %s3632
        %v3634 = vmul.f32 %v3633, %v3606
        %v3635 = vmul.f32 %v3633, %v3607
        %3638 = vrot.lane.b32.xlu0 %v3634, 126
        %v3639 = vpop.permute.xlu0 %3638
        %3640 = vrot.lane.b32.xlu0 %v3635, 126
        %v3641 = vpop.permute.xlu0 %3640
        %v3644 = vadd.f32 %v3630, %v3639
        %v3645 = vadd.f32 %v3631, %v3641
        %s3646 = sld [smem:[#allocation3 + $0x10a]]
        %v3647 = vstv %s3646
        %v3648 = vmul.f32 %v3647, %v3608
        %v3649 = vmul.f32 %v3647, %v3609
        %v3650 = vadd.f32 %v3644, %v3648
        %v3651 = vadd.f32 %v3645, %v3649
        %s3652 = sld [smem:[#allocation3 + $0x112]]
        %v3653 = vstv %s3652
        %v3654 = vmul.f32 %v3653, %v3608
        %v3655 = vmul.f32 %v3653, %v3609
        %3658 = vrot.lane.b32.xlu0 %v3654, 127
        %v3659 = vpop.permute.xlu0 %3658
        %3660 = vrot.lane.b32.xlu0 %v3655, 127
        %v3661 = vpop.permute.xlu0 %3660
        %v3664 = vadd.f32 %v3650, %v3659
        %v3665 = vadd.f32 %v3651, %v3661
        %s3666 = sld [smem:[#allocation3 + $0x11a]]
        %v3667 = vstv %s3666
        %v3668 = vmul.f32 %v3667, %v3608
        %v3669 = vmul.f32 %v3667, %v3609
        %3672 = vrot.lane.b32.xlu0 %v3668, 126
        %v3673 = vpop.permute.xlu0 %3672
        %3674 = vrot.lane.b32.xlu0 %v3669, 126
        %v3675 = vpop.permute.xlu0 %3674
        %v3678 = vadd.f32 %v3664, %v3673
        %v3679 = vadd.f32 %v3665, %v3675
        %s3680 = sld [smem:[#allocation3 + $0x122]]
        %v3681 = vstv %s3680
        %v3682 = vmul.f32 %v3681, %v3610
        %v3683 = vmul.f32 %v3681, %v3611
        %v3684 = vadd.f32 %v3678, %v3682
        %v3685 = vadd.f32 %v3679, %v3683
        %s3686 = sld [smem:[#allocation3 + $0x12a]]
        %v3687 = vstv %s3686
        %v3688 = vmul.f32 %v3687, %v3610
        %v3689 = vmul.f32 %v3687, %v3611
        %3692 = vrot.lane.b32.xlu0 %v3688, 127
        %v3693 = vpop.permute.xlu0 %3692
        %3694 = vrot.lane.b32.xlu0 %v3689, 127
        %v3695 = vpop.permute.xlu0 %3694
        %v3698 = vadd.f32 %v3684, %v3693
        %v3699 = vadd.f32 %v3685, %v3695
        %s3700 = sld [smem:[#allocation3 + $0x132]]
        %v3701 = vstv %s3700
        %v3702 = vmul.f32 %v3701, %v3610
        %v3703 = vmul.f32 %v3701, %v3611
        %3706 = vrot.lane.b32.xlu0 %v3702, 126
        %v3707 = vpop.permute.xlu0 %3706
        %3708 = vrot.lane.b32.xlu0 %v3703, 126
        %v3709 = vpop.permute.xlu0 %3708
        %v3712 = vadd.f32 %v3698, %v3707
        %v3713 = vadd.f32 %v3699, %v3709
        %s3714 = sld [smem:[#allocation3 + $0xf3]]
        %v3715 = vstv %s3714
        %v3716 = vmul.f32 %v3715, %v3606
        %v3717 = vmul.f32 %v3715, %v3607
        %v3718 = vadd.f32 %v3594, %v3716
        %v3719 = vadd.f32 %v3595, %v3717
        %s3720 = sld [smem:[#allocation3 + $0xfb]]
        %v3721 = vstv %s3720
        %v3722 = vmul.f32 %v3721, %v3606
        %v3723 = vmul.f32 %v3721, %v3607
        %3726 = vrot.lane.b32.xlu0 %v3722, 127
        %v3727 = vpop.permute.xlu0 %3726
        %3728 = vrot.lane.b32.xlu0 %v3723, 127
        %v3729 = vpop.permute.xlu0 %3728
        %v3732 = vadd.f32 %v3718, %v3727
        %v3733 = vadd.f32 %v3719, %v3729
        %s3734 = sld [smem:[#allocation3 + $0x103]]
        %v3735 = vstv %s3734
        %v3736 = vmul.f32 %v3735, %v3606
        %v3737 = vmul.f32 %v3735, %v3607
        %3740 = vrot.lane.b32.xlu0 %v3736, 126
        %v3741 = vpop.permute.xlu0 %3740
        %3742 = vrot.lane.b32.xlu0 %v3737, 126
        %v3743 = vpop.permute.xlu0 %3742
        %v3746 = vadd.f32 %v3732, %v3741
        %v3747 = vadd.f32 %v3733, %v3743
        %s3748 = sld [smem:[#allocation3 + $0x10b]]
        %v3749 = vstv %s3748
        %v3750 = vmul.f32 %v3749, %v3608
        %v3751 = vmul.f32 %v3749, %v3609
        %v3752 = vadd.f32 %v3746, %v3750
        %v3753 = vadd.f32 %v3747, %v3751
        %s3754 = sld [smem:[#allocation3 + $0x113]]
        %v3755 = vstv %s3754
        %v3756 = vmul.f32 %v3755, %v3608
        %v3757 = vmul.f32 %v3755, %v3609
        %3760 = vrot.lane.b32.xlu0 %v3756, 127
        %v3761 = vpop.permute.xlu0 %3760
        %3762 = vrot.lane.b32.xlu0 %v3757, 127
        %v3763 = vpop.permute.xlu0 %3762
        %v3766 = vadd.f32 %v3752, %v3761
        %v3767 = vadd.f32 %v3753, %v3763
        %s3768 = sld [smem:[#allocation3 + $0x11b]]
        %v3769 = vstv %s3768
        %v3770 = vmul.f32 %v3769, %v3608
        %v3771 = vmul.f32 %v3769, %v3609
        %3774 = vrot.lane.b32.xlu0 %v3770, 126
        %v3775 = vpop.permute.xlu0 %3774
        %3776 = vrot.lane.b32.xlu0 %v3771, 126
        %v3777 = vpop.permute.xlu0 %3776
        %v3780 = vadd.f32 %v3766, %v3775
        %v3781 = vadd.f32 %v3767, %v3777
        %s3782 = sld [smem:[#allocation3 + $0x123]]
        %v3783 = vstv %s3782
        %v3784 = vmul.f32 %v3783, %v3610
        %v3785 = vmul.f32 %v3783, %v3611
        %v3786 = vadd.f32 %v3780, %v3784
        %v3787 = vadd.f32 %v3781, %v3785
        %s3788 = sld [smem:[#allocation3 + $0x12b]]
        %v3789 = vstv %s3788
        %v3790 = vmul.f32 %v3789, %v3610
        %v3791 = vmul.f32 %v3789, %v3611
        %3794 = vrot.lane.b32.xlu0 %v3790, 127
        %v3795 = vpop.permute.xlu0 %3794
        %3796 = vrot.lane.b32.xlu0 %v3791, 127
        %v3797 = vpop.permute.xlu0 %3796
        %v3800 = vadd.f32 %v3786, %v3795
        %v3801 = vadd.f32 %v3787, %v3797
        %s3802 = sld [smem:[#allocation3 + $0x133]]
        %v3803 = vstv %s3802
        %v3804 = vmul.f32 %v3803, %v3610
        %v3805 = vmul.f32 %v3803, %v3611
        %3808 = vrot.lane.b32.xlu0 %v3804, 126
        %v3809 = vpop.permute.xlu0 %3808
        %3810 = vrot.lane.b32.xlu0 %v3805, 126
        %v3811 = vpop.permute.xlu0 %3810
        %v3814 = vadd.f32 %v3800, %v3809
        %v3815 = vadd.f32 %v3801, %v3811
        %v3816 = vsel %vm568, %v3712, 0.0
        %3817 = vadd.xlane.f32.xlu0 %v3816
        %v3818 = vpop.xlane.xlu0 %3817
        %v3819 = vsel %vm568, %v3713, 0.0
        %3820 = vadd.xlane.f32.xlu0 %v3819
        %v3821 = vpop.xlane.xlu0 %3820
        %v3822 = vadd.f32 %v3818, %v3821
        %v3823 = vrot.slane %v3822, 4
        %v3824 = vadd.f32 %v3822, %v3823
        %v3825 = vrot.slane %v3824, 2
        %v3826 = vadd.f32 %v3824, %v3825
        %v3827 = vrot.slane %v3826, 1
        %v3828 = vadd.f32 %v3826, %v3827
        %v3829 = vmul.f32 %v3828, 0.00390625
        %v3830 = vsub.f32 %v3712, %v3829
        %v3831 = vsub.f32 %v3713, %v3829
        %v3832 = vmul.f32 %v3830, %v3830
        %v3833 = vmul.f32 %v3831, %v3831
        %v3834 = vsel %vm568, %v3832, 0.0
        %3835 = vadd.xlane.f32.xlu0 %v3834
        %v3836 = vpop.xlane.xlu0 %3835
        %v3837 = vsel %vm568, %v3833, 0.0
        %3838 = vadd.xlane.f32.xlu0 %v3837
        %v3839 = vpop.xlane.xlu0 %3838
        %v3840 = vadd.f32 %v3836, %v3839
        %v3841 = vrot.slane %v3840, 4
        %v3842 = vadd.f32 %v3840, %v3841
        %v3843 = vrot.slane %v3842, 2
        %v3844 = vadd.f32 %v3842, %v3843
        %v3845 = vrot.slane %v3844, 1
        %v3846 = vadd.f32 %v3844, %v3845
        %v3847 = vmul.f32 %v3846, 0.00390625
        %s3848 = sld [smem:[#allocation3 + $0x134]]
        %v3849 = vadd.f32 %v3847, 1e-05
        %v3850 = vrsqrt.pop %v3849
        %v3851 = vstv %s3848
        %v3852 = vmul.f32 %v3851, %v3850
        %v3853 = vmul.f32 %v3830, %v3852
        %v3854 = vmul.f32 %v3831, %v3852
        %s3855 = sld [smem:[#allocation3 + $0x136]]
        %v3856 = vstv %s3855
        %v3857 = vadd.f32 %v3853, %v3856
        %v3858 = vadd.f32 %v3854, %v3856
        %v3859 = vtanh.pop %v3857
        %v3860 = vtanh.pop %v3858
        %v3861 = vsel %vm568, %v3814, 0.0
        %3862 = vadd.xlane.f32.xlu0 %v3861
        %v3863 = vpop.xlane.xlu0 %3862
        %v3864 = vsel %vm568, %v3815, 0.0
        %3865 = vadd.xlane.f32.xlu0 %v3864
        %v3866 = vpop.xlane.xlu0 %3865
        %v3867 = vadd.f32 %v3863, %v3866
        %v3868 = vrot.slane %v3867, 4
        %v3869 = vadd.f32 %v3867, %v3868
        %v3870 = vrot.slane %v3869, 2
        %v3871 = vadd.f32 %v3869, %v3870
        %v3872 = vrot.slane %v3871, 1
        %v3873 = vadd.f32 %v3871, %v3872
        %v3874 = vmul.f32 %v3873, 0.00390625
        %v3875 = vsub.f32 %v3814, %v3874
        %v3876 = vsub.f32 %v3815, %v3874
        %v3877 = vmul.f32 %v3875, %v3875
        %v3878 = vmul.f32 %v3876, %v3876
        %v3879 = vsel %vm568, %v3877, 0.0
        %3880 = vadd.xlane.f32.xlu0 %v3879
        %v3881 = vpop.xlane.xlu0 %3880
        %v3882 = vsel %vm568, %v3878, 0.0
        %3883 = vadd.xlane.f32.xlu0 %v3882
        %v3884 = vpop.xlane.xlu0 %3883
        %v3885 = vadd.f32 %v3881, %v3884
        %v3886 = vrot.slane %v3885, 4
        %v3887 = vadd.f32 %v3885, %v3886
        %v3888 = vrot.slane %v3887, 2
        %v3889 = vadd.f32 %v3887, %v3888
        %v3890 = vrot.slane %v3889, 1
        %v3891 = vadd.f32 %v3889, %v3890
        %v3892 = vmul.f32 %v3891, 0.00390625
        %s3893 = sld [smem:[#allocation3 + $0x135]]
        %v3894 = vadd.f32 %v3892, 1e-05
        %v3895 = vrsqrt.pop %v3894
        %v3896 = vstv %s3893
        %v3897 = vmul.f32 %v3896, %v3895
        %v3898 = vmul.f32 %v3875, %v3897
        %v3899 = vmul.f32 %v3876, %v3897
        %s3900 = sld [smem:[#allocation3 + $0x137]]
        %v3901 = vstv %s3900
        %v3902 = vadd.f32 %v3898, %v3901
        %v3903 = vadd.f32 %v3899, %v3901
        %v3904 = vtanh.pop %v3902
        %v3905 = vtanh.pop %v3903
        %3908 = vrot.lane.b32.xlu0 %v3859, 1
        %v3909 = vpop.permute.xlu0 %3908
        %3910 = vrot.lane.b32.xlu0 %v3860, 1
        %v3911 = vpop.permute.xlu0 %3910
        %3914 = vst.msk [vmem:[#allocation2 + $0x1] sm:$0xff] %vm937, %v3909
        %3915 = vst.msk [vmem:[#allocation2 + $0x9] sm:$0xff] %vm937, %v3911
        %v3916 = vld [vmem:[#allocation2] sm:$0xff]
        %v3917 = vld [vmem:[#allocation2 + $0x8] sm:$0xff]
        %v3918 = vld [vmem:[#allocation2 + $0x1] sm:$0xff]
        %v3919 = vld [vmem:[#allocation2 + $0x9] sm:$0xff]
        %v3920 = vld [vmem:[#allocation2 + $0x2] sm:$0xff]
        %v3921 = vld [vmem:[#allocation2 + $0xa] sm:$0xff]
        %s3922 = sld [smem:[#allocation3 + $0x138]]
        %v3923 = vstv %s3922
        %v3924 = vmul.f32 %v3923, %v3916
        %v3925 = vmul.f32 %v3923, %v3917
        %v3926 = vadd.f32 %v3924, 0.0
        %v3927 = vadd.f32 %v3925, 0.0
        %s3928 = sld [smem:[#allocation3 + $0x140]]
        %v3929 = vstv %s3928
        %v3930 = vmul.f32 %v3929, %v3916
        %v3931 = vmul.f32 %v3929, %v3917
        %3934 = vrot.lane.b32.xlu0 %v3930, 127
        %v3935 = vpop.permute.xlu0 %3934
        %3936 = vrot.lane.b32.xlu0 %v3931, 127
        %v3937 = vpop.permute.xlu0 %3936
        %v3940 = vadd.f32 %v3926, %v3935
        %v3941 = vadd.f32 %v3927, %v3937
        %s3942 = sld [smem:[#allocation3 + $0x148]]
        %v3943 = vstv %s3942
        %v3944 = vmul.f32 %v3943, %v3916
        %v3945 = vmul.f32 %v3943, %v3917
        %3948 = vrot.lane.b32.xlu0 %v3944, 126
        %v3949 = vpop.permute.xlu0 %3948
        %3950 = vrot.lane.b32.xlu0 %v3945, 126
        %v3951 = vpop.permute.xlu0 %3950
        %v3954 = vadd.f32 %v3940, %v3949
        %v3955 = vadd.f32 %v3941, %v3951
        %s3956 = sld [smem:[#allocation3 + $0x150]]
        %v3957 = vstv %s3956
        %v3958 = vmul.f32 %v3957, %v3918
        %v3959 = vmul.f32 %v3957, %v3919
        %v3960 = vadd.f32 %v3954, %v3958
        %v3961 = vadd.f32 %v3955, %v3959
        %s3962 = sld [smem:[#allocation3 + $0x158]]
        %v3963 = vstv %s3962
        %v3964 = vmul.f32 %v3963, %v3918
        %v3965 = vmul.f32 %v3963, %v3919
        %3968 = vrot.lane.b32.xlu0 %v3964, 127
        %v3969 = vpop.permute.xlu0 %3968
        %3970 = vrot.lane.b32.xlu0 %v3965, 127
        %v3971 = vpop.permute.xlu0 %3970
        %v3974 = vadd.f32 %v3960, %v3969
        %v3975 = vadd.f32 %v3961, %v3971
        %s3976 = sld [smem:[#allocation3 + $0x160]]
        %v3977 = vstv %s3976
        %v3978 = vmul.f32 %v3977, %v3918
        %v3979 = vmul.f32 %v3977, %v3919
        %3982 = vrot.lane.b32.xlu0 %v3978, 126
        %v3983 = vpop.permute.xlu0 %3982
        %3984 = vrot.lane.b32.xlu0 %v3979, 126
        %v3985 = vpop.permute.xlu0 %3984
        %v3988 = vadd.f32 %v3974, %v3983
        %v3989 = vadd.f32 %v3975, %v3985
        %s3990 = sld [smem:[#allocation3 + $0x168]]
        %v3991 = vstv %s3990
        %v3992 = vmul.f32 %v3991, %v3920
        %v3993 = vmul.f32 %v3991, %v3921
        %v3994 = vadd.f32 %v3988, %v3992
        %v3995 = vadd.f32 %v3989, %v3993
        %s3996 = sld [smem:[#allocation3 + $0x170]]
        %v3997 = vstv %s3996
        %v3998 = vmul.f32 %v3997, %v3920
        %v3999 = vmul.f32 %v3997, %v3921
        %4002 = vrot.lane.b32.xlu0 %v3998, 127
        %v4003 = vpop.permute.xlu0 %4002
        %4004 = vrot.lane.b32.xlu0 %v3999, 127
        %v4005 = vpop.permute.xlu0 %4004
        %v4008 = vadd.f32 %v3994, %v4003
        %v4009 = vadd.f32 %v3995, %v4005
        %s4010 = sld [smem:[#allocation3 + $0x178]]
        %v4011 = vstv %s4010
        %v4012 = vmul.f32 %v4011, %v3920
        %v4013 = vmul.f32 %v4011, %v3921
        %4016 = vrot.lane.b32.xlu0 %v4012, 126
        %v4017 = vpop.permute.xlu0 %4016
        %4018 = vrot.lane.b32.xlu0 %v4013, 126
        %v4019 = vpop.permute.xlu0 %4018
        %v4022 = vadd.f32 %v4008, %v4017
        %v4023 = vadd.f32 %v4009, %v4019
        %s4024 = sld [smem:[#allocation3 + $0x139]]
        %v4025 = vstv %s4024
        %v4026 = vmul.f32 %v4025, %v3916
        %v4027 = vmul.f32 %v4025, %v3917
        %v4028 = vadd.f32 %v4026, 0.0
        %v4029 = vadd.f32 %v4027, 0.0
        %s4030 = sld [smem:[#allocation3 + $0x141]]
        %v4031 = vstv %s4030
        %v4032 = vmul.f32 %v4031, %v3916
        %v4033 = vmul.f32 %v4031, %v3917
        %4036 = vrot.lane.b32.xlu0 %v4032, 127
        %v4037 = vpop.permute.xlu0 %4036
        %4038 = vrot.lane.b32.xlu0 %v4033, 127
        %v4039 = vpop.permute.xlu0 %4038
        %v4042 = vadd.f32 %v4028, %v4037
        %v4043 = vadd.f32 %v4029, %v4039
        %s4044 = sld [smem:[#allocation3 + $0x149]]
        %v4045 = vstv %s4044
        %v4046 = vmul.f32 %v4045, %v3916
        %v4047 = vmul.f32 %v4045, %v3917
        %4050 = vrot.lane.b32.xlu0 %v4046, 126
        %v4051 = vpop.permute.xlu0 %4050
        %4052 = vrot.lane.b32.xlu0 %v4047, 126
        %v4053 = vpop.permute.xlu0 %4052
        %v4056 = vadd.f32 %v4042, %v4051
        %v4057 = vadd.f32 %v4043, %v4053
        %s4058 = sld [smem:[#allocation3 + $0x151]]
        %v4059 = vstv %s4058
        %v4060 = vmul.f32 %v4059, %v3918
        %v4061 = vmul.f32 %v4059, %v3919
        %v4062 = vadd.f32 %v4056, %v4060
        %v4063 = vadd.f32 %v4057, %v4061
        %s4064 = sld [smem:[#allocation3 + $0x159]]
        %v4065 = vstv %s4064
        %v4066 = vmul.f32 %v4065, %v3918
        %v4067 = vmul.f32 %v4065, %v3919
        %4070 = vrot.lane.b32.xlu0 %v4066, 127
        %v4071 = vpop.permute.xlu0 %4070
        %4072 = vrot.lane.b32.xlu0 %v4067, 127
        %v4073 = vpop.permute.xlu0 %4072
        %v4076 = vadd.f32 %v4062, %v4071
        %v4077 = vadd.f32 %v4063, %v4073
        %s4078 = sld [smem:[#allocation3 + $0x161]]
        %v4079 = vstv %s4078
        %v4080 = vmul.f32 %v4079, %v3918
        %v4081 = vmul.f32 %v4079, %v3919
        %4084 = vrot.lane.b32.xlu0 %v4080, 126
        %v4085 = vpop.permute.xlu0 %4084
        %4086 = vrot.lane.b32.xlu0 %v4081, 126
        %v4087 = vpop.permute.xlu0 %4086
        %v4090 = vadd.f32 %v4076, %v4085
        %v4091 = vadd.f32 %v4077, %v4087
        %s4092 = sld [smem:[#allocation3 + $0x169]]
        %v4093 = vstv %s4092
        %v4094 = vmul.f32 %v4093, %v3920
        %v4095 = vmul.f32 %v4093, %v3921
        %v4096 = vadd.f32 %v4090, %v4094
        %v4097 = vadd.f32 %v4091, %v4095
        %s4098 = sld [smem:[#allocation3 + $0x171]]
        %v4099 = vstv %s4098
        %v4100 = vmul.f32 %v4099, %v3920
        %v4101 = vmul.f32 %v4099, %v3921
        %4104 = vrot.lane.b32.xlu0 %v4100, 127
        %v4105 = vpop.permute.xlu0 %4104
        %4106 = vrot.lane.b32.xlu0 %v4101, 127
        %v4107 = vpop.permute.xlu0 %4106
        %v4110 = vadd.f32 %v4096, %v4105
        %v4111 = vadd.f32 %v4097, %v4107
        %s4112 = sld [smem:[#allocation3 + $0x179]]
        %v4113 = vstv %s4112
        %v4114 = vmul.f32 %v4113, %v3920
        %v4115 = vmul.f32 %v4113, %v3921
        %4118 = vrot.lane.b32.xlu0 %v4114, 126
        %v4119 = vpop.permute.xlu0 %4118
        %4120 = vrot.lane.b32.xlu0 %v4115, 126
        %v4121 = vpop.permute.xlu0 %4120
        %v4124 = vadd.f32 %v4110, %v4119
        %v4125 = vadd.f32 %v4111, %v4121
        %s4126 = sld [smem:[#allocation3 + $0x13a]]
        %v4127 = vstv %s4126
        %v4128 = vmul.f32 %v4127, %v3916
        %v4129 = vmul.f32 %v4127, %v3917
        %v4130 = vadd.f32 %v4128, 0.0
        %v4131 = vadd.f32 %v4129, 0.0
        %s4132 = sld [smem:[#allocation3 + $0x142]]
        %v4133 = vstv %s4132
        %v4134 = vmul.f32 %v4133, %v3916
        %v4135 = vmul.f32 %v4133, %v3917
        %4138 = vrot.lane.b32.xlu0 %v4134, 127
        %v4139 = vpop.permute.xlu0 %4138
        %4140 = vrot.lane.b32.xlu0 %v4135, 127
        %v4141 = vpop.permute.xlu0 %4140
        %v4144 = vadd.f32 %v4130, %v4139
        %v4145 = vadd.f32 %v4131, %v4141
        %s4146 = sld [smem:[#allocation3 + $0x14a]]
        %v4147 = vstv %s4146
        %v4148 = vmul.f32 %v4147, %v3916
        %v4149 = vmul.f32 %v4147, %v3917
        %4152 = vrot.lane.b32.xlu0 %v4148, 126
        %v4153 = vpop.permute.xlu0 %4152
        %4154 = vrot.lane.b32.xlu0 %v4149, 126
        %v4155 = vpop.permute.xlu0 %4154
        %v4158 = vadd.f32 %v4144, %v4153
        %v4159 = vadd.f32 %v4145, %v4155
        %s4160 = sld [smem:[#allocation3 + $0x152]]
        %v4161 = vstv %s4160
        %v4162 = vmul.f32 %v4161, %v3918
        %v4163 = vmul.f32 %v4161, %v3919
        %v4164 = vadd.f32 %v4158, %v4162
        %v4165 = vadd.f32 %v4159, %v4163
        %s4166 = sld [smem:[#allocation3 + $0x15a]]
        %v4167 = vstv %s4166
        %v4168 = vmul.f32 %v4167, %v3918
        %v4169 = vmul.f32 %v4167, %v3919
        %4172 = vrot.lane.b32.xlu0 %v4168, 127
        %v4173 = vpop.permute.xlu0 %4172
        %4174 = vrot.lane.b32.xlu0 %v4169, 127
        %v4175 = vpop.permute.xlu0 %4174
        %v4178 = vadd.f32 %v4164, %v4173
        %v4179 = vadd.f32 %v4165, %v4175
        %s4180 = sld [smem:[#allocation3 + $0x162]]
        %v4181 = vstv %s4180
        %v4182 = vmul.f32 %v4181, %v3918
        %v4183 = vmul.f32 %v4181, %v3919
        %4186 = vrot.lane.b32.xlu0 %v4182, 126
        %v4187 = vpop.permute.xlu0 %4186
        %4188 = vrot.lane.b32.xlu0 %v4183, 126
        %v4189 = vpop.permute.xlu0 %4188
        %v4192 = vadd.f32 %v4178, %v4187
        %v4193 = vadd.f32 %v4179, %v4189
        %s4194 = sld [smem:[#allocation3 + $0x16a]]
        %v4195 = vstv %s4194
        %v4196 = vmul.f32 %v4195, %v3920
        %v4197 = vmul.f32 %v4195, %v3921
        %v4198 = vadd.f32 %v4192, %v4196
        %v4199 = vadd.f32 %v4193, %v4197
        %s4200 = sld [smem:[#allocation3 + $0x172]]
        %v4201 = vstv %s4200
        %v4202 = vmul.f32 %v4201, %v3920
        %v4203 = vmul.f32 %v4201, %v3921
        %4206 = vrot.lane.b32.xlu0 %v4202, 127
        %v4207 = vpop.permute.xlu0 %4206
        %4208 = vrot.lane.b32.xlu0 %v4203, 127
        %v4209 = vpop.permute.xlu0 %4208
        %v4212 = vadd.f32 %v4198, %v4207
        %v4213 = vadd.f32 %v4199, %v4209
        %s4214 = sld [smem:[#allocation3 + $0x17a]]
        %v4215 = vstv %s4214
        %v4216 = vmul.f32 %v4215, %v3920
        %v4217 = vmul.f32 %v4215, %v3921
        %4220 = vrot.lane.b32.xlu0 %v4216, 126
        %v4221 = vpop.permute.xlu0 %4220
        %4222 = vrot.lane.b32.xlu0 %v4217, 126
        %v4223 = vpop.permute.xlu0 %4222
        %v4226 = vadd.f32 %v4212, %v4221
        %v4227 = vadd.f32 %v4213, %v4223
        %s4228 = sld [smem:[#allocation3 + $0x13b]]
        %v4229 = vstv %s4228
        %v4230 = vmul.f32 %v4229, %v3916
        %v4231 = vmul.f32 %v4229, %v3917
        %v4232 = vadd.f32 %v4230, 0.0
        %v4233 = vadd.f32 %v4231, 0.0
        %s4234 = sld [smem:[#allocation3 + $0x143]]
        %v4235 = vstv %s4234
        %v4236 = vmul.f32 %v4235, %v3916
        %v4237 = vmul.f32 %v4235, %v3917
        %4240 = vrot.lane.b32.xlu0 %v4236, 127
        %v4241 = vpop.permute.xlu0 %4240
        %4242 = vrot.lane.b32.xlu0 %v4237, 127
        %v4243 = vpop.permute.xlu0 %4242
        %v4246 = vadd.f32 %v4232, %v4241
        %v4247 = vadd.f32 %v4233, %v4243
        %s4248 = sld [smem:[#allocation3 + $0x14b]]
        %v4249 = vstv %s4248
        %v4250 = vmul.f32 %v4249, %v3916
        %v4251 = vmul.f32 %v4249, %v3917
        %4254 = vrot.lane.b32.xlu0 %v4250, 126
        %v4255 = vpop.permute.xlu0 %4254
        %4256 = vrot.lane.b32.xlu0 %v4251, 126
        %v4257 = vpop.permute.xlu0 %4256
        %v4260 = vadd.f32 %v4246, %v4255
        %v4261 = vadd.f32 %v4247, %v4257
        %s4262 = sld [smem:[#allocation3 + $0x153]]
        %v4263 = vstv %s4262
        %v4264 = vmul.f32 %v4263, %v3918
        %v4265 = vmul.f32 %v4263, %v3919
        %v4266 = vadd.f32 %v4260, %v4264
        %v4267 = vadd.f32 %v4261, %v4265
        %s4268 = sld [smem:[#allocation3 + $0x15b]]
        %v4269 = vstv %s4268
        %v4270 = vmul.f32 %v4269, %v3918
        %v4271 = vmul.f32 %v4269, %v3919
        %4274 = vrot.lane.b32.xlu0 %v4270, 127
        %v4275 = vpop.permute.xlu0 %4274
        %4276 = vrot.lane.b32.xlu0 %v4271, 127
        %v4277 = vpop.permute.xlu0 %4276
        %v4280 = vadd.f32 %v4266, %v4275
        %v4281 = vadd.f32 %v4267, %v4277
        %s4282 = sld [smem:[#allocation3 + $0x163]]
        %v4283 = vstv %s4282
        %v4284 = vmul.f32 %v4283, %v3918
        %v4285 = vmul.f32 %v4283, %v3919
        %4288 = vrot.lane.b32.xlu0 %v4284, 126
        %v4289 = vpop.permute.xlu0 %4288
        %4290 = vrot.lane.b32.xlu0 %v4285, 126
        %v4291 = vpop.permute.xlu0 %4290
        %v4294 = vadd.f32 %v4280, %v4289
        %v4295 = vadd.f32 %v4281, %v4291
        %s4296 = sld [smem:[#allocation3 + $0x16b]]
        %v4297 = vstv %s4296
        %v4298 = vmul.f32 %v4297, %v3920
        %v4299 = vmul.f32 %v4297, %v3921
        %v4300 = vadd.f32 %v4294, %v4298
        %v4301 = vadd.f32 %v4295, %v4299
        %s4302 = sld [smem:[#allocation3 + $0x173]]
        %v4303 = vstv %s4302
        %v4304 = vmul.f32 %v4303, %v3920
        %v4305 = vmul.f32 %v4303, %v3921
        %4308 = vrot.lane.b32.xlu0 %v4304, 127
        %v4309 = vpop.permute.xlu0 %4308
        %4310 = vrot.lane.b32.xlu0 %v4305, 127
        %v4311 = vpop.permute.xlu0 %4310
        %v4314 = vadd.f32 %v4300, %v4309
        %v4315 = vadd.f32 %v4301, %v4311
        %s4316 = sld [smem:[#allocation3 + $0x17b]]
        %v4317 = vstv %s4316
        %v4318 = vmul.f32 %v4317, %v3920
        %v4319 = vmul.f32 %v4317, %v3921
        %4322 = vrot.lane.b32.xlu0 %v4318, 126
        %v4323 = vpop.permute.xlu0 %4322
        %4324 = vrot.lane.b32.xlu0 %v4319, 126
        %v4325 = vpop.permute.xlu0 %4324
        %v4328 = vadd.f32 %v4314, %v4323
        %v4329 = vadd.f32 %v4315, %v4325
        %4332 = vrot.lane.b32.xlu0 %v3904, 1
        %v4333 = vpop.permute.xlu0 %4332
        %4334 = vrot.lane.b32.xlu0 %v3905, 1
        %v4335 = vpop.permute.xlu0 %4334
        %4338 = vst.msk [vmem:[#allocation2 + $0x1] sm:$0xff] %vm937, %v4333
        %4339 = vst.msk [vmem:[#allocation2 + $0x9] sm:$0xff] %vm937, %v4335
        %v4340 = vld [vmem:[#allocation2] sm:$0xff]
        %v4341 = vld [vmem:[#allocation2 + $0x8] sm:$0xff]
        %v4342 = vld [vmem:[#allocation2 + $0x1] sm:$0xff]
        %v4343 = vld [vmem:[#allocation2 + $0x9] sm:$0xff]
        %v4344 = vld [vmem:[#allocation2 + $0x2] sm:$0xff]
        %v4345 = vld [vmem:[#allocation2 + $0xa] sm:$0xff]
        %s4346 = sld [smem:[#allocation3 + $0x13c]]
        %v4347 = vstv %s4346
        %v4348 = vmul.f32 %v4347, %v4340
        %v4349 = vmul.f32 %v4347, %v4341
        %v4350 = vadd.f32 %v4022, %v4348
        %v4351 = vadd.f32 %v4023, %v4349
        %s4352 = sld [smem:[#allocation3 + $0x144]]
        %v4353 = vstv %s4352
        %v4354 = vmul.f32 %v4353, %v4340
        %v4355 = vmul.f32 %v4353, %v4341
        %4358 = vrot.lane.b32.xlu0 %v4354, 127
        %v4359 = vpop.permute.xlu0 %4358
        %4360 = vrot.lane.b32.xlu0 %v4355, 127
        %v4361 = vpop.permute.xlu0 %4360
        %v4364 = vadd.f32 %v4350, %v4359
        %v4365 = vadd.f32 %v4351, %v4361
        %s4366 = sld [smem:[#allocation3 + $0x14c]]
        %v4367 = vstv %s4366
        %v4368 = vmul.f32 %v4367, %v4340
        %v4369 = vmul.f32 %v4367, %v4341
        %4372 = vrot.lane.b32.xlu0 %v4368, 126
        %v4373 = vpop.permute.xlu0 %4372
        %4374 = vrot.lane.b32.xlu0 %v4369, 126
        %v4375 = vpop.permute.xlu0 %4374
        %v4378 = vadd.f32 %v4364, %v4373
        %v4379 = vadd.f32 %v4365, %v4375
        %s4380 = sld [smem:[#allocation3 + $0x154]]
        %v4381 = vstv %s4380
        %v4382 = vmul.f32 %v4381, %v4342
        %v4383 = vmul.f32 %v4381, %v4343
        %v4384 = vadd.f32 %v4378, %v4382
        %v4385 = vadd.f32 %v4379, %v4383
        %s4386 = sld [smem:[#allocation3 + $0x15c]]
        %v4387 = vstv %s4386
        %v4388 = vmul.f32 %v4387, %v4342
        %v4389 = vmul.f32 %v4387, %v4343
        %4392 = vrot.lane.b32.xlu0 %v4388, 127
        %v4393 = vpop.permute.xlu0 %4392
        %4394 = vrot.lane.b32.xlu0 %v4389, 127
        %v4395 = vpop.permute.xlu0 %4394
        %v4398 = vadd.f32 %v4384, %v4393
        %v4399 = vadd.f32 %v4385, %v4395
        %s4400 = sld [smem:[#allocation3 + $0x164]]
        %v4401 = vstv %s4400
        %v4402 = vmul.f32 %v4401, %v4342
        %v4403 = vmul.f32 %v4401, %v4343
        %4406 = vrot.lane.b32.xlu0 %v4402, 126
        %v4407 = vpop.permute.xlu0 %4406
        %4408 = vrot.lane.b32.xlu0 %v4403, 126
        %v4409 = vpop.permute.xlu0 %4408
        %v4412 = vadd.f32 %v4398, %v4407
        %v4413 = vadd.f32 %v4399, %v4409
        %s4414 = sld [smem:[#allocation3 + $0x16c]]
        %v4415 = vstv %s4414
        %v4416 = vmul.f32 %v4415, %v4344
        %v4417 = vmul.f32 %v4415, %v4345
        %v4418 = vadd.f32 %v4412, %v4416
        %v4419 = vadd.f32 %v4413, %v4417
        %s4420 = sld [smem:[#allocation3 + $0x174]]
        %v4421 = vstv %s4420
        %v4422 = vmul.f32 %v4421, %v4344
        %v4423 = vmul.f32 %v4421, %v4345
        %4426 = vrot.lane.b32.xlu0 %v4422, 127
        %v4427 = vpop.permute.xlu0 %4426
        %4428 = vrot.lane.b32.xlu0 %v4423, 127
        %v4429 = vpop.permute.xlu0 %4428
        %v4432 = vadd.f32 %v4418, %v4427
        %v4433 = vadd.f32 %v4419, %v4429
        %s4434 = sld [smem:[#allocation3 + $0x17c]]
        %v4435 = vstv %s4434
        %v4436 = vmul.f32 %v4435, %v4344
        %v4437 = vmul.f32 %v4435, %v4345
        %4440 = vrot.lane.b32.xlu0 %v4436, 126
        %v4441 = vpop.permute.xlu0 %4440
        %4442 = vrot.lane.b32.xlu0 %v4437, 126
        %v4443 = vpop.permute.xlu0 %4442
        %v4446 = vadd.f32 %v4432, %v4441
        %v4447 = vadd.f32 %v4433, %v4443
        %s4448 = sld [smem:[#allocation3 + $0x13d]]
        %v4449 = vstv %s4448
        %v4450 = vmul.f32 %v4449, %v4340
        %v4451 = vmul.f32 %v4449, %v4341
        %v4452 = vadd.f32 %v4124, %v4450
        %v4453 = vadd.f32 %v4125, %v4451
        %s4454 = sld [smem:[#allocation3 + $0x145]]
        %v4455 = vstv %s4454
        %v4456 = vmul.f32 %v4455, %v4340
        %v4457 = vmul.f32 %v4455, %v4341
        %4460 = vrot.lane.b32.xlu0 %v4456, 127
        %v4461 = vpop.permute.xlu0 %4460
        %4462 = vrot.lane.b32.xlu0 %v4457, 127
        %v4463 = vpop.permute.xlu0 %4462
        %v4466 = vadd.f32 %v4452, %v4461
        %v4467 = vadd.f32 %v4453, %v4463
        %s4468 = sld [smem:[#allocation3 + $0x14d]]
        %v4469 = vstv %s4468
        %v4470 = vmul.f32 %v4469, %v4340
        %v4471 = vmul.f32 %v4469, %v4341
        %4474 = vrot.lane.b32.xlu0 %v4470, 126
        %v4475 = vpop.permute.xlu0 %4474
        %4476 = vrot.lane.b32.xlu0 %v4471, 126
        %v4477 = vpop.permute.xlu0 %4476
        %v4480 = vadd.f32 %v4466, %v4475
        %v4481 = vadd.f32 %v4467, %v4477
        %s4482 = sld [smem:[#allocation3 + $0x155]]
        %v4483 = vstv %s4482
        %v4484 = vmul.f32 %v4483, %v4342
        %v4485 = vmul.f32 %v4483, %v4343
        %v4486 = vadd.f32 %v4480, %v4484
        %v4487 = vadd.f32 %v4481, %v4485
        %s4488 = sld [smem:[#allocation3 + $0x15d]]
        %v4489 = vstv %s4488
        %v4490 = vmul.f32 %v4489, %v4342
        %v4491 = vmul.f32 %v4489, %v4343
        %4494 = vrot.lane.b32.xlu0 %v4490, 127
        %v4495 = vpop.permute.xlu0 %4494
        %4496 = vrot.lane.b32.xlu0 %v4491, 127
        %v4497 = vpop.permute.xlu0 %4496
        %v4500 = vadd.f32 %v4486, %v4495
        %v4501 = vadd.f32 %v4487, %v4497
        %s4502 = sld [smem:[#allocation3 + $0x165]]
        %v4503 = vstv %s4502
        %v4504 = vmul.f32 %v4503, %v4342
        %v4505 = vmul.f32 %v4503, %v4343
        %4508 = vrot.lane.b32.xlu0 %v4504, 126
        %v4509 = vpop.permute.xlu0 %4508
        %4510 = vrot.lane.b32.xlu0 %v4505, 126
        %v4511 = vpop.permute.xlu0 %4510
        %v4514 = vadd.f32 %v4500, %v4509
        %v4515 = vadd.f32 %v4501, %v4511
        %s4516 = sld [smem:[#allocation3 + $0x16d]]
        %v4517 = vstv %s4516
        %v4518 = vmul.f32 %v4517, %v4344
        %v4519 = vmul.f32 %v4517, %v4345
        %v4520 = vadd.f32 %v4514, %v4518
        %v4521 = vadd.f32 %v4515, %v4519
        %s4522 = sld [smem:[#allocation3 + $0x175]]
        %v4523 = vstv %s4522
        %v4524 = vmul.f32 %v4523, %v4344
        %v4525 = vmul.f32 %v4523, %v4345
        %4528 = vrot.lane.b32.xlu0 %v4524, 127
        %v4529 = vpop.permute.xlu0 %4528
        %4530 = vrot.lane.b32.xlu0 %v4525, 127
        %v4531 = vpop.permute.xlu0 %4530
        %v4534 = vadd.f32 %v4520, %v4529
        %v4535 = vadd.f32 %v4521, %v4531
        %s4536 = sld [smem:[#allocation3 + $0x17d]]
        %v4537 = vstv %s4536
        %v4538 = vmul.f32 %v4537, %v4344
        %v4539 = vmul.f32 %v4537, %v4345
        %4542 = vrot.lane.b32.xlu0 %v4538, 126
        %v4543 = vpop.permute.xlu0 %4542
        %4544 = vrot.lane.b32.xlu0 %v4539, 126
        %v4545 = vpop.permute.xlu0 %4544
        %v4548 = vadd.f32 %v4534, %v4543
        %v4549 = vadd.f32 %v4535, %v4545
        %s4550 = sld [smem:[#allocation3 + $0x13e]]
        %v4551 = vstv %s4550
        %v4552 = vmul.f32 %v4551, %v4340
        %v4553 = vmul.f32 %v4551, %v4341
        %v4554 = vadd.f32 %v4226, %v4552
        %v4555 = vadd.f32 %v4227, %v4553
        %s4556 = sld [smem:[#allocation3 + $0x146]]
        %v4557 = vstv %s4556
        %v4558 = vmul.f32 %v4557, %v4340
        %v4559 = vmul.f32 %v4557, %v4341
        %4562 = vrot.lane.b32.xlu0 %v4558, 127
        %v4563 = vpop.permute.xlu0 %4562
        %4564 = vrot.lane.b32.xlu0 %v4559, 127
        %v4565 = vpop.permute.xlu0 %4564
        %v4568 = vadd.f32 %v4554, %v4563
        %v4569 = vadd.f32 %v4555, %v4565
        %s4570 = sld [smem:[#allocation3 + $0x14e]]
        %v4571 = vstv %s4570
        %v4572 = vmul.f32 %v4571, %v4340
        %v4573 = vmul.f32 %v4571, %v4341
        %4576 = vrot.lane.b32.xlu0 %v4572, 126
        %v4577 = vpop.permute.xlu0 %4576
        %4578 = vrot.lane.b32.xlu0 %v4573, 126
        %v4579 = vpop.permute.xlu0 %4578
        %v4582 = vadd.f32 %v4568, %v4577
        %v4583 = vadd.f32 %v4569, %v4579
        %s4584 = sld [smem:[#allocation3 + $0x156]]
        %v4585 = vstv %s4584
        %v4586 = vmul.f32 %v4585, %v4342
        %v4587 = vmul.f32 %v4585, %v4343
        %v4588 = vadd.f32 %v4582, %v4586
        %v4589 = vadd.f32 %v4583, %v4587
        %s4590 = sld [smem:[#allocation3 + $0x15e]]
        %v4591 = vstv %s4590
        %v4592 = vmul.f32 %v4591, %v4342
        %v4593 = vmul.f32 %v4591, %v4343
        %4596 = vrot.lane.b32.xlu0 %v4592, 127
        %v4597 = vpop.permute.xlu0 %4596
        %4598 = vrot.lane.b32.xlu0 %v4593, 127
        %v4599 = vpop.permute.xlu0 %4598
        %v4602 = vadd.f32 %v4588, %v4597
        %v4603 = vadd.f32 %v4589, %v4599
        %s4604 = sld [smem:[#allocation3 + $0x166]]
        %v4605 = vstv %s4604
        %v4606 = vmul.f32 %v4605, %v4342
        %v4607 = vmul.f32 %v4605, %v4343
        %4610 = vrot.lane.b32.xlu0 %v4606, 126
        %v4611 = vpop.permute.xlu0 %4610
        %4612 = vrot.lane.b32.xlu0 %v4607, 126
        %v4613 = vpop.permute.xlu0 %4612
        %v4616 = vadd.f32 %v4602, %v4611
        %v4617 = vadd.f32 %v4603, %v4613
        %s4618 = sld [smem:[#allocation3 + $0x16e]]
        %v4619 = vstv %s4618
        %v4620 = vmul.f32 %v4619, %v4344
        %v4621 = vmul.f32 %v4619, %v4345
        %v4622 = vadd.f32 %v4616, %v4620
        %v4623 = vadd.f32 %v4617, %v4621
        %s4624 = sld [smem:[#allocation3 + $0x176]]
        %v4625 = vstv %s4624
        %v4626 = vmul.f32 %v4625, %v4344
        %v4627 = vmul.f32 %v4625, %v4345
        %4630 = vrot.lane.b32.xlu0 %v4626, 127
        %v4631 = vpop.permute.xlu0 %4630
        %4632 = vrot.lane.b32.xlu0 %v4627, 127
        %v4633 = vpop.permute.xlu0 %4632
        %v4636 = vadd.f32 %v4622, %v4631
        %v4637 = vadd.f32 %v4623, %v4633
        %s4638 = sld [smem:[#allocation3 + $0x17e]]
        %v4639 = vstv %s4638
        %v4640 = vmul.f32 %v4639, %v4344
        %v4641 = vmul.f32 %v4639, %v4345
        %4644 = vrot.lane.b32.xlu0 %v4640, 126
        %v4645 = vpop.permute.xlu0 %4644
        %4646 = vrot.lane.b32.xlu0 %v4641, 126
        %v4647 = vpop.permute.xlu0 %4646
        %v4650 = vadd.f32 %v4636, %v4645
        %v4651 = vadd.f32 %v4637, %v4647
        %s4652 = sld [smem:[#allocation3 + $0x13f]]
        %v4653 = vstv %s4652
        %v4654 = vmul.f32 %v4653, %v4340
        %v4655 = vmul.f32 %v4653, %v4341
        %v4656 = vadd.f32 %v4328, %v4654
        %v4657 = vadd.f32 %v4329, %v4655
        %s4658 = sld [smem:[#allocation3 + $0x147]]
        %v4659 = vstv %s4658
        %v4660 = vmul.f32 %v4659, %v4340
        %v4661 = vmul.f32 %v4659, %v4341
        %4664 = vrot.lane.b32.xlu0 %v4660, 127
        %v4665 = vpop.permute.xlu0 %4664
        %4666 = vrot.lane.b32.xlu0 %v4661, 127
        %v4667 = vpop.permute.xlu0 %4666
        %v4670 = vadd.f32 %v4656, %v4665
        %v4671 = vadd.f32 %v4657, %v4667
        %s4672 = sld [smem:[#allocation3 + $0x14f]]
        %v4673 = vstv %s4672
        %v4674 = vmul.f32 %v4673, %v4340
        %v4675 = vmul.f32 %v4673, %v4341
        %4678 = vrot.lane.b32.xlu0 %v4674, 126
        %v4679 = vpop.permute.xlu0 %4678
        %4680 = vrot.lane.b32.xlu0 %v4675, 126
        %v4681 = vpop.permute.xlu0 %4680
        %v4684 = vadd.f32 %v4670, %v4679
        %v4685 = vadd.f32 %v4671, %v4681
        %s4686 = sld [smem:[#allocation3 + $0x157]]
        %v4687 = vstv %s4686
        %v4688 = vmul.f32 %v4687, %v4342
        %v4689 = vmul.f32 %v4687, %v4343
        %v4690 = vadd.f32 %v4684, %v4688
        %v4691 = vadd.f32 %v4685, %v4689
        %s4692 = sld [smem:[#allocation3 + $0x15f]]
        %v4693 = vstv %s4692
        %v4694 = vmul.f32 %v4693, %v4342
        %v4695 = vmul.f32 %v4693, %v4343
        %4698 = vrot.lane.b32.xlu0 %v4694, 127
        %v4699 = vpop.permute.xlu0 %4698
        %4700 = vrot.lane.b32.xlu0 %v4695, 127
        %v4701 = vpop.permute.xlu0 %4700
        %v4704 = vadd.f32 %v4690, %v4699
        %v4705 = vadd.f32 %v4691, %v4701
        %s4706 = sld [smem:[#allocation3 + $0x167]]
        %v4707 = vstv %s4706
        %v4708 = vmul.f32 %v4707, %v4342
        %v4709 = vmul.f32 %v4707, %v4343
        %4712 = vrot.lane.b32.xlu0 %v4708, 126
        %v4713 = vpop.permute.xlu0 %4712
        %4714 = vrot.lane.b32.xlu0 %v4709, 126
        %v4715 = vpop.permute.xlu0 %4714
        %v4718 = vadd.f32 %v4704, %v4713
        %v4719 = vadd.f32 %v4705, %v4715
        %s4720 = sld [smem:[#allocation3 + $0x16f]]
        %v4721 = vstv %s4720
        %v4722 = vmul.f32 %v4721, %v4344
        %v4723 = vmul.f32 %v4721, %v4345
        %v4724 = vadd.f32 %v4718, %v4722
        %v4725 = vadd.f32 %v4719, %v4723
        %s4726 = sld [smem:[#allocation3 + $0x177]]
        %v4727 = vstv %s4726
        %v4728 = vmul.f32 %v4727, %v4344
        %v4729 = vmul.f32 %v4727, %v4345
        %4732 = vrot.lane.b32.xlu0 %v4728, 127
        %v4733 = vpop.permute.xlu0 %4732
        %4734 = vrot.lane.b32.xlu0 %v4729, 127
        %v4735 = vpop.permute.xlu0 %4734
        %v4738 = vadd.f32 %v4724, %v4733
        %v4739 = vadd.f32 %v4725, %v4735
        %s4740 = sld [smem:[#allocation3 + $0x17f]]
        %v4741 = vstv %s4740
        %v4742 = vmul.f32 %v4741, %v4344
        %v4743 = vmul.f32 %v4741, %v4345
        %4746 = vrot.lane.b32.xlu0 %v4742, 126
        %v4747 = vpop.permute.xlu0 %4746
        %4748 = vrot.lane.b32.xlu0 %v4743, 126
        %v4749 = vpop.permute.xlu0 %4748
        %v4752 = vadd.f32 %v4738, %v4747
        %v4753 = vadd.f32 %v4739, %v4749
        %v4754 = vsel %vm568, %v4446, 0.0
        %4755 = vadd.xlane.f32.xlu0 %v4754
        %v4756 = vpop.xlane.xlu0 %4755
        %v4757 = vsel %vm568, %v4447, 0.0
        %4758 = vadd.xlane.f32.xlu0 %v4757
        %v4759 = vpop.xlane.xlu0 %4758
        %v4760 = vadd.f32 %v4756, %v4759
        %v4761 = vrot.slane %v4760, 4
        %v4762 = vadd.f32 %v4760, %v4761
        %v4763 = vrot.slane %v4762, 2
        %v4764 = vadd.f32 %v4762, %v4763
        %v4765 = vrot.slane %v4764, 1
        %v4766 = vadd.f32 %v4764, %v4765
        %v4767 = vmul.f32 %v4766, 0.00390625
        %v4768 = vsub.f32 %v4446, %v4767
        %v4769 = vsub.f32 %v4447, %v4767
        %v4770 = vmul.f32 %v4768, %v4768
        %v4771 = vmul.f32 %v4769, %v4769
        %v4772 = vsel %vm568, %v4770, 0.0
        %4773 = vadd.xlane.f32.xlu0 %v4772
        %v4774 = vpop.xlane.xlu0 %4773
        %v4775 = vsel %vm568, %v4771, 0.0
        %4776 = vadd.xlane.f32.xlu0 %v4775
        %v4777 = vpop.xlane.xlu0 %4776
        %v4778 = vadd.f32 %v4774, %v4777
        %v4779 = vrot.slane %v4778, 4
        %v4780 = vadd.f32 %v4778, %v4779
        %v4781 = vrot.slane %v4780, 2
        %v4782 = vadd.f32 %v4780, %v4781
        %v4783 = vrot.slane %v4782, 1
        %v4784 = vadd.f32 %v4782, %v4783
        %v4785 = vmul.f32 %v4784, 0.00390625
        %s4786 = sld [smem:[#allocation3 + $0x180]]
        %v4787 = vadd.f32 %v4785, 1e-05
        %v4788 = vrsqrt.pop %v4787
        %v4789 = vstv %s4786
        %v4790 = vmul.f32 %v4789, %v4788
        %v4791 = vmul.f32 %v4768, %v4790
        %v4792 = vmul.f32 %v4769, %v4790
        %s4793 = sld [smem:[#allocation3 + $0x184]]
        %v4794 = vstv %s4793
        %v4795 = vadd.f32 %v4791, %v4794
        %v4796 = vadd.f32 %v4792, %v4794
        %v4797 = vtanh.pop %v4795
        %v4798 = vtanh.pop %v4796
        %v4799 = vsel %vm568, %v4548, 0.0
        %4800 = vadd.xlane.f32.xlu0 %v4799
        %v4801 = vpop.xlane.xlu0 %4800
        %v4802 = vsel %vm568, %v4549, 0.0
        %4803 = vadd.xlane.f32.xlu0 %v4802
        %v4804 = vpop.xlane.xlu0 %4803
        %v4805 = vadd.f32 %v4801, %v4804
        %v4806 = vrot.slane %v4805, 4
        %v4807 = vadd.f32 %v4805, %v4806
        %v4808 = vrot.slane %v4807, 2
        %v4809 = vadd.f32 %v4807, %v4808
        %v4810 = vrot.slane %v4809, 1
        %v4811 = vadd.f32 %v4809, %v4810
        %v4812 = vmul.f32 %v4811, 0.00390625
        %v4813 = vsub.f32 %v4548, %v4812
        %v4814 = vsub.f32 %v4549, %v4812
        %v4815 = vmul.f32 %v4813, %v4813
        %v4816 = vmul.f32 %v4814, %v4814
        %v4817 = vsel %vm568, %v4815, 0.0
        %4818 = vadd.xlane.f32.xlu0 %v4817
        %v4819 = vpop.xlane.xlu0 %4818
        %v4820 = vsel %vm568, %v4816, 0.0
        %4821 = vadd.xlane.f32.xlu0 %v4820
        %v4822 = vpop.xlane.xlu0 %4821
        %v4823 = vadd.f32 %v4819, %v4822
        %v4824 = vrot.slane %v4823, 4
        %v4825 = vadd.f32 %v4823, %v4824
        %v4826 = vrot.slane %v4825, 2
        %v4827 = vadd.f32 %v4825, %v4826
        %v4828 = vrot.slane %v4827, 1
        %v4829 = vadd.f32 %v4827, %v4828
        %v4830 = vmul.f32 %v4829, 0.00390625
        %s4831 = sld [smem:[#allocation3 + $0x181]]
        %v4832 = vadd.f32 %v4830, 1e-05
        %v4833 = vrsqrt.pop %v4832
        %v4834 = vstv %s4831
        %v4835 = vmul.f32 %v4834, %v4833
        %v4836 = vmul.f32 %v4813, %v4835
        %v4837 = vmul.f32 %v4814, %v4835
        %s4838 = sld [smem:[#allocation3 + $0x185]]
        %v4839 = vstv %s4838
        %v4840 = vadd.f32 %v4836, %v4839
        %v4841 = vadd.f32 %v4837, %v4839
        %v4842 = vtanh.pop %v4840
        %v4843 = vtanh.pop %v4841
        %v4844 = vsel %vm568, %v4650, 0.0
        %4845 = vadd.xlane.f32.xlu0 %v4844
        %v4846 = vpop.xlane.xlu0 %4845
        %v4847 = vsel %vm568, %v4651, 0.0
        %4848 = vadd.xlane.f32.xlu0 %v4847
        %v4849 = vpop.xlane.xlu0 %4848
        %v4850 = vadd.f32 %v4846, %v4849
        %v4851 = vrot.slane %v4850, 4
        %v4852 = vadd.f32 %v4850, %v4851
        %v4853 = vrot.slane %v4852, 2
        %v4854 = vadd.f32 %v4852, %v4853
        %v4855 = vrot.slane %v4854, 1
        %v4856 = vadd.f32 %v4854, %v4855
        %v4857 = vmul.f32 %v4856, 0.00390625
        %v4858 = vsub.f32 %v4650, %v4857
        %v4859 = vsub.f32 %v4651, %v4857
        %v4860 = vmul.f32 %v4858, %v4858
        %v4861 = vmul.f32 %v4859, %v4859
        %v4862 = vsel %vm568, %v4860, 0.0
        %4863 = vadd.xlane.f32.xlu0 %v4862
        %v4864 = vpop.xlane.xlu0 %4863
        %v4865 = vsel %vm568, %v4861, 0.0
        %4866 = vadd.xlane.f32.xlu0 %v4865
        %v4867 = vpop.xlane.xlu0 %4866
        %v4868 = vadd.f32 %v4864, %v4867
        %v4869 = vrot.slane %v4868, 4
        %v4870 = vadd.f32 %v4868, %v4869
        %v4871 = vrot.slane %v4870, 2
        %v4872 = vadd.f32 %v4870, %v4871
        %v4873 = vrot.slane %v4872, 1
        %v4874 = vadd.f32 %v4872, %v4873
        %v4875 = vmul.f32 %v4874, 0.00390625
        %s4876 = sld [smem:[#allocation3 + $0x182]]
        %v4877 = vadd.f32 %v4875, 1e-05
        %v4878 = vrsqrt.pop %v4877
        %v4879 = vstv %s4876
        %v4880 = vmul.f32 %v4879, %v4878
        %v4881 = vmul.f32 %v4858, %v4880
        %v4882 = vmul.f32 %v4859, %v4880
        %s4883 = sld [smem:[#allocation3 + $0x186]]
        %v4884 = vstv %s4883
        %v4885 = vadd.f32 %v4881, %v4884
        %v4886 = vadd.f32 %v4882, %v4884
        %v4887 = vtanh.pop %v4885
        %v4888 = vtanh.pop %v4886
        %v4889 = vsel %vm568, %v4752, 0.0
        %4890 = vadd.xlane.f32.xlu0 %v4889
        %v4891 = vpop.xlane.xlu0 %4890
        %v4892 = vsel %vm568, %v4753, 0.0
        %4893 = vadd.xlane.f32.xlu0 %v4892
        %v4894 = vpop.xlane.xlu0 %4893
        %v4895 = vadd.f32 %v4891, %v4894
        %v4896 = vrot.slane %v4895, 4
        %v4897 = vadd.f32 %v4895, %v4896
        %v4898 = vrot.slane %v4897, 2
        %v4899 = vadd.f32 %v4897, %v4898
        %v4900 = vrot.slane %v4899, 1
        %v4901 = vadd.f32 %v4899, %v4900
        %v4902 = vmul.f32 %v4901, 0.00390625
        %v4903 = vsub.f32 %v4752, %v4902
        %v4904 = vsub.f32 %v4753, %v4902
        %v4905 = vmul.f32 %v4903, %v4903
        %v4906 = vmul.f32 %v4904, %v4904
        %v4907 = vsel %vm568, %v4905, 0.0
        %4908 = vadd.xlane.f32.xlu0 %v4907
        %v4909 = vpop.xlane.xlu0 %4908
        %v4910 = vsel %vm568, %v4906, 0.0
        %4911 = vadd.xlane.f32.xlu0 %v4910
        %v4912 = vpop.xlane.xlu0 %4911
        %v4913 = vadd.f32 %v4909, %v4912
        %v4914 = vrot.slane %v4913, 4
        %v4915 = vadd.f32 %v4913, %v4914
        %v4916 = vrot.slane %v4915, 2
        %v4917 = vadd.f32 %v4915, %v4916
        %v4918 = vrot.slane %v4917, 1
        %v4919 = vadd.f32 %v4917, %v4918
        %v4920 = vmul.f32 %v4919, 0.00390625
        %s4921 = sld [smem:[#allocation3 + $0x183]]
        %v4922 = vadd.f32 %v4920, 1e-05
        %v4923 = vrsqrt.pop %v4922
        %v4924 = vstv %s4921
        %v4925 = vmul.f32 %v4924, %v4923
        %v4926 = vmul.f32 %v4903, %v4925
        %v4927 = vmul.f32 %v4904, %v4925
        %s4928 = sld [smem:[#allocation3 + $0x187]]
        %v4929 = vstv %s4928
        %v4930 = vadd.f32 %v4926, %v4929
        %v4931 = vadd.f32 %v4927, %v4929
        %v4932 = vtanh.pop %v4930
        %v4933 = vtanh.pop %v4931
        %v4934 = vadd.f32 %v2928, %v4797
        %v4935 = vadd.f32 %v2929, %v4798
        %v4936 = vadd.f32 %v2930, %v4842
        %v4937 = vadd.f32 %v2931, %v4843
        %v4938 = vadd.f32 %v2932, %v4887
        %v4939 = vadd.f32 %v2933, %v4888
        %v4940 = vadd.f32 %v2934, %v4932
        %v4941 = vadd.f32 %v2935, %v4933
        %s4942 = sld [smem:[#allocation3 + $0x188]]
        %v4943 = vstv %s4942
        %v4944 = vmul.f32 %v4943, %v612
        %v4945 = vmul.f32 %v4943, %v613
        %v4946 = vadd.f32 %v4944, 0.0
        %v4947 = vadd.f32 %v4945, 0.0
        %s4948 = sld [smem:[#allocation3 + $0x189]]
        %v4949 = vstv %s4948
        %v4950 = vmul.f32 %v4949, %v612
        %v4951 = vmul.f32 %v4949, %v613
        %v4952 = vadd.f32 %v4950, 0.0
        %v4953 = vadd.f32 %v4951, 0.0
        %s4954 = sld [smem:[#allocation3 + $0x18a]]
        %v4955 = vstv %s4954
        %v4956 = vmul.f32 %v4955, %v612
        %v4957 = vmul.f32 %v4955, %v613
        %v4958 = vadd.f32 %v4956, 0.0
        %v4959 = vadd.f32 %v4957, 0.0
        %s4960 = sld [smem:[#allocation3 + $0x18b]]
        %v4961 = vstv %s4960
        %v4962 = vmul.f32 %v4961, %v612
        %v4963 = vmul.f32 %v4961, %v613
        %v4964 = vadd.f32 %v4962, 0.0
        %v4965 = vadd.f32 %v4963, 0.0
        %s4966 = sld [smem:[#allocation3 + $0x18c]]
        %v4967 = vstv %s4966
        %v4968 = vmul.f32 %v4967, %v612
        %v4969 = vmul.f32 %v4967, %v613
        %v4970 = vadd.f32 %v4968, 0.0
        %v4971 = vadd.f32 %v4969, 0.0
        %s4972 = sld [smem:[#allocation3 + $0x18d]]
        %v4973 = vstv %s4972
        %v4974 = vmul.f32 %v4973, %v612
        %v4975 = vmul.f32 %v4973, %v613
        %v4976 = vadd.f32 %v4974, 0.0
        %v4977 = vadd.f32 %v4975, 0.0
        %s4978 = sld [smem:[#allocation3 + $0x18e]]
        %v4979 = vstv %s4978
        %v4980 = vmul.f32 %v4979, %v612
        %v4981 = vmul.f32 %v4979, %v613
        %v4982 = vadd.f32 %v4980, 0.0
        %v4983 = vadd.f32 %v4981, 0.0
        %s4984 = sld [smem:[#allocation3 + $0x18f]]
        %v4985 = vstv %s4984
        %v4986 = vmul.f32 %v4985, %v612
        %v4987 = vmul.f32 %v4985, %v613
        %v4988 = vadd.f32 %v4986, 0.0
        %v4989 = vadd.f32 %v4987, 0.0
        %s4990 = sld [smem:[#allocation3 + $0x190]]
        %v4991 = vstv %s4990
        %v4992 = vmul.f32 %v4991, %v657
        %v4993 = vmul.f32 %v4991, %v658
        %v4994 = vadd.f32 %v4946, %v4992
        %v4995 = vadd.f32 %v4947, %v4993
        %s4996 = sld [smem:[#allocation3 + $0x191]]
        %v4997 = vstv %s4996
        %v4998 = vmul.f32 %v4997, %v657
        %v4999 = vmul.f32 %v4997, %v658
        %v5000 = vadd.f32 %v4952, %v4998
        %v5001 = vadd.f32 %v4953, %v4999
        %s5002 = sld [smem:[#allocation3 + $0x192]]
        %v5003 = vstv %s5002
        %v5004 = vmul.f32 %v5003, %v657
        %v5005 = vmul.f32 %v5003, %v658
        %v5006 = vadd.f32 %v4958, %v5004
        %v5007 = vadd.f32 %v4959, %v5005
        %s5008 = sld [smem:[#allocation3 + $0x193]]
        %v5009 = vstv %s5008
        %v5010 = vmul.f32 %v5009, %v657
        %v5011 = vmul.f32 %v5009, %v658
        %v5012 = vadd.f32 %v4964, %v5010
        %v5013 = vadd.f32 %v4965, %v5011
        %s5014 = sld [smem:[#allocation3 + $0x194]]
        %v5015 = vstv %s5014
        %v5016 = vmul.f32 %v5015, %v657
        %v5017 = vmul.f32 %v5015, %v658
        %v5018 = vadd.f32 %v4970, %v5016
        %v5019 = vadd.f32 %v4971, %v5017
        %s5020 = sld [smem:[#allocation3 + $0x195]]
        %v5021 = vstv %s5020
        %v5022 = vmul.f32 %v5021, %v657
        %v5023 = vmul.f32 %v5021, %v658
        %v5024 = vadd.f32 %v4976, %v5022
        %v5025 = vadd.f32 %v4977, %v5023
        %s5026 = sld [smem:[#allocation3 + $0x196]]
        %v5027 = vstv %s5026
        %v5028 = vmul.f32 %v5027, %v657
        %v5029 = vmul.f32 %v5027, %v658
        %v5030 = vadd.f32 %v4982, %v5028
        %v5031 = vadd.f32 %v4983, %v5029
        %s5032 = sld [smem:[#allocation3 + $0x197]]
        %v5033 = vstv %s5032
        %v5034 = vmul.f32 %v5033, %v657
        %v5035 = vmul.f32 %v5033, %v658
        %v5036 = vadd.f32 %v4988, %v5034
        %v5037 = vadd.f32 %v4989, %v5035
        %s5038 = sld [smem:[#allocation3 + $0x198]]
        %v5039 = vstv %s5038
        %v5040 = vmul.f32 %v5039, %v702
        %v5041 = vmul.f32 %v5039, %v703
        %v5042 = vadd.f32 %v4994, %v5040
        %v5043 = vadd.f32 %v4995, %v5041
        %s5044 = sld [smem:[#allocation3 + $0x199]]
        %v5045 = vstv %s5044
        %v5046 = vmul.f32 %v5045, %v702
        %v5047 = vmul.f32 %v5045, %v703
        %v5048 = vadd.f32 %v5000, %v5046
        %v5049 = vadd.f32 %v5001, %v5047
        %s5050 = sld [smem:[#allocation3 + $0x19a]]
        %v5051 = vstv %s5050
        %v5052 = vmul.f32 %v5051, %v702
        %v5053 = vmul.f32 %v5051, %v703
        %v5054 = vadd.f32 %v5006, %v5052
        %v5055 = vadd.f32 %v5007, %v5053
        %s5056 = sld [smem:[#allocation3 + $0x19b]]
        %v5057 = vstv %s5056
        %v5058 = vmul.f32 %v5057, %v702
        %v5059 = vmul.f32 %v5057, %v703
        %v5060 = vadd.f32 %v5012, %v5058
        %v5061 = vadd.f32 %v5013, %v5059
        %s5062 = sld [smem:[#allocation3 + $0x19c]]
        %v5063 = vstv %s5062
        %v5064 = vmul.f32 %v5063, %v702
        %v5065 = vmul.f32 %v5063, %v703
        %v5066 = vadd.f32 %v5018, %v5064
        %v5067 = vadd.f32 %v5019, %v5065
        %s5068 = sld [smem:[#allocation3 + $0x19d]]
        %v5069 = vstv %s5068
        %v5070 = vmul.f32 %v5069, %v702
        %v5071 = vmul.f32 %v5069, %v703
        %v5072 = vadd.f32 %v5024, %v5070
        %v5073 = vadd.f32 %v5025, %v5071
        %s5074 = sld [smem:[#allocation3 + $0x19e]]
        %v5075 = vstv %s5074
        %v5076 = vmul.f32 %v5075, %v702
        %v5077 = vmul.f32 %v5075, %v703
        %v5078 = vadd.f32 %v5030, %v5076
        %v5079 = vadd.f32 %v5031, %v5077
        %s5080 = sld [smem:[#allocation3 + $0x19f]]
        %v5081 = vstv %s5080
        %v5082 = vmul.f32 %v5081, %v702
        %v5083 = vmul.f32 %v5081, %v703
        %v5084 = vadd.f32 %v5036, %v5082
        %v5085 = vadd.f32 %v5037, %v5083
        %s5086 = sld [smem:[#allocation3 + $0x1a0]]
        %v5087 = vstv %s5086
        %v5088 = vmul.f32 %v5087, %v747
        %v5089 = vmul.f32 %v5087, %v748
        %v5090 = vadd.f32 %v5042, %v5088
        %v5091 = vadd.f32 %v5043, %v5089
        %s5092 = sld [smem:[#allocation3 + $0x1a1]]
        %v5093 = vstv %s5092
        %v5094 = vmul.f32 %v5093, %v747
        %v5095 = vmul.f32 %v5093, %v748
        %v5096 = vadd.f32 %v5048, %v5094
        %v5097 = vadd.f32 %v5049, %v5095
        %s5098 = sld [smem:[#allocation3 + $0x1a2]]
        %v5099 = vstv %s5098
        %v5100 = vmul.f32 %v5099, %v747
        %v5101 = vmul.f32 %v5099, %v748
        %v5102 = vadd.f32 %v5054, %v5100
        %v5103 = vadd.f32 %v5055, %v5101
        %s5104 = sld [smem:[#allocation3 + $0x1a3]]
        %v5105 = vstv %s5104
        %v5106 = vmul.f32 %v5105, %v747
        %v5107 = vmul.f32 %v5105, %v748
        %v5108 = vadd.f32 %v5060, %v5106
        %v5109 = vadd.f32 %v5061, %v5107
        %s5110 = sld [smem:[#allocation3 + $0x1a4]]
        %v5111 = vstv %s5110
        %v5112 = vmul.f32 %v5111, %v747
        %v5113 = vmul.f32 %v5111, %v748
        %v5114 = vadd.f32 %v5066, %v5112
        %v5115 = vadd.f32 %v5067, %v5113
        %s5116 = sld [smem:[#allocation3 + $0x1a5]]
        %v5117 = vstv %s5116
        %v5118 = vmul.f32 %v5117, %v747
        %v5119 = vmul.f32 %v5117, %v748
        %v5120 = vadd.f32 %v5072, %v5118
        %v5121 = vadd.f32 %v5073, %v5119
        %s5122 = sld [smem:[#allocation3 + $0x1a6]]
        %v5123 = vstv %s5122
        %v5124 = vmul.f32 %v5123, %v747
        %v5125 = vmul.f32 %v5123, %v748
        %v5126 = vadd.f32 %v5078, %v5124
        %v5127 = vadd.f32 %v5079, %v5125
        %s5128 = sld [smem:[#allocation3 + $0x1a7]]
        %v5129 = vstv %s5128
        %v5130 = vmul.f32 %v5129, %v747
        %v5131 = vmul.f32 %v5129, %v748
        %v5132 = vadd.f32 %v5084, %v5130
        %v5133 = vadd.f32 %v5085, %v5131
        %s5134 = sld [smem:[#allocation3 + $0x1a8]]
        %v5135 = vstv %s5134
        %v5136 = vmul.f32 %v5135, %v4934
        %v5137 = vmul.f32 %v5135, %v4935
        %v5138 = vadd.f32 %v5090, %v5136
        %v5139 = vadd.f32 %v5091, %v5137
        %s5140 = sld [smem:[#allocation3 + $0x1a9]]
        %v5141 = vstv %s5140
        %v5142 = vmul.f32 %v5141, %v4934
        %v5143 = vmul.f32 %v5141, %v4935
        %v5144 = vadd.f32 %v5096, %v5142
        %v5145 = vadd.f32 %v5097, %v5143
        %s5146 = sld [smem:[#allocation3 + $0x1aa]]
        %v5147 = vstv %s5146
        %v5148 = vmul.f32 %v5147, %v4934
        %v5149 = vmul.f32 %v5147, %v4935
        %v5150 = vadd.f32 %v5102, %v5148
        %v5151 = vadd.f32 %v5103, %v5149
        %s5152 = sld [smem:[#allocation3 + $0x1ab]]
        %v5153 = vstv %s5152
        %v5154 = vmul.f32 %v5153, %v4934
        %v5155 = vmul.f32 %v5153, %v4935
        %v5156 = vadd.f32 %v5108, %v5154
        %v5157 = vadd.f32 %v5109, %v5155
        %s5158 = sld [smem:[#allocation3 + $0x1ac]]
        %v5159 = vstv %s5158
        %v5160 = vmul.f32 %v5159, %v4934
        %v5161 = vmul.f32 %v5159, %v4935
        %v5162 = vadd.f32 %v5114, %v5160
        %v5163 = vadd.f32 %v5115, %v5161
        %s5164 = sld [smem:[#allocation3 + $0x1ad]]
        %v5165 = vstv %s5164
        %v5166 = vmul.f32 %v5165, %v4934
        %v5167 = vmul.f32 %v5165, %v4935
        %v5168 = vadd.f32 %v5120, %v5166
        %v5169 = vadd.f32 %v5121, %v5167
        %s5170 = sld [smem:[#allocation3 + $0x1ae]]
        %v5171 = vstv %s5170
        %v5172 = vmul.f32 %v5171, %v4934
        %v5173 = vmul.f32 %v5171, %v4935
        %v5174 = vadd.f32 %v5126, %v5172
        %v5175 = vadd.f32 %v5127, %v5173
        %s5176 = sld [smem:[#allocation3 + $0x1af]]
        %v5177 = vstv %s5176
        %v5178 = vmul.f32 %v5177, %v4934
        %v5179 = vmul.f32 %v5177, %v4935
        %v5180 = vadd.f32 %v5132, %v5178
        %v5181 = vadd.f32 %v5133, %v5179
        %s5182 = sld [smem:[#allocation3 + $0x1b0]]
        %v5183 = vstv %s5182
        %v5184 = vmul.f32 %v5183, %v4936
        %v5185 = vmul.f32 %v5183, %v4937
        %v5186 = vadd.f32 %v5138, %v5184
        %v5187 = vadd.f32 %v5139, %v5185
        %s5188 = sld [smem:[#allocation3 + $0x1b1]]
        %v5189 = vstv %s5188
        %v5190 = vmul.f32 %v5189, %v4936
        %v5191 = vmul.f32 %v5189, %v4937
        %v5192 = vadd.f32 %v5144, %v5190
        %v5193 = vadd.f32 %v5145, %v5191
        %s5194 = sld [smem:[#allocation3 + $0x1b2]]
        %v5195 = vstv %s5194
        %v5196 = vmul.f32 %v5195, %v4936
        %v5197 = vmul.f32 %v5195, %v4937
        %v5198 = vadd.f32 %v5150, %v5196
        %v5199 = vadd.f32 %v5151, %v5197
        %s5200 = sld [smem:[#allocation3 + $0x1b3]]
        %v5201 = vstv %s5200
        %v5202 = vmul.f32 %v5201, %v4936
        %v5203 = vmul.f32 %v5201, %v4937
        %v5204 = vadd.f32 %v5156, %v5202
        %v5205 = vadd.f32 %v5157, %v5203
        %s5206 = sld [smem:[#allocation3 + $0x1b4]]
        %v5207 = vstv %s5206
        %v5208 = vmul.f32 %v5207, %v4936
        %v5209 = vmul.f32 %v5207, %v4937
        %v5210 = vadd.f32 %v5162, %v5208
        %v5211 = vadd.f32 %v5163, %v5209
        %s5212 = sld [smem:[#allocation3 + $0x1b5]]
        %v5213 = vstv %s5212
        %v5214 = vmul.f32 %v5213, %v4936
        %v5215 = vmul.f32 %v5213, %v4937
        %v5216 = vadd.f32 %v5168, %v5214
        %v5217 = vadd.f32 %v5169, %v5215
        %s5218 = sld [smem:[#allocation3 + $0x1b6]]
        %v5219 = vstv %s5218
        %v5220 = vmul.f32 %v5219, %v4936
        %v5221 = vmul.f32 %v5219, %v4937
        %v5222 = vadd.f32 %v5174, %v5220
        %v5223 = vadd.f32 %v5175, %v5221
        %s5224 = sld [smem:[#allocation3 + $0x1b7]]
        %v5225 = vstv %s5224
        %v5226 = vmul.f32 %v5225, %v4936
        %v5227 = vmul.f32 %v5225, %v4937
        %v5228 = vadd.f32 %v5180, %v5226
        %v5229 = vadd.f32 %v5181, %v5227
        %s5230 = sld [smem:[#allocation3 + $0x1b8]]
        %v5231 = vstv %s5230
        %v5232 = vmul.f32 %v5231, %v4938
        %v5233 = vmul.f32 %v5231, %v4939
        %v5234 = vadd.f32 %v5186, %v5232
        %v5235 = vadd.f32 %v5187, %v5233
        %s5236 = sld [smem:[#allocation3 + $0x1b9]]
        %v5237 = vstv %s5236
        %v5238 = vmul.f32 %v5237, %v4938
        %v5239 = vmul.f32 %v5237, %v4939
        %v5240 = vadd.f32 %v5192, %v5238
        %v5241 = vadd.f32 %v5193, %v5239
        %s5242 = sld [smem:[#allocation3 + $0x1ba]]
        %v5243 = vstv %s5242
        %v5244 = vmul.f32 %v5243, %v4938
        %v5245 = vmul.f32 %v5243, %v4939
        %v5246 = vadd.f32 %v5198, %v5244
        %v5247 = vadd.f32 %v5199, %v5245
        %s5248 = sld [smem:[#allocation3 + $0x1bb]]
        %v5249 = vstv %s5248
        %v5250 = vmul.f32 %v5249, %v4938
        %v5251 = vmul.f32 %v5249, %v4939
        %v5252 = vadd.f32 %v5204, %v5250
        %v5253 = vadd.f32 %v5205, %v5251
        %s5254 = sld [smem:[#allocation3 + $0x1bc]]
        %v5255 = vstv %s5254
        %v5256 = vmul.f32 %v5255, %v4938
        %v5257 = vmul.f32 %v5255, %v4939
        %v5258 = vadd.f32 %v5210, %v5256
        %v5259 = vadd.f32 %v5211, %v5257
        %s5260 = sld [smem:[#allocation3 + $0x1bd]]
        %v5261 = vstv %s5260
        %v5262 = vmul.f32 %v5261, %v4938
        %v5263 = vmul.f32 %v5261, %v4939
        %v5264 = vadd.f32 %v5216, %v5262
        %v5265 = vadd.f32 %v5217, %v5263
        %s5266 = sld [smem:[#allocation3 + $0x1be]]
        %v5267 = vstv %s5266
        %v5268 = vmul.f32 %v5267, %v4938
        %v5269 = vmul.f32 %v5267, %v4939
        %v5270 = vadd.f32 %v5222, %v5268
        %v5271 = vadd.f32 %v5223, %v5269
        %s5272 = sld [smem:[#allocation3 + $0x1bf]]
        %v5273 = vstv %s5272
        %v5274 = vmul.f32 %v5273, %v4938
        %v5275 = vmul.f32 %v5273, %v4939
        %v5276 = vadd.f32 %v5228, %v5274
        %v5277 = vadd.f32 %v5229, %v5275
        %s5278 = sld [smem:[#allocation3 + $0x1c0]]
        %v5279 = vstv %s5278
        %v5280 = vmul.f32 %v5279, %v4940
        %v5281 = vmul.f32 %v5279, %v4941
        %v5282 = vadd.f32 %v5234, %v5280
        %v5283 = vadd.f32 %v5235, %v5281
        %s5284 = sld [smem:[#allocation3 + $0x1c1]]
        %v5285 = vstv %s5284
        %v5286 = vmul.f32 %v5285, %v4940
        %v5287 = vmul.f32 %v5285, %v4941
        %v5288 = vadd.f32 %v5240, %v5286
        %v5289 = vadd.f32 %v5241, %v5287
        %s5290 = sld [smem:[#allocation3 + $0x1c2]]
        %v5291 = vstv %s5290
        %v5292 = vmul.f32 %v5291, %v4940
        %v5293 = vmul.f32 %v5291, %v4941
        %v5294 = vadd.f32 %v5246, %v5292
        %v5295 = vadd.f32 %v5247, %v5293
        %s5296 = sld [smem:[#allocation3 + $0x1c3]]
        %v5297 = vstv %s5296
        %v5298 = vmul.f32 %v5297, %v4940
        %v5299 = vmul.f32 %v5297, %v4941
        %v5300 = vadd.f32 %v5252, %v5298
        %v5301 = vadd.f32 %v5253, %v5299
        %s5302 = sld [smem:[#allocation3 + $0x1c4]]
        %v5303 = vstv %s5302
        %v5304 = vmul.f32 %v5303, %v4940
        %v5305 = vmul.f32 %v5303, %v4941
        %v5306 = vadd.f32 %v5258, %v5304
        %v5307 = vadd.f32 %v5259, %v5305
        %s5308 = sld [smem:[#allocation3 + $0x1c5]]
        %v5309 = vstv %s5308
        %v5310 = vmul.f32 %v5309, %v4940
        %v5311 = vmul.f32 %v5309, %v4941
        %v5312 = vadd.f32 %v5264, %v5310
        %v5313 = vadd.f32 %v5265, %v5311
        %s5314 = sld [smem:[#allocation3 + $0x1c6]]
        %v5315 = vstv %s5314
        %v5316 = vmul.f32 %v5315, %v4940
        %v5317 = vmul.f32 %v5315, %v4941
        %v5318 = vadd.f32 %v5270, %v5316
        %v5319 = vadd.f32 %v5271, %v5317
        %s5320 = sld [smem:[#allocation3 + $0x1c7]]
        %v5321 = vstv %s5320
        %v5322 = vmul.f32 %v5321, %v4940
        %v5323 = vmul.f32 %v5321, %v4941
        %v5324 = vadd.f32 %v5276, %v5322
        %v5325 = vadd.f32 %v5277, %v5323
        %s5326 = sld [smem:[#allocation3 + $0x1c8]]
        %v5327 = vstv %s5326
        %v5328 = vmul.f32 %v5327, %v2791
        %v5329 = vmul.f32 %v5327, %v2792
        %v5330 = vadd.f32 %v5282, %v5328
        %v5331 = vadd.f32 %v5283, %v5329
        %s5332 = sld [smem:[#allocation3 + $0x1c9]]
        %v5333 = vstv %s5332
        %v5334 = vmul.f32 %v5333, %v2791
        %v5335 = vmul.f32 %v5333, %v2792
        %v5336 = vadd.f32 %v5288, %v5334
        %v5337 = vadd.f32 %v5289, %v5335
        %s5338 = sld [smem:[#allocation3 + $0x1ca]]
        %v5339 = vstv %s5338
        %v5340 = vmul.f32 %v5339, %v2791
        %v5341 = vmul.f32 %v5339, %v2792
        %v5342 = vadd.f32 %v5294, %v5340
        %v5343 = vadd.f32 %v5295, %v5341
        %s5344 = sld [smem:[#allocation3 + $0x1cb]]
        %v5345 = vstv %s5344
        %v5346 = vmul.f32 %v5345, %v2791
        %v5347 = vmul.f32 %v5345, %v2792
        %v5348 = vadd.f32 %v5300, %v5346
        %v5349 = vadd.f32 %v5301, %v5347
        %s5350 = sld [smem:[#allocation3 + $0x1cc]]
        %v5351 = vstv %s5350
        %v5352 = vmul.f32 %v5351, %v2791
        %v5353 = vmul.f32 %v5351, %v2792
        %v5354 = vadd.f32 %v5306, %v5352
        %v5355 = vadd.f32 %v5307, %v5353
        %s5356 = sld [smem:[#allocation3 + $0x1cd]]
        %v5357 = vstv %s5356
        %v5358 = vmul.f32 %v5357, %v2791
        %v5359 = vmul.f32 %v5357, %v2792
        %v5360 = vadd.f32 %v5312, %v5358
        %v5361 = vadd.f32 %v5313, %v5359
        %s5362 = sld [smem:[#allocation3 + $0x1ce]]
        %v5363 = vstv %s5362
        %v5364 = vmul.f32 %v5363, %v2791
        %v5365 = vmul.f32 %v5363, %v2792
        %v5366 = vadd.f32 %v5318, %v5364
        %v5367 = vadd.f32 %v5319, %v5365
        %s5368 = sld [smem:[#allocation3 + $0x1cf]]
        %v5369 = vstv %s5368
        %v5370 = vmul.f32 %v5369, %v2791
        %v5371 = vmul.f32 %v5369, %v2792
        %v5372 = vadd.f32 %v5324, %v5370
        %v5373 = vadd.f32 %v5325, %v5371
        %s5374 = sld [smem:[#allocation3 + $0x1d0]]
        %v5375 = vstv %s5374
        %v5376 = vmul.f32 %v5375, %v2836
        %v5377 = vmul.f32 %v5375, %v2837
        %v5378 = vadd.f32 %v5330, %v5376
        %v5379 = vadd.f32 %v5331, %v5377
        %s5380 = sld [smem:[#allocation3 + $0x1d1]]
        %v5381 = vstv %s5380
        %v5382 = vmul.f32 %v5381, %v2836
        %v5383 = vmul.f32 %v5381, %v2837
        %v5384 = vadd.f32 %v5336, %v5382
        %v5385 = vadd.f32 %v5337, %v5383
        %s5386 = sld [smem:[#allocation3 + $0x1d2]]
        %v5387 = vstv %s5386
        %v5388 = vmul.f32 %v5387, %v2836
        %v5389 = vmul.f32 %v5387, %v2837
        %v5390 = vadd.f32 %v5342, %v5388
        %v5391 = vadd.f32 %v5343, %v5389
        %s5392 = sld [smem:[#allocation3 + $0x1d3]]
        %v5393 = vstv %s5392
        %v5394 = vmul.f32 %v5393, %v2836
        %v5395 = vmul.f32 %v5393, %v2837
        %v5396 = vadd.f32 %v5348, %v5394
        %v5397 = vadd.f32 %v5349, %v5395
        %s5398 = sld [smem:[#allocation3 + $0x1d4]]
        %v5399 = vstv %s5398
        %v5400 = vmul.f32 %v5399, %v2836
        %v5401 = vmul.f32 %v5399, %v2837
        %v5402 = vadd.f32 %v5354, %v5400
        %v5403 = vadd.f32 %v5355, %v5401
        %s5404 = sld [smem:[#allocation3 + $0x1d5]]
        %v5405 = vstv %s5404
        %v5406 = vmul.f32 %v5405, %v2836
        %v5407 = vmul.f32 %v5405, %v2837
        %v5408 = vadd.f32 %v5360, %v5406
        %v5409 = vadd.f32 %v5361, %v5407
        %s5410 = sld [smem:[#allocation3 + $0x1d6]]
        %v5411 = vstv %s5410
        %v5412 = vmul.f32 %v5411, %v2836
        %v5413 = vmul.f32 %v5411, %v2837
        %v5414 = vadd.f32 %v5366, %v5412
        %v5415 = vadd.f32 %v5367, %v5413
        %s5416 = sld [smem:[#allocation3 + $0x1d7]]
        %v5417 = vstv %s5416
        %v5418 = vmul.f32 %v5417, %v2836
        %v5419 = vmul.f32 %v5417, %v2837
        %v5420 = vadd.f32 %v5372, %v5418
        %v5421 = vadd.f32 %v5373, %v5419
        %s5422 = sld [smem:[#allocation3 + $0x1d8]]
        %v5423 = vstv %s5422
        %v5424 = vmul.f32 %v5423, %v2881
        %v5425 = vmul.f32 %v5423, %v2882
        %v5426 = vadd.f32 %v5378, %v5424
        %v5427 = vadd.f32 %v5379, %v5425
        %s5428 = sld [smem:[#allocation3 + $0x1d9]]
        %v5429 = vstv %s5428
        %v5430 = vmul.f32 %v5429, %v2881
        %v5431 = vmul.f32 %v5429, %v2882
        %v5432 = vadd.f32 %v5384, %v5430
        %v5433 = vadd.f32 %v5385, %v5431
        %s5434 = sld [smem:[#allocation3 + $0x1da]]
        %v5435 = vstv %s5434
        %v5436 = vmul.f32 %v5435, %v2881
        %v5437 = vmul.f32 %v5435, %v2882
        %v5438 = vadd.f32 %v5390, %v5436
        %v5439 = vadd.f32 %v5391, %v5437
        %s5440 = sld [smem:[#allocation3 + $0x1db]]
        %v5441 = vstv %s5440
        %v5442 = vmul.f32 %v5441, %v2881
        %v5443 = vmul.f32 %v5441, %v2882
        %v5444 = vadd.f32 %v5396, %v5442
        %v5445 = vadd.f32 %v5397, %v5443
        %s5446 = sld [smem:[#allocation3 + $0x1dc]]
        %v5447 = vstv %s5446
        %v5448 = vmul.f32 %v5447, %v2881
        %v5449 = vmul.f32 %v5447, %v2882
        %v5450 = vadd.f32 %v5402, %v5448
        %v5451 = vadd.f32 %v5403, %v5449
        %s5452 = sld [smem:[#allocation3 + $0x1dd]]
        %v5453 = vstv %s5452
        %v5454 = vmul.f32 %v5453, %v2881
        %v5455 = vmul.f32 %v5453, %v2882
        %v5456 = vadd.f32 %v5408, %v5454
        %v5457 = vadd.f32 %v5409, %v5455
        %s5458 = sld [smem:[#allocation3 + $0x1de]]
        %v5459 = vstv %s5458
        %v5460 = vmul.f32 %v5459, %v2881
        %v5461 = vmul.f32 %v5459, %v2882
        %v5462 = vadd.f32 %v5414, %v5460
        %v5463 = vadd.f32 %v5415, %v5461
        %s5464 = sld [smem:[#allocation3 + $0x1df]]
        %v5465 = vstv %s5464
        %v5466 = vmul.f32 %v5465, %v2881
        %v5467 = vmul.f32 %v5465, %v2882
        %v5468 = vadd.f32 %v5420, %v5466
        %v5469 = vadd.f32 %v5421, %v5467
        %s5470 = sld [smem:[#allocation3 + $0x1e0]]
        %v5471 = vstv %s5470
        %v5472 = vmul.f32 %v5471, %v2926
        %v5473 = vmul.f32 %v5471, %v2927
        %v5474 = vadd.f32 %v5426, %v5472
        %v5475 = vadd.f32 %v5427, %v5473
        %s5476 = sld [smem:[#allocation3 + $0x1e1]]
        %v5477 = vstv %s5476
        %v5478 = vmul.f32 %v5477, %v2926
        %v5479 = vmul.f32 %v5477, %v2927
        %v5480 = vadd.f32 %v5432, %v5478
        %v5481 = vadd.f32 %v5433, %v5479
        %s5482 = sld [smem:[#allocation3 + $0x1e2]]
        %v5483 = vstv %s5482
        %v5484 = vmul.f32 %v5483, %v2926
        %v5485 = vmul.f32 %v5483, %v2927
        %v5486 = vadd.f32 %v5438, %v5484
        %v5487 = vadd.f32 %v5439, %v5485
        %s5488 = sld [smem:[#allocation3 + $0x1e3]]
        %v5489 = vstv %s5488
        %v5490 = vmul.f32 %v5489, %v2926
        %v5491 = vmul.f32 %v5489, %v2927
        %v5492 = vadd.f32 %v5444, %v5490
        %v5493 = vadd.f32 %v5445, %v5491
        %s5494 = sld [smem:[#allocation3 + $0x1e4]]
        %v5495 = vstv %s5494
        %v5496 = vmul.f32 %v5495, %v2926
        %v5497 = vmul.f32 %v5495, %v2927
        %v5498 = vadd.f32 %v5450, %v5496
        %v5499 = vadd.f32 %v5451, %v5497
        %s5500 = sld [smem:[#allocation3 + $0x1e5]]
        %v5501 = vstv %s5500
        %v5502 = vmul.f32 %v5501, %v2926
        %v5503 = vmul.f32 %v5501, %v2927
        %v5504 = vadd.f32 %v5456, %v5502
        %v5505 = vadd.f32 %v5457, %v5503
        %s5506 = sld [smem:[#allocation3 + $0x1e6]]
        %v5507 = vstv %s5506
        %v5508 = vmul.f32 %v5507, %v2926
        %v5509 = vmul.f32 %v5507, %v2927
        %v5510 = vadd.f32 %v5462, %v5508
        %v5511 = vadd.f32 %v5463, %v5509
        %s5512 = sld [smem:[#allocation3 + $0x1e7]]
        %v5513 = vstv %s5512
        %v5514 = vmul.f32 %v5513, %v2926
        %v5515 = vmul.f32 %v5513, %v2927
        %v5516 = vadd.f32 %v5468, %v5514
        %v5517 = vadd.f32 %v5469, %v5515
        %v5518 = vsel %vm568, %v5474, 0.0
        %5519 = vadd.xlane.f32.xlu0 %v5518
        %v5520 = vpop.xlane.xlu0 %5519
        %v5521 = vsel %vm568, %v5475, 0.0
        %5522 = vadd.xlane.f32.xlu0 %v5521
        %v5523 = vpop.xlane.xlu0 %5522
        %v5524 = vadd.f32 %v5520, %v5523
        %v5525 = vrot.slane %v5524, 4
        %v5526 = vadd.f32 %v5524, %v5525
        %v5527 = vrot.slane %v5526, 2
        %v5528 = vadd.f32 %v5526, %v5527
        %v5529 = vrot.slane %v5528, 1
        %v5530 = vadd.f32 %v5528, %v5529
        %v5531 = vmul.f32 %v5530, 0.00390625
        %v5532 = vsub.f32 %v5474, %v5531
        %v5533 = vsub.f32 %v5475, %v5531
        %v5534 = vmul.f32 %v5532, %v5532
        %v5535 = vmul.f32 %v5533, %v5533
        %v5536 = vsel %vm568, %v5534, 0.0
        %5537 = vadd.xlane.f32.xlu0 %v5536
        %v5538 = vpop.xlane.xlu0 %5537
        %v5539 = vsel %vm568, %v5535, 0.0
        %5540 = vadd.xlane.f32.xlu0 %v5539
        %v5541 = vpop.xlane.xlu0 %5540
        %v5542 = vadd.f32 %v5538, %v5541
        %v5543 = vrot.slane %v5542, 4
        %v5544 = vadd.f32 %v5542, %v5543
        %v5545 = vrot.slane %v5544, 2
        %v5546 = vadd.f32 %v5544, %v5545
        %v5547 = vrot.slane %v5546, 1
        %v5548 = vadd.f32 %v5546, %v5547
        %v5549 = vmul.f32 %v5548, 0.00390625
        %s5550 = sld [smem:[#allocation3 + $0x1e8]]
        %v5551 = vadd.f32 %v5549, 1e-05
        %v5552 = vrsqrt.pop %v5551
        %v5553 = vstv %s5550
        %v5554 = vmul.f32 %v5553, %v5552
        %v5555 = vmul.f32 %v5532, %v5554
        %v5556 = vmul.f32 %v5533, %v5554
        %s5557 = sld [smem:[#allocation3 + $0x1f0]]
        %v5558 = vstv %s5557
        %v5559 = vadd.f32 %v5555, %v5558
        %v5560 = vadd.f32 %v5556, %v5558
        %v5561 = vtanh.pop %v5559
        %v5562 = vtanh.pop %v5560
        %v5563 = vsel %vm568, %v5480, 0.0
        %5564 = vadd.xlane.f32.xlu0 %v5563
        %v5565 = vpop.xlane.xlu0 %5564
        %v5566 = vsel %vm568, %v5481, 0.0
        %5567 = vadd.xlane.f32.xlu0 %v5566
        %v5568 = vpop.xlane.xlu0 %5567
        %v5569 = vadd.f32 %v5565, %v5568
        %v5570 = vrot.slane %v5569, 4
        %v5571 = vadd.f32 %v5569, %v5570
        %v5572 = vrot.slane %v5571, 2
        %v5573 = vadd.f32 %v5571, %v5572
        %v5574 = vrot.slane %v5573, 1
        %v5575 = vadd.f32 %v5573, %v5574
        %v5576 = vmul.f32 %v5575, 0.00390625
        %v5577 = vsub.f32 %v5480, %v5576
        %v5578 = vsub.f32 %v5481, %v5576
        %v5579 = vmul.f32 %v5577, %v5577
        %v5580 = vmul.f32 %v5578, %v5578
        %v5581 = vsel %vm568, %v5579, 0.0
        %5582 = vadd.xlane.f32.xlu0 %v5581
        %v5583 = vpop.xlane.xlu0 %5582
        %v5584 = vsel %vm568, %v5580, 0.0
        %5585 = vadd.xlane.f32.xlu0 %v5584
        %v5586 = vpop.xlane.xlu0 %5585
        %v5587 = vadd.f32 %v5583, %v5586
        %v5588 = vrot.slane %v5587, 4
        %v5589 = vadd.f32 %v5587, %v5588
        %v5590 = vrot.slane %v5589, 2
        %v5591 = vadd.f32 %v5589, %v5590
        %v5592 = vrot.slane %v5591, 1
        %v5593 = vadd.f32 %v5591, %v5592
        %v5594 = vmul.f32 %v5593, 0.00390625
        %s5595 = sld [smem:[#allocation3 + $0x1e9]]
        %v5596 = vadd.f32 %v5594, 1e-05
        %v5597 = vrsqrt.pop %v5596
        %v5598 = vstv %s5595
        %v5599 = vmul.f32 %v5598, %v5597
        %v5600 = vmul.f32 %v5577, %v5599
        %v5601 = vmul.f32 %v5578, %v5599
        %s5602 = sld [smem:[#allocation3 + $0x1f1]]
        %v5603 = vstv %s5602
        %v5604 = vadd.f32 %v5600, %v5603
        %v5605 = vadd.f32 %v5601, %v5603
        %v5606 = vtanh.pop %v5604
        %v5607 = vtanh.pop %v5605
        %v5608 = vsel %vm568, %v5486, 0.0
        %5609 = vadd.xlane.f32.xlu0 %v5608
        %v5610 = vpop.xlane.xlu0 %5609
        %v5611 = vsel %vm568, %v5487, 0.0
        %5612 = vadd.xlane.f32.xlu0 %v5611
        %v5613 = vpop.xlane.xlu0 %5612
        %v5614 = vadd.f32 %v5610, %v5613
        %v5615 = vrot.slane %v5614, 4
        %v5616 = vadd.f32 %v5614, %v5615
        %v5617 = vrot.slane %v5616, 2
        %v5618 = vadd.f32 %v5616, %v5617
        %v5619 = vrot.slane %v5618, 1
        %v5620 = vadd.f32 %v5618, %v5619
        %v5621 = vmul.f32 %v5620, 0.00390625
        %v5622 = vsub.f32 %v5486, %v5621
        %v5623 = vsub.f32 %v5487, %v5621
        %v5624 = vmul.f32 %v5622, %v5622
        %v5625 = vmul.f32 %v5623, %v5623
        %v5626 = vsel %vm568, %v5624, 0.0
        %5627 = vadd.xlane.f32.xlu0 %v5626
        %v5628 = vpop.xlane.xlu0 %5627
        %v5629 = vsel %vm568, %v5625, 0.0
        %5630 = vadd.xlane.f32.xlu0 %v5629
        %v5631 = vpop.xlane.xlu0 %5630
        %v5632 = vadd.f32 %v5628, %v5631
        %v5633 = vrot.slane %v5632, 4
        %v5634 = vadd.f32 %v5632, %v5633
        %v5635 = vrot.slane %v5634, 2
        %v5636 = vadd.f32 %v5634, %v5635
        %v5637 = vrot.slane %v5636, 1
        %v5638 = vadd.f32 %v5636, %v5637
        %v5639 = vmul.f32 %v5638, 0.00390625
        %s5640 = sld [smem:[#allocation3 + $0x1ea]]
        %v5641 = vadd.f32 %v5639, 1e-05
        %v5642 = vrsqrt.pop %v5641
        %v5643 = vstv %s5640
        %v5644 = vmul.f32 %v5643, %v5642
        %v5645 = vmul.f32 %v5622, %v5644
        %v5646 = vmul.f32 %v5623, %v5644
        %s5647 = sld [smem:[#allocation3 + $0x1f2]]
        %v5648 = vstv %s5647
        %v5649 = vadd.f32 %v5645, %v5648
        %v5650 = vadd.f32 %v5646, %v5648
        %v5651 = vtanh.pop %v5649
        %v5652 = vtanh.pop %v5650
        %v5653 = vsel %vm568, %v5492, 0.0
        %5654 = vadd.xlane.f32.xlu0 %v5653
        %v5655 = vpop.xlane.xlu0 %5654
        %v5656 = vsel %vm568, %v5493, 0.0
        %5657 = vadd.xlane.f32.xlu0 %v5656
        %v5658 = vpop.xlane.xlu0 %5657
        %v5659 = vadd.f32 %v5655, %v5658
        %v5660 = vrot.slane %v5659, 4
        %v5661 = vadd.f32 %v5659, %v5660
        %v5662 = vrot.slane %v5661, 2
        %v5663 = vadd.f32 %v5661, %v5662
        %v5664 = vrot.slane %v5663, 1
        %v5665 = vadd.f32 %v5663, %v5664
        %v5666 = vmul.f32 %v5665, 0.00390625
        %v5667 = vsub.f32 %v5492, %v5666
        %v5668 = vsub.f32 %v5493, %v5666
        %v5669 = vmul.f32 %v5667, %v5667
        %v5670 = vmul.f32 %v5668, %v5668
        %v5671 = vsel %vm568, %v5669, 0.0
        %5672 = vadd.xlane.f32.xlu0 %v5671
        %v5673 = vpop.xlane.xlu0 %5672
        %v5674 = vsel %vm568, %v5670, 0.0
        %5675 = vadd.xlane.f32.xlu0 %v5674
        %v5676 = vpop.xlane.xlu0 %5675
        %v5677 = vadd.f32 %v5673, %v5676
        %v5678 = vrot.slane %v5677, 4
        %v5679 = vadd.f32 %v5677, %v5678
        %v5680 = vrot.slane %v5679, 2
        %v5681 = vadd.f32 %v5679, %v5680
        %v5682 = vrot.slane %v5681, 1
        %v5683 = vadd.f32 %v5681, %v5682
        %v5684 = vmul.f32 %v5683, 0.00390625
        %s5685 = sld [smem:[#allocation3 + $0x1eb]]
        %v5686 = vadd.f32 %v5684, 1e-05
        %v5687 = vrsqrt.pop %v5686
        %v5688 = vstv %s5685
        %v5689 = vmul.f32 %v5688, %v5687
        %v5690 = vmul.f32 %v5667, %v5689
        %v5691 = vmul.f32 %v5668, %v5689
        %s5692 = sld [smem:[#allocation3 + $0x1f3]]
        %v5693 = vstv %s5692
        %v5694 = vadd.f32 %v5690, %v5693
        %v5695 = vadd.f32 %v5691, %v5693
        %v5696 = vtanh.pop %v5694
        %v5697 = vtanh.pop %v5695
        %v5698 = vsel %vm568, %v5498, 0.0
        %5699 = vadd.xlane.f32.xlu0 %v5698
        %v5700 = vpop.xlane.xlu0 %5699
        %v5701 = vsel %vm568, %v5499, 0.0
        %5702 = vadd.xlane.f32.xlu0 %v5701
        %v5703 = vpop.xlane.xlu0 %5702
        %v5704 = vadd.f32 %v5700, %v5703
        %v5705 = vrot.slane %v5704, 4
        %v5706 = vadd.f32 %v5704, %v5705
        %v5707 = vrot.slane %v5706, 2
        %v5708 = vadd.f32 %v5706, %v5707
        %v5709 = vrot.slane %v5708, 1
        %v5710 = vadd.f32 %v5708, %v5709
        %v5711 = vmul.f32 %v5710, 0.00390625
        %v5712 = vsub.f32 %v5498, %v5711
        %v5713 = vsub.f32 %v5499, %v5711
        %v5714 = vmul.f32 %v5712, %v5712
        %v5715 = vmul.f32 %v5713, %v5713
        %v5716 = vsel %vm568, %v5714, 0.0
        %5717 = vadd.xlane.f32.xlu0 %v5716
        %v5718 = vpop.xlane.xlu0 %5717
        %v5719 = vsel %vm568, %v5715, 0.0
        %5720 = vadd.xlane.f32.xlu0 %v5719
        %v5721 = vpop.xlane.xlu0 %5720
        %v5722 = vadd.f32 %v5718, %v5721
        %v5723 = vrot.slane %v5722, 4
        %v5724 = vadd.f32 %v5722, %v5723
        %v5725 = vrot.slane %v5724, 2
        %v5726 = vadd.f32 %v5724, %v5725
        %v5727 = vrot.slane %v5726, 1
        %v5728 = vadd.f32 %v5726, %v5727
        %v5729 = vmul.f32 %v5728, 0.00390625
        %s5730 = sld [smem:[#allocation3 + $0x1ec]]
        %v5731 = vadd.f32 %v5729, 1e-05
        %v5732 = vrsqrt.pop %v5731
        %v5733 = vstv %s5730
        %v5734 = vmul.f32 %v5733, %v5732
        %v5735 = vmul.f32 %v5712, %v5734
        %v5736 = vmul.f32 %v5713, %v5734
        %s5737 = sld [smem:[#allocation3 + $0x1f4]]
        %v5738 = vstv %s5737
        %v5739 = vadd.f32 %v5735, %v5738
        %v5740 = vadd.f32 %v5736, %v5738
        %v5741 = vtanh.pop %v5739
        %v5742 = vtanh.pop %v5740
        %v5743 = vsel %vm568, %v5504, 0.0
        %5744 = vadd.xlane.f32.xlu0 %v5743
        %v5745 = vpop.xlane.xlu0 %5744
        %v5746 = vsel %vm568, %v5505, 0.0
        %5747 = vadd.xlane.f32.xlu0 %v5746
        %v5748 = vpop.xlane.xlu0 %5747
        %v5749 = vadd.f32 %v5745, %v5748
        %v5750 = vrot.slane %v5749, 4
        %v5751 = vadd.f32 %v5749, %v5750
        %v5752 = vrot.slane %v5751, 2
        %v5753 = vadd.f32 %v5751, %v5752
        %v5754 = vrot.slane %v5753, 1
        %v5755 = vadd.f32 %v5753, %v5754
        %v5756 = vmul.f32 %v5755, 0.00390625
        %v5757 = vsub.f32 %v5504, %v5756
        %v5758 = vsub.f32 %v5505, %v5756
        %v5759 = vmul.f32 %v5757, %v5757
        %v5760 = vmul.f32 %v5758, %v5758
        %v5761 = vsel %vm568, %v5759, 0.0
        %5762 = vadd.xlane.f32.xlu0 %v5761
        %v5763 = vpop.xlane.xlu0 %5762
        %v5764 = vsel %vm568, %v5760, 0.0
        %5765 = vadd.xlane.f32.xlu0 %v5764
        %v5766 = vpop.xlane.xlu0 %5765
        %v5767 = vadd.f32 %v5763, %v5766
        %v5768 = vrot.slane %v5767, 4
        %v5769 = vadd.f32 %v5767, %v5768
        %v5770 = vrot.slane %v5769, 2
        %v5771 = vadd.f32 %v5769, %v5770
        %v5772 = vrot.slane %v5771, 1
        %v5773 = vadd.f32 %v5771, %v5772
        %v5774 = vmul.f32 %v5773, 0.00390625
        %s5775 = sld [smem:[#allocation3 + $0x1ed]]
        %v5776 = vadd.f32 %v5774, 1e-05
        %v5777 = vrsqrt.pop %v5776
        %v5778 = vstv %s5775
        %v5779 = vmul.f32 %v5778, %v5777
        %v5780 = vmul.f32 %v5757, %v5779
        %v5781 = vmul.f32 %v5758, %v5779
        %s5782 = sld [smem:[#allocation3 + $0x1f5]]
        %v5783 = vstv %s5782
        %v5784 = vadd.f32 %v5780, %v5783
        %v5785 = vadd.f32 %v5781, %v5783
        %v5786 = vtanh.pop %v5784
        %v5787 = vtanh.pop %v5785
        %v5788 = vsel %vm568, %v5510, 0.0
        %5789 = vadd.xlane.f32.xlu0 %v5788
        %v5790 = vpop.xlane.xlu0 %5789
        %v5791 = vsel %vm568, %v5511, 0.0
        %5792 = vadd.xlane.f32.xlu0 %v5791
        %v5793 = vpop.xlane.xlu0 %5792
        %v5794 = vadd.f32 %v5790, %v5793
        %v5795 = vrot.slane %v5794, 4
        %v5796 = vadd.f32 %v5794, %v5795
        %v5797 = vrot.slane %v5796, 2
        %v5798 = vadd.f32 %v5796, %v5797
        %v5799 = vrot.slane %v5798, 1
        %v5800 = vadd.f32 %v5798, %v5799
        %v5801 = vmul.f32 %v5800, 0.00390625
        %v5802 = vsub.f32 %v5510, %v5801
        %v5803 = vsub.f32 %v5511, %v5801
        %v5804 = vmul.f32 %v5802, %v5802
        %v5805 = vmul.f32 %v5803, %v5803
        %v5806 = vsel %vm568, %v5804, 0.0
        %5807 = vadd.xlane.f32.xlu0 %v5806
        %v5808 = vpop.xlane.xlu0 %5807
        %v5809 = vsel %vm568, %v5805, 0.0
        %5810 = vadd.xlane.f32.xlu0 %v5809
        %v5811 = vpop.xlane.xlu0 %5810
        %v5812 = vadd.f32 %v5808, %v5811
        %v5813 = vrot.slane %v5812, 4
        %v5814 = vadd.f32 %v5812, %v5813
        %v5815 = vrot.slane %v5814, 2
        %v5816 = vadd.f32 %v5814, %v5815
        %v5817 = vrot.slane %v5816, 1
        %v5818 = vadd.f32 %v5816, %v5817
        %v5819 = vmul.f32 %v5818, 0.00390625
        %s5820 = sld [smem:[#allocation3 + $0x1ee]]
        %v5821 = vadd.f32 %v5819, 1e-05
        %v5822 = vrsqrt.pop %v5821
        %v5823 = vstv %s5820
        %v5824 = vmul.f32 %v5823, %v5822
        %v5825 = vmul.f32 %v5802, %v5824
        %v5826 = vmul.f32 %v5803, %v5824
        %s5827 = sld [smem:[#allocation3 + $0x1f6]]
        %v5828 = vstv %s5827
        %v5829 = vadd.f32 %v5825, %v5828
        %v5830 = vadd.f32 %v5826, %v5828
        %v5831 = vtanh.pop %v5829
        %v5832 = vtanh.pop %v5830
        %v5833 = vsel %vm568, %v5516, 0.0
        %5834 = vadd.xlane.f32.xlu0 %v5833
        %v5835 = vpop.xlane.xlu0 %5834
        %v5836 = vsel %vm568, %v5517, 0.0
        %5837 = vadd.xlane.f32.xlu0 %v5836
        %v5838 = vpop.xlane.xlu0 %5837
        %v5839 = vadd.f32 %v5835, %v5838
        %v5840 = vrot.slane %v5839, 4
        %v5841 = vadd.f32 %v5839, %v5840
        %v5842 = vrot.slane %v5841, 2
        %v5843 = vadd.f32 %v5841, %v5842
        %v5844 = vrot.slane %v5843, 1
        %v5845 = vadd.f32 %v5843, %v5844
        %v5846 = vmul.f32 %v5845, 0.00390625
        %v5847 = vsub.f32 %v5516, %v5846
        %v5848 = vsub.f32 %v5517, %v5846
        %v5849 = vmul.f32 %v5847, %v5847
        %v5850 = vmul.f32 %v5848, %v5848
        %v5851 = vsel %vm568, %v5849, 0.0
        %5852 = vadd.xlane.f32.xlu0 %v5851
        %v5853 = vpop.xlane.xlu0 %5852
        %v5854 = vsel %vm568, %v5850, 0.0
        %5855 = vadd.xlane.f32.xlu0 %v5854
        %v5856 = vpop.xlane.xlu0 %5855
        %v5857 = vadd.f32 %v5853, %v5856
        %v5858 = vrot.slane %v5857, 4
        %v5859 = vadd.f32 %v5857, %v5858
        %v5860 = vrot.slane %v5859, 2
        %v5861 = vadd.f32 %v5859, %v5860
        %v5862 = vrot.slane %v5861, 1
        %v5863 = vadd.f32 %v5861, %v5862
        %v5864 = vmul.f32 %v5863, 0.00390625
        %s5865 = sld [smem:[#allocation3 + $0x1ef]]
        %v5866 = vadd.f32 %v5864, 1e-05
        %v5867 = vrsqrt.pop %v5866
        %v5868 = vstv %s5865
        %v5869 = vmul.f32 %v5868, %v5867
        %v5870 = vmul.f32 %v5847, %v5869
        %v5871 = vmul.f32 %v5848, %v5869
        %s5872 = sld [smem:[#allocation3 + $0x1f7]]
        %v5873 = vstv %s5872
        %v5874 = vadd.f32 %v5870, %v5873
        %v5875 = vadd.f32 %v5871, %v5873
        %v5876 = vtanh.pop %v5874
        %v5877 = vtanh.pop %v5875
        %5878 = vst.msk [vmem:[%s150] sm:$0xff] %vm568, %v5561
        %5879 = vst.msk [vmem:[%s150 + $0x8] sm:$0xff] %vm568, %v5562
        %s5880 = scalar_lea.vmem %s150, 16 [#allocation6]
        %5881 = vst.msk [vmem:[%s5880] sm:$0xff] %vm568, %v5606
        %5882 = vst.msk [vmem:[%s5880 + $0x8] sm:$0xff] %vm568, %v5607
        %s5883 = scalar_lea.vmem %s150, 32 [#allocation6]
        %5884 = vst.msk [vmem:[%s5883] sm:$0xff] %vm568, %v5651
        %5885 = vst.msk [vmem:[%s5883 + $0x8] sm:$0xff] %vm568, %v5652
        %s5886 = scalar_lea.vmem %s150, 48 [#allocation6]
        %5887 = vst.msk [vmem:[%s5886] sm:$0xff] %vm568, %v5696
        %5888 = vst.msk [vmem:[%s5886 + $0x8] sm:$0xff] %vm568, %v5697
        %s5889 = scalar_lea.vmem %s150, 64 [#allocation6]
        %5890 = vst.msk [vmem:[%s5889] sm:$0xff] %vm568, %v5741
        %5891 = vst.msk [vmem:[%s5889 + $0x8] sm:$0xff] %vm568, %v5742
        %s5892 = scalar_lea.vmem %s150, 80 [#allocation6]
        %5893 = vst.msk [vmem:[%s5892] sm:$0xff] %vm568, %v5786
        %5894 = vst.msk [vmem:[%s5892 + $0x8] sm:$0xff] %vm568, %v5787
        %s5895 = scalar_lea.vmem %s150, 96 [#allocation6]
        %5896 = vst.msk [vmem:[%s5895] sm:$0xff] %vm568, %v5831
        %5897 = vst.msk [vmem:[%s5895 + $0x8] sm:$0xff] %vm568, %v5832
        %s5898 = scalar_lea.vmem %s150, 112 [#allocation6]
        %5899 = vst.msk [vmem:[%s5898] sm:$0xff] %vm568, %v5876
        %5900 = vst.msk [vmem:[%s5898 + $0x8] sm:$0xff] %vm568, %v5877
        %s5901 = sand.u32 %s72, 1
        %s5902 = scalar_lea.sflag [#allocation4], %s5901
        %s5903 = sand.u32 %s72, 1
        %s5904 = smul.addr %s5903, 128
        %s5905 = scalar_lea.vmem [#allocation6], %s5904
        // Predicated region
        $region33: #{c2f1_pallas.1} parent=27 // pred_check
          %p5906 = pneg %p82
        $region34: #{c2f1_pallas.1} parent=27 // pred_check_branch
          %5908 = sbr.rel (%p5906) target = $region36
        $region35: #{c2f1_pallas.1} parent=27 // pred_region
          %s5910 = ssub.s32 2048, 2048
          %5911 = vsyncadd %s5902, %s5910
          %s5912 = smul.addr %s17, 16
          %s5913 = smul.addr %s5912, 128
          %s5914 = scalar_lea.hbm %s2, %s5913
          %s5915 = sshll.u32 %s5905, 4
          %s5916 = int_to_ptr.vmem [resolvable:$true] %s5915
          %5921 = dma.vmem_to_hbm [thread:$0]  %s5916, 2048, %s5914, %s5902, 128, 128, 8
        $region36: #{c2f1_pallas.1} parent=27 // pred_fallthru
          _
      $region28: #{c2f1_pallas.1} parent=5 // pred_fallthru
        _
      %p5922 = scmp.le.s32.totalorder 2, %s12
      // Predicated region
      $region37: #{c2f1_pallas.1} parent=5 // pred_check
        %p5923 = pneg %p5922
      $region38: #{c2f1_pallas.1} parent=5 // pred_check_branch
        %5925 = sbr.rel (%p5923) target = $region40
      $region39: #{c2f1_pallas.1} parent=5 // pred_region
        %s5926 = ssub.s32 %s12, 2
        // Predicated region
        $region41: #{c2f1_pallas.1} parent=39 // pred_check
          %p5927 = pneg %p88
        $region42: #{c2f1_pallas.1} parent=39 // pred_check_branch
          %5929 = sbr.rel (%p5927) target = $region44
        $region43: #{c2f1_pallas.1} parent=39 // pred_region
          %s5930 = sand.u32 %s73, 1
          %s5931 = scalar_lea.sflag [#allocation4], %s5930
          %s5932 = sand.u32 %s73, 1
          %s5933 = smul.addr %s5932, 128
          %s5934 = scalar_lea.vmem [#allocation6], %s5933
          %5935 = dma.done %s5931, 2048
        $region44: #{c2f1_pallas.1} parent=39 // pred_fallthru
          _
      $region40: #{c2f1_pallas.1} parent=5 // pred_fallthru
        _
    $region6: #{c2f1_pallas.1} parent=1 // loop_footer
      %s16 = sadd.s32 1, %s12
    $region7: #{c2f1_pallas.1} parent=1 // loop_footer_branch
      %11 = sbr.rel target = $region3
    $region8: #{c2f1_pallas.1} parent=1 // loop_exit
      _
    %5936 = vsyncpa [#allocation4], 1
    %s5937 = scalar_lea.sflag [#allocation4], 1
    %5938 = vsyncpa %s5937, 1
    %5939 = vsyncpa [#allocation5], 1
    %s5940 = scalar_lea.sflag [#allocation5], 1
    %5941 = vsyncpa %s5940, 1

</llo_original>
